<compile_context>
chip_gen: v5e
topology: v5e:2x2
jax: 0.10.0
libtpu: 0.0.40
codegen_flags: <defaults>
</compile_context>

<pallas_src>
import functools
import numpy as np
import jax
import jax.numpy as jnp
from jax.experimental import pallas as pl
from jax.experimental.pallas import tpu as pltpu


# ----------------------------- conv matmul kernel ----------------------------

def _conv_mm_kernel(x_ref, w_ref, b_ref, o_ref):
    """o = relu(x @ w + b); bf16 operands, f32 accumulate, bf16 store."""
    y = jnp.dot(x_ref[...], w_ref[...], preferred_element_type=jnp.float32)
    y = jnp.maximum(y + b_ref[...], 0.0)
    o_ref[...] = y.astype(o_ref.dtype)


def pallas_conv_matmul(patches, wflat, b):
    """patches:(M,K) bf16, wflat:(K,N) bf16, b:(1,N) f32 -> (M,N) bf16."""
    M, K = patches.shape
    Kw, N = wflat.shape
    assert K == Kw, (K, Kw)
    return pl.pallas_call(
        _conv_mm_kernel,
        out_shape=jax.ShapeDtypeStruct((M, N), jnp.bfloat16),
        grid_spec=pltpu.PrefetchScalarGridSpec(
            num_scalar_prefetch=0,
            grid=(1,),
            in_specs=[
                pl.BlockSpec((M, K), lambda i: (0, 0)),
                pl.BlockSpec((K, N), lambda i: (0, 0)),
                pl.BlockSpec((1, N), lambda i: (0, 0)),
            ],
            out_specs=pl.BlockSpec((M, N), lambda i: (0, 0)),
        ),
        compiler_params=pltpu.CompilerParams(
            dimension_semantics=("parallel",)),
    )(patches, wflat, b)


# --------------------------- fused MLP + heads kernel -------------------------

def _mlp_kernel(feat_ref, x3_ref, w1_ref, w1x3_ref, b1_ref,
                w2_ref, b2_ref, wh_ref, bh_ref, out_ref, acc_ref):
    """K-tiled lin1 with fused lin2 + actor|critic head in the flush branch."""
    k = pl.program_id(0)

    @pl.when(k == 0)
    def _():
        acc_ref[...] = jnp.zeros_like(acc_ref)

    acc_ref[...] += jnp.dot(feat_ref[...], w1_ref[...],
                            preferred_element_type=jnp.float32)

    @pl.when(k == pl.num_programs(0) - 1)
    def _():
        # lin1 epilogue: aux-feature contribution + bias + ReLU.
        h = acc_ref[...]
        h = h + jnp.dot(x3_ref[...], w1x3_ref[...],
                        preferred_element_type=jnp.float32)
        h = jnp.maximum(h + b1_ref[...], 0.0)
        # lin2 + ReLU, hidden stays in VMEM.
        h = jnp.dot(h.astype(jnp.bfloat16), w2_ref[...],
                    preferred_element_type=jnp.float32)
        h = jnp.maximum(h + b2_ref[...], 0.0)
        # fused actor | critic head.
        y = jnp.dot(h.astype(jnp.bfloat16), wh_ref[...],
                    preferred_element_type=jnp.float32)
        out_ref[...] = (y + bh_ref[...]).astype(out_ref.dtype)


def pallas_mlp_head(feat, x3, kp, *, tk=2304):
    """feat:(M,9216) bf16, x3:(M,z) f32 -> (M, output_dim + 1) f32."""
    M, K = feat.shape
    Z = x3.shape[1]
    N1 = kp["lin1_w"].shape[1]     # 512
    NH = kp["head_w"].shape[1]     # output_dim + 1
    assert K % tk == 0, (K, tk)
    grid_k = K // tk
    return pl.pallas_call(
        _mlp_kernel,
        out_shape=jax.ShapeDtypeStruct((M, NH), jnp.float32),
        grid_spec=pltpu.PrefetchScalarGridSpec(
            num_scalar_prefetch=0,
            grid=(grid_k,),
            in_specs=[
                pl.BlockSpec((M, tk), lambda k: (0, k)),     # image features (bf16)
                pl.BlockSpec((M, Z), lambda k: (0, 0)),      # aux features (f32)
                pl.BlockSpec((tk, N1), lambda k: (k, 0)),    # lin1 weight (bf16)
                pl.BlockSpec((Z, N1), lambda k: (0, 0)),     # lin1 aux weight (f32)
                pl.BlockSpec((1, N1), lambda k: (0, 0)),     # lin1 bias
                pl.BlockSpec((N1, N1), lambda k: (0, 0)),    # lin2 weight (bf16)
                pl.BlockSpec((1, N1), lambda k: (0, 0)),     # lin2 bias
                pl.BlockSpec((N1, NH), lambda k: (0, 0)),    # head weight (bf16)
                pl.BlockSpec((1, NH), lambda k: (0, 0)),     # head bias
            ],
            out_specs=pl.BlockSpec((M, NH), lambda k: (0, 0)),
            scratch_shapes=[pltpu.VMEM((M, N1), jnp.float32)],
        ),
        compiler_params=pltpu.CompilerParams(
            dimension_semantics=("arbitrary",)),
    )(feat, x3, kp["lin1_w"], kp["lin1x3_w"], kp["lin1_b"],
      kp["lin2_w"], kp["lin2_b"], kp["head_w"], kp["head_b"])


# --------------------------- conv via im2col (NHWC) --------------------------

def _im2col_nhwc(x, k, s):
    """x: (B,H,W,C) -> (B*Ho*Wo, k*k*C); patch features ordered (kh, kw, C)."""
    B, H, W, C = x.shape
    Ho = (H - k) // s + 1
    Wo = (W - k) // s + 1
    cols = [x[:, i:i + s * Ho:s, j:j + s * Wo:s, :]
            for i in range(k) for j in range(k)]
    col = jnp.stack(cols, axis=3)                       # (B, Ho, Wo, k*k, C)
    return col.reshape(B * Ho * Wo, k * k * C), Ho, Wo


def conv2d_relu_nhwc(x, wflat, b, ksize, stride):
    """PyTorch-semantics VALID Conv2d + ReLU, NHWC layout, bf16 activations.

    x: (B,H,W,Cin); wflat: (k*k*Cin, Cout) bf16, pre-flattened from OIHW."""
    B = x.shape[0]
    Cout = wflat.shape[1]
    patches, Ho, Wo = _im2col_nhwc(x.astype(jnp.bfloat16), ksize, stride)
    y = pallas_conv_matmul(patches, wflat, b)           # (B*Ho*Wo, Cout) bf16
    return y.reshape(B, Ho, Wo, Cout)


# ------------------------------ PPO forward ----------------------------------

def ppo_forward(kp, x1, x3, *, output_dim):
    x = jnp.transpose(x1, (0, 2, 3, 1))                 # NCHW -> NHWC, once
    x = conv2d_relu_nhwc(x, kp["conv1_w"], kp["conv1_b"], 8, 4)   # (B,30,30,32)
    x = conv2d_relu_nhwc(x, kp["conv2_w"], kp["conv2_b"], 4, 2)   # (B,14,14,64)
    x = conv2d_relu_nhwc(x, kp["conv3_w"], kp["conv3_b"], 3, 1)   # (B,12,12,64)
    B = x.shape[0]
    feat = x.reshape(B, -1)                             # (B, 9216) bf16, NHWC flatten
    # TODO(synk): start the lin1 weight DMA as a cross-call future before the
    # conv stack (P10) to hide the dominant weight load behind conv compute.
    y = pallas_mlp_head(feat, x3, kp)                   # (B, output_dim + 1) f32
    return y[:, :output_dim], y[:, output_dim:]


# --------------------------- deterministic init -------------------------------

def _orthogonal(rng, shape, gain):
    rows = shape[0]
    cols = int(np.prod(shape[1:]))
    a = rng.standard_normal((rows, cols))
    flat = a if rows >= cols else a.T
    q, r = np.linalg.qr(flat)
    q = q * np.sign(np.diag(r))
    if rows < cols:
        q = q.T
    return (gain * q).reshape(shape).astype(np.float32)


def init_params(c, z, output_dim, seed=114514):
    rng = np.random.default_rng(seed)
    g = float(np.sqrt(2.0))  # nn.init.calculate_gain('relu')
    p = {
        "conv1_w": _orthogonal(rng, (32, c, 8, 8), g),
        "conv1_b": np.zeros((32,), np.float32),
        "conv2_w": _orthogonal(rng, (64, 32, 4, 4), g),
        "conv2_b": np.zeros((64,), np.float32),
        "conv3_w": _orthogonal(rng, (64, 64, 3, 3), g),
        "conv3_b": np.zeros((64,), np.float32),
        "lin1_w": _orthogonal(rng, (512, 9216 + z), g),
        "lin1_b": np.zeros((512,), np.float32),
        "lin2_w": _orthogonal(rng, (512, 512), g),
        "lin2_b": np.zeros((512,), np.float32),
        "critic_w": _orthogonal(rng, (1, 512), g),
        "critic_b": np.zeros((1,), np.float32),
        "actor_w": _orthogonal(rng, (output_dim, 512), g),
        "actor_b": np.zeros((output_dim,), np.float32),
    }
    return {k: jnp.asarray(v) for k, v in p.items()}


def prepare_kernel_params(p, z):
    """One-time conversion of raw (PyTorch-layout) params to kernel layouts."""
    def conv_flat(w):   # OIHW -> (kh*kw*Cin, Cout), matching NHWC im2col order
        O, I, kh, kw = w.shape
        return (jnp.transpose(w, (2, 3, 1, 0))
                .reshape(kh * kw * I, O).astype(jnp.bfloat16))

    def row_bias(b):
        return b.reshape(1, -1).astype(jnp.float32)

    kp = {
        "conv1_w": conv_flat(p["conv1_w"]), "conv1_b": row_bias(p["conv1_b"]),
        "conv2_w": conv_flat(p["conv2_w"]), "conv2_b": row_bias(p["conv2_b"]),
        "conv3_w": conv_flat(p["conv3_w"]), "conv3_b": row_bias(p["conv3_b"]),
    }

    # lin1: split into the image part (K = 9216 columns, permuted from
    # PyTorch's NCHW-flatten order to the NHWC-flatten order produced by the
    # conv stack, transposed to (K, 512), stored bf16) and the tiny auxiliary
    # part (z, 512) kept in f32. No padding needed: 9216 = 72 * 128.
    C3, H3, W3 = 64, 12, 12
    img = C3 * H3 * W3                                   # 9216
    nchw_of_nhwc = np.arange(img).reshape(C3, H3, W3).transpose(1, 2, 0).reshape(-1)
    w1 = p["lin1_w"]                                     # (512, 9216 + z)
    kp["lin1_w"] = w1[:, :img][:, nchw_of_nhwc].T.astype(jnp.bfloat16)  # (9216,512)
    kp["lin1x3_w"] = w1[:, img:].T.astype(jnp.float32)                  # (z, 512)
    kp["lin1_b"] = row_bias(p["lin1_b"])

    kp["lin2_w"] = p["lin2_w"].T.astype(jnp.bfloat16)
    kp["lin2_b"] = row_bias(p["lin2_b"])

    # fused actor | critic head: N = output_dim + 1
    kp["head_w"] = jnp.concatenate(
        [p["actor_w"].T, p["critic_w"].T], axis=1).astype(jnp.bfloat16)
    kp["head_b"] = row_bias(jnp.concatenate([p["actor_b"], p["critic_b"]]))
    # TODO(synk): per-channel int8 (v5e/v6e) / fp8 (v7x) quantization of lin1_w
    # would halve the dominant weight DMA; kept bf16 for generation-neutral accuracy.
    return kp


# -------------------------- pure-JAX reference -------------------------------

def ref_forward(params, x1, x3):
    hp = jax.lax.Precision.HIGHEST

    def conv(x, w, b, s):
        y = jax.lax.conv_general_dilated(
            x, w, (s, s), "VALID",
            dimension_numbers=("NCHW", "OIHW", "NCHW"), precision=hp)
        return jax.nn.relu(y + b[None, :, None, None])

    x = conv(x1, params["conv1_w"], params["conv1_b"], 4)
    x = conv(x, params["conv2_w"], params["conv2_b"], 2)
    x = conv(x, params["conv3_w"], params["conv3_b"], 1)
    B = x.shape[0]
    x = x.reshape(B, -1)
    x = jnp.concatenate([x, x3], axis=1)
    x = jax.nn.relu(jnp.dot(x, params["lin1_w"].T, precision=hp) + params["lin1_b"])
    x = jax.nn.relu(jnp.dot(x, params["lin2_w"].T, precision=hp) + params["lin2_b"])
    logits = jnp.dot(x, params["actor_w"].T, precision=hp) + params["actor_b"]
    value = jnp.dot(x, params["critic_w"].T, precision=hp) + params["critic_b"]
    return logits, value


# ---------------------------------- main -------------------------------------

if __name__ == "__main__":
    # Module contract forces H = W = 126 (so the flattened conv output is 9216).
    B, C, H, W = 2, 4, 126, 126
    Z = 8            # aux-feature dim (input_dim[1])
    A = 7            # output_dim (number of actions)

    params = init_params(C, Z, A)
    kparams = prepare_kernel_params(params, Z)

    key = jax.random.PRNGKey(0)
    k1, k2 = jax.random.split(key)
    x1 = jax.random.normal(k1, (B, C, H, W), jnp.float32)
    x3 = jax.random.normal(k2, (B, Z), jnp.float32)

    forward = jax.jit(functools.partial(ppo_forward, output_dim=A))
    logits, value = forward(kparams, x1, x3)
    jax.block_until_ready((logits, value))

    assert logits.shape == (B, A) and value.shape == (B, 1)

    ref_logits, ref_value = ref_forward(params, x1, x3)
    np.testing.assert_allclose(np.asarray(logits), np.asarray(ref_logits),
                               rtol=2e-2, atol=2e-2)
    np.testing.assert_allclose(np.asarray(value), np.asarray(ref_value),
                               rtol=2e-2, atol=2e-2)

    print("KERNEL_OK")
</pallas_src>

<mosaic_0001>
module attributes {stable_mosaic.version = 11 : i64} {
  func.func @_conv_mm_kernel(%arg0: i32, %arg1: memref<1800x256xbf16, #tpu.memory_space<vmem>>, %arg2: memref<256x32xbf16, #tpu.memory_space<vmem>>, %arg3: memref<1x32xf32, #tpu.memory_space<vmem>>, %arg4: memref<1800x32xbf16, #tpu.memory_space<vmem>>) attributes {dimension_semantics = [#tpu.dimension_semantics<parallel>], iteration_bounds = array<i64: 1>, scalar_prefetch = 0 : i64, scratch_operands = 0 : i64, tpu.core_type = #tpu.core_type<tc>, window_params = [{pipeline_mode = #tpu.pipeline_mode<synchronous>, transform_indices = @transform_0, window_bounds = array<i64: 1800, 256>}, {pipeline_mode = #tpu.pipeline_mode<synchronous>, transform_indices = @transform_1, window_bounds = array<i64: 256, 32>}, {pipeline_mode = #tpu.pipeline_mode<synchronous>, transform_indices = @transform_2, window_bounds = array<i64: 1, 32>}, {pipeline_mode = #tpu.pipeline_mode<synchronous>, transform_indices = @transform_3, window_bounds = array<i64: 1800, 32>}]} {
    %c0 = arith.constant 0 : index
    %c0_0 = arith.constant 0 : index
    %0 = vector.load %arg1[%c0, %c0_0] : memref<1800x256xbf16, #tpu.memory_space<vmem>>, vector<1800x256xbf16>
    %c0_1 = arith.constant 0 : index
    %c0_2 = arith.constant 0 : index
    %1 = vector.load %arg2[%c0_1, %c0_2] : memref<256x32xbf16, #tpu.memory_space<vmem>>, vector<256x32xbf16>
    %cst = arith.constant dense<0.000000e+00> : vector<1800x32xf32>
    %2 = tpu.matmul %0, %1, %cst {dimension_numbers = #tpu.dot_dimension_numbers<[1], [0], [0], [1], [0, 0, 1, 1], [], []>} : vector<1800x256xbf16>, vector<256x32xbf16>, vector<1800x32xf32> -> vector<1800x32xf32>
    %c0_3 = arith.constant 0 : index
    %c0_4 = arith.constant 0 : index
    %3 = vector.load %arg3[%c0_3, %c0_4] : memref<1x32xf32, #tpu.memory_space<vmem>>, vector<1x32xf32>
    %4 = vector.broadcast %3 : vector<1x32xf32> to vector<1800x32xf32>
    %5 = arith.addf %2, %4 : vector<1800x32xf32>
    %cst_5 = arith.constant 0.000000e+00 : f32
    %6 = vector.broadcast %cst_5 : f32 to vector<1800x32xf32>
    %7 = arith.maximumf %5, %6 : vector<1800x32xf32>
    %8 = arith.truncf %7 : vector<1800x32xf32> to vector<1800x32xbf16>
    %c0_6 = arith.constant 0 : index
    %c0_7 = arith.constant 0 : index
    %9 = vector.load %arg4[%c0_6, %c0_7] : memref<1800x32xbf16, #tpu.memory_space<vmem>>, vector<1800x32xbf16>
    tpu.vector_store %arg4[%c0_6, %c0_7], %8 {strides = array<i32>} : memref<1800x32xbf16, #tpu.memory_space<vmem>>, vector<1800x32xbf16>,
    return
  }
  func.func @transform_0(%arg0: i32) -> (i32, i32) {
    %c0_i32 = arith.constant 0 : i32
    %c0_i32_0 = arith.constant 0 : i32
    %c0_i32_1 = arith.constant 0 : i32
    return %c0_i32, %c0_i32_0 : i32, i32
  }
  func.func @transform_1(%arg0: i32) -> (i32, i32) {
    %c0_i32 = arith.constant 0 : i32
    %c0_i32_0 = arith.constant 0 : i32
    %c0_i32_1 = arith.constant 0 : i32
    return %c0_i32, %c0_i32_0 : i32, i32
  }
  func.func @transform_2(%arg0: i32) -> (i32, i32) {
    %c0_i32 = arith.constant 0 : i32
    %c0_i32_0 = arith.constant 0 : i32
    %c0_i32_1 = arith.constant 0 : i32
    return %c0_i32, %c0_i32_0 : i32, i32
  }
  func.func @transform_3(%arg0: i32) -> (i32, i32) {
    %c0_i32 = arith.constant 0 : i32
    %c0_i32_0 = arith.constant 0 : i32
    %c0_i32_1 = arith.constant 0 : i32
    return %c0_i32, %c0_i32_0 : i32, i32
  }
}

module attributes {stable_mosaic.version = 11 : i64} {
  func.func @_conv_mm_kernel(%arg0: i32, %arg1: memref<392x512xbf16, #tpu.memory_space<vmem>>, %arg2: memref<512x64xbf16, #tpu.memory_space<vmem>>, %arg3: memref<1x64xf32, #tpu.memory_space<vmem>>, %arg4: memref<392x64xbf16, #tpu.memory_space<vmem>>) attributes {dimension_semantics = [#tpu.dimension_semantics<parallel>], iteration_bounds = array<i64: 1>, scalar_prefetch = 0 : i64, scratch_operands = 0 : i64, tpu.core_type = #tpu.core_type<tc>, window_params = [{pipeline_mode = #tpu.pipeline_mode<synchronous>, transform_indices = @transform_0, window_bounds = array<i64: 392, 512>}, {pipeline_mode = #tpu.pipeline_mode<synchronous>, transform_indices = @transform_1, window_bounds = array<i64: 512, 64>}, {pipeline_mode = #tpu.pipeline_mode<synchronous>, transform_indices = @transform_2, window_bounds = array<i64: 1, 64>}, {pipeline_mode = #tpu.pipeline_mode<synchronous>, transform_indices = @transform_3, window_bounds = array<i64: 392, 64>}]} {
    %c0 = arith.constant 0 : index
    %c0_0 = arith.constant 0 : index
    %0 = vector.load %arg1[%c0, %c0_0] : memref<392x512xbf16, #tpu.memory_space<vmem>>, vector<392x512xbf16>
    %c0_1 = arith.constant 0 : index
    %c0_2 = arith.constant 0 : index
    %1 = vector.load %arg2[%c0_1, %c0_2] : memref<512x64xbf16, #tpu.memory_space<vmem>>, vector<512x64xbf16>
    %cst = arith.constant dense<0.000000e+00> : vector<392x64xf32>
    %2 = tpu.matmul %0, %1, %cst {dimension_numbers = #tpu.dot_dimension_numbers<[1], [0], [0], [1], [0, 0, 1, 1], [], []>} : vector<392x512xbf16>, vector<512x64xbf16>, vector<392x64xf32> -> vector<392x64xf32>
    %c0_3 = arith.constant 0 : index
    %c0_4 = arith.constant 0 : index
    %3 = vector.load %arg3[%c0_3, %c0_4] : memref<1x64xf32, #tpu.memory_space<vmem>>, vector<1x64xf32>
    %4 = vector.broadcast %3 : vector<1x64xf32> to vector<392x64xf32>
    %5 = arith.addf %2, %4 : vector<392x64xf32>
    %cst_5 = arith.constant 0.000000e+00 : f32
    %6 = vector.broadcast %cst_5 : f32 to vector<392x64xf32>
    %7 = arith.maximumf %5, %6 : vector<392x64xf32>
    %8 = arith.truncf %7 : vector<392x64xf32> to vector<392x64xbf16>
    %c0_6 = arith.constant 0 : index
    %c0_7 = arith.constant 0 : index
    %9 = vector.load %arg4[%c0_6, %c0_7] : memref<392x64xbf16, #tpu.memory_space<vmem>>, vector<392x64xbf16>
    tpu.vector_store %arg4[%c0_6, %c0_7], %8 {strides = array<i32>} : memref<392x64xbf16, #tpu.memory_space<vmem>>, vector<392x64xbf16>,
    return
  }
  func.func @transform_0(%arg0: i32) -> (i32, i32) {
    %c0_i32 = arith.constant 0 : i32
    %c0_i32_0 = arith.constant 0 : i32
    %c0_i32_1 = arith.constant 0 : i32
    return %c0_i32, %c0_i32_0 : i32, i32
  }
  func.func @transform_1(%arg0: i32) -> (i32, i32) {
    %c0_i32 = arith.constant 0 : i32
    %c0_i32_0 = arith.constant 0 : i32
    %c0_i32_1 = arith.constant 0 : i32
    return %c0_i32, %c0_i32_0 : i32, i32
  }
  func.func @transform_2(%arg0: i32) -> (i32, i32) {
    %c0_i32 = arith.constant 0 : i32
    %c0_i32_0 = arith.constant 0 : i32
    %c0_i32_1 = arith.constant 0 : i32
    return %c0_i32, %c0_i32_0 : i32, i32
  }
  func.func @transform_3(%arg0: i32) -> (i32, i32) {
    %c0_i32 = arith.constant 0 : i32
    %c0_i32_0 = arith.constant 0 : i32
    %c0_i32_1 = arith.constant 0 : i32
    return %c0_i32, %c0_i32_0 : i32, i32
  }
}

module attributes {stable_mosaic.version = 11 : i64} {
  func.func @_conv_mm_kernel(%arg0: i32, %arg1: memref<288x576xbf16, #tpu.memory_space<vmem>>, %arg2: memref<576x64xbf16, #tpu.memory_space<vmem>>, %arg3: memref<1x64xf32, #tpu.memory_space<vmem>>, %arg4: memref<288x64xbf16, #tpu.memory_space<vmem>>) attributes {dimension_semantics = [#tpu.dimension_semantics<parallel>], iteration_bounds = array<i64: 1>, scalar_prefetch = 0 : i64, scratch_operands = 0 : i64, tpu.core_type = #tpu.core_type<tc>, window_params = [{pipeline_mode = #tpu.pipeline_mode<synchronous>, transform_indices = @transform_0, window_bounds = array<i64: 288, 576>}, {pipeline_mode = #tpu.pipeline_mode<synchronous>, transform_indices = @transform_1, window_bounds = array<i64: 576, 64>}, {pipeline_mode = #tpu.pipeline_mode<synchronous>, transform_indices = @transform_2, window_bounds = array<i64: 1, 64>}, {pipeline_mode = #tpu.pipeline_mode<synchronous>, transform_indices = @transform_3, window_bounds = array<i64: 288, 64>}]} {
    %c0 = arith.constant 0 : index
    %c0_0 = arith.constant 0 : index
    %0 = vector.load %arg1[%c0, %c0_0] : memref<288x576xbf16, #tpu.memory_space<vmem>>, vector<288x576xbf16>
    %c0_1 = arith.constant 0 : index
    %c0_2 = arith.constant 0 : index
    %1 = vector.load %arg2[%c0_1, %c0_2] : memref<576x64xbf16, #tpu.memory_space<vmem>>, vector<576x64xbf16>
    %cst = arith.constant dense<0.000000e+00> : vector<288x64xf32>
    %2 = tpu.matmul %0, %1, %cst {dimension_numbers = #tpu.dot_dimension_numbers<[1], [0], [0], [1], [0, 0, 1, 1], [], []>} : vector<288x576xbf16>, vector<576x64xbf16>, vector<288x64xf32> -> vector<288x64xf32>
    %c0_3 = arith.constant 0 : index
    %c0_4 = arith.constant 0 : index
    %3 = vector.load %arg3[%c0_3, %c0_4] : memref<1x64xf32, #tpu.memory_space<vmem>>, vector<1x64xf32>
    %4 = vector.broadcast %3 : vector<1x64xf32> to vector<288x64xf32>
    %5 = arith.addf %2, %4 : vector<288x64xf32>
    %cst_5 = arith.constant 0.000000e+00 : f32
    %6 = vector.broadcast %cst_5 : f32 to vector<288x64xf32>
    %7 = arith.maximumf %5, %6 : vector<288x64xf32>
    %8 = arith.truncf %7 : vector<288x64xf32> to vector<288x64xbf16>
    %c0_6 = arith.constant 0 : index
    %c0_7 = arith.constant 0 : index
    %9 = vector.load %arg4[%c0_6, %c0_7] : memref<288x64xbf16, #tpu.memory_space<vmem>>, vector<288x64xbf16>
    tpu.vector_store %arg4[%c0_6, %c0_7], %8 {strides = array<i32>} : memref<288x64xbf16, #tpu.memory_space<vmem>>, vector<288x64xbf16>,
    return
  }
  func.func @transform_0(%arg0: i32) -> (i32, i32) {
    %c0_i32 = arith.constant 0 : i32
    %c0_i32_0 = arith.constant 0 : i32
    %c0_i32_1 = arith.constant 0 : i32
    return %c0_i32, %c0_i32_0 : i32, i32
  }
  func.func @transform_1(%arg0: i32) -> (i32, i32) {
    %c0_i32 = arith.constant 0 : i32
    %c0_i32_0 = arith.constant 0 : i32
    %c0_i32_1 = arith.constant 0 : i32
    return %c0_i32, %c0_i32_0 : i32, i32
  }
  func.func @transform_2(%arg0: i32) -> (i32, i32) {
    %c0_i32 = arith.constant 0 : i32
    %c0_i32_0 = arith.constant 0 : i32
    %c0_i32_1 = arith.constant 0 : i32
    return %c0_i32, %c0_i32_0 : i32, i32
  }
  func.func @transform_3(%arg0: i32) -> (i32, i32) {
    %c0_i32 = arith.constant 0 : i32
    %c0_i32_0 = arith.constant 0 : i32
    %c0_i32_1 = arith.constant 0 : i32
    return %c0_i32, %c0_i32_0 : i32, i32
  }
}

module attributes {stable_mosaic.version = 11 : i64} {
  func.func @_mlp_kernel(%arg0: i32, %arg1: memref<2x2304xbf16, #tpu.memory_space<vmem>>, %arg2: memref<2x8xf32, #tpu.memory_space<vmem>>, %arg3: memref<2304x512xbf16, #tpu.memory_space<vmem>>, %arg4: memref<8x512xf32, #tpu.memory_space<vmem>>, %arg5: memref<1x512xf32, #tpu.memory_space<vmem>>, %arg6: memref<512x512xbf16, #tpu.memory_space<vmem>>, %arg7: memref<1x512xf32, #tpu.memory_space<vmem>>, %arg8: memref<512x8xbf16, #tpu.memory_space<vmem>>, %arg9: memref<1x8xf32, #tpu.memory_space<vmem>>, %arg10: memref<2x8xf32, #tpu.memory_space<vmem>>, %arg11: memref<2x512xf32, #tpu.memory_space<vmem>>) attributes {dimension_semantics = [#tpu.dimension_semantics<arbitrary>], iteration_bounds = array<i64: 4>, scalar_prefetch = 0 : i64, scratch_operands = 1 : i64, tpu.core_type = #tpu.core_type<tc>, window_params = [{transform_indices = @transform_0, window_bounds = array<i64: 2, 2304>}, {pipeline_mode = #tpu.pipeline_mode<synchronous>, transform_indices = @transform_1, window_bounds = array<i64: 2, 8>}, {transform_indices = @transform_2, window_bounds = array<i64: 2304, 512>}, {pipeline_mode = #tpu.pipeline_mode<synchronous>, transform_indices = @transform_3, window_bounds = array<i64: 8, 512>}, {pipeline_mode = #tpu.pipeline_mode<synchronous>, transform_indices = @transform_4, window_bounds = array<i64: 1, 512>}, {pipeline_mode = #tpu.pipeline_mode<synchronous>, transform_indices = @transform_5, window_bounds = array<i64: 512, 512>}, {pipeline_mode = #tpu.pipeline_mode<synchronous>, transform_indices = @transform_6, window_bounds = array<i64: 1, 512>}, {pipeline_mode = #tpu.pipeline_mode<synchronous>, transform_indices = @transform_7, window_bounds = array<i64: 512, 8>}, {pipeline_mode = #tpu.pipeline_mode<synchronous>, transform_indices = @transform_8, window_bounds = array<i64: 1, 8>}, {pipeline_mode = #tpu.pipeline_mode<synchronous>, transform_indices = @transform_9, window_bounds = array<i64: 2, 8>}]} {
    %c0_i32 = arith.constant 0 : i32
    %0 = arith.cmpi eq, %arg0, %c0_i32 : i32
    %1 = arith.extui %0 : i1 to i32
    %c0_i32_0 = arith.constant 0 : i32
    %2 = arith.cmpi ne, %1, %c0_i32_0 : i32
    scf.if %2 {
      %cst_9 = arith.constant 0.000000e+00 : f32
      %12 = vector.broadcast %cst_9 : f32 to vector<2x512xf32>
      %c0_10 = arith.constant 0 : index
      %c0_11 = arith.constant 0 : index
      %13 = vector.load %arg11[%c0_10, %c0_11] : memref<2x512xf32, #tpu.memory_space<vmem>>, vector<2x512xf32>
      tpu.vector_store %arg11[%c0_10, %c0_11], %12 {strides = array<i32>} : memref<2x512xf32, #tpu.memory_space<vmem>>, vector<2x512xf32>,
    } else {
    }
    %c0 = arith.constant 0 : index
    %c0_1 = arith.constant 0 : index
    %3 = vector.load %arg11[%c0, %c0_1] : memref<2x512xf32, #tpu.memory_space<vmem>>, vector<2x512xf32>
    %c0_2 = arith.constant 0 : index
    %c0_3 = arith.constant 0 : index
    %4 = vector.load %arg1[%c0_2, %c0_3] : memref<2x2304xbf16, #tpu.memory_space<vmem>>, vector<2x2304xbf16>
    %c0_4 = arith.constant 0 : index
    %c0_5 = arith.constant 0 : index
    %5 = vector.load %arg3[%c0_4, %c0_5] : memref<2304x512xbf16, #tpu.memory_space<vmem>>, vector<2304x512xbf16>
    %cst = arith.constant dense<0.000000e+00> : vector<2x512xf32>
    %6 = tpu.matmul %4, %5, %cst {dimension_numbers = #tpu.dot_dimension_numbers<[1], [0], [0], [1], [0, 0, 1, 1], [], []>} : vector<2x2304xbf16>, vector<2304x512xbf16>, vector<2x512xf32> -> vector<2x512xf32>
    %7 = arith.addf %3, %6 : vector<2x512xf32>
    %c0_6 = arith.constant 0 : index
    %c0_7 = arith.constant 0 : index
    %8 = vector.load %arg11[%c0_6, %c0_7] : memref<2x512xf32, #tpu.memory_space<vmem>>, vector<2x512xf32>
    tpu.vector_store %arg11[%c0_6, %c0_7], %7 {strides = array<i32>} : memref<2x512xf32, #tpu.memory_space<vmem>>, vector<2x512xf32>,
    %c3_i32 = arith.constant 3 : i32
    %9 = arith.cmpi eq, %arg0, %c3_i32 : i32
    %10 = arith.extui %9 : i1 to i32
    %c0_i32_8 = arith.constant 0 : i32
    %11 = arith.cmpi ne, %10, %c0_i32_8 : i32
    scf.if %11 {
      %c0_9 = arith.constant 0 : index
      %c0_10 = arith.constant 0 : index
      %12 = vector.load %arg11[%c0_9, %c0_10] : memref<2x512xf32, #tpu.memory_space<vmem>>, vector<2x512xf32>
      %c0_11 = arith.constant 0 : index
      %c0_12 = arith.constant 0 : index
      %13 = vector.load %arg2[%c0_11, %c0_12] : memref<2x8xf32, #tpu.memory_space<vmem>>, vector<2x8xf32>
      %c0_13 = arith.constant 0 : index
      %c0_14 = arith.constant 0 : index
      %14 = vector.load %arg4[%c0_13, %c0_14] : memref<8x512xf32, #tpu.memory_space<vmem>>, vector<8x512xf32>
      %cst_15 = arith.constant dense<0.000000e+00> : vector<2x512xf32>
      %15 = tpu.matmul %13, %14, %cst_15 {dimension_numbers = #tpu.dot_dimension_numbers<[1], [0], [0], [1], [0, 0, 1, 1], [], []>} : vector<2x8xf32>, vector<8x512xf32>, vector<2x512xf32> -> vector<2x512xf32>
      %16 = arith.addf %12, %15 : vector<2x512xf32>
      %c0_16 = arith.constant 0 : index
      %c0_17 = arith.constant 0 : index
      %17 = vector.load %arg5[%c0_16, %c0_17] : memref<1x512xf32, #tpu.memory_space<vmem>>, vector<1x512xf32>
      %18 = vector.broadcast %17 : vector<1x512xf32> to vector<2x512xf32>
      %19 = arith.addf %16, %18 : vector<2x512xf32>
      %cst_18 = arith.constant 0.000000e+00 : f32
      %20 = vector.broadcast %cst_18 : f32 to vector<2x512xf32>
      %21 = arith.maximumf %19, %20 : vector<2x512xf32>
      %22 = arith.truncf %21 : vector<2x512xf32> to vector<2x512xbf16>
      %c0_19 = arith.constant 0 : index
      %c0_20 = arith.constant 0 : index
      %23 = vector.load %arg6[%c0_19, %c0_20] : memref<512x512xbf16, #tpu.memory_space<vmem>>, vector<512x512xbf16>
      %cst_21 = arith.constant dense<0.000000e+00> : vector<2x512xf32>
      %24 = tpu.matmul %22, %23, %cst_21 {dimension_numbers = #tpu.dot_dimension_numbers<[1], [0], [0], [1], [0, 0, 1, 1], [], []>} : vector<2x512xbf16>, vector<512x512xbf16>, vector<2x512xf32> -> vector<2x512xf32>
      %c0_22 = arith.constant 0 : index
      %c0_23 = arith.constant 0 : index
      %25 = vector.load %arg7[%c0_22, %c0_23] : memref<1x512xf32, #tpu.memory_space<vmem>>, vector<1x512xf32>
      %26 = vector.broadcast %25 : vector<1x512xf32> to vector<2x512xf32>
      %27 = arith.addf %24, %26 : vector<2x512xf32>
      %cst_24 = arith.constant 0.000000e+00 : f32
      %28 = vector.broadcast %cst_24 : f32 to vector<2x512xf32>
      %29 = arith.maximumf %27, %28 : vector<2x512xf32>
      %30 = arith.truncf %29 : vector<2x512xf32> to vector<2x512xbf16>
      %c0_25 = arith.constant 0 : index
      %c0_26 = arith.constant 0 : index
      %31 = vector.load %arg8[%c0_25, %c0_26] : memref<512x8xbf16, #tpu.memory_space<vmem>>, vector<512x8xbf16>
      %cst_27 = arith.constant dense<0.000000e+00> : vector<2x8xf32>
      %32 = tpu.matmul %30, %31, %cst_27 {dimension_numbers = #tpu.dot_dimension_numbers<[1], [0], [0], [1], [0, 0, 1, 1], [], []>} : vector<2x512xbf16>, vector<512x8xbf16>, vector<2x8xf32> -> vector<2x8xf32>
      %c0_28 = arith.constant 0 : index
      %c0_29 = arith.constant 0 : index
      %33 = vector.load %arg9[%c0_28, %c0_29] : memref<1x8xf32, #tpu.memory_space<vmem>>, vector<1x8xf32>
      %34 = vector.broadcast %33 : vector<1x8xf32> to vector<2x8xf32>
      %35 = arith.addf %32, %34 : vector<2x8xf32>
      %c0_30 = arith.constant 0 : index
      %c0_31 = arith.constant 0 : index
      %36 = vector.load %arg10[%c0_30, %c0_31] : memref<2x8xf32, #tpu.memory_space<vmem>>, vector<2x8xf32>
      tpu.vector_store %arg10[%c0_30, %c0_31], %35 {strides = array<i32>} : memref<2x8xf32, #tpu.memory_space<vmem>>, vector<2x8xf32>,
    } else {
    }
    return
  }
  func.func @transform_0(%arg0: i32) -> (i32, i32) {
    %c0_i32 = arith.constant 0 : i32
    %c0_i32_0 = arith.constant 0 : i32
    return %c0_i32, %arg0 : i32, i32
  }
  func.func @transform_1(%arg0: i32) -> (i32, i32) {
    %c0_i32 = arith.constant 0 : i32
    %c0_i32_0 = arith.constant 0 : i32
    %c0_i32_1 = arith.constant 0 : i32
    return %c0_i32, %c0_i32_0 : i32, i32
  }
  func.func @transform_2(%arg0: i32) -> (i32, i32) {
    %c0_i32 = arith.constant 0 : i32
    %c0_i32_0 = arith.constant 0 : i32
    return %arg0, %c0_i32 : i32, i32
  }
  func.func @transform_3(%arg0: i32) -> (i32, i32) {
    %c0_i32 = arith.constant 0 : i32
    %c0_i32_0 = arith.constant 0 : i32
    %c0_i32_1 = arith.constant 0 : i32
    return %c0_i32, %c0_i32_0 : i32, i32
  }
  func.func @transform_4(%arg0: i32) -> (i32, i32) {
    %c0_i32 = arith.constant 0 : i32
    %c0_i32_0 = arith.constant 0 : i32
    %c0_i32_1 = arith.constant 0 : i32
    return %c0_i32, %c0_i32_0 : i32, i32
  }
  func.func @transform_5(%arg0: i32) -> (i32, i32) {
    %c0_i32 = arith.constant 0 : i32
    %c0_i32_0 = arith.constant 0 : i32
    %c0_i32_1 = arith.constant 0 : i32
    return %c0_i32, %c0_i32_0 : i32, i32
  }
  func.func @transform_6(%arg0: i32) -> (i32, i32) {
    %c0_i32 = arith.constant 0 : i32
    %c0_i32_0 = arith.constant 0 : i32
    %c0_i32_1 = arith.constant 0 : i32
    return %c0_i32, %c0_i32_0 : i32, i32
  }
  func.func @transform_7(%arg0: i32) -> (i32, i32) {
    %c0_i32 = arith.constant 0 : i32
    %c0_i32_0 = arith.constant 0 : i32
    %c0_i32_1 = arith.constant 0 : i32
    return %c0_i32, %c0_i32_0 : i32, i32
  }
  func.func @transform_8(%arg0: i32) -> (i32, i32) {
    %c0_i32 = arith.constant 0 : i32
    %c0_i32_0 = arith.constant 0 : i32
    %c0_i32_1 = arith.constant 0 : i32
    return %c0_i32, %c0_i32_0 : i32, i32
  }
  func.func @transform_9(%arg0: i32) -> (i32, i32) {
    %c0_i32 = arith.constant 0 : i32
    %c0_i32_0 = arith.constant 0 : i32
    %c0_i32_1 = arith.constant 0 : i32
    return %c0_i32, %c0_i32_0 : i32, i32
  }
}

</mosaic_0001>

<llo_original>
// kernel: ppo_forward.4
$region0: #{ppo_forward.4}
  #allocation0 [shape = 'u32[]', space=smem, size = 0x4, offset = 0x4, fixed_abs, tag = 'smem constant byte address 0x4 - core index']
  #allocation1 [shape = 'u32[72,128]{1,0:T(1,128)}', space=vmem, size = 0x9000, scoped, tag = 'internal scratch']
  %s0 = inlined_call_operand.vmem [shape: bf16[1800,256], index: 0, kind: input, shape index: {}]
  %s1 = inlined_call_operand.vmem [shape: bf16[256,32], index: 1, kind: input, shape index: {}]
  %s2 = inlined_call_operand.vmem [shape: f32[1,32], index: 2, kind: input, shape index: {}]
  %s3 = inlined_call_operand.vmem [shape: bf16[1800,32], index: 3, kind: output, shape index: {}]
  %s4 = sld [smem:[#allocation0]]
  $region22: #{ppo_forward.4} parent=0
    _
  %s6 = ssub.s32 1, %s4
  %s7 = scalar_select 0, %s6, %s4
  // Predicated region
  $region2: #{ppo_forward.4} parent=0 // pred_check
    _
  $region3: #{ppo_forward.4} parent=0 // pred_check_branch
    %9 = sbr.rel (0) target = $region5
  $region4: #{ppo_forward.4} parent=0 // pred_region
    _
  $region5: #{ppo_forward.4} parent=0 // pred_fallthru
    _
  // Predicated region
  $region6: #{ppo_forward.4} parent=0 // pred_check
    _
  $region7: #{ppo_forward.4} parent=0 // pred_check_branch
    %11 = sbr.rel (0) target = $region9
  $region8: #{ppo_forward.4} parent=0 // pred_region
    _
  $region9: #{ppo_forward.4} parent=0 // pred_fallthru
    _
  // Predicated region
  $region10: #{ppo_forward.4} parent=0 // pred_check
    _
  $region11: #{ppo_forward.4} parent=0 // pred_check_branch
    %13 = sbr.rel (0) target = $region13
  $region12: #{ppo_forward.4} parent=0 // pred_region
    _
  $region13: #{ppo_forward.4} parent=0 // pred_fallthru
    _
  %v14 = vld [vmem:[%s0] sm:$0xff]
  %v15 = vld [vmem:[%s0 + $0x8] sm:$0xff]
  %v16 = vld [vmem:[%s0 + $0x10] sm:$0xff]
  %v17 = vld [vmem:[%s0 + $0x18] sm:$0xff]
  %v18 = vld [vmem:[%s0 + $0x20] sm:$0xff]
  %v19 = vld [vmem:[%s0 + $0x28] sm:$0xff]
  %v20 = vld [vmem:[%s0 + $0x30] sm:$0xff]
  %v21 = vld [vmem:[%s0 + $0x38] sm:$0xff]
  %v22 = vld [vmem:[%s0 + $0x40] sm:$0xff]
  %v23 = vld [vmem:[%s0 + $0x48] sm:$0xff]
  %v24 = vld [vmem:[%s0 + $0x50] sm:$0xff]
  %v25 = vld [vmem:[%s0 + $0x58] sm:$0xff]
  %v26 = vld [vmem:[%s0 + $0x60] sm:$0xff]
  %v27 = vld [vmem:[%s0 + $0x68] sm:$0xff]
  %v28 = vld [vmem:[%s0 + $0x70] sm:$0xff]
  %v29 = vld [vmem:[%s0 + $0x78] sm:$0xff]
  %v30 = vld [vmem:[%s0 + $0x80] sm:$0xff]
  %v31 = vld [vmem:[%s0 + $0x88] sm:$0xff]
  %v32 = vld [vmem:[%s0 + $0x90] sm:$0xff]
  %v33 = vld [vmem:[%s0 + $0x98] sm:$0xff]
  %v34 = vld [vmem:[%s0 + $0xa0] sm:$0xff]
  %v35 = vld [vmem:[%s0 + $0xa8] sm:$0xff]
  %v36 = vld [vmem:[%s0 + $0xb0] sm:$0xff]
  %v37 = vld [vmem:[%s0 + $0xb8] sm:$0xff]
  %v38 = vld [vmem:[%s0 + $0xc0] sm:$0xff]
  %v39 = vld [vmem:[%s0 + $0xc8] sm:$0xff]
  %v40 = vld [vmem:[%s0 + $0xd0] sm:$0xff]
  %v41 = vld [vmem:[%s0 + $0xd8] sm:$0xff]
  %v42 = vld [vmem:[%s0 + $0xe0] sm:$0xff]
  %v43 = vld [vmem:[%s0 + $0xe8] sm:$0xff]
  %v44 = vld [vmem:[%s0 + $0xf0] sm:$0xff]
  %v45 = vld [vmem:[%s0 + $0xf8] sm:$0xff]
  %v46 = vld [vmem:[%s0 + $0x100] sm:$0xff]
  %v47 = vld [vmem:[%s0 + $0x108] sm:$0xff]
  %v48 = vld [vmem:[%s0 + $0x110] sm:$0xff]
  %v49 = vld [vmem:[%s0 + $0x118] sm:$0xff]
  %v50 = vld [vmem:[%s0 + $0x120] sm:$0xff]
  %v51 = vld [vmem:[%s0 + $0x128] sm:$0xff]
  %v52 = vld [vmem:[%s0 + $0x130] sm:$0xff]
  %v53 = vld [vmem:[%s0 + $0x138] sm:$0xff]
  %v54 = vld [vmem:[%s0 + $0x140] sm:$0xff]
  %v55 = vld [vmem:[%s0 + $0x148] sm:$0xff]
  %v56 = vld [vmem:[%s0 + $0x150] sm:$0xff]
  %v57 = vld [vmem:[%s0 + $0x158] sm:$0xff]
  %v58 = vld [vmem:[%s0 + $0x160] sm:$0xff]
  %v59 = vld [vmem:[%s0 + $0x168] sm:$0xff]
  %v60 = vld [vmem:[%s0 + $0x170] sm:$0xff]
  %v61 = vld [vmem:[%s0 + $0x178] sm:$0xff]
  %v62 = vld [vmem:[%s0 + $0x180] sm:$0xff]
  %v63 = vld [vmem:[%s0 + $0x188] sm:$0xff]
  %v64 = vld [vmem:[%s0 + $0x190] sm:$0xff]
  %v65 = vld [vmem:[%s0 + $0x198] sm:$0xff]
  %v66 = vld [vmem:[%s0 + $0x1a0] sm:$0xff]
  %v67 = vld [vmem:[%s0 + $0x1a8] sm:$0xff]
  %v68 = vld [vmem:[%s0 + $0x1b0] sm:$0xff]
  %v69 = vld [vmem:[%s0 + $0x1b8] sm:$0xff]
  %v70 = vld [vmem:[%s0 + $0x1c0] sm:$0xff]
  %v71 = vld [vmem:[%s0 + $0x1c8] sm:$0xff]
  %v72 = vld [vmem:[%s0 + $0x1d0] sm:$0xff]
  %v73 = vld [vmem:[%s0 + $0x1d8] sm:$0xff]
  %v74 = vld [vmem:[%s0 + $0x1e0] sm:$0xff]
  %v75 = vld [vmem:[%s0 + $0x1e8] sm:$0xff]
  %v76 = vld [vmem:[%s0 + $0x1f0] sm:$0xff]
  %v77 = vld [vmem:[%s0 + $0x1f8] sm:$0xff]
  %v78 = vld [vmem:[%s0 + $0x200] sm:$0xff]
  %v79 = vld [vmem:[%s0 + $0x208] sm:$0xff]
  %v80 = vld [vmem:[%s0 + $0x210] sm:$0xff]
  %v81 = vld [vmem:[%s0 + $0x218] sm:$0xff]
  %v82 = vld [vmem:[%s0 + $0x220] sm:$0xff]
  %v83 = vld [vmem:[%s0 + $0x228] sm:$0xff]
  %v84 = vld [vmem:[%s0 + $0x230] sm:$0xff]
  %v85 = vld [vmem:[%s0 + $0x238] sm:$0xff]
  %v86 = vld [vmem:[%s0 + $0x240] sm:$0xff]
  %v87 = vld [vmem:[%s0 + $0x248] sm:$0xff]
  %v88 = vld [vmem:[%s0 + $0x250] sm:$0xff]
  %v89 = vld [vmem:[%s0 + $0x258] sm:$0xff]
  %v90 = vld [vmem:[%s0 + $0x260] sm:$0xff]
  %v91 = vld [vmem:[%s0 + $0x268] sm:$0xff]
  %v92 = vld [vmem:[%s0 + $0x270] sm:$0xff]
  %v93 = vld [vmem:[%s0 + $0x278] sm:$0xff]
  %v94 = vld [vmem:[%s0 + $0x280] sm:$0xff]
  %v95 = vld [vmem:[%s0 + $0x288] sm:$0xff]
  %v96 = vld [vmem:[%s0 + $0x290] sm:$0xff]
  %v97 = vld [vmem:[%s0 + $0x298] sm:$0xff]
  %v98 = vld [vmem:[%s0 + $0x2a0] sm:$0xff]
  %v99 = vld [vmem:[%s0 + $0x2a8] sm:$0xff]
  %v100 = vld [vmem:[%s0 + $0x2b0] sm:$0xff]
  %v101 = vld [vmem:[%s0 + $0x2b8] sm:$0xff]
  %v102 = vld [vmem:[%s0 + $0x2c0] sm:$0xff]
  %v103 = vld [vmem:[%s0 + $0x2c8] sm:$0xff]
  %v104 = vld [vmem:[%s0 + $0x2d0] sm:$0xff]
  %v105 = vld [vmem:[%s0 + $0x2d8] sm:$0xff]
  %v106 = vld [vmem:[%s0 + $0x2e0] sm:$0xff]
  %v107 = vld [vmem:[%s0 + $0x2e8] sm:$0xff]
  %v108 = vld [vmem:[%s0 + $0x2f0] sm:$0xff]
  %v109 = vld [vmem:[%s0 + $0x2f8] sm:$0xff]
  %v110 = vld [vmem:[%s0 + $0x300] sm:$0xff]
  %v111 = vld [vmem:[%s0 + $0x308] sm:$0xff]
  %v112 = vld [vmem:[%s0 + $0x310] sm:$0xff]
  %v113 = vld [vmem:[%s0 + $0x318] sm:$0xff]
  %v114 = vld [vmem:[%s0 + $0x320] sm:$0xff]
  %v115 = vld [vmem:[%s0 + $0x328] sm:$0xff]
  %v116 = vld [vmem:[%s0 + $0x330] sm:$0xff]
  %v117 = vld [vmem:[%s0 + $0x338] sm:$0xff]
  %v118 = vld [vmem:[%s0 + $0x340] sm:$0xff]
  %v119 = vld [vmem:[%s0 + $0x348] sm:$0xff]
  %v120 = vld [vmem:[%s0 + $0x350] sm:$0xff]
  %v121 = vld [vmem:[%s0 + $0x358] sm:$0xff]
  %v122 = vld [vmem:[%s0 + $0x360] sm:$0xff]
  %v123 = vld [vmem:[%s0 + $0x368] sm:$0xff]
  %v124 = vld [vmem:[%s0 + $0x370] sm:$0xff]
  %v125 = vld [vmem:[%s0 + $0x378] sm:$0xff]
  %v126 = vld [vmem:[%s0 + $0x380] sm:$0xff]
  %v127 = vld [vmem:[%s0 + $0x388] sm:$0xff]
  %v128 = vld [vmem:[%s0 + $0x390] sm:$0xff]
  %v129 = vld [vmem:[%s0 + $0x398] sm:$0xff]
  %v130 = vld [vmem:[%s0 + $0x3a0] sm:$0xff]
  %v131 = vld [vmem:[%s0 + $0x3a8] sm:$0xff]
  %v132 = vld [vmem:[%s0 + $0x3b0] sm:$0xff]
  %v133 = vld [vmem:[%s0 + $0x3b8] sm:$0xff]
  %v134 = vld [vmem:[%s0 + $0x3c0] sm:$0xff]
  %v135 = vld [vmem:[%s0 + $0x3c8] sm:$0xff]
  %v136 = vld [vmem:[%s0 + $0x3d0] sm:$0xff]
  %v137 = vld [vmem:[%s0 + $0x3d8] sm:$0xff]
  %v138 = vld [vmem:[%s0 + $0x3e0] sm:$0xff]
  %v139 = vld [vmem:[%s0 + $0x3e8] sm:$0xff]
  %v140 = vld [vmem:[%s0 + $0x3f0] sm:$0xff]
  %v141 = vld [vmem:[%s0 + $0x3f8] sm:$0xff]
  %v142 = vld [vmem:[%s0 + $0x400] sm:$0xff]
  %v143 = vld [vmem:[%s0 + $0x408] sm:$0xff]
  %v144 = vld [vmem:[%s0 + $0x410] sm:$0xff]
  %v145 = vld [vmem:[%s0 + $0x418] sm:$0xff]
  %v146 = vld [vmem:[%s0 + $0x420] sm:$0xff]
  %v147 = vld [vmem:[%s0 + $0x428] sm:$0xff]
  %v148 = vld [vmem:[%s0 + $0x430] sm:$0xff]
  %v149 = vld [vmem:[%s0 + $0x438] sm:$0xff]
  %v150 = vld [vmem:[%s0 + $0x440] sm:$0xff]
  %v151 = vld [vmem:[%s0 + $0x448] sm:$0xff]
  %v152 = vld [vmem:[%s0 + $0x450] sm:$0xff]
  %v153 = vld [vmem:[%s0 + $0x458] sm:$0xff]
  %v154 = vld [vmem:[%s0 + $0x460] sm:$0xff]
  %v155 = vld [vmem:[%s0 + $0x468] sm:$0xff]
  %v156 = vld [vmem:[%s0 + $0x470] sm:$0xff]
  %v157 = vld [vmem:[%s0 + $0x478] sm:$0xff]
  %v158 = vld [vmem:[%s0 + $0x480] sm:$0xff]
  %v159 = vld [vmem:[%s0 + $0x488] sm:$0xff]
  %v160 = vld [vmem:[%s0 + $0x490] sm:$0xff]
  %v161 = vld [vmem:[%s0 + $0x498] sm:$0xff]
  %v162 = vld [vmem:[%s0 + $0x4a0] sm:$0xff]
  %v163 = vld [vmem:[%s0 + $0x4a8] sm:$0xff]
  %v164 = vld [vmem:[%s0 + $0x4b0] sm:$0xff]
  %v165 = vld [vmem:[%s0 + $0x4b8] sm:$0xff]
  %v166 = vld [vmem:[%s0 + $0x4c0] sm:$0xff]
  %v167 = vld [vmem:[%s0 + $0x4c8] sm:$0xff]
  %v168 = vld [vmem:[%s0 + $0x4d0] sm:$0xff]
  %v169 = vld [vmem:[%s0 + $0x4d8] sm:$0xff]
  %v170 = vld [vmem:[%s0 + $0x4e0] sm:$0xff]
  %v171 = vld [vmem:[%s0 + $0x4e8] sm:$0xff]
  %v172 = vld [vmem:[%s0 + $0x4f0] sm:$0xff]
  %v173 = vld [vmem:[%s0 + $0x4f8] sm:$0xff]
  %v174 = vld [vmem:[%s0 + $0x500] sm:$0xff]
  %v175 = vld [vmem:[%s0 + $0x508] sm:$0xff]
  %v176 = vld [vmem:[%s0 + $0x510] sm:$0xff]
  %v177 = vld [vmem:[%s0 + $0x518] sm:$0xff]
  %v178 = vld [vmem:[%s0 + $0x520] sm:$0xff]
  %v179 = vld [vmem:[%s0 + $0x528] sm:$0xff]
  %v180 = vld [vmem:[%s0 + $0x530] sm:$0xff]
  %v181 = vld [vmem:[%s0 + $0x538] sm:$0xff]
  %v182 = vld [vmem:[%s0 + $0x540] sm:$0xff]
  %v183 = vld [vmem:[%s0 + $0x548] sm:$0xff]
  %v184 = vld [vmem:[%s0 + $0x550] sm:$0xff]
  %v185 = vld [vmem:[%s0 + $0x558] sm:$0xff]
  %v186 = vld [vmem:[%s0 + $0x560] sm:$0xff]
  %v187 = vld [vmem:[%s0 + $0x568] sm:$0xff]
  %v188 = vld [vmem:[%s0 + $0x570] sm:$0xff]
  %v189 = vld [vmem:[%s0 + $0x578] sm:$0xff]
  %v190 = vld [vmem:[%s0 + $0x580] sm:$0xff]
  %v191 = vld [vmem:[%s0 + $0x588] sm:$0xff]
  %v192 = vld [vmem:[%s0 + $0x590] sm:$0xff]
  %v193 = vld [vmem:[%s0 + $0x598] sm:$0xff]
  %v194 = vld [vmem:[%s0 + $0x5a0] sm:$0xff]
  %v195 = vld [vmem:[%s0 + $0x5a8] sm:$0xff]
  %v196 = vld [vmem:[%s0 + $0x5b0] sm:$0xff]
  %v197 = vld [vmem:[%s0 + $0x5b8] sm:$0xff]
  %v198 = vld [vmem:[%s0 + $0x5c0] sm:$0xff]
  %v199 = vld [vmem:[%s0 + $0x5c8] sm:$0xff]
  %v200 = vld [vmem:[%s0 + $0x5d0] sm:$0xff]
  %v201 = vld [vmem:[%s0 + $0x5d8] sm:$0xff]
  %v202 = vld [vmem:[%s0 + $0x5e0] sm:$0xff]
  %v203 = vld [vmem:[%s0 + $0x5e8] sm:$0xff]
  %v204 = vld [vmem:[%s0 + $0x5f0] sm:$0xff]
  %v205 = vld [vmem:[%s0 + $0x5f8] sm:$0xff]
  %v206 = vld [vmem:[%s0 + $0x600] sm:$0xff]
  %v207 = vld [vmem:[%s0 + $0x608] sm:$0xff]
  %v208 = vld [vmem:[%s0 + $0x610] sm:$0xff]
  %v209 = vld [vmem:[%s0 + $0x618] sm:$0xff]
  %v210 = vld [vmem:[%s0 + $0x620] sm:$0xff]
  %v211 = vld [vmem:[%s0 + $0x628] sm:$0xff]
  %v212 = vld [vmem:[%s0 + $0x630] sm:$0xff]
  %v213 = vld [vmem:[%s0 + $0x638] sm:$0xff]
  %v214 = vld [vmem:[%s0 + $0x640] sm:$0xff]
  %v215 = vld [vmem:[%s0 + $0x648] sm:$0xff]
  %v216 = vld [vmem:[%s0 + $0x650] sm:$0xff]
  %v217 = vld [vmem:[%s0 + $0x658] sm:$0xff]
  %v218 = vld [vmem:[%s0 + $0x660] sm:$0xff]
  %v219 = vld [vmem:[%s0 + $0x668] sm:$0xff]
  %v220 = vld [vmem:[%s0 + $0x670] sm:$0xff]
  %v221 = vld [vmem:[%s0 + $0x678] sm:$0xff]
  %v222 = vld [vmem:[%s0 + $0x680] sm:$0xff]
  %v223 = vld [vmem:[%s0 + $0x688] sm:$0xff]
  %v224 = vld [vmem:[%s0 + $0x690] sm:$0xff]
  %v225 = vld [vmem:[%s0 + $0x698] sm:$0xff]
  %v226 = vld [vmem:[%s0 + $0x6a0] sm:$0xff]
  %v227 = vld [vmem:[%s0 + $0x6a8] sm:$0xff]
  %v228 = vld [vmem:[%s0 + $0x6b0] sm:$0xff]
  %v229 = vld [vmem:[%s0 + $0x6b8] sm:$0xff]
  %v230 = vld [vmem:[%s0 + $0x6c0] sm:$0xff]
  %v231 = vld [vmem:[%s0 + $0x6c8] sm:$0xff]
  %v232 = vld [vmem:[%s0 + $0x6d0] sm:$0xff]
  %v233 = vld [vmem:[%s0 + $0x6d8] sm:$0xff]
  %v234 = vld [vmem:[%s0 + $0x6e0] sm:$0xff]
  %v235 = vld [vmem:[%s0 + $0x6e8] sm:$0xff]
  %v236 = vld [vmem:[%s0 + $0x6f0] sm:$0xff]
  %v237 = vld [vmem:[%s0 + $0x6f8] sm:$0xff]
  %v238 = vld [vmem:[%s0 + $0x700] sm:$0xff]
  %v239 = vld [vmem:[%s1] sm:$0xf]
  %v240 = vld [vmem:[%s1 + $0x4] sm:$0xf]
  %v241 = vld [vmem:[%s1 + $0x8] sm:$0xf]
  %v242 = vld [vmem:[%s1 + $0xc] sm:$0xf]
  %v243 = vld [vmem:[%s1 + $0x10] sm:$0xf]
  %v244 = vld [vmem:[%s1 + $0x14] sm:$0xf]
  %v245 = vld [vmem:[%s1 + $0x18] sm:$0xf]
  %v246 = vld [vmem:[%s1 + $0x1c] sm:$0xf]
  %v247 = vld [vmem:[%s1 + $0x20] sm:$0xf]
  %v248 = vld [vmem:[%s1 + $0x24] sm:$0xf]
  %v249 = vld [vmem:[%s1 + $0x28] sm:$0xf]
  %v250 = vld [vmem:[%s1 + $0x2c] sm:$0xf]
  %v251 = vld [vmem:[%s1 + $0x30] sm:$0xf]
  %v252 = vld [vmem:[%s1 + $0x34] sm:$0xf]
  %v253 = vld [vmem:[%s1 + $0x38] sm:$0xf]
  %v254 = vld [vmem:[%s1 + $0x3c] sm:$0xf]
  %v255 = vld [vmem:[%s1 + $0x40] sm:$0xf]
  %v256 = vld [vmem:[%s1 + $0x44] sm:$0xf]
  %v257 = vld [vmem:[%s1 + $0x48] sm:$0xf]
  %v258 = vld [vmem:[%s1 + $0x4c] sm:$0xf]
  %v259 = vld [vmem:[%s1 + $0x50] sm:$0xf]
  %v260 = vld [vmem:[%s1 + $0x54] sm:$0xf]
  %v261 = vld [vmem:[%s1 + $0x58] sm:$0xf]
  %v262 = vld [vmem:[%s1 + $0x5c] sm:$0xf]
  %v263 = vld [vmem:[%s1 + $0x60] sm:$0xf]
  %v264 = vld [vmem:[%s1 + $0x64] sm:$0xf]
  %v265 = vld [vmem:[%s1 + $0x68] sm:$0xf]
  %v266 = vld [vmem:[%s1 + $0x6c] sm:$0xf]
  %v267 = vld [vmem:[%s1 + $0x70] sm:$0xf]
  %v268 = vld [vmem:[%s1 + $0x74] sm:$0xf]
  %v269 = vld [vmem:[%s1 + $0x78] sm:$0xf]
  %v270 = vld [vmem:[%s1 + $0x7c] sm:$0xf]
  %v271 = vld [vmem:[%s2] sm:$0x1]
  %v273 = vperm.slane %v271, 0
  %v500 = vunpack.c.l.b16 %v14
  %v501 = vunpack.c.h.b16 %v14
  %v502 = vunpack.c.l.b16 %v15
  %v503 = vunpack.c.h.b16 %v15
  %v504 = vunpack.c.l.b16 %v16
  %v505 = vunpack.c.h.b16 %v16
  %v506 = vunpack.c.l.b16 %v17
  %v507 = vunpack.c.h.b16 %v17
  %v508 = vunpack.c.l.b16 %v18
  %v509 = vunpack.c.h.b16 %v18
  %v510 = vunpack.c.l.b16 %v19
  %v511 = vunpack.c.h.b16 %v19
  %v512 = vunpack.c.l.b16 %v20
  %v513 = vunpack.c.h.b16 %v20
  %v514 = vunpack.c.l.b16 %v21
  %v515 = vunpack.c.h.b16 %v21
  %v516 = vunpack.c.l.b16 %v22
  %v517 = vunpack.c.h.b16 %v22
  %v518 = vunpack.c.l.b16 %v23
  %v519 = vunpack.c.h.b16 %v23
  %v520 = vunpack.c.l.b16 %v24
  %v521 = vunpack.c.h.b16 %v24
  %v522 = vunpack.c.l.b16 %v25
  %v523 = vunpack.c.h.b16 %v25
  %v524 = vunpack.c.l.b16 %v26
  %v525 = vunpack.c.h.b16 %v26
  %v526 = vunpack.c.l.b16 %v27
  %v527 = vunpack.c.h.b16 %v27
  %v528 = vunpack.c.l.b16 %v28
  %v529 = vunpack.c.h.b16 %v28
  %v530 = vunpack.c.l.b16 %v29
  %v531 = vunpack.c.h.b16 %v29
  %v532 = vunpack.c.l.b16 %v30
  %v533 = vunpack.c.h.b16 %v30
  %v534 = vunpack.c.l.b16 %v31
  %v535 = vunpack.c.h.b16 %v31
  %v536 = vunpack.c.l.b16 %v32
  %v537 = vunpack.c.h.b16 %v32
  %v538 = vunpack.c.l.b16 %v33
  %v539 = vunpack.c.h.b16 %v33
  %v540 = vunpack.c.l.b16 %v34
  %v541 = vunpack.c.h.b16 %v34
  %v542 = vunpack.c.l.b16 %v35
  %v543 = vunpack.c.h.b16 %v35
  %v544 = vunpack.c.l.b16 %v36
  %v545 = vunpack.c.h.b16 %v36
  %v546 = vunpack.c.l.b16 %v37
  %v547 = vunpack.c.h.b16 %v37
  %v548 = vunpack.c.l.b16 %v38
  %v549 = vunpack.c.h.b16 %v38
  %v550 = vunpack.c.l.b16 %v39
  %v551 = vunpack.c.h.b16 %v39
  %v552 = vunpack.c.l.b16 %v40
  %v553 = vunpack.c.h.b16 %v40
  %v554 = vunpack.c.l.b16 %v41
  %v555 = vunpack.c.h.b16 %v41
  %v556 = vunpack.c.l.b16 %v42
  %v557 = vunpack.c.h.b16 %v42
  %v558 = vunpack.c.l.b16 %v43
  %v559 = vunpack.c.h.b16 %v43
  %v560 = vunpack.c.l.b16 %v44
  %v561 = vunpack.c.h.b16 %v44
  %v562 = vunpack.c.l.b16 %v45
  %v563 = vunpack.c.h.b16 %v45
  %v564 = vunpack.c.l.b16 %v46
  %v565 = vunpack.c.h.b16 %v46
  %v566 = vunpack.c.l.b16 %v47
  %v567 = vunpack.c.h.b16 %v47
  %v568 = vunpack.c.l.b16 %v48
  %v569 = vunpack.c.h.b16 %v48
  %v570 = vunpack.c.l.b16 %v49
  %v571 = vunpack.c.h.b16 %v49
  %v572 = vunpack.c.l.b16 %v50
  %v573 = vunpack.c.h.b16 %v50
  %v574 = vunpack.c.l.b16 %v51
  %v575 = vunpack.c.h.b16 %v51
  %v576 = vunpack.c.l.b16 %v52
  %v577 = vunpack.c.h.b16 %v52
  %v578 = vunpack.c.l.b16 %v53
  %v579 = vunpack.c.h.b16 %v53
  %v580 = vunpack.c.l.b16 %v54
  %v581 = vunpack.c.h.b16 %v54
  %v582 = vunpack.c.l.b16 %v55
  %v583 = vunpack.c.h.b16 %v55
  %v584 = vunpack.c.l.b16 %v56
  %v585 = vunpack.c.h.b16 %v56
  %v586 = vunpack.c.l.b16 %v57
  %v587 = vunpack.c.h.b16 %v57
  %v588 = vunpack.c.l.b16 %v58
  %v589 = vunpack.c.h.b16 %v58
  %v590 = vunpack.c.l.b16 %v59
  %v591 = vunpack.c.h.b16 %v59
  %v592 = vunpack.c.l.b16 %v60
  %v593 = vunpack.c.h.b16 %v60
  %v594 = vunpack.c.l.b16 %v61
  %v595 = vunpack.c.h.b16 %v61
  %v596 = vunpack.c.l.b16 %v62
  %v597 = vunpack.c.h.b16 %v62
  %v598 = vunpack.c.l.b16 %v63
  %v599 = vunpack.c.h.b16 %v63
  %v600 = vunpack.c.l.b16 %v64
  %v601 = vunpack.c.h.b16 %v64
  %v602 = vunpack.c.l.b16 %v65
  %v603 = vunpack.c.h.b16 %v65
  %v604 = vunpack.c.l.b16 %v66
  %v605 = vunpack.c.h.b16 %v66
  %v606 = vunpack.c.l.b16 %v67
  %v607 = vunpack.c.h.b16 %v67
  %v608 = vunpack.c.l.b16 %v68
  %v609 = vunpack.c.h.b16 %v68
  %v610 = vunpack.c.l.b16 %v69
  %v611 = vunpack.c.h.b16 %v69
  %v612 = vunpack.c.l.b16 %v70
  %v613 = vunpack.c.h.b16 %v70
  %v614 = vunpack.c.l.b16 %v71
  %v615 = vunpack.c.h.b16 %v71
  %v616 = vunpack.c.l.b16 %v72
  %v617 = vunpack.c.h.b16 %v72
  %v618 = vunpack.c.l.b16 %v73
  %v619 = vunpack.c.h.b16 %v73
  %v620 = vunpack.c.l.b16 %v74
  %v621 = vunpack.c.h.b16 %v74
  %v622 = vunpack.c.l.b16 %v75
  %v623 = vunpack.c.h.b16 %v75
  %v624 = vunpack.c.l.b16 %v76
  %v625 = vunpack.c.h.b16 %v76
  %v626 = vunpack.c.l.b16 %v77
  %v627 = vunpack.c.h.b16 %v77
  %v628 = vunpack.c.l.b16 %v78
  %v629 = vunpack.c.h.b16 %v78
  %v630 = vunpack.c.l.b16 %v79
  %v631 = vunpack.c.h.b16 %v79
  %v632 = vunpack.c.l.b16 %v80
  %v633 = vunpack.c.h.b16 %v80
  %v634 = vunpack.c.l.b16 %v81
  %v635 = vunpack.c.h.b16 %v81
  %v636 = vunpack.c.l.b16 %v82
  %v637 = vunpack.c.h.b16 %v82
  %v638 = vunpack.c.l.b16 %v83
  %v639 = vunpack.c.h.b16 %v83
  %v640 = vunpack.c.l.b16 %v84
  %v641 = vunpack.c.h.b16 %v84
  %v642 = vunpack.c.l.b16 %v85
  %v643 = vunpack.c.h.b16 %v85
  %v644 = vunpack.c.l.b16 %v86
  %v645 = vunpack.c.h.b16 %v86
  %v646 = vunpack.c.l.b16 %v87
  %v647 = vunpack.c.h.b16 %v87
  %v648 = vunpack.c.l.b16 %v88
  %v649 = vunpack.c.h.b16 %v88
  %v650 = vunpack.c.l.b16 %v89
  %v651 = vunpack.c.h.b16 %v89
  %v652 = vunpack.c.l.b16 %v90
  %v653 = vunpack.c.h.b16 %v90
  %v654 = vunpack.c.l.b16 %v91
  %v655 = vunpack.c.h.b16 %v91
  %v656 = vunpack.c.l.b16 %v92
  %v657 = vunpack.c.h.b16 %v92
  %v658 = vunpack.c.l.b16 %v93
  %v659 = vunpack.c.h.b16 %v93
  %v660 = vunpack.c.l.b16 %v94
  %v661 = vunpack.c.h.b16 %v94
  %v662 = vunpack.c.l.b16 %v95
  %v663 = vunpack.c.h.b16 %v95
  %v664 = vunpack.c.l.b16 %v96
  %v665 = vunpack.c.h.b16 %v96
  %v666 = vunpack.c.l.b16 %v97
  %v667 = vunpack.c.h.b16 %v97
  %v668 = vunpack.c.l.b16 %v98
  %v669 = vunpack.c.h.b16 %v98
  %v670 = vunpack.c.l.b16 %v99
  %v671 = vunpack.c.h.b16 %v99
  %v672 = vunpack.c.l.b16 %v100
  %v673 = vunpack.c.h.b16 %v100
  %v674 = vunpack.c.l.b16 %v101
  %v675 = vunpack.c.h.b16 %v101
  %v676 = vunpack.c.l.b16 %v102
  %v677 = vunpack.c.h.b16 %v102
  %v678 = vunpack.c.l.b16 %v103
  %v679 = vunpack.c.h.b16 %v103
  %v680 = vunpack.c.l.b16 %v104
  %v681 = vunpack.c.h.b16 %v104
  %v682 = vunpack.c.l.b16 %v105
  %v683 = vunpack.c.h.b16 %v105
  %v684 = vunpack.c.l.b16 %v106
  %v685 = vunpack.c.h.b16 %v106
  %v686 = vunpack.c.l.b16 %v107
  %v687 = vunpack.c.h.b16 %v107
  %v688 = vunpack.c.l.b16 %v108
  %v689 = vunpack.c.h.b16 %v108
  %v690 = vunpack.c.l.b16 %v109
  %v691 = vunpack.c.h.b16 %v109
  %v692 = vunpack.c.l.b16 %v110
  %v693 = vunpack.c.h.b16 %v110
  %v694 = vunpack.c.l.b16 %v111
  %v695 = vunpack.c.h.b16 %v111
  %v696 = vunpack.c.l.b16 %v112
  %v697 = vunpack.c.h.b16 %v112
  %v698 = vunpack.c.l.b16 %v113
  %v699 = vunpack.c.h.b16 %v113
  %v700 = vunpack.c.l.b16 %v114
  %v701 = vunpack.c.h.b16 %v114
  %v702 = vunpack.c.l.b16 %v115
  %v703 = vunpack.c.h.b16 %v115
  %v704 = vunpack.c.l.b16 %v116
  %v705 = vunpack.c.h.b16 %v116
  %v706 = vunpack.c.l.b16 %v117
  %v707 = vunpack.c.h.b16 %v117
  %v708 = vunpack.c.l.b16 %v118
  %v709 = vunpack.c.h.b16 %v118
  %v710 = vunpack.c.l.b16 %v119
  %v711 = vunpack.c.h.b16 %v119
  %v712 = vunpack.c.l.b16 %v120
  %v713 = vunpack.c.h.b16 %v120
  %v714 = vunpack.c.l.b16 %v121
  %v715 = vunpack.c.h.b16 %v121
  %v716 = vunpack.c.l.b16 %v122
  %v717 = vunpack.c.h.b16 %v122
  %v718 = vunpack.c.l.b16 %v123
  %v719 = vunpack.c.h.b16 %v123
  %v720 = vunpack.c.l.b16 %v124
  %v721 = vunpack.c.h.b16 %v124
  %v722 = vunpack.c.l.b16 %v125
  %v723 = vunpack.c.h.b16 %v125
  %v724 = vunpack.c.l.b16 %v126
  %v725 = vunpack.c.h.b16 %v126
  %v726 = vunpack.c.l.b16 %v127
  %v727 = vunpack.c.h.b16 %v127
  %v728 = vunpack.c.l.b16 %v128
  %v729 = vunpack.c.h.b16 %v128
  %v730 = vunpack.c.l.b16 %v129
  %v731 = vunpack.c.h.b16 %v129
  %v732 = vunpack.c.l.b16 %v130
  %v733 = vunpack.c.h.b16 %v130
  %v734 = vunpack.c.l.b16 %v131
  %v735 = vunpack.c.h.b16 %v131
  %v736 = vunpack.c.l.b16 %v132
  %v737 = vunpack.c.h.b16 %v132
  %v738 = vunpack.c.l.b16 %v133
  %v739 = vunpack.c.h.b16 %v133
  %v740 = vunpack.c.l.b16 %v134
  %v741 = vunpack.c.h.b16 %v134
  %v742 = vunpack.c.l.b16 %v135
  %v743 = vunpack.c.h.b16 %v135
  %v744 = vunpack.c.l.b16 %v136
  %v745 = vunpack.c.h.b16 %v136
  %v746 = vunpack.c.l.b16 %v137
  %v747 = vunpack.c.h.b16 %v137
  %v748 = vunpack.c.l.b16 %v138
  %v749 = vunpack.c.h.b16 %v138
  %v750 = vunpack.c.l.b16 %v139
  %v751 = vunpack.c.h.b16 %v139
  %v752 = vunpack.c.l.b16 %v140
  %v753 = vunpack.c.h.b16 %v140
  %v754 = vunpack.c.l.b16 %v141
  %v755 = vunpack.c.h.b16 %v141
  %v756 = vunpack.c.l.b16 %v142
  %v757 = vunpack.c.h.b16 %v142
  %v758 = vunpack.c.l.b16 %v143
  %v759 = vunpack.c.h.b16 %v143
  %v760 = vunpack.c.l.b16 %v144
  %v761 = vunpack.c.h.b16 %v144
  %v762 = vunpack.c.l.b16 %v145
  %v763 = vunpack.c.h.b16 %v145
  %v764 = vunpack.c.l.b16 %v146
  %v765 = vunpack.c.h.b16 %v146
  %v766 = vunpack.c.l.b16 %v147
  %v767 = vunpack.c.h.b16 %v147
  %v768 = vunpack.c.l.b16 %v148
  %v769 = vunpack.c.h.b16 %v148
  %v770 = vunpack.c.l.b16 %v149
  %v771 = vunpack.c.h.b16 %v149
  %v772 = vunpack.c.l.b16 %v150
  %v773 = vunpack.c.h.b16 %v150
  %v774 = vunpack.c.l.b16 %v151
  %v775 = vunpack.c.h.b16 %v151
  %v776 = vunpack.c.l.b16 %v152
  %v777 = vunpack.c.h.b16 %v152
  %v778 = vunpack.c.l.b16 %v153
  %v779 = vunpack.c.h.b16 %v153
  %v780 = vunpack.c.l.b16 %v154
  %v781 = vunpack.c.h.b16 %v154
  %v782 = vunpack.c.l.b16 %v155
  %v783 = vunpack.c.h.b16 %v155
  %v784 = vunpack.c.l.b16 %v156
  %v785 = vunpack.c.h.b16 %v156
  %v786 = vunpack.c.l.b16 %v157
  %v787 = vunpack.c.h.b16 %v157
  %v788 = vunpack.c.l.b16 %v158
  %v789 = vunpack.c.h.b16 %v158
  %v790 = vunpack.c.l.b16 %v159
  %v791 = vunpack.c.h.b16 %v159
  %v792 = vunpack.c.l.b16 %v160
  %v793 = vunpack.c.h.b16 %v160
  %v794 = vunpack.c.l.b16 %v161
  %v795 = vunpack.c.h.b16 %v161
  %v796 = vunpack.c.l.b16 %v162
  %v797 = vunpack.c.h.b16 %v162
  %v798 = vunpack.c.l.b16 %v163
  %v799 = vunpack.c.h.b16 %v163
  %v800 = vunpack.c.l.b16 %v164
  %v801 = vunpack.c.h.b16 %v164
  %v802 = vunpack.c.l.b16 %v165
  %v803 = vunpack.c.h.b16 %v165
  %v804 = vunpack.c.l.b16 %v166
  %v805 = vunpack.c.h.b16 %v166
  %v806 = vunpack.c.l.b16 %v167
  %v807 = vunpack.c.h.b16 %v167
  %v808 = vunpack.c.l.b16 %v168
  %v809 = vunpack.c.h.b16 %v168
  %v810 = vunpack.c.l.b16 %v169
  %v811 = vunpack.c.h.b16 %v169
  %v812 = vunpack.c.l.b16 %v170
  %v813 = vunpack.c.h.b16 %v170
  %v814 = vunpack.c.l.b16 %v171
  %v815 = vunpack.c.h.b16 %v171
  %v816 = vunpack.c.l.b16 %v172
  %v817 = vunpack.c.h.b16 %v172
  %v818 = vunpack.c.l.b16 %v173
  %v819 = vunpack.c.h.b16 %v173
  %v820 = vunpack.c.l.b16 %v174
  %v821 = vunpack.c.h.b16 %v174
  %v822 = vunpack.c.l.b16 %v175
  %v823 = vunpack.c.h.b16 %v175
  %v824 = vunpack.c.l.b16 %v176
  %v825 = vunpack.c.h.b16 %v176
  %v826 = vunpack.c.l.b16 %v177
  %v827 = vunpack.c.h.b16 %v177
  %v828 = vunpack.c.l.b16 %v178
  %v829 = vunpack.c.h.b16 %v178
  %v830 = vunpack.c.l.b16 %v179
  %v831 = vunpack.c.h.b16 %v179
  %v832 = vunpack.c.l.b16 %v180
  %v833 = vunpack.c.h.b16 %v180
  %v834 = vunpack.c.l.b16 %v181
  %v835 = vunpack.c.h.b16 %v181
  %v836 = vunpack.c.l.b16 %v182
  %v837 = vunpack.c.h.b16 %v182
  %v838 = vunpack.c.l.b16 %v183
  %v839 = vunpack.c.h.b16 %v183
  %v840 = vunpack.c.l.b16 %v184
  %v841 = vunpack.c.h.b16 %v184
  %v842 = vunpack.c.l.b16 %v185
  %v843 = vunpack.c.h.b16 %v185
  %v844 = vunpack.c.l.b16 %v186
  %v845 = vunpack.c.h.b16 %v186
  %v846 = vunpack.c.l.b16 %v187
  %v847 = vunpack.c.h.b16 %v187
  %v848 = vunpack.c.l.b16 %v188
  %v849 = vunpack.c.h.b16 %v188
  %v850 = vunpack.c.l.b16 %v189
  %v851 = vunpack.c.h.b16 %v189
  %v852 = vunpack.c.l.b16 %v190
  %v853 = vunpack.c.h.b16 %v190
  %v854 = vunpack.c.l.b16 %v191
  %v855 = vunpack.c.h.b16 %v191
  %v856 = vunpack.c.l.b16 %v192
  %v857 = vunpack.c.h.b16 %v192
  %v858 = vunpack.c.l.b16 %v193
  %v859 = vunpack.c.h.b16 %v193
  %v860 = vunpack.c.l.b16 %v194
  %v861 = vunpack.c.h.b16 %v194
  %v862 = vunpack.c.l.b16 %v195
  %v863 = vunpack.c.h.b16 %v195
  %v864 = vunpack.c.l.b16 %v196
  %v865 = vunpack.c.h.b16 %v196
  %v866 = vunpack.c.l.b16 %v197
  %v867 = vunpack.c.h.b16 %v197
  %v868 = vunpack.c.l.b16 %v198
  %v869 = vunpack.c.h.b16 %v198
  %v870 = vunpack.c.l.b16 %v199
  %v871 = vunpack.c.h.b16 %v199
  %v872 = vunpack.c.l.b16 %v200
  %v873 = vunpack.c.h.b16 %v200
  %v874 = vunpack.c.l.b16 %v201
  %v875 = vunpack.c.h.b16 %v201
  %v876 = vunpack.c.l.b16 %v202
  %v877 = vunpack.c.h.b16 %v202
  %v878 = vunpack.c.l.b16 %v203
  %v879 = vunpack.c.h.b16 %v203
  %v880 = vunpack.c.l.b16 %v204
  %v881 = vunpack.c.h.b16 %v204
  %v882 = vunpack.c.l.b16 %v205
  %v883 = vunpack.c.h.b16 %v205
  %v884 = vunpack.c.l.b16 %v206
  %v885 = vunpack.c.h.b16 %v206
  %v886 = vunpack.c.l.b16 %v207
  %v887 = vunpack.c.h.b16 %v207
  %v888 = vunpack.c.l.b16 %v208
  %v889 = vunpack.c.h.b16 %v208
  %v890 = vunpack.c.l.b16 %v209
  %v891 = vunpack.c.h.b16 %v209
  %v892 = vunpack.c.l.b16 %v210
  %v893 = vunpack.c.h.b16 %v210
  %v894 = vunpack.c.l.b16 %v211
  %v895 = vunpack.c.h.b16 %v211
  %v896 = vunpack.c.l.b16 %v212
  %v897 = vunpack.c.h.b16 %v212
  %v898 = vunpack.c.l.b16 %v213
  %v899 = vunpack.c.h.b16 %v213
  %v900 = vunpack.c.l.b16 %v214
  %v901 = vunpack.c.h.b16 %v214
  %v902 = vunpack.c.l.b16 %v215
  %v903 = vunpack.c.h.b16 %v215
  %v904 = vunpack.c.l.b16 %v216
  %v905 = vunpack.c.h.b16 %v216
  %v906 = vunpack.c.l.b16 %v217
  %v907 = vunpack.c.h.b16 %v217
  %v908 = vunpack.c.l.b16 %v218
  %v909 = vunpack.c.h.b16 %v218
  %v910 = vunpack.c.l.b16 %v219
  %v911 = vunpack.c.h.b16 %v219
  %v912 = vunpack.c.l.b16 %v220
  %v913 = vunpack.c.h.b16 %v220
  %v914 = vunpack.c.l.b16 %v221
  %v915 = vunpack.c.h.b16 %v221
  %v916 = vunpack.c.l.b16 %v222
  %v917 = vunpack.c.h.b16 %v222
  %v918 = vunpack.c.l.b16 %v223
  %v919 = vunpack.c.h.b16 %v223
  %v920 = vunpack.c.l.b16 %v224
  %v921 = vunpack.c.h.b16 %v224
  %v922 = vunpack.c.l.b16 %v225
  %v923 = vunpack.c.h.b16 %v225
  %v924 = vunpack.c.l.b16 %v226
  %v925 = vunpack.c.h.b16 %v226
  %v926 = vunpack.c.l.b16 %v227
  %v927 = vunpack.c.h.b16 %v227
  %v928 = vunpack.c.l.b16 %v228
  %v929 = vunpack.c.h.b16 %v228
  %v930 = vunpack.c.l.b16 %v229
  %v931 = vunpack.c.h.b16 %v229
  %v932 = vunpack.c.l.b16 %v230
  %v933 = vunpack.c.h.b16 %v230
  %v934 = vunpack.c.l.b16 %v231
  %v935 = vunpack.c.h.b16 %v231
  %v936 = vunpack.c.l.b16 %v232
  %v937 = vunpack.c.h.b16 %v232
  %v938 = vunpack.c.l.b16 %v233
  %v939 = vunpack.c.h.b16 %v233
  %v940 = vunpack.c.l.b16 %v234
  %v941 = vunpack.c.h.b16 %v234
  %v942 = vunpack.c.l.b16 %v235
  %v943 = vunpack.c.h.b16 %v235
  %v944 = vunpack.c.l.b16 %v236
  %v945 = vunpack.c.h.b16 %v236
  %v946 = vunpack.c.l.b16 %v237
  %v947 = vunpack.c.h.b16 %v237
  %v948 = vunpack.c.l.b16 %v238
  %v949 = vunpack.c.h.b16 %v238
  %v950 = vpack.c.b16 %v502, %v500
  %v951 = vpack.c.b16 %v503, %v501
  %v952 = vpack.c.b16 %v506, %v504
  %v953 = vpack.c.b16 %v507, %v505
  %v954 = vpack.c.b16 %v510, %v508
  %v955 = vpack.c.b16 %v511, %v509
  %v956 = vpack.c.b16 %v514, %v512
  %v957 = vpack.c.b16 %v515, %v513
  %v958 = vpack.c.b16 %v518, %v516
  %v959 = vpack.c.b16 %v519, %v517
  %v960 = vpack.c.b16 %v522, %v520
  %v961 = vpack.c.b16 %v523, %v521
  %v962 = vpack.c.b16 %v526, %v524
  %v963 = vpack.c.b16 %v527, %v525
  %v964 = vpack.c.b16 %v530, %v528
  %v965 = vpack.c.b16 %v531, %v529
  %v966 = vpack.c.b16 %v534, %v532
  %v967 = vpack.c.b16 %v535, %v533
  %v968 = vpack.c.b16 %v538, %v536
  %v969 = vpack.c.b16 %v539, %v537
  %v970 = vpack.c.b16 %v542, %v540
  %v971 = vpack.c.b16 %v543, %v541
  %v972 = vpack.c.b16 %v546, %v544
  %v973 = vpack.c.b16 %v547, %v545
  %v974 = vpack.c.b16 %v550, %v548
  %v975 = vpack.c.b16 %v551, %v549
  %v976 = vpack.c.b16 %v554, %v552
  %v977 = vpack.c.b16 %v555, %v553
  %v978 = vpack.c.b16 %v558, %v556
  %v979 = vpack.c.b16 %v559, %v557
  %v980 = vpack.c.b16 %v562, %v560
  %v981 = vpack.c.b16 %v563, %v561
  %v982 = vpack.c.b16 %v566, %v564
  %v983 = vpack.c.b16 %v567, %v565
  %v984 = vpack.c.b16 %v570, %v568
  %v985 = vpack.c.b16 %v571, %v569
  %v986 = vpack.c.b16 %v574, %v572
  %v987 = vpack.c.b16 %v575, %v573
  %v988 = vpack.c.b16 %v578, %v576
  %v989 = vpack.c.b16 %v579, %v577
  %v990 = vpack.c.b16 %v582, %v580
  %v991 = vpack.c.b16 %v583, %v581
  %v992 = vpack.c.b16 %v586, %v584
  %v993 = vpack.c.b16 %v587, %v585
  %v994 = vpack.c.b16 %v590, %v588
  %v995 = vpack.c.b16 %v591, %v589
  %v996 = vpack.c.b16 %v594, %v592
  %v997 = vpack.c.b16 %v595, %v593
  %v998 = vpack.c.b16 %v598, %v596
  %v999 = vpack.c.b16 %v599, %v597
  %v1000 = vpack.c.b16 %v602, %v600
  %v1001 = vpack.c.b16 %v603, %v601
  %v1002 = vpack.c.b16 %v606, %v604
  %v1003 = vpack.c.b16 %v607, %v605
  %v1004 = vpack.c.b16 %v610, %v608
  %v1005 = vpack.c.b16 %v611, %v609
  %v1006 = vpack.c.b16 %v614, %v612
  %v1007 = vpack.c.b16 %v615, %v613
  %v1008 = vpack.c.b16 %v618, %v616
  %v1009 = vpack.c.b16 %v619, %v617
  %v1010 = vpack.c.b16 %v622, %v620
  %v1011 = vpack.c.b16 %v623, %v621
  %v1012 = vpack.c.b16 %v626, %v624
  %v1013 = vpack.c.b16 %v627, %v625
  %v1014 = vpack.c.b16 %v630, %v628
  %v1015 = vpack.c.b16 %v631, %v629
  %v1016 = vpack.c.b16 %v634, %v632
  %v1017 = vpack.c.b16 %v635, %v633
  %v1018 = vpack.c.b16 %v638, %v636
  %v1019 = vpack.c.b16 %v639, %v637
  %v1020 = vpack.c.b16 %v642, %v640
  %v1021 = vpack.c.b16 %v643, %v641
  %v1022 = vpack.c.b16 %v646, %v644
  %v1023 = vpack.c.b16 %v647, %v645
  %v1024 = vpack.c.b16 %v650, %v648
  %v1025 = vpack.c.b16 %v651, %v649
  %v1026 = vpack.c.b16 %v654, %v652
  %v1027 = vpack.c.b16 %v655, %v653
  %v1028 = vpack.c.b16 %v658, %v656
  %v1029 = vpack.c.b16 %v659, %v657
  %v1030 = vpack.c.b16 %v662, %v660
  %v1031 = vpack.c.b16 %v663, %v661
  %v1032 = vpack.c.b16 %v666, %v664
  %v1033 = vpack.c.b16 %v667, %v665
  %v1034 = vpack.c.b16 %v670, %v668
  %v1035 = vpack.c.b16 %v671, %v669
  %v1036 = vpack.c.b16 %v674, %v672
  %v1037 = vpack.c.b16 %v675, %v673
  %v1038 = vpack.c.b16 %v678, %v676
  %v1039 = vpack.c.b16 %v679, %v677
  %v1040 = vpack.c.b16 %v682, %v680
  %v1041 = vpack.c.b16 %v683, %v681
  %v1042 = vpack.c.b16 %v686, %v684
  %v1043 = vpack.c.b16 %v687, %v685
  %v1044 = vpack.c.b16 %v690, %v688
  %v1045 = vpack.c.b16 %v691, %v689
  %v1046 = vpack.c.b16 %v694, %v692
  %v1047 = vpack.c.b16 %v695, %v693
  %v1048 = vpack.c.b16 %v698, %v696
  %v1049 = vpack.c.b16 %v699, %v697
  %v1050 = vpack.c.b16 %v702, %v700
  %v1051 = vpack.c.b16 %v703, %v701
  %v1052 = vpack.c.b16 %v706, %v704
  %v1053 = vpack.c.b16 %v707, %v705
  %v1054 = vpack.c.b16 %v710, %v708
  %v1055 = vpack.c.b16 %v711, %v709
  %v1056 = vpack.c.b16 %v714, %v712
  %v1057 = vpack.c.b16 %v715, %v713
  %v1058 = vpack.c.b16 %v718, %v716
  %v1059 = vpack.c.b16 %v719, %v717
  %v1060 = vpack.c.b16 %v722, %v720
  %v1061 = vpack.c.b16 %v723, %v721
  %v1062 = vpack.c.b16 %v726, %v724
  %v1063 = vpack.c.b16 %v727, %v725
  %v1064 = vpack.c.b16 %v730, %v728
  %v1065 = vpack.c.b16 %v731, %v729
  %v1066 = vpack.c.b16 %v734, %v732
  %v1067 = vpack.c.b16 %v735, %v733
  %v1068 = vpack.c.b16 %v738, %v736
  %v1069 = vpack.c.b16 %v739, %v737
  %v1070 = vpack.c.b16 %v742, %v740
  %v1071 = vpack.c.b16 %v743, %v741
  %v1072 = vpack.c.b16 %v746, %v744
  %v1073 = vpack.c.b16 %v747, %v745
  %v1074 = vpack.c.b16 %v750, %v748
  %v1075 = vpack.c.b16 %v751, %v749
  %v1076 = vpack.c.b16 %v754, %v752
  %v1077 = vpack.c.b16 %v755, %v753
  %v1078 = vpack.c.b16 %v758, %v756
  %v1079 = vpack.c.b16 %v759, %v757
  %v1080 = vpack.c.b16 %v762, %v760
  %v1081 = vpack.c.b16 %v763, %v761
  %v1082 = vpack.c.b16 %v766, %v764
  %v1083 = vpack.c.b16 %v767, %v765
  %v1084 = vpack.c.b16 %v770, %v768
  %v1085 = vpack.c.b16 %v771, %v769
  %v1086 = vpack.c.b16 %v774, %v772
  %v1087 = vpack.c.b16 %v775, %v773
  %v1088 = vpack.c.b16 %v778, %v776
  %v1089 = vpack.c.b16 %v779, %v777
  %v1090 = vpack.c.b16 %v782, %v780
  %v1091 = vpack.c.b16 %v783, %v781
  %v1092 = vpack.c.b16 %v786, %v784
  %v1093 = vpack.c.b16 %v787, %v785
  %v1094 = vpack.c.b16 %v790, %v788
  %v1095 = vpack.c.b16 %v791, %v789
  %v1096 = vpack.c.b16 %v794, %v792
  %v1097 = vpack.c.b16 %v795, %v793
  %v1098 = vpack.c.b16 %v798, %v796
  %v1099 = vpack.c.b16 %v799, %v797
  %v1100 = vpack.c.b16 %v802, %v800
  %v1101 = vpack.c.b16 %v803, %v801
  %v1102 = vpack.c.b16 %v806, %v804
  %v1103 = vpack.c.b16 %v807, %v805
  %v1104 = vpack.c.b16 %v810, %v808
  %v1105 = vpack.c.b16 %v811, %v809
  %v1106 = vpack.c.b16 %v814, %v812
  %v1107 = vpack.c.b16 %v815, %v813
  %v1108 = vpack.c.b16 %v818, %v816
  %v1109 = vpack.c.b16 %v819, %v817
  %v1110 = vpack.c.b16 %v822, %v820
  %v1111 = vpack.c.b16 %v823, %v821
  %v1112 = vpack.c.b16 %v826, %v824
  %v1113 = vpack.c.b16 %v827, %v825
  %v1114 = vpack.c.b16 %v830, %v828
  %v1115 = vpack.c.b16 %v831, %v829
  %v1116 = vpack.c.b16 %v834, %v832
  %v1117 = vpack.c.b16 %v835, %v833
  %v1118 = vpack.c.b16 %v838, %v836
  %v1119 = vpack.c.b16 %v839, %v837
  %v1120 = vpack.c.b16 %v842, %v840
  %v1121 = vpack.c.b16 %v843, %v841
  %v1122 = vpack.c.b16 %v846, %v844
  %v1123 = vpack.c.b16 %v847, %v845
  %v1124 = vpack.c.b16 %v850, %v848
  %v1125 = vpack.c.b16 %v851, %v849
  %v1126 = vpack.c.b16 %v854, %v852
  %v1127 = vpack.c.b16 %v855, %v853
  %v1128 = vpack.c.b16 %v858, %v856
  %v1129 = vpack.c.b16 %v859, %v857
  %v1130 = vpack.c.b16 %v862, %v860
  %v1131 = vpack.c.b16 %v863, %v861
  %v1132 = vpack.c.b16 %v866, %v864
  %v1133 = vpack.c.b16 %v867, %v865
  %v1134 = vpack.c.b16 %v870, %v868
  %v1135 = vpack.c.b16 %v871, %v869
  %v1136 = vpack.c.b16 %v874, %v872
  %v1137 = vpack.c.b16 %v875, %v873
  %v1138 = vpack.c.b16 %v878, %v876
  %v1139 = vpack.c.b16 %v879, %v877
  %v1140 = vpack.c.b16 %v882, %v880
  %v1141 = vpack.c.b16 %v883, %v881
  %v1142 = vpack.c.b16 %v886, %v884
  %v1143 = vpack.c.b16 %v887, %v885
  %v1144 = vpack.c.b16 %v890, %v888
  %v1145 = vpack.c.b16 %v891, %v889
  %v1146 = vpack.c.b16 %v894, %v892
  %v1147 = vpack.c.b16 %v895, %v893
  %v1148 = vpack.c.b16 %v898, %v896
  %v1149 = vpack.c.b16 %v899, %v897
  %v1150 = vpack.c.b16 %v902, %v900
  %v1151 = vpack.c.b16 %v903, %v901
  %v1152 = vpack.c.b16 %v906, %v904
  %v1153 = vpack.c.b16 %v907, %v905
  %v1154 = vpack.c.b16 %v910, %v908
  %v1155 = vpack.c.b16 %v911, %v909
  %v1156 = vpack.c.b16 %v914, %v912
  %v1157 = vpack.c.b16 %v915, %v913
  %v1158 = vpack.c.b16 %v918, %v916
  %v1159 = vpack.c.b16 %v919, %v917
  %v1160 = vpack.c.b16 %v922, %v920
  %v1161 = vpack.c.b16 %v923, %v921
  %v1162 = vpack.c.b16 %v926, %v924
  %v1163 = vpack.c.b16 %v927, %v925
  %v1164 = vpack.c.b16 %v930, %v928
  %v1165 = vpack.c.b16 %v931, %v929
  %v1166 = vpack.c.b16 %v934, %v932
  %v1167 = vpack.c.b16 %v935, %v933
  %v1168 = vpack.c.b16 %v938, %v936
  %v1169 = vpack.c.b16 %v939, %v937
  %v1170 = vpack.c.b16 %v942, %v940
  %v1171 = vpack.c.b16 %v943, %v941
  %v1172 = vpack.c.b16 %v946, %v944
  %v1173 = vpack.c.b16 %v947, %v945
  %v1174 = vpack.c.b16 %v948, %v948
  %v1175 = vpack.c.b16 %v949, %v949
  %v1434 = vunpack.c.l.b16 %v239
  %v1435 = vunpack.c.l.b16 %v240
  %v1436 = vunpack.c.l.b16 %v241
  %v1437 = vunpack.c.l.b16 %v242
  %v1438 = vunpack.c.l.b16 %v243
  %v1439 = vunpack.c.l.b16 %v244
  %v1440 = vunpack.c.l.b16 %v245
  %v1441 = vunpack.c.l.b16 %v246
  %v1442 = vunpack.c.l.b16 %v247
  %v1443 = vunpack.c.l.b16 %v248
  %v1444 = vunpack.c.l.b16 %v249
  %v1445 = vunpack.c.l.b16 %v250
  %v1446 = vunpack.c.l.b16 %v251
  %v1447 = vunpack.c.l.b16 %v252
  %v1448 = vunpack.c.l.b16 %v253
  %v1449 = vunpack.c.l.b16 %v254
  %v1450 = vunpack.c.l.b16 %v255
  %v1451 = vunpack.c.l.b16 %v256
  %v1452 = vunpack.c.l.b16 %v257
  %v1453 = vunpack.c.l.b16 %v258
  %v1454 = vunpack.c.l.b16 %v259
  %v1455 = vunpack.c.l.b16 %v260
  %v1456 = vunpack.c.l.b16 %v261
  %v1457 = vunpack.c.l.b16 %v262
  %v1458 = vunpack.c.l.b16 %v263
  %v1459 = vunpack.c.l.b16 %v264
  %v1460 = vunpack.c.l.b16 %v265
  %v1461 = vunpack.c.l.b16 %v266
  %v1462 = vunpack.c.l.b16 %v267
  %v1463 = vunpack.c.l.b16 %v268
  %v1464 = vunpack.c.l.b16 %v269
  %v1465 = vunpack.c.l.b16 %v270
  %v1466 = vpack.c.b16 %v1435, %v1434
  %v1467 = vpack.c.b16 %v1437, %v1436
  %v1468 = vpack.c.b16 %v1439, %v1438
  %v1469 = vpack.c.b16 %v1441, %v1440
  %v1470 = vpack.c.b16 %v1443, %v1442
  %v1471 = vpack.c.b16 %v1445, %v1444
  %v1472 = vpack.c.b16 %v1447, %v1446
  %v1473 = vpack.c.b16 %v1449, %v1448
  %v1474 = vpack.c.b16 %v1451, %v1450
  %v1475 = vpack.c.b16 %v1453, %v1452
  %v1476 = vpack.c.b16 %v1455, %v1454
  %v1477 = vpack.c.b16 %v1457, %v1456
  %v1478 = vpack.c.b16 %v1459, %v1458
  %v1479 = vpack.c.b16 %v1461, %v1460
  %v1480 = vpack.c.b16 %v1463, %v1462
  %v1481 = vpack.c.b16 %v1465, %v1464
  %1498 = vmatpush.bf16.msra.mxu0 %v1473
  %1499 = vmatpush.bf16.msra.mxu0 %v1472
  %1500 = vmatpush.bf16.msra.mxu0 %v1471
  %1501 = vmatpush.bf16.msra.mxu0 %v1470
  %1502 = vmatpush.bf16.msra.mxu0 %v1469
  %1503 = vmatpush.bf16.msra.mxu0 %v1468
  %1504 = vmatpush.bf16.msra.mxu0 %v1467
  %1505 = vmatpush.bf16.msra.mxu0 %v1466
  %1506 = vmatmul.bf16.gmra.mxu0 %v950
  %v1507 = vpop.f32.mrf.mxu0
  %v1508 = vadd.f32 %v273, %v1507
  %v1509 = vpop.f32.mrf.mxu0
  %v1510 = vadd.f32 %v273, %v1509
  %1511 = vmatmul.bf16.gmra.mxu0 %v952
  %v1512 = vpop.f32.mrf.mxu0
  %v1513 = vadd.f32 %v273, %v1512
  %v1514 = vpop.f32.mrf.mxu0
  %v1515 = vadd.f32 %v273, %v1514
  %1516 = vmatmul.bf16.gmra.mxu0 %v954
  %v1517 = vpop.f32.mrf.mxu0
  %v1518 = vadd.f32 %v273, %v1517
  %v1519 = vpop.f32.mrf.mxu0
  %v1520 = vadd.f32 %v273, %v1519
  %1521 = vmatmul.bf16.gmra.mxu0 %v956
  %v1522 = vpop.f32.mrf.mxu0
  %v1523 = vadd.f32 %v273, %v1522
  %v1524 = vpop.f32.mrf.mxu0
  %v1525 = vadd.f32 %v273, %v1524
  %1526 = vmatmul.bf16.gmra.mxu0 %v958
  %v1527 = vpop.f32.mrf.mxu0
  %v1528 = vadd.f32 %v273, %v1527
  %v1529 = vpop.f32.mrf.mxu0
  %v1530 = vadd.f32 %v273, %v1529
  %1531 = vmatmul.bf16.gmra.mxu0 %v960
  %v1532 = vpop.f32.mrf.mxu0
  %v1533 = vadd.f32 %v273, %v1532
  %v1534 = vpop.f32.mrf.mxu0
  %v1535 = vadd.f32 %v273, %v1534
  %1536 = vmatmul.bf16.gmra.mxu0 %v962
  %v1537 = vpop.f32.mrf.mxu0
  %v1538 = vadd.f32 %v273, %v1537
  %v1539 = vpop.f32.mrf.mxu0
  %v1540 = vadd.f32 %v273, %v1539
  %1541 = vmatmul.bf16.gmra.mxu0 %v964
  %v1542 = vpop.f32.mrf.mxu0
  %v1543 = vadd.f32 %v273, %v1542
  %v1544 = vpop.f32.mrf.mxu0
  %v1545 = vadd.f32 %v273, %v1544
  %1546 = vmatmul.bf16.gmra.mxu0 %v966
  %v1547 = vpop.f32.mrf.mxu0
  %v1548 = vadd.f32 %v273, %v1547
  %v1549 = vpop.f32.mrf.mxu0
  %v1550 = vadd.f32 %v273, %v1549
  %1551 = vmatmul.bf16.gmra.mxu0 %v968
  %v1552 = vpop.f32.mrf.mxu0
  %v1553 = vadd.f32 %v273, %v1552
  %v1554 = vpop.f32.mrf.mxu0
  %v1555 = vadd.f32 %v273, %v1554
  %1556 = vmatmul.bf16.gmra.mxu0 %v970
  %v1557 = vpop.f32.mrf.mxu0
  %v1558 = vadd.f32 %v273, %v1557
  %v1559 = vpop.f32.mrf.mxu0
  %v1560 = vadd.f32 %v273, %v1559
  %1561 = vmatmul.bf16.gmra.mxu0 %v972
  %v1562 = vpop.f32.mrf.mxu0
  %v1563 = vadd.f32 %v273, %v1562
  %v1564 = vpop.f32.mrf.mxu0
  %v1565 = vadd.f32 %v273, %v1564
  %1566 = vmatmul.bf16.gmra.mxu0 %v974
  %v1567 = vpop.f32.mrf.mxu0
  %v1568 = vadd.f32 %v273, %v1567
  %v1569 = vpop.f32.mrf.mxu0
  %v1570 = vadd.f32 %v273, %v1569
  %1571 = vmatmul.bf16.gmra.mxu0 %v976
  %v1572 = vpop.f32.mrf.mxu0
  %v1573 = vadd.f32 %v273, %v1572
  %v1574 = vpop.f32.mrf.mxu0
  %v1575 = vadd.f32 %v273, %v1574
  %1576 = vmatmul.bf16.gmra.mxu0 %v978
  %v1577 = vpop.f32.mrf.mxu0
  %v1578 = vadd.f32 %v273, %v1577
  %v1579 = vpop.f32.mrf.mxu0
  %v1580 = vadd.f32 %v273, %v1579
  %1581 = vmatmul.bf16.gmra.mxu0 %v980
  %v1582 = vpop.f32.mrf.mxu0
  %v1583 = vadd.f32 %v273, %v1582
  %v1584 = vpop.f32.mrf.mxu0
  %v1585 = vadd.f32 %v273, %v1584
  %1586 = vmatmul.bf16.gmra.mxu0 %v982
  %v1587 = vpop.f32.mrf.mxu0
  %v1588 = vadd.f32 %v273, %v1587
  %v1589 = vpop.f32.mrf.mxu0
  %v1590 = vadd.f32 %v273, %v1589
  %1591 = vmatmul.bf16.gmra.mxu0 %v984
  %v1592 = vpop.f32.mrf.mxu0
  %v1593 = vadd.f32 %v273, %v1592
  %v1594 = vpop.f32.mrf.mxu0
  %v1595 = vadd.f32 %v273, %v1594
  %1596 = vmatmul.bf16.gmra.mxu0 %v986
  %v1597 = vpop.f32.mrf.mxu0
  %v1598 = vadd.f32 %v273, %v1597
  %v1599 = vpop.f32.mrf.mxu0
  %v1600 = vadd.f32 %v273, %v1599
  %1601 = vmatmul.bf16.gmra.mxu0 %v988
  %v1602 = vpop.f32.mrf.mxu0
  %v1603 = vadd.f32 %v273, %v1602
  %v1604 = vpop.f32.mrf.mxu0
  %v1605 = vadd.f32 %v273, %v1604
  %1606 = vmatmul.bf16.gmra.mxu0 %v990
  %v1607 = vpop.f32.mrf.mxu0
  %v1608 = vadd.f32 %v273, %v1607
  %v1609 = vpop.f32.mrf.mxu0
  %v1610 = vadd.f32 %v273, %v1609
  %1611 = vmatmul.bf16.gmra.mxu0 %v992
  %v1612 = vpop.f32.mrf.mxu0
  %v1613 = vadd.f32 %v273, %v1612
  %v1614 = vpop.f32.mrf.mxu0
  %v1615 = vadd.f32 %v273, %v1614
  %1616 = vmatmul.bf16.gmra.mxu0 %v994
  %v1617 = vpop.f32.mrf.mxu0
  %v1618 = vadd.f32 %v273, %v1617
  %v1619 = vpop.f32.mrf.mxu0
  %v1620 = vadd.f32 %v273, %v1619
  %1621 = vmatmul.bf16.gmra.mxu0 %v996
  %v1622 = vpop.f32.mrf.mxu0
  %v1623 = vadd.f32 %v273, %v1622
  %v1624 = vpop.f32.mrf.mxu0
  %v1625 = vadd.f32 %v273, %v1624
  %1626 = vmatmul.bf16.gmra.mxu0 %v998
  %v1627 = vpop.f32.mrf.mxu0
  %v1628 = vadd.f32 %v273, %v1627
  %v1629 = vpop.f32.mrf.mxu0
  %v1630 = vadd.f32 %v273, %v1629
  %1631 = vmatmul.bf16.gmra.mxu0 %v1000
  %v1632 = vpop.f32.mrf.mxu0
  %v1633 = vadd.f32 %v273, %v1632
  %v1634 = vpop.f32.mrf.mxu0
  %v1635 = vadd.f32 %v273, %v1634
  %1636 = vmatmul.bf16.gmra.mxu0 %v1002
  %v1637 = vpop.f32.mrf.mxu0
  %v1638 = vadd.f32 %v273, %v1637
  %v1639 = vpop.f32.mrf.mxu0
  %v1640 = vadd.f32 %v273, %v1639
  %1641 = vmatmul.bf16.gmra.mxu0 %v1004
  %v1642 = vpop.f32.mrf.mxu0
  %v1643 = vadd.f32 %v273, %v1642
  %v1644 = vpop.f32.mrf.mxu0
  %v1645 = vadd.f32 %v273, %v1644
  %1646 = vmatmul.bf16.gmra.mxu0 %v1006
  %v1647 = vpop.f32.mrf.mxu0
  %v1648 = vadd.f32 %v273, %v1647
  %v1649 = vpop.f32.mrf.mxu0
  %v1650 = vadd.f32 %v273, %v1649
  %1651 = vmatmul.bf16.gmra.mxu0 %v1008
  %v1652 = vpop.f32.mrf.mxu0
  %v1653 = vadd.f32 %v273, %v1652
  %v1654 = vpop.f32.mrf.mxu0
  %v1655 = vadd.f32 %v273, %v1654
  %1656 = vmatmul.bf16.gmra.mxu0 %v1010
  %v1657 = vpop.f32.mrf.mxu0
  %v1658 = vadd.f32 %v273, %v1657
  %v1659 = vpop.f32.mrf.mxu0
  %v1660 = vadd.f32 %v273, %v1659
  %1661 = vmatmul.bf16.gmra.mxu0 %v1012
  %v1662 = vpop.f32.mrf.mxu0
  %v1663 = vadd.f32 %v273, %v1662
  %v1664 = vpop.f32.mrf.mxu0
  %v1665 = vadd.f32 %v273, %v1664
  %1666 = vmatmul.bf16.gmra.mxu0 %v1014
  %v1667 = vpop.f32.mrf.mxu0
  %v1668 = vadd.f32 %v273, %v1667
  %v1669 = vpop.f32.mrf.mxu0
  %v1670 = vadd.f32 %v273, %v1669
  %1671 = vmatmul.bf16.gmra.mxu0 %v1016
  %v1672 = vpop.f32.mrf.mxu0
  %v1673 = vadd.f32 %v273, %v1672
  %v1674 = vpop.f32.mrf.mxu0
  %v1675 = vadd.f32 %v273, %v1674
  %1676 = vmatmul.bf16.gmra.mxu0 %v1018
  %v1677 = vpop.f32.mrf.mxu0
  %v1678 = vadd.f32 %v273, %v1677
  %v1679 = vpop.f32.mrf.mxu0
  %v1680 = vadd.f32 %v273, %v1679
  %1681 = vmatmul.bf16.gmra.mxu0 %v1020
  %v1682 = vpop.f32.mrf.mxu0
  %v1683 = vadd.f32 %v273, %v1682
  %v1684 = vpop.f32.mrf.mxu0
  %v1685 = vadd.f32 %v273, %v1684
  %1686 = vmatmul.bf16.gmra.mxu0 %v1022
  %v1687 = vpop.f32.mrf.mxu0
  %v1688 = vadd.f32 %v273, %v1687
  %v1689 = vpop.f32.mrf.mxu0
  %v1690 = vadd.f32 %v273, %v1689
  %1691 = vmatmul.bf16.gmra.mxu0 %v1024
  %v1692 = vpop.f32.mrf.mxu0
  %v1693 = vadd.f32 %v273, %v1692
  %v1694 = vpop.f32.mrf.mxu0
  %v1695 = vadd.f32 %v273, %v1694
  %1696 = vmatmul.bf16.gmra.mxu0 %v1026
  %v1697 = vpop.f32.mrf.mxu0
  %v1698 = vadd.f32 %v273, %v1697
  %v1699 = vpop.f32.mrf.mxu0
  %v1700 = vadd.f32 %v273, %v1699
  %1701 = vmatmul.bf16.gmra.mxu0 %v1028
  %v1702 = vpop.f32.mrf.mxu0
  %v1703 = vadd.f32 %v273, %v1702
  %v1704 = vpop.f32.mrf.mxu0
  %v1705 = vadd.f32 %v273, %v1704
  %1706 = vmatmul.bf16.gmra.mxu0 %v1030
  %v1707 = vpop.f32.mrf.mxu0
  %v1708 = vadd.f32 %v273, %v1707
  %v1709 = vpop.f32.mrf.mxu0
  %v1710 = vadd.f32 %v273, %v1709
  %1711 = vmatmul.bf16.gmra.mxu0 %v1032
  %v1712 = vpop.f32.mrf.mxu0
  %v1713 = vadd.f32 %v273, %v1712
  %v1714 = vpop.f32.mrf.mxu0
  %v1715 = vadd.f32 %v273, %v1714
  %1716 = vmatmul.bf16.gmra.mxu0 %v1034
  %v1717 = vpop.f32.mrf.mxu0
  %v1718 = vadd.f32 %v273, %v1717
  %v1719 = vpop.f32.mrf.mxu0
  %v1720 = vadd.f32 %v273, %v1719
  %1721 = vmatmul.bf16.gmra.mxu0 %v1036
  %v1722 = vpop.f32.mrf.mxu0
  %v1723 = vadd.f32 %v273, %v1722
  %v1724 = vpop.f32.mrf.mxu0
  %v1725 = vadd.f32 %v273, %v1724
  %1726 = vmatmul.bf16.gmra.mxu0 %v1038
  %v1727 = vpop.f32.mrf.mxu0
  %v1728 = vadd.f32 %v273, %v1727
  %v1729 = vpop.f32.mrf.mxu0
  %v1730 = vadd.f32 %v273, %v1729
  %1731 = vmatmul.bf16.gmra.mxu0 %v1040
  %v1732 = vpop.f32.mrf.mxu0
  %v1733 = vadd.f32 %v273, %v1732
  %v1734 = vpop.f32.mrf.mxu0
  %v1735 = vadd.f32 %v273, %v1734
  %1736 = vmatmul.bf16.gmra.mxu0 %v1042
  %v1737 = vpop.f32.mrf.mxu0
  %v1738 = vadd.f32 %v273, %v1737
  %v1739 = vpop.f32.mrf.mxu0
  %v1740 = vadd.f32 %v273, %v1739
  %1741 = vmatmul.bf16.gmra.mxu0 %v1044
  %v1742 = vpop.f32.mrf.mxu0
  %v1743 = vadd.f32 %v273, %v1742
  %v1744 = vpop.f32.mrf.mxu0
  %v1745 = vadd.f32 %v273, %v1744
  %1746 = vmatmul.bf16.gmra.mxu0 %v1046
  %v1747 = vpop.f32.mrf.mxu0
  %v1748 = vadd.f32 %v273, %v1747
  %v1749 = vpop.f32.mrf.mxu0
  %v1750 = vadd.f32 %v273, %v1749
  %1751 = vmatmul.bf16.gmra.mxu0 %v1048
  %v1752 = vpop.f32.mrf.mxu0
  %v1753 = vadd.f32 %v273, %v1752
  %v1754 = vpop.f32.mrf.mxu0
  %v1755 = vadd.f32 %v273, %v1754
  %1756 = vmatmul.bf16.gmra.mxu0 %v1050
  %v1757 = vpop.f32.mrf.mxu0
  %v1758 = vadd.f32 %v273, %v1757
  %v1759 = vpop.f32.mrf.mxu0
  %v1760 = vadd.f32 %v273, %v1759
  %1761 = vmatmul.bf16.gmra.mxu0 %v1052
  %v1762 = vpop.f32.mrf.mxu0
  %v1763 = vadd.f32 %v273, %v1762
  %v1764 = vpop.f32.mrf.mxu0
  %v1765 = vadd.f32 %v273, %v1764
  %1766 = vmatmul.bf16.gmra.mxu0 %v1054
  %v1767 = vpop.f32.mrf.mxu0
  %v1768 = vadd.f32 %v273, %v1767
  %v1769 = vpop.f32.mrf.mxu0
  %v1770 = vadd.f32 %v273, %v1769
  %1771 = vmatmul.bf16.gmra.mxu0 %v1056
  %v1772 = vpop.f32.mrf.mxu0
  %v1773 = vadd.f32 %v273, %v1772
  %v1774 = vpop.f32.mrf.mxu0
  %v1775 = vadd.f32 %v273, %v1774
  %1776 = vmatmul.bf16.gmra.mxu0 %v1058
  %v1777 = vpop.f32.mrf.mxu0
  %v1778 = vadd.f32 %v273, %v1777
  %v1779 = vpop.f32.mrf.mxu0
  %v1780 = vadd.f32 %v273, %v1779
  %1781 = vmatmul.bf16.gmra.mxu0 %v1060
  %v1782 = vpop.f32.mrf.mxu0
  %v1783 = vadd.f32 %v273, %v1782
  %v1784 = vpop.f32.mrf.mxu0
  %v1785 = vadd.f32 %v273, %v1784
  %1786 = vmatmul.bf16.gmra.mxu0 %v1062
  %v1787 = vpop.f32.mrf.mxu0
  %v1788 = vadd.f32 %v273, %v1787
  %v1789 = vpop.f32.mrf.mxu0
  %v1790 = vadd.f32 %v273, %v1789
  %1791 = vmatmul.bf16.gmra.mxu0 %v1064
  %v1792 = vpop.f32.mrf.mxu0
  %v1793 = vadd.f32 %v273, %v1792
  %v1794 = vpop.f32.mrf.mxu0
  %v1795 = vadd.f32 %v273, %v1794
  %1796 = vmatmul.bf16.gmra.mxu0 %v1066
  %v1797 = vpop.f32.mrf.mxu0
  %v1798 = vadd.f32 %v273, %v1797
  %v1799 = vpop.f32.mrf.mxu0
  %v1800 = vadd.f32 %v273, %v1799
  %1801 = vmatmul.bf16.gmra.mxu0 %v1068
  %v1802 = vpop.f32.mrf.mxu0
  %v1803 = vadd.f32 %v273, %v1802
  %v1804 = vpop.f32.mrf.mxu0
  %v1805 = vadd.f32 %v273, %v1804
  %1806 = vmatmul.bf16.gmra.mxu0 %v1070
  %v1807 = vpop.f32.mrf.mxu0
  %v1808 = vadd.f32 %v273, %v1807
  %v1809 = vpop.f32.mrf.mxu0
  %v1810 = vadd.f32 %v273, %v1809
  %1811 = vmatmul.bf16.gmra.mxu0 %v1072
  %v1812 = vpop.f32.mrf.mxu0
  %v1813 = vadd.f32 %v273, %v1812
  %v1814 = vpop.f32.mrf.mxu0
  %v1815 = vadd.f32 %v273, %v1814
  %1816 = vmatmul.bf16.gmra.mxu0 %v1074
  %v1817 = vpop.f32.mrf.mxu0
  %v1818 = vadd.f32 %v273, %v1817
  %v1819 = vpop.f32.mrf.mxu0
  %v1820 = vadd.f32 %v273, %v1819
  %1821 = vmatmul.bf16.gmra.mxu0 %v1076
  %v1822 = vpop.f32.mrf.mxu0
  %v1823 = vadd.f32 %v273, %v1822
  %v1824 = vpop.f32.mrf.mxu0
  %v1825 = vadd.f32 %v273, %v1824
  %1826 = vmatmul.bf16.gmra.mxu0 %v1078
  %v1827 = vpop.f32.mrf.mxu0
  %v1828 = vadd.f32 %v273, %v1827
  %v1829 = vpop.f32.mrf.mxu0
  %v1830 = vadd.f32 %v273, %v1829
  %1831 = vmatmul.bf16.gmra.mxu0 %v1080
  %v1832 = vpop.f32.mrf.mxu0
  %v1833 = vadd.f32 %v273, %v1832
  %v1834 = vpop.f32.mrf.mxu0
  %v1835 = vadd.f32 %v273, %v1834
  %1836 = vmatmul.bf16.gmra.mxu0 %v1082
  %v1837 = vpop.f32.mrf.mxu0
  %v1838 = vadd.f32 %v273, %v1837
  %v1839 = vpop.f32.mrf.mxu0
  %v1840 = vadd.f32 %v273, %v1839
  %1841 = vmatmul.bf16.gmra.mxu0 %v1084
  %v1842 = vpop.f32.mrf.mxu0
  %v1843 = vadd.f32 %v273, %v1842
  %v1844 = vpop.f32.mrf.mxu0
  %v1845 = vadd.f32 %v273, %v1844
  %1846 = vmatmul.bf16.gmra.mxu0 %v1086
  %v1847 = vpop.f32.mrf.mxu0
  %v1848 = vadd.f32 %v273, %v1847
  %v1849 = vpop.f32.mrf.mxu0
  %v1850 = vadd.f32 %v273, %v1849
  %1851 = vmatmul.bf16.gmra.mxu0 %v1088
  %v1852 = vpop.f32.mrf.mxu0
  %v1853 = vadd.f32 %v273, %v1852
  %v1854 = vpop.f32.mrf.mxu0
  %v1855 = vadd.f32 %v273, %v1854
  %1856 = vmatmul.bf16.gmra.mxu0 %v1090
  %v1857 = vpop.f32.mrf.mxu0
  %v1858 = vadd.f32 %v273, %v1857
  %v1859 = vpop.f32.mrf.mxu0
  %v1860 = vadd.f32 %v273, %v1859
  %1861 = vmatmul.bf16.gmra.mxu0 %v1092
  %v1862 = vpop.f32.mrf.mxu0
  %v1863 = vadd.f32 %v273, %v1862
  %v1864 = vpop.f32.mrf.mxu0
  %v1865 = vadd.f32 %v273, %v1864
  %1866 = vmatmul.bf16.gmra.mxu0 %v1094
  %v1867 = vpop.f32.mrf.mxu0
  %v1868 = vadd.f32 %v273, %v1867
  %v1869 = vpop.f32.mrf.mxu0
  %v1870 = vadd.f32 %v273, %v1869
  %1871 = vmatmul.bf16.gmra.mxu0 %v1096
  %v1872 = vpop.f32.mrf.mxu0
  %v1873 = vadd.f32 %v273, %v1872
  %v1874 = vpop.f32.mrf.mxu0
  %v1875 = vadd.f32 %v273, %v1874
  %1876 = vmatmul.bf16.gmra.mxu0 %v1098
  %v1877 = vpop.f32.mrf.mxu0
  %v1878 = vadd.f32 %v273, %v1877
  %v1879 = vpop.f32.mrf.mxu0
  %v1880 = vadd.f32 %v273, %v1879
  %1881 = vmatmul.bf16.gmra.mxu0 %v1100
  %v1882 = vpop.f32.mrf.mxu0
  %v1883 = vadd.f32 %v273, %v1882
  %v1884 = vpop.f32.mrf.mxu0
  %v1885 = vadd.f32 %v273, %v1884
  %1886 = vmatmul.bf16.gmra.mxu0 %v1102
  %v1887 = vpop.f32.mrf.mxu0
  %v1888 = vadd.f32 %v273, %v1887
  %v1889 = vpop.f32.mrf.mxu0
  %v1890 = vadd.f32 %v273, %v1889
  %1891 = vmatmul.bf16.gmra.mxu0 %v1104
  %v1892 = vpop.f32.mrf.mxu0
  %v1893 = vadd.f32 %v273, %v1892
  %v1894 = vpop.f32.mrf.mxu0
  %v1895 = vadd.f32 %v273, %v1894
  %1896 = vmatmul.bf16.gmra.mxu0 %v1106
  %v1897 = vpop.f32.mrf.mxu0
  %v1898 = vadd.f32 %v273, %v1897
  %v1899 = vpop.f32.mrf.mxu0
  %v1900 = vadd.f32 %v273, %v1899
  %1901 = vmatmul.bf16.gmra.mxu0 %v1108
  %v1902 = vpop.f32.mrf.mxu0
  %v1903 = vadd.f32 %v273, %v1902
  %v1904 = vpop.f32.mrf.mxu0
  %v1905 = vadd.f32 %v273, %v1904
  %1906 = vmatmul.bf16.gmra.mxu0 %v1110
  %v1907 = vpop.f32.mrf.mxu0
  %v1908 = vadd.f32 %v273, %v1907
  %v1909 = vpop.f32.mrf.mxu0
  %v1910 = vadd.f32 %v273, %v1909
  %1911 = vmatmul.bf16.gmra.mxu0 %v1112
  %v1912 = vpop.f32.mrf.mxu0
  %v1913 = vadd.f32 %v273, %v1912
  %v1914 = vpop.f32.mrf.mxu0
  %v1915 = vadd.f32 %v273, %v1914
  %1916 = vmatmul.bf16.gmra.mxu0 %v1114
  %v1917 = vpop.f32.mrf.mxu0
  %v1918 = vadd.f32 %v273, %v1917
  %v1919 = vpop.f32.mrf.mxu0
  %v1920 = vadd.f32 %v273, %v1919
  %1921 = vmatmul.bf16.gmra.mxu0 %v1116
  %v1922 = vpop.f32.mrf.mxu0
  %v1923 = vadd.f32 %v273, %v1922
  %v1924 = vpop.f32.mrf.mxu0
  %v1925 = vadd.f32 %v273, %v1924
  %1926 = vmatmul.bf16.gmra.mxu0 %v1118
  %v1927 = vpop.f32.mrf.mxu0
  %v1928 = vadd.f32 %v273, %v1927
  %v1929 = vpop.f32.mrf.mxu0
  %v1930 = vadd.f32 %v273, %v1929
  %1931 = vmatmul.bf16.gmra.mxu0 %v1120
  %v1932 = vpop.f32.mrf.mxu0
  %v1933 = vadd.f32 %v273, %v1932
  %v1934 = vpop.f32.mrf.mxu0
  %v1935 = vadd.f32 %v273, %v1934
  %1936 = vmatmul.bf16.gmra.mxu0 %v1122
  %v1937 = vpop.f32.mrf.mxu0
  %v1938 = vadd.f32 %v273, %v1937
  %v1939 = vpop.f32.mrf.mxu0
  %v1940 = vadd.f32 %v273, %v1939
  %1941 = vmatmul.bf16.gmra.mxu0 %v1124
  %v1942 = vpop.f32.mrf.mxu0
  %v1943 = vadd.f32 %v273, %v1942
  %v1944 = vpop.f32.mrf.mxu0
  %v1945 = vadd.f32 %v273, %v1944
  %1946 = vmatmul.bf16.gmra.mxu0 %v1126
  %v1947 = vpop.f32.mrf.mxu0
  %v1948 = vadd.f32 %v273, %v1947
  %v1949 = vpop.f32.mrf.mxu0
  %v1950 = vadd.f32 %v273, %v1949
  %1951 = vmatmul.bf16.gmra.mxu0 %v1128
  %v1952 = vpop.f32.mrf.mxu0
  %v1953 = vadd.f32 %v273, %v1952
  %v1954 = vpop.f32.mrf.mxu0
  %v1955 = vadd.f32 %v273, %v1954
  %1956 = vmatmul.bf16.gmra.mxu0 %v1130
  %v1957 = vpop.f32.mrf.mxu0
  %v1958 = vadd.f32 %v273, %v1957
  %v1959 = vpop.f32.mrf.mxu0
  %v1960 = vadd.f32 %v273, %v1959
  %1961 = vmatmul.bf16.gmra.mxu0 %v1132
  %v1962 = vpop.f32.mrf.mxu0
  %v1963 = vadd.f32 %v273, %v1962
  %v1964 = vpop.f32.mrf.mxu0
  %v1965 = vadd.f32 %v273, %v1964
  %1966 = vmatmul.bf16.gmra.mxu0 %v1134
  %v1967 = vpop.f32.mrf.mxu0
  %v1968 = vadd.f32 %v273, %v1967
  %v1969 = vpop.f32.mrf.mxu0
  %v1970 = vadd.f32 %v273, %v1969
  %1971 = vmatmul.bf16.gmra.mxu0 %v1136
  %v1972 = vpop.f32.mrf.mxu0
  %v1973 = vadd.f32 %v273, %v1972
  %v1974 = vpop.f32.mrf.mxu0
  %v1975 = vadd.f32 %v273, %v1974
  %1976 = vmatmul.bf16.gmra.mxu0 %v1138
  %v1977 = vpop.f32.mrf.mxu0
  %v1978 = vadd.f32 %v273, %v1977
  %v1979 = vpop.f32.mrf.mxu0
  %v1980 = vadd.f32 %v273, %v1979
  %1981 = vmatmul.bf16.gmra.mxu0 %v1140
  %v1982 = vpop.f32.mrf.mxu0
  %v1983 = vadd.f32 %v273, %v1982
  %v1984 = vpop.f32.mrf.mxu0
  %v1985 = vadd.f32 %v273, %v1984
  %1986 = vmatmul.bf16.gmra.mxu0 %v1142
  %v1987 = vpop.f32.mrf.mxu0
  %v1988 = vadd.f32 %v273, %v1987
  %v1989 = vpop.f32.mrf.mxu0
  %v1990 = vadd.f32 %v273, %v1989
  %1991 = vmatmul.bf16.gmra.mxu0 %v1144
  %v1992 = vpop.f32.mrf.mxu0
  %v1993 = vadd.f32 %v273, %v1992
  %v1994 = vpop.f32.mrf.mxu0
  %v1995 = vadd.f32 %v273, %v1994
  %1996 = vmatmul.bf16.gmra.mxu0 %v1146
  %v1997 = vpop.f32.mrf.mxu0
  %v1998 = vadd.f32 %v273, %v1997
  %v1999 = vpop.f32.mrf.mxu0
  %v2000 = vadd.f32 %v273, %v1999
  %2001 = vmatmul.bf16.gmra.mxu0 %v1148
  %v2002 = vpop.f32.mrf.mxu0
  %v2003 = vadd.f32 %v273, %v2002
  %v2004 = vpop.f32.mrf.mxu0
  %v2005 = vadd.f32 %v273, %v2004
  %2006 = vmatmul.bf16.gmra.mxu0 %v1150
  %v2007 = vpop.f32.mrf.mxu0
  %v2008 = vadd.f32 %v273, %v2007
  %v2009 = vpop.f32.mrf.mxu0
  %v2010 = vadd.f32 %v273, %v2009
  %2011 = vmatmul.bf16.gmra.mxu0 %v1152
  %v2012 = vpop.f32.mrf.mxu0
  %v2013 = vadd.f32 %v273, %v2012
  %v2014 = vpop.f32.mrf.mxu0
  %v2015 = vadd.f32 %v273, %v2014
  %2016 = vmatmul.bf16.gmra.mxu0 %v1154
  %v2017 = vpop.f32.mrf.mxu0
  %v2018 = vadd.f32 %v273, %v2017
  %v2019 = vpop.f32.mrf.mxu0
  %v2020 = vadd.f32 %v273, %v2019
  %2021 = vmatmul.bf16.gmra.mxu0 %v1156
  %v2022 = vpop.f32.mrf.mxu0
  %v2023 = vadd.f32 %v273, %v2022
  %v2024 = vpop.f32.mrf.mxu0
  %v2025 = vadd.f32 %v273, %v2024
  %2026 = vmatmul.bf16.gmra.mxu0 %v1158
  %v2027 = vpop.f32.mrf.mxu0
  %v2028 = vadd.f32 %v273, %v2027
  %v2029 = vpop.f32.mrf.mxu0
  %v2030 = vadd.f32 %v273, %v2029
  %2031 = vmatmul.bf16.gmra.mxu0 %v1160
  %v2032 = vpop.f32.mrf.mxu0
  %v2033 = vadd.f32 %v273, %v2032
  %v2034 = vpop.f32.mrf.mxu0
  %v2035 = vadd.f32 %v273, %v2034
  %2036 = vmatmul.bf16.gmra.mxu0 %v1162
  %v2037 = vpop.f32.mrf.mxu0
  %v2038 = vadd.f32 %v273, %v2037
  %v2039 = vpop.f32.mrf.mxu0
  %v2040 = vadd.f32 %v273, %v2039
  %2041 = vmatmul.bf16.gmra.mxu0 %v1164
  %v2042 = vpop.f32.mrf.mxu0
  %v2043 = vadd.f32 %v273, %v2042
  %v2044 = vpop.f32.mrf.mxu0
  %v2045 = vadd.f32 %v273, %v2044
  %2046 = vmatmul.bf16.gmra.mxu0 %v1166
  %v2047 = vpop.f32.mrf.mxu0
  %v2048 = vadd.f32 %v273, %v2047
  %v2049 = vpop.f32.mrf.mxu0
  %v2050 = vadd.f32 %v273, %v2049
  %2051 = vmatmul.bf16.gmra.mxu0 %v1168
  %v2052 = vpop.f32.mrf.mxu0
  %v2053 = vadd.f32 %v273, %v2052
  %v2054 = vpop.f32.mrf.mxu0
  %v2055 = vadd.f32 %v273, %v2054
  %2056 = vmatmul.bf16.gmra.mxu0 %v1170
  %v2057 = vpop.f32.mrf.mxu0
  %v2058 = vadd.f32 %v273, %v2057
  %v2059 = vpop.f32.mrf.mxu0
  %v2060 = vadd.f32 %v273, %v2059
  %2061 = vmatmul.bf16.gmra.mxu0 %v1172
  %v2062 = vpop.f32.mrf.mxu0
  %v2063 = vadd.f32 %v273, %v2062
  %v2064 = vpop.f32.mrf.mxu0
  %v2065 = vadd.f32 %v273, %v2064
  %2066 = vmatmul.bf16.gmra.mxu0 %v1174
  %v2067 = vpop.f32.mrf.mxu0
  %v2068 = vadd.f32 %v273, %v2067
  %v2069 = vpop.f32.mrf.mxu0
  %2070 = vdwg.mxu0
  %2071 = vmatpush.bf16.msra.mxu0 %v1481
  %2072 = vmatpush.bf16.msra.mxu0 %v1480
  %2073 = vmatpush.bf16.msra.mxu0 %v1479
  %2074 = vmatpush.bf16.msra.mxu0 %v1478
  %2075 = vmatpush.bf16.msra.mxu0 %v1477
  %2076 = vmatpush.bf16.msra.mxu0 %v1476
  %2077 = vmatpush.bf16.msra.mxu0 %v1475
  %2078 = vmatpush.bf16.msra.mxu0 %v1474
  %2079 = vmatmul.bf16.gmra.mxu0 %v951
  %v2080 = vpop.f32.mrf.mxu0
  %v2081 = vadd.f32 %v1508, %v2080
  %v2082 = vpop.f32.mrf.mxu0
  %v2083 = vadd.f32 %v1510, %v2082
  %2084 = vmatmul.bf16.gmra.mxu0 %v953
  %v2085 = vpop.f32.mrf.mxu0
  %v2086 = vadd.f32 %v1513, %v2085
  %v2087 = vpop.f32.mrf.mxu0
  %v2088 = vadd.f32 %v1515, %v2087
  %2089 = vmatmul.bf16.gmra.mxu0 %v955
  %v2090 = vpop.f32.mrf.mxu0
  %v2091 = vadd.f32 %v1518, %v2090
  %v2092 = vpop.f32.mrf.mxu0
  %v2093 = vadd.f32 %v1520, %v2092
  %2094 = vmatmul.bf16.gmra.mxu0 %v957
  %v2095 = vpop.f32.mrf.mxu0
  %v2096 = vadd.f32 %v1523, %v2095
  %v2097 = vpop.f32.mrf.mxu0
  %v2098 = vadd.f32 %v1525, %v2097
  %2099 = vmatmul.bf16.gmra.mxu0 %v959
  %v2100 = vpop.f32.mrf.mxu0
  %v2101 = vadd.f32 %v1528, %v2100
  %v2102 = vpop.f32.mrf.mxu0
  %v2103 = vadd.f32 %v1530, %v2102
  %2104 = vmatmul.bf16.gmra.mxu0 %v961
  %v2105 = vpop.f32.mrf.mxu0
  %v2106 = vadd.f32 %v1533, %v2105
  %v2107 = vpop.f32.mrf.mxu0
  %v2108 = vadd.f32 %v1535, %v2107
  %2109 = vmatmul.bf16.gmra.mxu0 %v963
  %v2110 = vpop.f32.mrf.mxu0
  %v2111 = vadd.f32 %v1538, %v2110
  %v2112 = vpop.f32.mrf.mxu0
  %v2113 = vadd.f32 %v1540, %v2112
  %2114 = vmatmul.bf16.gmra.mxu0 %v965
  %v2115 = vpop.f32.mrf.mxu0
  %v2116 = vadd.f32 %v1543, %v2115
  %v2117 = vpop.f32.mrf.mxu0
  %v2118 = vadd.f32 %v1545, %v2117
  %2119 = vmatmul.bf16.gmra.mxu0 %v967
  %v2120 = vpop.f32.mrf.mxu0
  %v2121 = vadd.f32 %v1548, %v2120
  %v2122 = vpop.f32.mrf.mxu0
  %v2123 = vadd.f32 %v1550, %v2122
  %2124 = vmatmul.bf16.gmra.mxu0 %v969
  %v2125 = vpop.f32.mrf.mxu0
  %v2126 = vadd.f32 %v1553, %v2125
  %v2127 = vpop.f32.mrf.mxu0
  %v2128 = vadd.f32 %v1555, %v2127
  %2129 = vmatmul.bf16.gmra.mxu0 %v971
  %v2130 = vpop.f32.mrf.mxu0
  %v2131 = vadd.f32 %v1558, %v2130
  %v2132 = vpop.f32.mrf.mxu0
  %v2133 = vadd.f32 %v1560, %v2132
  %2134 = vmatmul.bf16.gmra.mxu0 %v973
  %v2135 = vpop.f32.mrf.mxu0
  %v2136 = vadd.f32 %v1563, %v2135
  %v2137 = vpop.f32.mrf.mxu0
  %v2138 = vadd.f32 %v1565, %v2137
  %2139 = vmatmul.bf16.gmra.mxu0 %v975
  %v2140 = vpop.f32.mrf.mxu0
  %v2141 = vadd.f32 %v1568, %v2140
  %v2142 = vpop.f32.mrf.mxu0
  %v2143 = vadd.f32 %v1570, %v2142
  %2144 = vmatmul.bf16.gmra.mxu0 %v977
  %v2145 = vpop.f32.mrf.mxu0
  %v2146 = vadd.f32 %v1573, %v2145
  %v2147 = vpop.f32.mrf.mxu0
  %v2148 = vadd.f32 %v1575, %v2147
  %2149 = vmatmul.bf16.gmra.mxu0 %v979
  %v2150 = vpop.f32.mrf.mxu0
  %v2151 = vadd.f32 %v1578, %v2150
  %v2152 = vpop.f32.mrf.mxu0
  %v2153 = vadd.f32 %v1580, %v2152
  %2154 = vmatmul.bf16.gmra.mxu0 %v981
  %v2155 = vpop.f32.mrf.mxu0
  %v2156 = vadd.f32 %v1583, %v2155
  %v2157 = vpop.f32.mrf.mxu0
  %v2158 = vadd.f32 %v1585, %v2157
  %2159 = vmatmul.bf16.gmra.mxu0 %v983
  %v2160 = vpop.f32.mrf.mxu0
  %v2161 = vadd.f32 %v1588, %v2160
  %v2162 = vpop.f32.mrf.mxu0
  %v2163 = vadd.f32 %v1590, %v2162
  %2164 = vmatmul.bf16.gmra.mxu0 %v985
  %v2165 = vpop.f32.mrf.mxu0
  %v2166 = vadd.f32 %v1593, %v2165
  %v2167 = vpop.f32.mrf.mxu0
  %v2168 = vadd.f32 %v1595, %v2167
  %2169 = vmatmul.bf16.gmra.mxu0 %v987
  %v2170 = vpop.f32.mrf.mxu0
  %v2171 = vadd.f32 %v1598, %v2170
  %v2172 = vpop.f32.mrf.mxu0
  %v2173 = vadd.f32 %v1600, %v2172
  %2174 = vmatmul.bf16.gmra.mxu0 %v989
  %v2175 = vpop.f32.mrf.mxu0
  %v2176 = vadd.f32 %v1603, %v2175
  %v2177 = vpop.f32.mrf.mxu0
  %v2178 = vadd.f32 %v1605, %v2177
  %2179 = vmatmul.bf16.gmra.mxu0 %v991
  %v2180 = vpop.f32.mrf.mxu0
  %v2181 = vadd.f32 %v1608, %v2180
  %v2182 = vpop.f32.mrf.mxu0
  %v2183 = vadd.f32 %v1610, %v2182
  %2184 = vmatmul.bf16.gmra.mxu0 %v993
  %v2185 = vpop.f32.mrf.mxu0
  %v2186 = vadd.f32 %v1613, %v2185
  %v2187 = vpop.f32.mrf.mxu0
  %v2188 = vadd.f32 %v1615, %v2187
  %2189 = vmatmul.bf16.gmra.mxu0 %v995
  %v2190 = vpop.f32.mrf.mxu0
  %v2191 = vadd.f32 %v1618, %v2190
  %v2192 = vpop.f32.mrf.mxu0
  %v2193 = vadd.f32 %v1620, %v2192
  %2194 = vmatmul.bf16.gmra.mxu0 %v997
  %v2195 = vpop.f32.mrf.mxu0
  %v2196 = vadd.f32 %v1623, %v2195
  %v2197 = vpop.f32.mrf.mxu0
  %v2198 = vadd.f32 %v1625, %v2197
  %2199 = vmatmul.bf16.gmra.mxu0 %v999
  %v2200 = vpop.f32.mrf.mxu0
  %v2201 = vadd.f32 %v1628, %v2200
  %v2202 = vpop.f32.mrf.mxu0
  %v2203 = vadd.f32 %v1630, %v2202
  %2204 = vmatmul.bf16.gmra.mxu0 %v1001
  %v2205 = vpop.f32.mrf.mxu0
  %v2206 = vadd.f32 %v1633, %v2205
  %v2207 = vpop.f32.mrf.mxu0
  %v2208 = vadd.f32 %v1635, %v2207
  %2209 = vmatmul.bf16.gmra.mxu0 %v1003
  %v2210 = vpop.f32.mrf.mxu0
  %v2211 = vadd.f32 %v1638, %v2210
  %v2212 = vpop.f32.mrf.mxu0
  %v2213 = vadd.f32 %v1640, %v2212
  %2214 = vmatmul.bf16.gmra.mxu0 %v1005
  %v2215 = vpop.f32.mrf.mxu0
  %v2216 = vadd.f32 %v1643, %v2215
  %v2217 = vpop.f32.mrf.mxu0
  %v2218 = vadd.f32 %v1645, %v2217
  %2219 = vmatmul.bf16.gmra.mxu0 %v1007
  %v2220 = vpop.f32.mrf.mxu0
  %v2221 = vadd.f32 %v1648, %v2220
  %v2222 = vpop.f32.mrf.mxu0
  %v2223 = vadd.f32 %v1650, %v2222
  %2224 = vmatmul.bf16.gmra.mxu0 %v1009
  %v2225 = vpop.f32.mrf.mxu0
  %v2226 = vadd.f32 %v1653, %v2225
  %v2227 = vpop.f32.mrf.mxu0
  %v2228 = vadd.f32 %v1655, %v2227
  %2229 = vmatmul.bf16.gmra.mxu0 %v1011
  %v2230 = vpop.f32.mrf.mxu0
  %v2231 = vadd.f32 %v1658, %v2230
  %v2232 = vpop.f32.mrf.mxu0
  %v2233 = vadd.f32 %v1660, %v2232
  %2234 = vmatmul.bf16.gmra.mxu0 %v1013
  %v2235 = vpop.f32.mrf.mxu0
  %v2236 = vadd.f32 %v1663, %v2235
  %v2237 = vpop.f32.mrf.mxu0
  %v2238 = vadd.f32 %v1665, %v2237
  %2239 = vmatmul.bf16.gmra.mxu0 %v1015
  %v2240 = vpop.f32.mrf.mxu0
  %v2241 = vadd.f32 %v1668, %v2240
  %v2242 = vpop.f32.mrf.mxu0
  %v2243 = vadd.f32 %v1670, %v2242
  %2244 = vmatmul.bf16.gmra.mxu0 %v1017
  %v2245 = vpop.f32.mrf.mxu0
  %v2246 = vadd.f32 %v1673, %v2245
  %v2247 = vpop.f32.mrf.mxu0
  %v2248 = vadd.f32 %v1675, %v2247
  %2249 = vmatmul.bf16.gmra.mxu0 %v1019
  %v2250 = vpop.f32.mrf.mxu0
  %v2251 = vadd.f32 %v1678, %v2250
  %v2252 = vpop.f32.mrf.mxu0
  %v2253 = vadd.f32 %v1680, %v2252
  %2254 = vmatmul.bf16.gmra.mxu0 %v1021
  %v2255 = vpop.f32.mrf.mxu0
  %v2256 = vadd.f32 %v1683, %v2255
  %v2257 = vpop.f32.mrf.mxu0
  %v2258 = vadd.f32 %v1685, %v2257
  %2259 = vmatmul.bf16.gmra.mxu0 %v1023
  %v2260 = vpop.f32.mrf.mxu0
  %v2261 = vadd.f32 %v1688, %v2260
  %v2262 = vpop.f32.mrf.mxu0
  %v2263 = vadd.f32 %v1690, %v2262
  %2264 = vmatmul.bf16.gmra.mxu0 %v1025
  %v2265 = vpop.f32.mrf.mxu0
  %v2266 = vadd.f32 %v1693, %v2265
  %v2267 = vpop.f32.mrf.mxu0
  %v2268 = vadd.f32 %v1695, %v2267
  %2269 = vmatmul.bf16.gmra.mxu0 %v1027
  %v2270 = vpop.f32.mrf.mxu0
  %v2271 = vadd.f32 %v1698, %v2270
  %v2272 = vpop.f32.mrf.mxu0
  %v2273 = vadd.f32 %v1700, %v2272
  %2274 = vmatmul.bf16.gmra.mxu0 %v1029
  %v2275 = vpop.f32.mrf.mxu0
  %v2276 = vadd.f32 %v1703, %v2275
  %v2277 = vpop.f32.mrf.mxu0
  %v2278 = vadd.f32 %v1705, %v2277
  %2279 = vmatmul.bf16.gmra.mxu0 %v1031
  %v2280 = vpop.f32.mrf.mxu0
  %v2281 = vadd.f32 %v1708, %v2280
  %v2282 = vpop.f32.mrf.mxu0
  %v2283 = vadd.f32 %v1710, %v2282
  %2284 = vmatmul.bf16.gmra.mxu0 %v1033
  %v2285 = vpop.f32.mrf.mxu0
  %v2286 = vadd.f32 %v1713, %v2285
  %v2287 = vpop.f32.mrf.mxu0
  %v2288 = vadd.f32 %v1715, %v2287
  %2289 = vmatmul.bf16.gmra.mxu0 %v1035
  %v2290 = vpop.f32.mrf.mxu0
  %v2291 = vadd.f32 %v1718, %v2290
  %v2292 = vpop.f32.mrf.mxu0
  %v2293 = vadd.f32 %v1720, %v2292
  %2294 = vmatmul.bf16.gmra.mxu0 %v1037
  %v2295 = vpop.f32.mrf.mxu0
  %v2296 = vadd.f32 %v1723, %v2295
  %v2297 = vpop.f32.mrf.mxu0
  %v2298 = vadd.f32 %v1725, %v2297
  %2299 = vmatmul.bf16.gmra.mxu0 %v1039
  %v2300 = vpop.f32.mrf.mxu0
  %v2301 = vadd.f32 %v1728, %v2300
  %v2302 = vpop.f32.mrf.mxu0
  %v2303 = vadd.f32 %v1730, %v2302
  %2304 = vmatmul.bf16.gmra.mxu0 %v1041
  %v2305 = vpop.f32.mrf.mxu0
  %v2306 = vadd.f32 %v1733, %v2305
  %v2307 = vpop.f32.mrf.mxu0
  %v2308 = vadd.f32 %v1735, %v2307
  %2309 = vmatmul.bf16.gmra.mxu0 %v1043
  %v2310 = vpop.f32.mrf.mxu0
  %v2311 = vadd.f32 %v1738, %v2310
  %v2312 = vpop.f32.mrf.mxu0
  %v2313 = vadd.f32 %v1740, %v2312
  %2314 = vmatmul.bf16.gmra.mxu0 %v1045
  %v2315 = vpop.f32.mrf.mxu0
  %v2316 = vadd.f32 %v1743, %v2315
  %v2317 = vpop.f32.mrf.mxu0
  %v2318 = vadd.f32 %v1745, %v2317
  %2319 = vmatmul.bf16.gmra.mxu0 %v1047
  %v2320 = vpop.f32.mrf.mxu0
  %v2321 = vadd.f32 %v1748, %v2320
  %v2322 = vpop.f32.mrf.mxu0
  %v2323 = vadd.f32 %v1750, %v2322
  %2324 = vmatmul.bf16.gmra.mxu0 %v1049
  %v2325 = vpop.f32.mrf.mxu0
  %v2326 = vadd.f32 %v1753, %v2325
  %v2327 = vpop.f32.mrf.mxu0
  %v2328 = vadd.f32 %v1755, %v2327
  %2329 = vmatmul.bf16.gmra.mxu0 %v1051
  %v2330 = vpop.f32.mrf.mxu0
  %v2331 = vadd.f32 %v1758, %v2330
  %v2332 = vpop.f32.mrf.mxu0
  %v2333 = vadd.f32 %v1760, %v2332
  %2334 = vmatmul.bf16.gmra.mxu0 %v1053
  %v2335 = vpop.f32.mrf.mxu0
  %v2336 = vadd.f32 %v1763, %v2335
  %v2337 = vpop.f32.mrf.mxu0
  %v2338 = vadd.f32 %v1765, %v2337
  %2339 = vmatmul.bf16.gmra.mxu0 %v1055
  %v2340 = vpop.f32.mrf.mxu0
  %v2341 = vadd.f32 %v1768, %v2340
  %v2342 = vpop.f32.mrf.mxu0
  %v2343 = vadd.f32 %v1770, %v2342
  %2344 = vmatmul.bf16.gmra.mxu0 %v1057
  %v2345 = vpop.f32.mrf.mxu0
  %v2346 = vadd.f32 %v1773, %v2345
  %v2347 = vpop.f32.mrf.mxu0
  %v2348 = vadd.f32 %v1775, %v2347
  %2349 = vmatmul.bf16.gmra.mxu0 %v1059
  %v2350 = vpop.f32.mrf.mxu0
  %v2351 = vadd.f32 %v1778, %v2350
  %v2352 = vpop.f32.mrf.mxu0
  %v2353 = vadd.f32 %v1780, %v2352
  %2354 = vmatmul.bf16.gmra.mxu0 %v1061
  %v2355 = vpop.f32.mrf.mxu0
  %v2356 = vadd.f32 %v1783, %v2355
  %v2357 = vpop.f32.mrf.mxu0
  %v2358 = vadd.f32 %v1785, %v2357
  %2359 = vmatmul.bf16.gmra.mxu0 %v1063
  %v2360 = vpop.f32.mrf.mxu0
  %v2361 = vadd.f32 %v1788, %v2360
  %v2362 = vpop.f32.mrf.mxu0
  %v2363 = vadd.f32 %v1790, %v2362
  %2364 = vmatmul.bf16.gmra.mxu0 %v1065
  %v2365 = vpop.f32.mrf.mxu0
  %v2366 = vadd.f32 %v1793, %v2365
  %v2367 = vpop.f32.mrf.mxu0
  %v2368 = vadd.f32 %v1795, %v2367
  %2369 = vmatmul.bf16.gmra.mxu0 %v1067
  %v2370 = vpop.f32.mrf.mxu0
  %v2371 = vadd.f32 %v1798, %v2370
  %v2372 = vpop.f32.mrf.mxu0
  %v2373 = vadd.f32 %v1800, %v2372
  %2374 = vmatmul.bf16.gmra.mxu0 %v1069
  %v2375 = vpop.f32.mrf.mxu0
  %v2376 = vadd.f32 %v1803, %v2375
  %v2377 = vpop.f32.mrf.mxu0
  %v2378 = vadd.f32 %v1805, %v2377
  %2379 = vmatmul.bf16.gmra.mxu0 %v1071
  %v2380 = vpop.f32.mrf.mxu0
  %v2381 = vadd.f32 %v1808, %v2380
  %v2382 = vpop.f32.mrf.mxu0
  %v2383 = vadd.f32 %v1810, %v2382
  %2384 = vmatmul.bf16.gmra.mxu0 %v1073
  %v2385 = vpop.f32.mrf.mxu0
  %v2386 = vadd.f32 %v1813, %v2385
  %v2387 = vpop.f32.mrf.mxu0
  %v2388 = vadd.f32 %v1815, %v2387
  %2389 = vmatmul.bf16.gmra.mxu0 %v1075
  %v2390 = vpop.f32.mrf.mxu0
  %v2391 = vadd.f32 %v1818, %v2390
  %v2392 = vpop.f32.mrf.mxu0
  %v2393 = vadd.f32 %v1820, %v2392
  %2394 = vmatmul.bf16.gmra.mxu0 %v1077
  %v2395 = vpop.f32.mrf.mxu0
  %v2396 = vadd.f32 %v1823, %v2395
  %v2397 = vpop.f32.mrf.mxu0
  %v2398 = vadd.f32 %v1825, %v2397
  %2399 = vmatmul.bf16.gmra.mxu0 %v1079
  %v2400 = vpop.f32.mrf.mxu0
  %v2401 = vadd.f32 %v1828, %v2400
  %v2402 = vpop.f32.mrf.mxu0
  %v2403 = vadd.f32 %v1830, %v2402
  %2404 = vmatmul.bf16.gmra.mxu0 %v1081
  %v2405 = vpop.f32.mrf.mxu0
  %v2406 = vadd.f32 %v1833, %v2405
  %v2407 = vpop.f32.mrf.mxu0
  %v2408 = vadd.f32 %v1835, %v2407
  %2409 = vmatmul.bf16.gmra.mxu0 %v1083
  %v2410 = vpop.f32.mrf.mxu0
  %v2411 = vadd.f32 %v1838, %v2410
  %v2412 = vpop.f32.mrf.mxu0
  %v2413 = vadd.f32 %v1840, %v2412
  %2414 = vmatmul.bf16.gmra.mxu0 %v1085
  %v2415 = vpop.f32.mrf.mxu0
  %v2416 = vadd.f32 %v1843, %v2415
  %v2417 = vpop.f32.mrf.mxu0
  %v2418 = vadd.f32 %v1845, %v2417
  %2419 = vmatmul.bf16.gmra.mxu0 %v1087
  %v2420 = vpop.f32.mrf.mxu0
  %v2421 = vadd.f32 %v1848, %v2420
  %v2422 = vpop.f32.mrf.mxu0
  %v2423 = vadd.f32 %v1850, %v2422
  %2424 = vmatmul.bf16.gmra.mxu0 %v1089
  %v2425 = vpop.f32.mrf.mxu0
  %v2426 = vadd.f32 %v1853, %v2425
  %v2427 = vpop.f32.mrf.mxu0
  %v2428 = vadd.f32 %v1855, %v2427
  %2429 = vmatmul.bf16.gmra.mxu0 %v1091
  %v2430 = vpop.f32.mrf.mxu0
  %v2431 = vadd.f32 %v1858, %v2430
  %v2432 = vpop.f32.mrf.mxu0
  %v2433 = vadd.f32 %v1860, %v2432
  %2434 = vmatmul.bf16.gmra.mxu0 %v1093
  %v2435 = vpop.f32.mrf.mxu0
  %v2436 = vadd.f32 %v1863, %v2435
  %v2437 = vpop.f32.mrf.mxu0
  %v2438 = vadd.f32 %v1865, %v2437
  %2439 = vmatmul.bf16.gmra.mxu0 %v1095
  %v2440 = vpop.f32.mrf.mxu0
  %v2441 = vadd.f32 %v1868, %v2440
  %v2442 = vpop.f32.mrf.mxu0
  %v2443 = vadd.f32 %v1870, %v2442
  %2444 = vmatmul.bf16.gmra.mxu0 %v1097
  %v2445 = vpop.f32.mrf.mxu0
  %v2446 = vadd.f32 %v1873, %v2445
  %v2447 = vpop.f32.mrf.mxu0
  %v2448 = vadd.f32 %v1875, %v2447
  %2449 = vmatmul.bf16.gmra.mxu0 %v1099
  %v2450 = vpop.f32.mrf.mxu0
  %v2451 = vadd.f32 %v1878, %v2450
  %v2452 = vpop.f32.mrf.mxu0
  %v2453 = vadd.f32 %v1880, %v2452
  %2454 = vmatmul.bf16.gmra.mxu0 %v1101
  %v2455 = vpop.f32.mrf.mxu0
  %v2456 = vadd.f32 %v1883, %v2455
  %v2457 = vpop.f32.mrf.mxu0
  %v2458 = vadd.f32 %v1885, %v2457
  %2459 = vmatmul.bf16.gmra.mxu0 %v1103
  %v2460 = vpop.f32.mrf.mxu0
  %v2461 = vadd.f32 %v1888, %v2460
  %v2462 = vpop.f32.mrf.mxu0
  %v2463 = vadd.f32 %v1890, %v2462
  %2464 = vmatmul.bf16.gmra.mxu0 %v1105
  %v2465 = vpop.f32.mrf.mxu0
  %v2466 = vadd.f32 %v1893, %v2465
  %v2467 = vpop.f32.mrf.mxu0
  %v2468 = vadd.f32 %v1895, %v2467
  %2469 = vmatmul.bf16.gmra.mxu0 %v1107
  %v2470 = vpop.f32.mrf.mxu0
  %v2471 = vadd.f32 %v1898, %v2470
  %v2472 = vpop.f32.mrf.mxu0
  %v2473 = vadd.f32 %v1900, %v2472
  %2474 = vmatmul.bf16.gmra.mxu0 %v1109
  %v2475 = vpop.f32.mrf.mxu0
  %v2476 = vadd.f32 %v1903, %v2475
  %v2477 = vpop.f32.mrf.mxu0
  %v2478 = vadd.f32 %v1905, %v2477
  %2479 = vmatmul.bf16.gmra.mxu0 %v1111
  %v2480 = vpop.f32.mrf.mxu0
  %v2481 = vadd.f32 %v1908, %v2480
  %v2482 = vpop.f32.mrf.mxu0
  %v2483 = vadd.f32 %v1910, %v2482
  %2484 = vmatmul.bf16.gmra.mxu0 %v1113
  %v2485 = vpop.f32.mrf.mxu0
  %v2486 = vadd.f32 %v1913, %v2485
  %v2487 = vpop.f32.mrf.mxu0
  %v2488 = vadd.f32 %v1915, %v2487
  %2489 = vmatmul.bf16.gmra.mxu0 %v1115
  %v2490 = vpop.f32.mrf.mxu0
  %v2491 = vadd.f32 %v1918, %v2490
  %v2492 = vpop.f32.mrf.mxu0
  %v2493 = vadd.f32 %v1920, %v2492
  %2494 = vmatmul.bf16.gmra.mxu0 %v1117
  %v2495 = vpop.f32.mrf.mxu0
  %v2496 = vadd.f32 %v1923, %v2495
  %v2497 = vpop.f32.mrf.mxu0
  %v2498 = vadd.f32 %v1925, %v2497
  %2499 = vmatmul.bf16.gmra.mxu0 %v1119
  %v2500 = vpop.f32.mrf.mxu0
  %v2501 = vadd.f32 %v1928, %v2500
  %v2502 = vpop.f32.mrf.mxu0
  %v2503 = vadd.f32 %v1930, %v2502
  %2504 = vmatmul.bf16.gmra.mxu0 %v1121
  %v2505 = vpop.f32.mrf.mxu0
  %v2506 = vadd.f32 %v1933, %v2505
  %v2507 = vpop.f32.mrf.mxu0
  %v2508 = vadd.f32 %v1935, %v2507
  %2509 = vmatmul.bf16.gmra.mxu0 %v1123
  %v2510 = vpop.f32.mrf.mxu0
  %v2511 = vadd.f32 %v1938, %v2510
  %v2512 = vpop.f32.mrf.mxu0
  %v2513 = vadd.f32 %v1940, %v2512
  %2514 = vmatmul.bf16.gmra.mxu0 %v1125
  %v2515 = vpop.f32.mrf.mxu0
  %v2516 = vadd.f32 %v1943, %v2515
  %v2517 = vpop.f32.mrf.mxu0
  %v2518 = vadd.f32 %v1945, %v2517
  %2519 = vmatmul.bf16.gmra.mxu0 %v1127
  %v2520 = vpop.f32.mrf.mxu0
  %v2521 = vadd.f32 %v1948, %v2520
  %v2522 = vpop.f32.mrf.mxu0
  %v2523 = vadd.f32 %v1950, %v2522
  %2524 = vmatmul.bf16.gmra.mxu0 %v1129
  %v2525 = vpop.f32.mrf.mxu0
  %v2526 = vadd.f32 %v1953, %v2525
  %v2527 = vpop.f32.mrf.mxu0
  %v2528 = vadd.f32 %v1955, %v2527
  %2529 = vmatmul.bf16.gmra.mxu0 %v1131
  %v2530 = vpop.f32.mrf.mxu0
  %v2531 = vadd.f32 %v1958, %v2530
  %v2532 = vpop.f32.mrf.mxu0
  %v2533 = vadd.f32 %v1960, %v2532
  %2534 = vmatmul.bf16.gmra.mxu0 %v1133
  %v2535 = vpop.f32.mrf.mxu0
  %v2536 = vadd.f32 %v1963, %v2535
  %v2537 = vpop.f32.mrf.mxu0
  %v2538 = vadd.f32 %v1965, %v2537
  %2539 = vmatmul.bf16.gmra.mxu0 %v1135
  %v2540 = vpop.f32.mrf.mxu0
  %v2541 = vadd.f32 %v1968, %v2540
  %v2542 = vpop.f32.mrf.mxu0
  %v2543 = vadd.f32 %v1970, %v2542
  %2544 = vmatmul.bf16.gmra.mxu0 %v1137
  %v2545 = vpop.f32.mrf.mxu0
  %v2546 = vadd.f32 %v1973, %v2545
  %v2547 = vpop.f32.mrf.mxu0
  %v2548 = vadd.f32 %v1975, %v2547
  %2549 = vmatmul.bf16.gmra.mxu0 %v1139
  %v2550 = vpop.f32.mrf.mxu0
  %v2551 = vadd.f32 %v1978, %v2550
  %v2552 = vpop.f32.mrf.mxu0
  %v2553 = vadd.f32 %v1980, %v2552
  %2554 = vmatmul.bf16.gmra.mxu0 %v1141
  %v2555 = vpop.f32.mrf.mxu0
  %v2556 = vadd.f32 %v1983, %v2555
  %v2557 = vpop.f32.mrf.mxu0
  %v2558 = vadd.f32 %v1985, %v2557
  %2559 = vmatmul.bf16.gmra.mxu0 %v1143
  %v2560 = vpop.f32.mrf.mxu0
  %v2561 = vadd.f32 %v1988, %v2560
  %v2562 = vpop.f32.mrf.mxu0
  %v2563 = vadd.f32 %v1990, %v2562
  %2564 = vmatmul.bf16.gmra.mxu0 %v1145
  %v2565 = vpop.f32.mrf.mxu0
  %v2566 = vadd.f32 %v1993, %v2565
  %v2567 = vpop.f32.mrf.mxu0
  %v2568 = vadd.f32 %v1995, %v2567
  %2569 = vmatmul.bf16.gmra.mxu0 %v1147
  %v2570 = vpop.f32.mrf.mxu0
  %v2571 = vadd.f32 %v1998, %v2570
  %v2572 = vpop.f32.mrf.mxu0
  %v2573 = vadd.f32 %v2000, %v2572
  %2574 = vmatmul.bf16.gmra.mxu0 %v1149
  %v2575 = vpop.f32.mrf.mxu0
  %v2576 = vadd.f32 %v2003, %v2575
  %v2577 = vpop.f32.mrf.mxu0
  %v2578 = vadd.f32 %v2005, %v2577
  %2579 = vmatmul.bf16.gmra.mxu0 %v1151
  %v2580 = vpop.f32.mrf.mxu0
  %v2581 = vadd.f32 %v2008, %v2580
  %v2582 = vpop.f32.mrf.mxu0
  %v2583 = vadd.f32 %v2010, %v2582
  %2584 = vmatmul.bf16.gmra.mxu0 %v1153
  %v2585 = vpop.f32.mrf.mxu0
  %v2586 = vadd.f32 %v2013, %v2585
  %v2587 = vpop.f32.mrf.mxu0
  %v2588 = vadd.f32 %v2015, %v2587
  %2589 = vmatmul.bf16.gmra.mxu0 %v1155
  %v2590 = vpop.f32.mrf.mxu0
  %v2591 = vadd.f32 %v2018, %v2590
  %v2592 = vpop.f32.mrf.mxu0
  %v2593 = vadd.f32 %v2020, %v2592
  %2594 = vmatmul.bf16.gmra.mxu0 %v1157
  %v2595 = vpop.f32.mrf.mxu0
  %v2596 = vadd.f32 %v2023, %v2595
  %v2597 = vpop.f32.mrf.mxu0
  %v2598 = vadd.f32 %v2025, %v2597
  %2599 = vmatmul.bf16.gmra.mxu0 %v1159
  %v2600 = vpop.f32.mrf.mxu0
  %v2601 = vadd.f32 %v2028, %v2600
  %v2602 = vpop.f32.mrf.mxu0
  %v2603 = vadd.f32 %v2030, %v2602
  %2604 = vmatmul.bf16.gmra.mxu0 %v1161
  %v2605 = vpop.f32.mrf.mxu0
  %v2606 = vadd.f32 %v2033, %v2605
  %v2607 = vpop.f32.mrf.mxu0
  %v2608 = vadd.f32 %v2035, %v2607
  %2609 = vmatmul.bf16.gmra.mxu0 %v1163
  %v2610 = vpop.f32.mrf.mxu0
  %v2611 = vadd.f32 %v2038, %v2610
  %v2612 = vpop.f32.mrf.mxu0
  %v2613 = vadd.f32 %v2040, %v2612
  %2614 = vmatmul.bf16.gmra.mxu0 %v1165
  %v2615 = vpop.f32.mrf.mxu0
  %v2616 = vadd.f32 %v2043, %v2615
  %v2617 = vpop.f32.mrf.mxu0
  %v2618 = vadd.f32 %v2045, %v2617
  %2619 = vmatmul.bf16.gmra.mxu0 %v1167
  %v2620 = vpop.f32.mrf.mxu0
  %v2621 = vadd.f32 %v2048, %v2620
  %v2622 = vpop.f32.mrf.mxu0
  %v2623 = vadd.f32 %v2050, %v2622
  %2624 = vmatmul.bf16.gmra.mxu0 %v1169
  %v2625 = vpop.f32.mrf.mxu0
  %v2626 = vadd.f32 %v2053, %v2625
  %v2627 = vpop.f32.mrf.mxu0
  %v2628 = vadd.f32 %v2055, %v2627
  %2629 = vmatmul.bf16.gmra.mxu0 %v1171
  %v2630 = vpop.f32.mrf.mxu0
  %v2631 = vadd.f32 %v2058, %v2630
  %v2632 = vpop.f32.mrf.mxu0
  %v2633 = vadd.f32 %v2060, %v2632
  %2634 = vmatmul.bf16.gmra.mxu0 %v1173
  %v2635 = vpop.f32.mrf.mxu0
  %v2636 = vadd.f32 %v2063, %v2635
  %v2637 = vpop.f32.mrf.mxu0
  %v2638 = vadd.f32 %v2065, %v2637
  %2639 = vmatmul.bf16.gmra.mxu0 %v1175
  %v2640 = vpop.f32.mrf.mxu0
  %v2641 = vadd.f32 %v2068, %v2640
  %v2642 = vpop.f32.mrf.mxu0
  %2643 = vdwg.mxu0
  %v2644 = vmax.f32 %v2081, 0.0
  %v2645 = vmax.f32 %v2083, 0.0
  %v2646 = vmax.f32 %v2086, 0.0
  %v2647 = vmax.f32 %v2088, 0.0
  %v2648 = vmax.f32 %v2091, 0.0
  %v2649 = vmax.f32 %v2093, 0.0
  %v2650 = vmax.f32 %v2096, 0.0
  %v2651 = vmax.f32 %v2098, 0.0
  %v2652 = vmax.f32 %v2101, 0.0
  %v2653 = vmax.f32 %v2103, 0.0
  %v2654 = vmax.f32 %v2106, 0.0
  %v2655 = vmax.f32 %v2108, 0.0
  %v2656 = vmax.f32 %v2111, 0.0
  %v2657 = vmax.f32 %v2113, 0.0
  %v2658 = vmax.f32 %v2116, 0.0
  %v2659 = vmax.f32 %v2118, 0.0
  %v2660 = vmax.f32 %v2121, 0.0
  %v2661 = vmax.f32 %v2123, 0.0
  %v2662 = vmax.f32 %v2126, 0.0
  %v2663 = vmax.f32 %v2128, 0.0
  %v2664 = vmax.f32 %v2131, 0.0
  %v2665 = vmax.f32 %v2133, 0.0
  %v2666 = vmax.f32 %v2136, 0.0
  %v2667 = vmax.f32 %v2138, 0.0
  %v2668 = vmax.f32 %v2141, 0.0
  %v2669 = vmax.f32 %v2143, 0.0
  %v2670 = vmax.f32 %v2146, 0.0
  %v2671 = vmax.f32 %v2148, 0.0
  %v2672 = vmax.f32 %v2151, 0.0
  %v2673 = vmax.f32 %v2153, 0.0
  %v2674 = vmax.f32 %v2156, 0.0
  %v2675 = vmax.f32 %v2158, 0.0
  %v2676 = vmax.f32 %v2161, 0.0
  %v2677 = vmax.f32 %v2163, 0.0
  %v2678 = vmax.f32 %v2166, 0.0
  %v2679 = vmax.f32 %v2168, 0.0
  %v2680 = vmax.f32 %v2171, 0.0
  %v2681 = vmax.f32 %v2173, 0.0
  %v2682 = vmax.f32 %v2176, 0.0
  %v2683 = vmax.f32 %v2178, 0.0
  %v2684 = vmax.f32 %v2181, 0.0
  %v2685 = vmax.f32 %v2183, 0.0
  %v2686 = vmax.f32 %v2186, 0.0
  %v2687 = vmax.f32 %v2188, 0.0
  %v2688 = vmax.f32 %v2191, 0.0
  %v2689 = vmax.f32 %v2193, 0.0
  %v2690 = vmax.f32 %v2196, 0.0
  %v2691 = vmax.f32 %v2198, 0.0
  %v2692 = vmax.f32 %v2201, 0.0
  %v2693 = vmax.f32 %v2203, 0.0
  %v2694 = vmax.f32 %v2206, 0.0
  %v2695 = vmax.f32 %v2208, 0.0
  %v2696 = vmax.f32 %v2211, 0.0
  %v2697 = vmax.f32 %v2213, 0.0
  %v2698 = vmax.f32 %v2216, 0.0
  %v2699 = vmax.f32 %v2218, 0.0
  %v2700 = vmax.f32 %v2221, 0.0
  %v2701 = vmax.f32 %v2223, 0.0
  %v2702 = vmax.f32 %v2226, 0.0
  %v2703 = vmax.f32 %v2228, 0.0
  %v2704 = vmax.f32 %v2231, 0.0
  %v2705 = vmax.f32 %v2233, 0.0
  %v2706 = vmax.f32 %v2236, 0.0
  %v2707 = vmax.f32 %v2238, 0.0
  %v2708 = vmax.f32 %v2241, 0.0
  %v2709 = vmax.f32 %v2243, 0.0
  %v2710 = vmax.f32 %v2246, 0.0
  %v2711 = vmax.f32 %v2248, 0.0
  %v2712 = vmax.f32 %v2251, 0.0
  %v2713 = vmax.f32 %v2253, 0.0
  %v2714 = vmax.f32 %v2256, 0.0
  %v2715 = vmax.f32 %v2258, 0.0
  %v2716 = vmax.f32 %v2261, 0.0
  %v2717 = vmax.f32 %v2263, 0.0
  %v2718 = vmax.f32 %v2266, 0.0
  %v2719 = vmax.f32 %v2268, 0.0
  %v2720 = vmax.f32 %v2271, 0.0
  %v2721 = vmax.f32 %v2273, 0.0
  %v2722 = vmax.f32 %v2276, 0.0
  %v2723 = vmax.f32 %v2278, 0.0
  %v2724 = vmax.f32 %v2281, 0.0
  %v2725 = vmax.f32 %v2283, 0.0
  %v2726 = vmax.f32 %v2286, 0.0
  %v2727 = vmax.f32 %v2288, 0.0
  %v2728 = vmax.f32 %v2291, 0.0
  %v2729 = vmax.f32 %v2293, 0.0
  %v2730 = vmax.f32 %v2296, 0.0
  %v2731 = vmax.f32 %v2298, 0.0
  %v2732 = vmax.f32 %v2301, 0.0
  %v2733 = vmax.f32 %v2303, 0.0
  %v2734 = vmax.f32 %v2306, 0.0
  %v2735 = vmax.f32 %v2308, 0.0
  %v2736 = vmax.f32 %v2311, 0.0
  %v2737 = vmax.f32 %v2313, 0.0
  %v2738 = vmax.f32 %v2316, 0.0
  %v2739 = vmax.f32 %v2318, 0.0
  %v2740 = vmax.f32 %v2321, 0.0
  %v2741 = vmax.f32 %v2323, 0.0
  %v2742 = vmax.f32 %v2326, 0.0
  %v2743 = vmax.f32 %v2328, 0.0
  %v2744 = vmax.f32 %v2331, 0.0
  %v2745 = vmax.f32 %v2333, 0.0
  %v2746 = vmax.f32 %v2336, 0.0
  %v2747 = vmax.f32 %v2338, 0.0
  %v2748 = vmax.f32 %v2341, 0.0
  %v2749 = vmax.f32 %v2343, 0.0
  %v2750 = vmax.f32 %v2346, 0.0
  %v2751 = vmax.f32 %v2348, 0.0
  %v2752 = vmax.f32 %v2351, 0.0
  %v2753 = vmax.f32 %v2353, 0.0
  %v2754 = vmax.f32 %v2356, 0.0
  %v2755 = vmax.f32 %v2358, 0.0
  %v2756 = vmax.f32 %v2361, 0.0
  %v2757 = vmax.f32 %v2363, 0.0
  %v2758 = vmax.f32 %v2366, 0.0
  %v2759 = vmax.f32 %v2368, 0.0
  %v2760 = vmax.f32 %v2371, 0.0
  %v2761 = vmax.f32 %v2373, 0.0
  %v2762 = vmax.f32 %v2376, 0.0
  %v2763 = vmax.f32 %v2378, 0.0
  %v2764 = vmax.f32 %v2381, 0.0
  %v2765 = vmax.f32 %v2383, 0.0
  %v2766 = vmax.f32 %v2386, 0.0
  %v2767 = vmax.f32 %v2388, 0.0
  %v2768 = vmax.f32 %v2391, 0.0
  %v2769 = vmax.f32 %v2393, 0.0
  %v2770 = vmax.f32 %v2396, 0.0
  %v2771 = vmax.f32 %v2398, 0.0
  %v2772 = vmax.f32 %v2401, 0.0
  %v2773 = vmax.f32 %v2403, 0.0
  %v2774 = vmax.f32 %v2406, 0.0
  %v2775 = vmax.f32 %v2408, 0.0
  %v2776 = vmax.f32 %v2411, 0.0
  %v2777 = vmax.f32 %v2413, 0.0
  %v2778 = vmax.f32 %v2416, 0.0
  %v2779 = vmax.f32 %v2418, 0.0
  %v2780 = vmax.f32 %v2421, 0.0
  %v2781 = vmax.f32 %v2423, 0.0
  %v2782 = vmax.f32 %v2426, 0.0
  %v2783 = vmax.f32 %v2428, 0.0
  %v2784 = vmax.f32 %v2431, 0.0
  %v2785 = vmax.f32 %v2433, 0.0
  %v2786 = vmax.f32 %v2436, 0.0
  %v2787 = vmax.f32 %v2438, 0.0
  %v2788 = vmax.f32 %v2441, 0.0
  %v2789 = vmax.f32 %v2443, 0.0
  %v2790 = vmax.f32 %v2446, 0.0
  %v2791 = vmax.f32 %v2448, 0.0
  %v2792 = vmax.f32 %v2451, 0.0
  %v2793 = vmax.f32 %v2453, 0.0
  %v2794 = vmax.f32 %v2456, 0.0
  %v2795 = vmax.f32 %v2458, 0.0
  %v2796 = vmax.f32 %v2461, 0.0
  %v2797 = vmax.f32 %v2463, 0.0
  %v2798 = vmax.f32 %v2466, 0.0
  %v2799 = vmax.f32 %v2468, 0.0
  %v2800 = vmax.f32 %v2471, 0.0
  %v2801 = vmax.f32 %v2473, 0.0
  %v2802 = vmax.f32 %v2476, 0.0
  %v2803 = vmax.f32 %v2478, 0.0
  %v2804 = vmax.f32 %v2481, 0.0
  %v2805 = vmax.f32 %v2483, 0.0
  %v2806 = vmax.f32 %v2486, 0.0
  %v2807 = vmax.f32 %v2488, 0.0
  %v2808 = vmax.f32 %v2491, 0.0
  %v2809 = vmax.f32 %v2493, 0.0
  %v2810 = vmax.f32 %v2496, 0.0
  %v2811 = vmax.f32 %v2498, 0.0
  %v2812 = vmax.f32 %v2501, 0.0
  %v2813 = vmax.f32 %v2503, 0.0
  %v2814 = vmax.f32 %v2506, 0.0
  %v2815 = vmax.f32 %v2508, 0.0
  %v2816 = vmax.f32 %v2511, 0.0
  %v2817 = vmax.f32 %v2513, 0.0
  %v2818 = vmax.f32 %v2516, 0.0
  %v2819 = vmax.f32 %v2518, 0.0
  %v2820 = vmax.f32 %v2521, 0.0
  %v2821 = vmax.f32 %v2523, 0.0
  %v2822 = vmax.f32 %v2526, 0.0
  %v2823 = vmax.f32 %v2528, 0.0
  %v2824 = vmax.f32 %v2531, 0.0
  %v2825 = vmax.f32 %v2533, 0.0
  %v2826 = vmax.f32 %v2536, 0.0
  %v2827 = vmax.f32 %v2538, 0.0
  %v2828 = vmax.f32 %v2541, 0.0
  %v2829 = vmax.f32 %v2543, 0.0
  %v2830 = vmax.f32 %v2546, 0.0
  %v2831 = vmax.f32 %v2548, 0.0
  %v2832 = vmax.f32 %v2551, 0.0
  %v2833 = vmax.f32 %v2553, 0.0
  %v2834 = vmax.f32 %v2556, 0.0
  %v2835 = vmax.f32 %v2558, 0.0
  %v2836 = vmax.f32 %v2561, 0.0
  %v2837 = vmax.f32 %v2563, 0.0
  %v2838 = vmax.f32 %v2566, 0.0
  %v2839 = vmax.f32 %v2568, 0.0
  %v2840 = vmax.f32 %v2571, 0.0
  %v2841 = vmax.f32 %v2573, 0.0
  %v2842 = vmax.f32 %v2576, 0.0
  %v2843 = vmax.f32 %v2578, 0.0
  %v2844 = vmax.f32 %v2581, 0.0
  %v2845 = vmax.f32 %v2583, 0.0
  %v2846 = vmax.f32 %v2586, 0.0
  %v2847 = vmax.f32 %v2588, 0.0
  %v2848 = vmax.f32 %v2591, 0.0
  %v2849 = vmax.f32 %v2593, 0.0
  %v2850 = vmax.f32 %v2596, 0.0
  %v2851 = vmax.f32 %v2598, 0.0
  %v2852 = vmax.f32 %v2601, 0.0
  %v2853 = vmax.f32 %v2603, 0.0
  %v2854 = vmax.f32 %v2606, 0.0
  %v2855 = vmax.f32 %v2608, 0.0
  %v2856 = vmax.f32 %v2611, 0.0
  %v2857 = vmax.f32 %v2613, 0.0
  %v2858 = vmax.f32 %v2616, 0.0
  %v2859 = vmax.f32 %v2618, 0.0
  %v2860 = vmax.f32 %v2621, 0.0
  %v2861 = vmax.f32 %v2623, 0.0
  %v2862 = vmax.f32 %v2626, 0.0
  %v2863 = vmax.f32 %v2628, 0.0
  %v2864 = vmax.f32 %v2631, 0.0
  %v2865 = vmax.f32 %v2633, 0.0
  %v2866 = vmax.f32 %v2636, 0.0
  %v2867 = vmax.f32 %v2638, 0.0
  %v2868 = vmax.f32 %v2641, 0.0
  %v2869 = vpack.c.bf16 %v2644, %v2644
  %v2870 = vpack.c.bf16 %v2645, %v2645
  %v2871 = vpack.c.bf16 %v2646, %v2646
  %v2872 = vpack.c.bf16 %v2647, %v2647
  %v2873 = vpack.c.bf16 %v2648, %v2648
  %v2874 = vpack.c.bf16 %v2649, %v2649
  %v2875 = vpack.c.bf16 %v2650, %v2650
  %v2876 = vpack.c.bf16 %v2651, %v2651
  %v2877 = vpack.c.bf16 %v2652, %v2652
  %v2878 = vpack.c.bf16 %v2653, %v2653
  %v2879 = vpack.c.bf16 %v2654, %v2654
  %v2880 = vpack.c.bf16 %v2655, %v2655
  %v2881 = vpack.c.bf16 %v2656, %v2656
  %v2882 = vpack.c.bf16 %v2657, %v2657
  %v2883 = vpack.c.bf16 %v2658, %v2658
  %v2884 = vpack.c.bf16 %v2659, %v2659
  %v2885 = vpack.c.bf16 %v2660, %v2660
  %v2886 = vpack.c.bf16 %v2661, %v2661
  %v2887 = vpack.c.bf16 %v2662, %v2662
  %v2888 = vpack.c.bf16 %v2663, %v2663
  %v2889 = vpack.c.bf16 %v2664, %v2664
  %v2890 = vpack.c.bf16 %v2665, %v2665
  %v2891 = vpack.c.bf16 %v2666, %v2666
  %v2892 = vpack.c.bf16 %v2667, %v2667
  %v2893 = vpack.c.bf16 %v2668, %v2668
  %v2894 = vpack.c.bf16 %v2669, %v2669
  %v2895 = vpack.c.bf16 %v2670, %v2670
  %v2896 = vpack.c.bf16 %v2671, %v2671
  %v2897 = vpack.c.bf16 %v2672, %v2672
  %v2898 = vpack.c.bf16 %v2673, %v2673
  %v2899 = vpack.c.bf16 %v2674, %v2674
  %v2900 = vpack.c.bf16 %v2675, %v2675
  %v2901 = vpack.c.bf16 %v2676, %v2676
  %v2902 = vpack.c.bf16 %v2677, %v2677
  %v2903 = vpack.c.bf16 %v2678, %v2678
  %v2904 = vpack.c.bf16 %v2679, %v2679
  %v2905 = vpack.c.bf16 %v2680, %v2680
  %v2906 = vpack.c.bf16 %v2681, %v2681
  %v2907 = vpack.c.bf16 %v2682, %v2682
  %v2908 = vpack.c.bf16 %v2683, %v2683
  %v2909 = vpack.c.bf16 %v2684, %v2684
  %v2910 = vpack.c.bf16 %v2685, %v2685
  %v2911 = vpack.c.bf16 %v2686, %v2686
  %v2912 = vpack.c.bf16 %v2687, %v2687
  %v2913 = vpack.c.bf16 %v2688, %v2688
  %v2914 = vpack.c.bf16 %v2689, %v2689
  %v2915 = vpack.c.bf16 %v2690, %v2690
  %v2916 = vpack.c.bf16 %v2691, %v2691
  %v2917 = vpack.c.bf16 %v2692, %v2692
  %v2918 = vpack.c.bf16 %v2693, %v2693
  %v2919 = vpack.c.bf16 %v2694, %v2694
  %v2920 = vpack.c.bf16 %v2695, %v2695
  %v2921 = vpack.c.bf16 %v2696, %v2696
  %v2922 = vpack.c.bf16 %v2697, %v2697
  %v2923 = vpack.c.bf16 %v2698, %v2698
  %v2924 = vpack.c.bf16 %v2699, %v2699
  %v2925 = vpack.c.bf16 %v2700, %v2700
  %v2926 = vpack.c.bf16 %v2701, %v2701
  %v2927 = vpack.c.bf16 %v2702, %v2702
  %v2928 = vpack.c.bf16 %v2703, %v2703
  %v2929 = vpack.c.bf16 %v2704, %v2704
  %v2930 = vpack.c.bf16 %v2705, %v2705
  %v2931 = vpack.c.bf16 %v2706, %v2706
  %v2932 = vpack.c.bf16 %v2707, %v2707
  %v2933 = vpack.c.bf16 %v2708, %v2708
  %v2934 = vpack.c.bf16 %v2709, %v2709
  %v2935 = vpack.c.bf16 %v2710, %v2710
  %v2936 = vpack.c.bf16 %v2711, %v2711
  %v2937 = vpack.c.bf16 %v2712, %v2712
  %v2938 = vpack.c.bf16 %v2713, %v2713
  %v2939 = vpack.c.bf16 %v2714, %v2714
  %v2940 = vpack.c.bf16 %v2715, %v2715
  %v2941 = vpack.c.bf16 %v2716, %v2716
  %v2942 = vpack.c.bf16 %v2717, %v2717
  %v2943 = vpack.c.bf16 %v2718, %v2718
  %v2944 = vpack.c.bf16 %v2719, %v2719
  %v2945 = vpack.c.bf16 %v2720, %v2720
  %v2946 = vpack.c.bf16 %v2721, %v2721
  %v2947 = vpack.c.bf16 %v2722, %v2722
  %v2948 = vpack.c.bf16 %v2723, %v2723
  %v2949 = vpack.c.bf16 %v2724, %v2724
  %v2950 = vpack.c.bf16 %v2725, %v2725
  %v2951 = vpack.c.bf16 %v2726, %v2726
  %v2952 = vpack.c.bf16 %v2727, %v2727
  %v2953 = vpack.c.bf16 %v2728, %v2728
  %v2954 = vpack.c.bf16 %v2729, %v2729
  %v2955 = vpack.c.bf16 %v2730, %v2730
  %v2956 = vpack.c.bf16 %v2731, %v2731
  %v2957 = vpack.c.bf16 %v2732, %v2732
  %v2958 = vpack.c.bf16 %v2733, %v2733
  %v2959 = vpack.c.bf16 %v2734, %v2734
  %v2960 = vpack.c.bf16 %v2735, %v2735
  %v2961 = vpack.c.bf16 %v2736, %v2736
  %v2962 = vpack.c.bf16 %v2737, %v2737
  %v2963 = vpack.c.bf16 %v2738, %v2738
  %v2964 = vpack.c.bf16 %v2739, %v2739
  %v2965 = vpack.c.bf16 %v2740, %v2740
  %v2966 = vpack.c.bf16 %v2741, %v2741
  %v2967 = vpack.c.bf16 %v2742, %v2742
  %v2968 = vpack.c.bf16 %v2743, %v2743
  %v2969 = vpack.c.bf16 %v2744, %v2744
  %v2970 = vpack.c.bf16 %v2745, %v2745
  %v2971 = vpack.c.bf16 %v2746, %v2746
  %v2972 = vpack.c.bf16 %v2747, %v2747
  %v2973 = vpack.c.bf16 %v2748, %v2748
  %v2974 = vpack.c.bf16 %v2749, %v2749
  %v2975 = vpack.c.bf16 %v2750, %v2750
  %v2976 = vpack.c.bf16 %v2751, %v2751
  %v2977 = vpack.c.bf16 %v2752, %v2752
  %v2978 = vpack.c.bf16 %v2753, %v2753
  %v2979 = vpack.c.bf16 %v2754, %v2754
  %v2980 = vpack.c.bf16 %v2755, %v2755
  %v2981 = vpack.c.bf16 %v2756, %v2756
  %v2982 = vpack.c.bf16 %v2757, %v2757
  %v2983 = vpack.c.bf16 %v2758, %v2758
  %v2984 = vpack.c.bf16 %v2759, %v2759
  %v2985 = vpack.c.bf16 %v2760, %v2760
  %v2986 = vpack.c.bf16 %v2761, %v2761
  %v2987 = vpack.c.bf16 %v2762, %v2762
  %v2988 = vpack.c.bf16 %v2763, %v2763
  %v2989 = vpack.c.bf16 %v2764, %v2764
  %v2990 = vpack.c.bf16 %v2765, %v2765
  %v2991 = vpack.c.bf16 %v2766, %v2766
  %v2992 = vpack.c.bf16 %v2767, %v2767
  %v2993 = vpack.c.bf16 %v2768, %v2768
  %v2994 = vpack.c.bf16 %v2769, %v2769
  %v2995 = vpack.c.bf16 %v2770, %v2770
  %v2996 = vpack.c.bf16 %v2771, %v2771
  %v2997 = vpack.c.bf16 %v2772, %v2772
  %v2998 = vpack.c.bf16 %v2773, %v2773
  %v2999 = vpack.c.bf16 %v2774, %v2774
  %v3000 = vpack.c.bf16 %v2775, %v2775
  %v3001 = vpack.c.bf16 %v2776, %v2776
  %v3002 = vpack.c.bf16 %v2777, %v2777
  %v3003 = vpack.c.bf16 %v2778, %v2778
  %v3004 = vpack.c.bf16 %v2779, %v2779
  %v3005 = vpack.c.bf16 %v2780, %v2780
  %v3006 = vpack.c.bf16 %v2781, %v2781
  %v3007 = vpack.c.bf16 %v2782, %v2782
  %v3008 = vpack.c.bf16 %v2783, %v2783
  %v3009 = vpack.c.bf16 %v2784, %v2784
  %v3010 = vpack.c.bf16 %v2785, %v2785
  %v3011 = vpack.c.bf16 %v2786, %v2786
  %v3012 = vpack.c.bf16 %v2787, %v2787
  %v3013 = vpack.c.bf16 %v2788, %v2788
  %v3014 = vpack.c.bf16 %v2789, %v2789
  %v3015 = vpack.c.bf16 %v2790, %v2790
  %v3016 = vpack.c.bf16 %v2791, %v2791
  %v3017 = vpack.c.bf16 %v2792, %v2792
  %v3018 = vpack.c.bf16 %v2793, %v2793
  %v3019 = vpack.c.bf16 %v2794, %v2794
  %v3020 = vpack.c.bf16 %v2795, %v2795
  %v3021 = vpack.c.bf16 %v2796, %v2796
  %v3022 = vpack.c.bf16 %v2797, %v2797
  %v3023 = vpack.c.bf16 %v2798, %v2798
  %v3024 = vpack.c.bf16 %v2799, %v2799
  %v3025 = vpack.c.bf16 %v2800, %v2800
  %v3026 = vpack.c.bf16 %v2801, %v2801
  %v3027 = vpack.c.bf16 %v2802, %v2802
  %v3028 = vpack.c.bf16 %v2803, %v2803
  %v3029 = vpack.c.bf16 %v2804, %v2804
  %v3030 = vpack.c.bf16 %v2805, %v2805
  %v3031 = vpack.c.bf16 %v2806, %v2806
  %v3032 = vpack.c.bf16 %v2807, %v2807
  %v3033 = vpack.c.bf16 %v2808, %v2808
  %v3034 = vpack.c.bf16 %v2809, %v2809
  %v3035 = vpack.c.bf16 %v2810, %v2810
  %v3036 = vpack.c.bf16 %v2811, %v2811
  %v3037 = vpack.c.bf16 %v2812, %v2812
  %v3038 = vpack.c.bf16 %v2813, %v2813
  %v3039 = vpack.c.bf16 %v2814, %v2814
  %v3040 = vpack.c.bf16 %v2815, %v2815
  %v3041 = vpack.c.bf16 %v2816, %v2816
  %v3042 = vpack.c.bf16 %v2817, %v2817
  %v3043 = vpack.c.bf16 %v2818, %v2818
  %v3044 = vpack.c.bf16 %v2819, %v2819
  %v3045 = vpack.c.bf16 %v2820, %v2820
  %v3046 = vpack.c.bf16 %v2821, %v2821
  %v3047 = vpack.c.bf16 %v2822, %v2822
  %v3048 = vpack.c.bf16 %v2823, %v2823
  %v3049 = vpack.c.bf16 %v2824, %v2824
  %v3050 = vpack.c.bf16 %v2825, %v2825
  %v3051 = vpack.c.bf16 %v2826, %v2826
  %v3052 = vpack.c.bf16 %v2827, %v2827
  %v3053 = vpack.c.bf16 %v2828, %v2828
  %v3054 = vpack.c.bf16 %v2829, %v2829
  %v3055 = vpack.c.bf16 %v2830, %v2830
  %v3056 = vpack.c.bf16 %v2831, %v2831
  %v3057 = vpack.c.bf16 %v2832, %v2832
  %v3058 = vpack.c.bf16 %v2833, %v2833
  %v3059 = vpack.c.bf16 %v2834, %v2834
  %v3060 = vpack.c.bf16 %v2835, %v2835
  %v3061 = vpack.c.bf16 %v2836, %v2836
  %v3062 = vpack.c.bf16 %v2837, %v2837
  %v3063 = vpack.c.bf16 %v2838, %v2838
  %v3064 = vpack.c.bf16 %v2839, %v2839
  %v3065 = vpack.c.bf16 %v2840, %v2840
  %v3066 = vpack.c.bf16 %v2841, %v2841
  %v3067 = vpack.c.bf16 %v2842, %v2842
  %v3068 = vpack.c.bf16 %v2843, %v2843
  %v3069 = vpack.c.bf16 %v2844, %v2844
  %v3070 = vpack.c.bf16 %v2845, %v2845
  %v3071 = vpack.c.bf16 %v2846, %v2846
  %v3072 = vpack.c.bf16 %v2847, %v2847
  %v3073 = vpack.c.bf16 %v2848, %v2848
  %v3074 = vpack.c.bf16 %v2849, %v2849
  %v3075 = vpack.c.bf16 %v2850, %v2850
  %v3076 = vpack.c.bf16 %v2851, %v2851
  %v3077 = vpack.c.bf16 %v2852, %v2852
  %v3078 = vpack.c.bf16 %v2853, %v2853
  %v3079 = vpack.c.bf16 %v2854, %v2854
  %v3080 = vpack.c.bf16 %v2855, %v2855
  %v3081 = vpack.c.bf16 %v2856, %v2856
  %v3082 = vpack.c.bf16 %v2857, %v2857
  %v3083 = vpack.c.bf16 %v2858, %v2858
  %v3084 = vpack.c.bf16 %v2859, %v2859
  %v3085 = vpack.c.bf16 %v2860, %v2860
  %v3086 = vpack.c.bf16 %v2861, %v2861
  %v3087 = vpack.c.bf16 %v2862, %v2862
  %v3088 = vpack.c.bf16 %v2863, %v2863
  %v3089 = vpack.c.bf16 %v2864, %v2864
  %v3090 = vpack.c.bf16 %v2865, %v2865
  %v3091 = vpack.c.bf16 %v2866, %v2866
  %v3092 = vpack.c.bf16 %v2867, %v2867
  %v3093 = vpack.c.bf16 %v2868, %v2868
  %vm3094 = vcmask 257024
  %3095 = vst.msk [vmem:[%s3] sm:$0xf] %vm3094, %v2869
  %3096 = vst.msk [vmem:[%s3 + $0x4] sm:$0xf] %vm3094, %v2870
  %3097 = vst.msk [vmem:[%s3 + $0x8] sm:$0xf] %vm3094, %v2871
  %3098 = vst.msk [vmem:[%s3 + $0xc] sm:$0xf] %vm3094, %v2872
  %3099 = vst.msk [vmem:[%s3 + $0x10] sm:$0xf] %vm3094, %v2873
  %3100 = vst.msk [vmem:[%s3 + $0x14] sm:$0xf] %vm3094, %v2874
  %3101 = vst.msk [vmem:[%s3 + $0x18] sm:$0xf] %vm3094, %v2875
  %3102 = vst.msk [vmem:[%s3 + $0x1c] sm:$0xf] %vm3094, %v2876
  %3103 = vst.msk [vmem:[%s3 + $0x20] sm:$0xf] %vm3094, %v2877
  %3104 = vst.msk [vmem:[%s3 + $0x24] sm:$0xf] %vm3094, %v2878
  %3105 = vst.msk [vmem:[%s3 + $0x28] sm:$0xf] %vm3094, %v2879
  %3106 = vst.msk [vmem:[%s3 + $0x2c] sm:$0xf] %vm3094, %v2880
  %3107 = vst.msk [vmem:[%s3 + $0x30] sm:$0xf] %vm3094, %v2881
  %3108 = vst.msk [vmem:[%s3 + $0x34] sm:$0xf] %vm3094, %v2882
  %3109 = vst.msk [vmem:[%s3 + $0x38] sm:$0xf] %vm3094, %v2883
  %3110 = vst.msk [vmem:[%s3 + $0x3c] sm:$0xf] %vm3094, %v2884
  %3111 = vst.msk [vmem:[%s3 + $0x40] sm:$0xf] %vm3094, %v2885
  %3112 = vst.msk [vmem:[%s3 + $0x44] sm:$0xf] %vm3094, %v2886
  %3113 = vst.msk [vmem:[%s3 + $0x48] sm:$0xf] %vm3094, %v2887
  %3114 = vst.msk [vmem:[%s3 + $0x4c] sm:$0xf] %vm3094, %v2888
  %3115 = vst.msk [vmem:[%s3 + $0x50] sm:$0xf] %vm3094, %v2889
  %3116 = vst.msk [vmem:[%s3 + $0x54] sm:$0xf] %vm3094, %v2890
  %3117 = vst.msk [vmem:[%s3 + $0x58] sm:$0xf] %vm3094, %v2891
  %3118 = vst.msk [vmem:[%s3 + $0x5c] sm:$0xf] %vm3094, %v2892
  %3119 = vst.msk [vmem:[%s3 + $0x60] sm:$0xf] %vm3094, %v2893
  %3120 = vst.msk [vmem:[%s3 + $0x64] sm:$0xf] %vm3094, %v2894
  %3121 = vst.msk [vmem:[%s3 + $0x68] sm:$0xf] %vm3094, %v2895
  %3122 = vst.msk [vmem:[%s3 + $0x6c] sm:$0xf] %vm3094, %v2896
  %3123 = vst.msk [vmem:[%s3 + $0x70] sm:$0xf] %vm3094, %v2897
  %3124 = vst.msk [vmem:[%s3 + $0x74] sm:$0xf] %vm3094, %v2898
  %3125 = vst.msk [vmem:[%s3 + $0x78] sm:$0xf] %vm3094, %v2899
  %3126 = vst.msk [vmem:[%s3 + $0x7c] sm:$0xf] %vm3094, %v2900
  %3127 = vst.msk [vmem:[%s3 + $0x80] sm:$0xf] %vm3094, %v2901
  %3128 = vst.msk [vmem:[%s3 + $0x84] sm:$0xf] %vm3094, %v2902
  %3129 = vst.msk [vmem:[%s3 + $0x88] sm:$0xf] %vm3094, %v2903
  %3130 = vst.msk [vmem:[%s3 + $0x8c] sm:$0xf] %vm3094, %v2904
  %3131 = vst.msk [vmem:[%s3 + $0x90] sm:$0xf] %vm3094, %v2905
  %3132 = vst.msk [vmem:[%s3 + $0x94] sm:$0xf] %vm3094, %v2906
  %3133 = vst.msk [vmem:[%s3 + $0x98] sm:$0xf] %vm3094, %v2907
  %3134 = vst.msk [vmem:[%s3 + $0x9c] sm:$0xf] %vm3094, %v2908
  %3135 = vst.msk [vmem:[%s3 + $0xa0] sm:$0xf] %vm3094, %v2909
  %3136 = vst.msk [vmem:[%s3 + $0xa4] sm:$0xf] %vm3094, %v2910
  %3137 = vst.msk [vmem:[%s3 + $0xa8] sm:$0xf] %vm3094, %v2911
  %3138 = vst.msk [vmem:[%s3 + $0xac] sm:$0xf] %vm3094, %v2912
  %3139 = vst.msk [vmem:[%s3 + $0xb0] sm:$0xf] %vm3094, %v2913
  %3140 = vst.msk [vmem:[%s3 + $0xb4] sm:$0xf] %vm3094, %v2914
  %3141 = vst.msk [vmem:[%s3 + $0xb8] sm:$0xf] %vm3094, %v2915
  %3142 = vst.msk [vmem:[%s3 + $0xbc] sm:$0xf] %vm3094, %v2916
  %3143 = vst.msk [vmem:[%s3 + $0xc0] sm:$0xf] %vm3094, %v2917
  %3144 = vst.msk [vmem:[%s3 + $0xc4] sm:$0xf] %vm3094, %v2918
  %3145 = vst.msk [vmem:[%s3 + $0xc8] sm:$0xf] %vm3094, %v2919
  %3146 = vst.msk [vmem:[%s3 + $0xcc] sm:$0xf] %vm3094, %v2920
  %3147 = vst.msk [vmem:[%s3 + $0xd0] sm:$0xf] %vm3094, %v2921
  %3148 = vst.msk [vmem:[%s3 + $0xd4] sm:$0xf] %vm3094, %v2922
  %3149 = vst.msk [vmem:[%s3 + $0xd8] sm:$0xf] %vm3094, %v2923
  %3150 = vst.msk [vmem:[%s3 + $0xdc] sm:$0xf] %vm3094, %v2924
  %3151 = vst.msk [vmem:[%s3 + $0xe0] sm:$0xf] %vm3094, %v2925
  %3152 = vst.msk [vmem:[%s3 + $0xe4] sm:$0xf] %vm3094, %v2926
  %3153 = vst.msk [vmem:[%s3 + $0xe8] sm:$0xf] %vm3094, %v2927
  %3154 = vst.msk [vmem:[%s3 + $0xec] sm:$0xf] %vm3094, %v2928
  %3155 = vst.msk [vmem:[%s3 + $0xf0] sm:$0xf] %vm3094, %v2929
  %3156 = vst.msk [vmem:[%s3 + $0xf4] sm:$0xf] %vm3094, %v2930
  %3157 = vst.msk [vmem:[%s3 + $0xf8] sm:$0xf] %vm3094, %v2931
  %3158 = vst.msk [vmem:[%s3 + $0xfc] sm:$0xf] %vm3094, %v2932
  %3159 = vst.msk [vmem:[%s3 + $0x100] sm:$0xf] %vm3094, %v2933
  %3160 = vst.msk [vmem:[%s3 + $0x104] sm:$0xf] %vm3094, %v2934
  %3161 = vst.msk [vmem:[%s3 + $0x108] sm:$0xf] %vm3094, %v2935
  %3162 = vst.msk [vmem:[%s3 + $0x10c] sm:$0xf] %vm3094, %v2936
  %3163 = vst.msk [vmem:[%s3 + $0x110] sm:$0xf] %vm3094, %v2937
  %3164 = vst.msk [vmem:[%s3 + $0x114] sm:$0xf] %vm3094, %v2938
  %3165 = vst.msk [vmem:[%s3 + $0x118] sm:$0xf] %vm3094, %v2939
  %3166 = vst.msk [vmem:[%s3 + $0x11c] sm:$0xf] %vm3094, %v2940
  %3167 = vst.msk [vmem:[%s3 + $0x120] sm:$0xf] %vm3094, %v2941
  %3168 = vst.msk [vmem:[%s3 + $0x124] sm:$0xf] %vm3094, %v2942
  %3169 = vst.msk [vmem:[%s3 + $0x128] sm:$0xf] %vm3094, %v2943
  %3170 = vst.msk [vmem:[%s3 + $0x12c] sm:$0xf] %vm3094, %v2944
  %3171 = vst.msk [vmem:[%s3 + $0x130] sm:$0xf] %vm3094, %v2945
  %3172 = vst.msk [vmem:[%s3 + $0x134] sm:$0xf] %vm3094, %v2946
  %3173 = vst.msk [vmem:[%s3 + $0x138] sm:$0xf] %vm3094, %v2947
  %3174 = vst.msk [vmem:[%s3 + $0x13c] sm:$0xf] %vm3094, %v2948
  %3175 = vst.msk [vmem:[%s3 + $0x140] sm:$0xf] %vm3094, %v2949
  %3176 = vst.msk [vmem:[%s3 + $0x144] sm:$0xf] %vm3094, %v2950
  %3177 = vst.msk [vmem:[%s3 + $0x148] sm:$0xf] %vm3094, %v2951
  %3178 = vst.msk [vmem:[%s3 + $0x14c] sm:$0xf] %vm3094, %v2952
  %3179 = vst.msk [vmem:[%s3 + $0x150] sm:$0xf] %vm3094, %v2953
  %3180 = vst.msk [vmem:[%s3 + $0x154] sm:$0xf] %vm3094, %v2954
  %3181 = vst.msk [vmem:[%s3 + $0x158] sm:$0xf] %vm3094, %v2955
  %3182 = vst.msk [vmem:[%s3 + $0x15c] sm:$0xf] %vm3094, %v2956
  %3183 = vst.msk [vmem:[%s3 + $0x160] sm:$0xf] %vm3094, %v2957
  %3184 = vst.msk [vmem:[%s3 + $0x164] sm:$0xf] %vm3094, %v2958
  %3185 = vst.msk [vmem:[%s3 + $0x168] sm:$0xf] %vm3094, %v2959
  %3186 = vst.msk [vmem:[%s3 + $0x16c] sm:$0xf] %vm3094, %v2960
  %3187 = vst.msk [vmem:[%s3 + $0x170] sm:$0xf] %vm3094, %v2961
  %3188 = vst.msk [vmem:[%s3 + $0x174] sm:$0xf] %vm3094, %v2962
  %3189 = vst.msk [vmem:[%s3 + $0x178] sm:$0xf] %vm3094, %v2963
  %3190 = vst.msk [vmem:[%s3 + $0x17c] sm:$0xf] %vm3094, %v2964
  %3191 = vst.msk [vmem:[%s3 + $0x180] sm:$0xf] %vm3094, %v2965
  %3192 = vst.msk [vmem:[%s3 + $0x184] sm:$0xf] %vm3094, %v2966
  %3193 = vst.msk [vmem:[%s3 + $0x188] sm:$0xf] %vm3094, %v2967
  %3194 = vst.msk [vmem:[%s3 + $0x18c] sm:$0xf] %vm3094, %v2968
  %3195 = vst.msk [vmem:[%s3 + $0x190] sm:$0xf] %vm3094, %v2969
  %3196 = vst.msk [vmem:[%s3 + $0x194] sm:$0xf] %vm3094, %v2970
  %3197 = vst.msk [vmem:[%s3 + $0x198] sm:$0xf] %vm3094, %v2971
  %3198 = vst.msk [vmem:[%s3 + $0x19c] sm:$0xf] %vm3094, %v2972
  %3199 = vst.msk [vmem:[%s3 + $0x1a0] sm:$0xf] %vm3094, %v2973
  %3200 = vst.msk [vmem:[%s3 + $0x1a4] sm:$0xf] %vm3094, %v2974
  %3201 = vst.msk [vmem:[%s3 + $0x1a8] sm:$0xf] %vm3094, %v2975
  %3202 = vst.msk [vmem:[%s3 + $0x1ac] sm:$0xf] %vm3094, %v2976
  %3203 = vst.msk [vmem:[%s3 + $0x1b0] sm:$0xf] %vm3094, %v2977
  %3204 = vst.msk [vmem:[%s3 + $0x1b4] sm:$0xf] %vm3094, %v2978
  %3205 = vst.msk [vmem:[%s3 + $0x1b8] sm:$0xf] %vm3094, %v2979
  %3206 = vst.msk [vmem:[%s3 + $0x1bc] sm:$0xf] %vm3094, %v2980
  %3207 = vst.msk [vmem:[%s3 + $0x1c0] sm:$0xf] %vm3094, %v2981
  %3208 = vst.msk [vmem:[%s3 + $0x1c4] sm:$0xf] %vm3094, %v2982
  %3209 = vst.msk [vmem:[%s3 + $0x1c8] sm:$0xf] %vm3094, %v2983
  %3210 = vst.msk [vmem:[%s3 + $0x1cc] sm:$0xf] %vm3094, %v2984
  %3211 = vst.msk [vmem:[%s3 + $0x1d0] sm:$0xf] %vm3094, %v2985
  %3212 = vst.msk [vmem:[%s3 + $0x1d4] sm:$0xf] %vm3094, %v2986
  %3213 = vst.msk [vmem:[%s3 + $0x1d8] sm:$0xf] %vm3094, %v2987
  %3214 = vst.msk [vmem:[%s3 + $0x1dc] sm:$0xf] %vm3094, %v2988
  %3215 = vst.msk [vmem:[%s3 + $0x1e0] sm:$0xf] %vm3094, %v2989
  %3216 = vst.msk [vmem:[%s3 + $0x1e4] sm:$0xf] %vm3094, %v2990
  %3217 = vst.msk [vmem:[%s3 + $0x1e8] sm:$0xf] %vm3094, %v2991
  %3218 = vst.msk [vmem:[%s3 + $0x1ec] sm:$0xf] %vm3094, %v2992
  %3219 = vst.msk [vmem:[%s3 + $0x1f0] sm:$0xf] %vm3094, %v2993
  %3220 = vst.msk [vmem:[%s3 + $0x1f4] sm:$0xf] %vm3094, %v2994
  %3221 = vst.msk [vmem:[%s3 + $0x1f8] sm:$0xf] %vm3094, %v2995
  %3222 = vst.msk [vmem:[%s3 + $0x1fc] sm:$0xf] %vm3094, %v2996
  %3223 = vst.msk [vmem:[%s3 + $0x200] sm:$0xf] %vm3094, %v2997
  %3224 = vst.msk [vmem:[%s3 + $0x204] sm:$0xf] %vm3094, %v2998
  %3225 = vst.msk [vmem:[%s3 + $0x208] sm:$0xf] %vm3094, %v2999
  %3226 = vst.msk [vmem:[%s3 + $0x20c] sm:$0xf] %vm3094, %v3000
  %3227 = vst.msk [vmem:[%s3 + $0x210] sm:$0xf] %vm3094, %v3001
  %3228 = vst.msk [vmem:[%s3 + $0x214] sm:$0xf] %vm3094, %v3002
  %3229 = vst.msk [vmem:[%s3 + $0x218] sm:$0xf] %vm3094, %v3003
  %3230 = vst.msk [vmem:[%s3 + $0x21c] sm:$0xf] %vm3094, %v3004
  %3231 = vst.msk [vmem:[%s3 + $0x220] sm:$0xf] %vm3094, %v3005
  %3232 = vst.msk [vmem:[%s3 + $0x224] sm:$0xf] %vm3094, %v3006
  %3233 = vst.msk [vmem:[%s3 + $0x228] sm:$0xf] %vm3094, %v3007
  %3234 = vst.msk [vmem:[%s3 + $0x22c] sm:$0xf] %vm3094, %v3008
  %3235 = vst.msk [vmem:[%s3 + $0x230] sm:$0xf] %vm3094, %v3009
  %3236 = vst.msk [vmem:[%s3 + $0x234] sm:$0xf] %vm3094, %v3010
  %3237 = vst.msk [vmem:[%s3 + $0x238] sm:$0xf] %vm3094, %v3011
  %3238 = vst.msk [vmem:[%s3 + $0x23c] sm:$0xf] %vm3094, %v3012
  %3239 = vst.msk [vmem:[%s3 + $0x240] sm:$0xf] %vm3094, %v3013
  %3240 = vst.msk [vmem:[%s3 + $0x244] sm:$0xf] %vm3094, %v3014
  %3241 = vst.msk [vmem:[%s3 + $0x248] sm:$0xf] %vm3094, %v3015
  %3242 = vst.msk [vmem:[%s3 + $0x24c] sm:$0xf] %vm3094, %v3016
  %3243 = vst.msk [vmem:[%s3 + $0x250] sm:$0xf] %vm3094, %v3017
  %3244 = vst.msk [vmem:[%s3 + $0x254] sm:$0xf] %vm3094, %v3018
  %3245 = vst.msk [vmem:[%s3 + $0x258] sm:$0xf] %vm3094, %v3019
  %3246 = vst.msk [vmem:[%s3 + $0x25c] sm:$0xf] %vm3094, %v3020
  %3247 = vst.msk [vmem:[%s3 + $0x260] sm:$0xf] %vm3094, %v3021
  %3248 = vst.msk [vmem:[%s3 + $0x264] sm:$0xf] %vm3094, %v3022
  %3249 = vst.msk [vmem:[%s3 + $0x268] sm:$0xf] %vm3094, %v3023
  %3250 = vst.msk [vmem:[%s3 + $0x26c] sm:$0xf] %vm3094, %v3024
  %3251 = vst.msk [vmem:[%s3 + $0x270] sm:$0xf] %vm3094, %v3025
  %3252 = vst.msk [vmem:[%s3 + $0x274] sm:$0xf] %vm3094, %v3026
  %3253 = vst.msk [vmem:[%s3 + $0x278] sm:$0xf] %vm3094, %v3027
  %3254 = vst.msk [vmem:[%s3 + $0x27c] sm:$0xf] %vm3094, %v3028
  %3255 = vst.msk [vmem:[%s3 + $0x280] sm:$0xf] %vm3094, %v3029
  %3256 = vst.msk [vmem:[%s3 + $0x284] sm:$0xf] %vm3094, %v3030
  %3257 = vst.msk [vmem:[%s3 + $0x288] sm:$0xf] %vm3094, %v3031
  %3258 = vst.msk [vmem:[%s3 + $0x28c] sm:$0xf] %vm3094, %v3032
  %3259 = vst.msk [vmem:[%s3 + $0x290] sm:$0xf] %vm3094, %v3033
  %3260 = vst.msk [vmem:[%s3 + $0x294] sm:$0xf] %vm3094, %v3034
  %3261 = vst.msk [vmem:[%s3 + $0x298] sm:$0xf] %vm3094, %v3035
  %3262 = vst.msk [vmem:[%s3 + $0x29c] sm:$0xf] %vm3094, %v3036
  %3263 = vst.msk [vmem:[%s3 + $0x2a0] sm:$0xf] %vm3094, %v3037
  %3264 = vst.msk [vmem:[%s3 + $0x2a4] sm:$0xf] %vm3094, %v3038
  %3265 = vst.msk [vmem:[%s3 + $0x2a8] sm:$0xf] %vm3094, %v3039
  %3266 = vst.msk [vmem:[%s3 + $0x2ac] sm:$0xf] %vm3094, %v3040
  %3267 = vst.msk [vmem:[%s3 + $0x2b0] sm:$0xf] %vm3094, %v3041
  %3268 = vst.msk [vmem:[%s3 + $0x2b4] sm:$0xf] %vm3094, %v3042
  %3269 = vst.msk [vmem:[%s3 + $0x2b8] sm:$0xf] %vm3094, %v3043
  %3270 = vst.msk [vmem:[%s3 + $0x2bc] sm:$0xf] %vm3094, %v3044
  %3271 = vst.msk [vmem:[%s3 + $0x2c0] sm:$0xf] %vm3094, %v3045
  %3272 = vst.msk [vmem:[%s3 + $0x2c4] sm:$0xf] %vm3094, %v3046
  %3273 = vst.msk [vmem:[%s3 + $0x2c8] sm:$0xf] %vm3094, %v3047
  %3274 = vst.msk [vmem:[%s3 + $0x2cc] sm:$0xf] %vm3094, %v3048
  %3275 = vst.msk [vmem:[%s3 + $0x2d0] sm:$0xf] %vm3094, %v3049
  %3276 = vst.msk [vmem:[%s3 + $0x2d4] sm:$0xf] %vm3094, %v3050
  %3277 = vst.msk [vmem:[%s3 + $0x2d8] sm:$0xf] %vm3094, %v3051
  %3278 = vst.msk [vmem:[%s3 + $0x2dc] sm:$0xf] %vm3094, %v3052
  %3279 = vst.msk [vmem:[%s3 + $0x2e0] sm:$0xf] %vm3094, %v3053
  %3280 = vst.msk [vmem:[%s3 + $0x2e4] sm:$0xf] %vm3094, %v3054
  %3281 = vst.msk [vmem:[%s3 + $0x2e8] sm:$0xf] %vm3094, %v3055
  %3282 = vst.msk [vmem:[%s3 + $0x2ec] sm:$0xf] %vm3094, %v3056
  %3283 = vst.msk [vmem:[%s3 + $0x2f0] sm:$0xf] %vm3094, %v3057
  %3284 = vst.msk [vmem:[%s3 + $0x2f4] sm:$0xf] %vm3094, %v3058
  %3285 = vst.msk [vmem:[%s3 + $0x2f8] sm:$0xf] %vm3094, %v3059
  %3286 = vst.msk [vmem:[%s3 + $0x2fc] sm:$0xf] %vm3094, %v3060
  %3287 = vst.msk [vmem:[%s3 + $0x300] sm:$0xf] %vm3094, %v3061
  %3288 = vst.msk [vmem:[%s3 + $0x304] sm:$0xf] %vm3094, %v3062
  %3289 = vst.msk [vmem:[%s3 + $0x308] sm:$0xf] %vm3094, %v3063
  %3290 = vst.msk [vmem:[%s3 + $0x30c] sm:$0xf] %vm3094, %v3064
  %3291 = vst.msk [vmem:[%s3 + $0x310] sm:$0xf] %vm3094, %v3065
  %3292 = vst.msk [vmem:[%s3 + $0x314] sm:$0xf] %vm3094, %v3066
  %3293 = vst.msk [vmem:[%s3 + $0x318] sm:$0xf] %vm3094, %v3067
  %3294 = vst.msk [vmem:[%s3 + $0x31c] sm:$0xf] %vm3094, %v3068
  %3295 = vst.msk [vmem:[%s3 + $0x320] sm:$0xf] %vm3094, %v3069
  %3296 = vst.msk [vmem:[%s3 + $0x324] sm:$0xf] %vm3094, %v3070
  %3297 = vst.msk [vmem:[%s3 + $0x328] sm:$0xf] %vm3094, %v3071
  %3298 = vst.msk [vmem:[%s3 + $0x32c] sm:$0xf] %vm3094, %v3072
  %3299 = vst.msk [vmem:[%s3 + $0x330] sm:$0xf] %vm3094, %v3073
  %3300 = vst.msk [vmem:[%s3 + $0x334] sm:$0xf] %vm3094, %v3074
  %3301 = vst.msk [vmem:[%s3 + $0x338] sm:$0xf] %vm3094, %v3075
  %3302 = vst.msk [vmem:[%s3 + $0x33c] sm:$0xf] %vm3094, %v3076
  %3303 = vst.msk [vmem:[%s3 + $0x340] sm:$0xf] %vm3094, %v3077
  %3304 = vst.msk [vmem:[%s3 + $0x344] sm:$0xf] %vm3094, %v3078
  %3305 = vst.msk [vmem:[%s3 + $0x348] sm:$0xf] %vm3094, %v3079
  %3306 = vst.msk [vmem:[%s3 + $0x34c] sm:$0xf] %vm3094, %v3080
  %3307 = vst.msk [vmem:[%s3 + $0x350] sm:$0xf] %vm3094, %v3081
  %3308 = vst.msk [vmem:[%s3 + $0x354] sm:$0xf] %vm3094, %v3082
  %3309 = vst.msk [vmem:[%s3 + $0x358] sm:$0xf] %vm3094, %v3083
  %3310 = vst.msk [vmem:[%s3 + $0x35c] sm:$0xf] %vm3094, %v3084
  %3311 = vst.msk [vmem:[%s3 + $0x360] sm:$0xf] %vm3094, %v3085
  %3312 = vst.msk [vmem:[%s3 + $0x364] sm:$0xf] %vm3094, %v3086
  %3313 = vst.msk [vmem:[%s3 + $0x368] sm:$0xf] %vm3094, %v3087
  %3314 = vst.msk [vmem:[%s3 + $0x36c] sm:$0xf] %vm3094, %v3088
  %3315 = vst.msk [vmem:[%s3 + $0x370] sm:$0xf] %vm3094, %v3089
  %3316 = vst.msk [vmem:[%s3 + $0x374] sm:$0xf] %vm3094, %v3090
  %3317 = vst.msk [vmem:[%s3 + $0x378] sm:$0xf] %vm3094, %v3091
  %3318 = vst.msk [vmem:[%s3 + $0x37c] sm:$0xf] %vm3094, %v3092
  %3319 = vst.msk [vmem:[%s3 + $0x380] sm:$0xf] %vm3094, %v3093
  // Predicated region
  $region14: #{ppo_forward.4} parent=0 // pred_check
    _
  $region15: #{ppo_forward.4} parent=0 // pred_check_branch
    %3321 = sbr.rel (0) target = $region17
  $region16: #{ppo_forward.4} parent=0 // pred_region
    _
  $region17: #{ppo_forward.4} parent=0 // pred_fallthru
    _
  // Predicated region
  $region18: #{ppo_forward.4} parent=0 // pred_check
    _
  $region19: #{ppo_forward.4} parent=0 // pred_check_branch
    %3323 = sbr.rel (0) target = $region21
  $region20: #{ppo_forward.4} parent=0 // pred_region
    _
  $region21: #{ppo_forward.4} parent=0 // pred_fallthru
    _

// kernel: ppo_forward.5
$region0: #{ppo_forward.5}
  #allocation0 [shape = 'u32[]', space=smem, size = 0x4, offset = 0x4, fixed_abs, tag = 'smem constant byte address 0x4 - core index']
  #allocation1 [shape = 'u32[72,128]{1,0:T(1,128)}', space=vmem, size = 0x9000, scoped, tag = 'internal scratch']
  %s0 = inlined_call_operand.vmem [shape: bf16[392,512], index: 0, kind: input, shape index: {}]
  %s1 = inlined_call_operand.vmem [shape: bf16[512,64], index: 1, kind: input, shape index: {}]
  %s2 = inlined_call_operand.vmem [shape: f32[1,64], index: 2, kind: input, shape index: {}]
  %s3 = inlined_call_operand.vmem [shape: bf16[392,64], index: 3, kind: output, shape index: {}]
  %s4 = sld [smem:[#allocation0]]
  $region22: #{ppo_forward.5} parent=0
    _
  %s6 = ssub.s32 1, %s4
  %s7 = scalar_select 0, %s6, %s4
  // Predicated region
  $region2: #{ppo_forward.5} parent=0 // pred_check
    _
  $region3: #{ppo_forward.5} parent=0 // pred_check_branch
    %9 = sbr.rel (0) target = $region5
  $region4: #{ppo_forward.5} parent=0 // pred_region
    _
  $region5: #{ppo_forward.5} parent=0 // pred_fallthru
    _
  // Predicated region
  $region6: #{ppo_forward.5} parent=0 // pred_check
    _
  $region7: #{ppo_forward.5} parent=0 // pred_check_branch
    %11 = sbr.rel (0) target = $region9
  $region8: #{ppo_forward.5} parent=0 // pred_region
    _
  $region9: #{ppo_forward.5} parent=0 // pred_fallthru
    _
  // Predicated region
  $region10: #{ppo_forward.5} parent=0 // pred_check
    _
  $region11: #{ppo_forward.5} parent=0 // pred_check_branch
    %13 = sbr.rel (0) target = $region13
  $region12: #{ppo_forward.5} parent=0 // pred_region
    _
  $region13: #{ppo_forward.5} parent=0 // pred_fallthru
    _
  %v14 = vld [vmem:[%s0] sm:$0xff]
  %v15 = vld [vmem:[%s0 + $0x8] sm:$0xff]
  %v16 = vld [vmem:[%s0 + $0x10] sm:$0xff]
  %v17 = vld [vmem:[%s0 + $0x18] sm:$0xff]
  %v18 = vld [vmem:[%s0 + $0x20] sm:$0xff]
  %v19 = vld [vmem:[%s0 + $0x28] sm:$0xff]
  %v20 = vld [vmem:[%s0 + $0x30] sm:$0xff]
  %v21 = vld [vmem:[%s0 + $0x38] sm:$0xff]
  %v22 = vld [vmem:[%s0 + $0x40] sm:$0xff]
  %v23 = vld [vmem:[%s0 + $0x48] sm:$0xff]
  %v24 = vld [vmem:[%s0 + $0x50] sm:$0xff]
  %v25 = vld [vmem:[%s0 + $0x58] sm:$0xff]
  %v26 = vld [vmem:[%s0 + $0x60] sm:$0xff]
  %v27 = vld [vmem:[%s0 + $0x68] sm:$0xff]
  %v28 = vld [vmem:[%s0 + $0x70] sm:$0xff]
  %v29 = vld [vmem:[%s0 + $0x78] sm:$0xff]
  %v30 = vld [vmem:[%s0 + $0x80] sm:$0xff]
  %v31 = vld [vmem:[%s0 + $0x88] sm:$0xff]
  %v32 = vld [vmem:[%s0 + $0x90] sm:$0xff]
  %v33 = vld [vmem:[%s0 + $0x98] sm:$0xff]
  %v34 = vld [vmem:[%s0 + $0xa0] sm:$0xff]
  %v35 = vld [vmem:[%s0 + $0xa8] sm:$0xff]
  %v36 = vld [vmem:[%s0 + $0xb0] sm:$0xff]
  %v37 = vld [vmem:[%s0 + $0xb8] sm:$0xff]
  %v38 = vld [vmem:[%s0 + $0xc0] sm:$0xff]
  %v39 = vld [vmem:[%s0 + $0xc8] sm:$0xff]
  %v40 = vld [vmem:[%s0 + $0xd0] sm:$0xff]
  %v41 = vld [vmem:[%s0 + $0xd8] sm:$0xff]
  %v42 = vld [vmem:[%s0 + $0xe0] sm:$0xff]
  %v43 = vld [vmem:[%s0 + $0xe8] sm:$0xff]
  %v44 = vld [vmem:[%s0 + $0xf0] sm:$0xff]
  %v45 = vld [vmem:[%s0 + $0xf8] sm:$0xff]
  %v46 = vld [vmem:[%s0 + $0x100] sm:$0xff]
  %v47 = vld [vmem:[%s0 + $0x108] sm:$0xff]
  %v48 = vld [vmem:[%s0 + $0x110] sm:$0xff]
  %v49 = vld [vmem:[%s0 + $0x118] sm:$0xff]
  %v50 = vld [vmem:[%s0 + $0x120] sm:$0xff]
  %v51 = vld [vmem:[%s0 + $0x128] sm:$0xff]
  %v52 = vld [vmem:[%s0 + $0x130] sm:$0xff]
  %v53 = vld [vmem:[%s0 + $0x138] sm:$0xff]
  %v54 = vld [vmem:[%s0 + $0x140] sm:$0xff]
  %v55 = vld [vmem:[%s0 + $0x148] sm:$0xff]
  %v56 = vld [vmem:[%s0 + $0x150] sm:$0xff]
  %v57 = vld [vmem:[%s0 + $0x158] sm:$0xff]
  %v58 = vld [vmem:[%s0 + $0x160] sm:$0xff]
  %v59 = vld [vmem:[%s0 + $0x168] sm:$0xff]
  %v60 = vld [vmem:[%s0 + $0x170] sm:$0xff]
  %v61 = vld [vmem:[%s0 + $0x178] sm:$0xff]
  %v62 = vld [vmem:[%s0 + $0x180] sm:$0xff]
  %v63 = vld [vmem:[%s0 + $0x188] sm:$0xff]
  %v64 = vld [vmem:[%s0 + $0x190] sm:$0xff]
  %v65 = vld [vmem:[%s0 + $0x198] sm:$0xff]
  %v66 = vld [vmem:[%s0 + $0x1a0] sm:$0xff]
  %v67 = vld [vmem:[%s0 + $0x1a8] sm:$0xff]
  %v68 = vld [vmem:[%s0 + $0x1b0] sm:$0xff]
  %v69 = vld [vmem:[%s0 + $0x1b8] sm:$0xff]
  %v70 = vld [vmem:[%s0 + $0x1c0] sm:$0xff]
  %v71 = vld [vmem:[%s0 + $0x1c8] sm:$0xff]
  %v72 = vld [vmem:[%s0 + $0x1d0] sm:$0xff]
  %v73 = vld [vmem:[%s0 + $0x1d8] sm:$0xff]
  %v74 = vld [vmem:[%s0 + $0x1e0] sm:$0xff]
  %v75 = vld [vmem:[%s0 + $0x1e8] sm:$0xff]
  %v76 = vld [vmem:[%s0 + $0x1f0] sm:$0xff]
  %v77 = vld [vmem:[%s0 + $0x1f8] sm:$0xff]
  %v78 = vld [vmem:[%s0 + $0x200] sm:$0xff]
  %v79 = vld [vmem:[%s0 + $0x208] sm:$0xff]
  %v80 = vld [vmem:[%s0 + $0x210] sm:$0xff]
  %v81 = vld [vmem:[%s0 + $0x218] sm:$0xff]
  %v82 = vld [vmem:[%s0 + $0x220] sm:$0xff]
  %v83 = vld [vmem:[%s0 + $0x228] sm:$0xff]
  %v84 = vld [vmem:[%s0 + $0x230] sm:$0xff]
  %v85 = vld [vmem:[%s0 + $0x238] sm:$0xff]
  %v86 = vld [vmem:[%s0 + $0x240] sm:$0xff]
  %v87 = vld [vmem:[%s0 + $0x248] sm:$0xff]
  %v88 = vld [vmem:[%s0 + $0x250] sm:$0xff]
  %v89 = vld [vmem:[%s0 + $0x258] sm:$0xff]
  %v90 = vld [vmem:[%s0 + $0x260] sm:$0xff]
  %v91 = vld [vmem:[%s0 + $0x268] sm:$0xff]
  %v92 = vld [vmem:[%s0 + $0x270] sm:$0xff]
  %v93 = vld [vmem:[%s0 + $0x278] sm:$0xff]
  %v94 = vld [vmem:[%s0 + $0x280] sm:$0xff]
  %v95 = vld [vmem:[%s0 + $0x288] sm:$0xff]
  %v96 = vld [vmem:[%s0 + $0x290] sm:$0xff]
  %v97 = vld [vmem:[%s0 + $0x298] sm:$0xff]
  %v98 = vld [vmem:[%s0 + $0x2a0] sm:$0xff]
  %v99 = vld [vmem:[%s0 + $0x2a8] sm:$0xff]
  %v100 = vld [vmem:[%s0 + $0x2b0] sm:$0xff]
  %v101 = vld [vmem:[%s0 + $0x2b8] sm:$0xff]
  %v102 = vld [vmem:[%s0 + $0x2c0] sm:$0xff]
  %v103 = vld [vmem:[%s0 + $0x2c8] sm:$0xff]
  %v104 = vld [vmem:[%s0 + $0x2d0] sm:$0xff]
  %v105 = vld [vmem:[%s0 + $0x2d8] sm:$0xff]
  %v106 = vld [vmem:[%s0 + $0x2e0] sm:$0xff]
  %v107 = vld [vmem:[%s0 + $0x2e8] sm:$0xff]
  %v108 = vld [vmem:[%s0 + $0x2f0] sm:$0xff]
  %v109 = vld [vmem:[%s0 + $0x2f8] sm:$0xff]
  %v110 = vld [vmem:[%s0 + $0x300] sm:$0xff]
  %v111 = vld [vmem:[%s0 + $0x308] sm:$0xff]
  %v112 = vld [vmem:[%s1] sm:$0xf]
  %v113 = vld [vmem:[%s1 + $0x4] sm:$0xf]
  %v114 = vld [vmem:[%s1 + $0x8] sm:$0xf]
  %v115 = vld [vmem:[%s1 + $0xc] sm:$0xf]
  %v116 = vld [vmem:[%s1 + $0x10] sm:$0xf]
  %v117 = vld [vmem:[%s1 + $0x14] sm:$0xf]
  %v118 = vld [vmem:[%s1 + $0x18] sm:$0xf]
  %v119 = vld [vmem:[%s1 + $0x1c] sm:$0xf]
  %v120 = vld [vmem:[%s1 + $0x20] sm:$0xf]
  %v121 = vld [vmem:[%s1 + $0x24] sm:$0xf]
  %v122 = vld [vmem:[%s1 + $0x28] sm:$0xf]
  %v123 = vld [vmem:[%s1 + $0x2c] sm:$0xf]
  %v124 = vld [vmem:[%s1 + $0x30] sm:$0xf]
  %v125 = vld [vmem:[%s1 + $0x34] sm:$0xf]
  %v126 = vld [vmem:[%s1 + $0x38] sm:$0xf]
  %v127 = vld [vmem:[%s1 + $0x3c] sm:$0xf]
  %v128 = vld [vmem:[%s1 + $0x40] sm:$0xf]
  %v129 = vld [vmem:[%s1 + $0x44] sm:$0xf]
  %v130 = vld [vmem:[%s1 + $0x48] sm:$0xf]
  %v131 = vld [vmem:[%s1 + $0x4c] sm:$0xf]
  %v132 = vld [vmem:[%s1 + $0x50] sm:$0xf]
  %v133 = vld [vmem:[%s1 + $0x54] sm:$0xf]
  %v134 = vld [vmem:[%s1 + $0x58] sm:$0xf]
  %v135 = vld [vmem:[%s1 + $0x5c] sm:$0xf]
  %v136 = vld [vmem:[%s1 + $0x60] sm:$0xf]
  %v137 = vld [vmem:[%s1 + $0x64] sm:$0xf]
  %v138 = vld [vmem:[%s1 + $0x68] sm:$0xf]
  %v139 = vld [vmem:[%s1 + $0x6c] sm:$0xf]
  %v140 = vld [vmem:[%s1 + $0x70] sm:$0xf]
  %v141 = vld [vmem:[%s1 + $0x74] sm:$0xf]
  %v142 = vld [vmem:[%s1 + $0x78] sm:$0xf]
  %v143 = vld [vmem:[%s1 + $0x7c] sm:$0xf]
  %v144 = vld [vmem:[%s1 + $0x80] sm:$0xf]
  %v145 = vld [vmem:[%s1 + $0x84] sm:$0xf]
  %v146 = vld [vmem:[%s1 + $0x88] sm:$0xf]
  %v147 = vld [vmem:[%s1 + $0x8c] sm:$0xf]
  %v148 = vld [vmem:[%s1 + $0x90] sm:$0xf]
  %v149 = vld [vmem:[%s1 + $0x94] sm:$0xf]
  %v150 = vld [vmem:[%s1 + $0x98] sm:$0xf]
  %v151 = vld [vmem:[%s1 + $0x9c] sm:$0xf]
  %v152 = vld [vmem:[%s1 + $0xa0] sm:$0xf]
  %v153 = vld [vmem:[%s1 + $0xa4] sm:$0xf]
  %v154 = vld [vmem:[%s1 + $0xa8] sm:$0xf]
  %v155 = vld [vmem:[%s1 + $0xac] sm:$0xf]
  %v156 = vld [vmem:[%s1 + $0xb0] sm:$0xf]
  %v157 = vld [vmem:[%s1 + $0xb4] sm:$0xf]
  %v158 = vld [vmem:[%s1 + $0xb8] sm:$0xf]
  %v159 = vld [vmem:[%s1 + $0xbc] sm:$0xf]
  %v160 = vld [vmem:[%s1 + $0xc0] sm:$0xf]
  %v161 = vld [vmem:[%s1 + $0xc4] sm:$0xf]
  %v162 = vld [vmem:[%s1 + $0xc8] sm:$0xf]
  %v163 = vld [vmem:[%s1 + $0xcc] sm:$0xf]
  %v164 = vld [vmem:[%s1 + $0xd0] sm:$0xf]
  %v165 = vld [vmem:[%s1 + $0xd4] sm:$0xf]
  %v166 = vld [vmem:[%s1 + $0xd8] sm:$0xf]
  %v167 = vld [vmem:[%s1 + $0xdc] sm:$0xf]
  %v168 = vld [vmem:[%s1 + $0xe0] sm:$0xf]
  %v169 = vld [vmem:[%s1 + $0xe4] sm:$0xf]
  %v170 = vld [vmem:[%s1 + $0xe8] sm:$0xf]
  %v171 = vld [vmem:[%s1 + $0xec] sm:$0xf]
  %v172 = vld [vmem:[%s1 + $0xf0] sm:$0xf]
  %v173 = vld [vmem:[%s1 + $0xf4] sm:$0xf]
  %v174 = vld [vmem:[%s1 + $0xf8] sm:$0xf]
  %v175 = vld [vmem:[%s1 + $0xfc] sm:$0xf]
  %v176 = vld [vmem:[%s2] sm:$0x1]
  %v178 = vperm.slane %v176, 0
  %v278 = vunpack.c.l.b16 %v14
  %v279 = vunpack.c.h.b16 %v14
  %v280 = vunpack.c.l.b16 %v15
  %v281 = vunpack.c.h.b16 %v15
  %v282 = vunpack.c.l.b16 %v16
  %v283 = vunpack.c.h.b16 %v16
  %v284 = vunpack.c.l.b16 %v17
  %v285 = vunpack.c.h.b16 %v17
  %v286 = vunpack.c.l.b16 %v18
  %v287 = vunpack.c.h.b16 %v18
  %v288 = vunpack.c.l.b16 %v19
  %v289 = vunpack.c.h.b16 %v19
  %v290 = vunpack.c.l.b16 %v20
  %v291 = vunpack.c.h.b16 %v20
  %v292 = vunpack.c.l.b16 %v21
  %v293 = vunpack.c.h.b16 %v21
  %v294 = vunpack.c.l.b16 %v22
  %v295 = vunpack.c.h.b16 %v22
  %v296 = vunpack.c.l.b16 %v23
  %v297 = vunpack.c.h.b16 %v23
  %v298 = vunpack.c.l.b16 %v24
  %v299 = vunpack.c.h.b16 %v24
  %v300 = vunpack.c.l.b16 %v25
  %v301 = vunpack.c.h.b16 %v25
  %v302 = vunpack.c.l.b16 %v26
  %v303 = vunpack.c.h.b16 %v26
  %v304 = vunpack.c.l.b16 %v27
  %v305 = vunpack.c.h.b16 %v27
  %v306 = vunpack.c.l.b16 %v28
  %v307 = vunpack.c.h.b16 %v28
  %v308 = vunpack.c.l.b16 %v29
  %v309 = vunpack.c.h.b16 %v29
  %v310 = vunpack.c.l.b16 %v30
  %v311 = vunpack.c.h.b16 %v30
  %v312 = vunpack.c.l.b16 %v31
  %v313 = vunpack.c.h.b16 %v31
  %v314 = vunpack.c.l.b16 %v32
  %v315 = vunpack.c.h.b16 %v32
  %v316 = vunpack.c.l.b16 %v33
  %v317 = vunpack.c.h.b16 %v33
  %v318 = vunpack.c.l.b16 %v34
  %v319 = vunpack.c.h.b16 %v34
  %v320 = vunpack.c.l.b16 %v35
  %v321 = vunpack.c.h.b16 %v35
  %v322 = vunpack.c.l.b16 %v36
  %v323 = vunpack.c.h.b16 %v36
  %v324 = vunpack.c.l.b16 %v37
  %v325 = vunpack.c.h.b16 %v37
  %v326 = vunpack.c.l.b16 %v38
  %v327 = vunpack.c.h.b16 %v38
  %v328 = vunpack.c.l.b16 %v39
  %v329 = vunpack.c.h.b16 %v39
  %v330 = vunpack.c.l.b16 %v40
  %v331 = vunpack.c.h.b16 %v40
  %v332 = vunpack.c.l.b16 %v41
  %v333 = vunpack.c.h.b16 %v41
  %v334 = vunpack.c.l.b16 %v42
  %v335 = vunpack.c.h.b16 %v42
  %v336 = vunpack.c.l.b16 %v43
  %v337 = vunpack.c.h.b16 %v43
  %v338 = vunpack.c.l.b16 %v44
  %v339 = vunpack.c.h.b16 %v44
  %v340 = vunpack.c.l.b16 %v45
  %v341 = vunpack.c.h.b16 %v45
  %v342 = vunpack.c.l.b16 %v46
  %v343 = vunpack.c.h.b16 %v46
  %v344 = vunpack.c.l.b16 %v47
  %v345 = vunpack.c.h.b16 %v47
  %v346 = vunpack.c.l.b16 %v48
  %v347 = vunpack.c.h.b16 %v48
  %v348 = vunpack.c.l.b16 %v49
  %v349 = vunpack.c.h.b16 %v49
  %v350 = vunpack.c.l.b16 %v50
  %v351 = vunpack.c.h.b16 %v50
  %v352 = vunpack.c.l.b16 %v51
  %v353 = vunpack.c.h.b16 %v51
  %v354 = vunpack.c.l.b16 %v52
  %v355 = vunpack.c.h.b16 %v52
  %v356 = vunpack.c.l.b16 %v53
  %v357 = vunpack.c.h.b16 %v53
  %v358 = vunpack.c.l.b16 %v54
  %v359 = vunpack.c.h.b16 %v54
  %v360 = vunpack.c.l.b16 %v55
  %v361 = vunpack.c.h.b16 %v55
  %v362 = vunpack.c.l.b16 %v56
  %v363 = vunpack.c.h.b16 %v56
  %v364 = vunpack.c.l.b16 %v57
  %v365 = vunpack.c.h.b16 %v57
  %v366 = vunpack.c.l.b16 %v58
  %v367 = vunpack.c.h.b16 %v58
  %v368 = vunpack.c.l.b16 %v59
  %v369 = vunpack.c.h.b16 %v59
  %v370 = vunpack.c.l.b16 %v60
  %v371 = vunpack.c.h.b16 %v60
  %v372 = vunpack.c.l.b16 %v61
  %v373 = vunpack.c.h.b16 %v61
  %v374 = vunpack.c.l.b16 %v62
  %v375 = vunpack.c.h.b16 %v62
  %v376 = vunpack.c.l.b16 %v63
  %v377 = vunpack.c.h.b16 %v63
  %v378 = vunpack.c.l.b16 %v64
  %v379 = vunpack.c.h.b16 %v64
  %v380 = vunpack.c.l.b16 %v65
  %v381 = vunpack.c.h.b16 %v65
  %v382 = vunpack.c.l.b16 %v66
  %v383 = vunpack.c.h.b16 %v66
  %v384 = vunpack.c.l.b16 %v67
  %v385 = vunpack.c.h.b16 %v67
  %v386 = vunpack.c.l.b16 %v68
  %v387 = vunpack.c.h.b16 %v68
  %v388 = vunpack.c.l.b16 %v69
  %v389 = vunpack.c.h.b16 %v69
  %v390 = vunpack.c.l.b16 %v70
  %v391 = vunpack.c.h.b16 %v70
  %v392 = vunpack.c.l.b16 %v71
  %v393 = vunpack.c.h.b16 %v71
  %v394 = vunpack.c.l.b16 %v72
  %v395 = vunpack.c.h.b16 %v72
  %v396 = vunpack.c.l.b16 %v73
  %v397 = vunpack.c.h.b16 %v73
  %v398 = vunpack.c.l.b16 %v74
  %v399 = vunpack.c.h.b16 %v74
  %v400 = vunpack.c.l.b16 %v75
  %v401 = vunpack.c.h.b16 %v75
  %v402 = vunpack.c.l.b16 %v76
  %v403 = vunpack.c.h.b16 %v76
  %v404 = vunpack.c.l.b16 %v77
  %v405 = vunpack.c.h.b16 %v77
  %v406 = vunpack.c.l.b16 %v78
  %v407 = vunpack.c.h.b16 %v78
  %v408 = vunpack.c.l.b16 %v79
  %v409 = vunpack.c.h.b16 %v79
  %v410 = vunpack.c.l.b16 %v80
  %v411 = vunpack.c.h.b16 %v80
  %v412 = vunpack.c.l.b16 %v81
  %v413 = vunpack.c.h.b16 %v81
  %v414 = vunpack.c.l.b16 %v82
  %v415 = vunpack.c.h.b16 %v82
  %v416 = vunpack.c.l.b16 %v83
  %v417 = vunpack.c.h.b16 %v83
  %v418 = vunpack.c.l.b16 %v84
  %v419 = vunpack.c.h.b16 %v84
  %v420 = vunpack.c.l.b16 %v85
  %v421 = vunpack.c.h.b16 %v85
  %v422 = vunpack.c.l.b16 %v86
  %v423 = vunpack.c.h.b16 %v86
  %v424 = vunpack.c.l.b16 %v87
  %v425 = vunpack.c.h.b16 %v87
  %v426 = vunpack.c.l.b16 %v88
  %v427 = vunpack.c.h.b16 %v88
  %v428 = vunpack.c.l.b16 %v89
  %v429 = vunpack.c.h.b16 %v89
  %v430 = vunpack.c.l.b16 %v90
  %v431 = vunpack.c.h.b16 %v90
  %v432 = vunpack.c.l.b16 %v91
  %v433 = vunpack.c.h.b16 %v91
  %v434 = vunpack.c.l.b16 %v92
  %v435 = vunpack.c.h.b16 %v92
  %v436 = vunpack.c.l.b16 %v93
  %v437 = vunpack.c.h.b16 %v93
  %v438 = vunpack.c.l.b16 %v94
  %v439 = vunpack.c.h.b16 %v94
  %v440 = vunpack.c.l.b16 %v95
  %v441 = vunpack.c.h.b16 %v95
  %v442 = vunpack.c.l.b16 %v96
  %v443 = vunpack.c.h.b16 %v96
  %v444 = vunpack.c.l.b16 %v97
  %v445 = vunpack.c.h.b16 %v97
  %v446 = vunpack.c.l.b16 %v98
  %v447 = vunpack.c.h.b16 %v98
  %v448 = vunpack.c.l.b16 %v99
  %v449 = vunpack.c.h.b16 %v99
  %v450 = vunpack.c.l.b16 %v100
  %v451 = vunpack.c.h.b16 %v100
  %v452 = vunpack.c.l.b16 %v101
  %v453 = vunpack.c.h.b16 %v101
  %v454 = vunpack.c.l.b16 %v102
  %v455 = vunpack.c.h.b16 %v102
  %v456 = vunpack.c.l.b16 %v103
  %v457 = vunpack.c.h.b16 %v103
  %v458 = vunpack.c.l.b16 %v104
  %v459 = vunpack.c.h.b16 %v104
  %v460 = vunpack.c.l.b16 %v105
  %v461 = vunpack.c.h.b16 %v105
  %v462 = vunpack.c.l.b16 %v106
  %v463 = vunpack.c.h.b16 %v106
  %v464 = vunpack.c.l.b16 %v107
  %v465 = vunpack.c.h.b16 %v107
  %v466 = vunpack.c.l.b16 %v108
  %v467 = vunpack.c.h.b16 %v108
  %v468 = vunpack.c.l.b16 %v109
  %v469 = vunpack.c.h.b16 %v109
  %v470 = vunpack.c.l.b16 %v110
  %v471 = vunpack.c.h.b16 %v110
  %v472 = vunpack.c.l.b16 %v111
  %v473 = vunpack.c.h.b16 %v111
  %v474 = vpack.c.b16 %v282, %v278
  %v475 = vpack.c.b16 %v283, %v279
  %v476 = vpack.c.b16 %v284, %v280
  %v477 = vpack.c.b16 %v285, %v281
  %v478 = vpack.c.b16 %v290, %v286
  %v479 = vpack.c.b16 %v291, %v287
  %v480 = vpack.c.b16 %v292, %v288
  %v481 = vpack.c.b16 %v293, %v289
  %v482 = vpack.c.b16 %v298, %v294
  %v483 = vpack.c.b16 %v299, %v295
  %v484 = vpack.c.b16 %v300, %v296
  %v485 = vpack.c.b16 %v301, %v297
  %v486 = vpack.c.b16 %v306, %v302
  %v487 = vpack.c.b16 %v307, %v303
  %v488 = vpack.c.b16 %v308, %v304
  %v489 = vpack.c.b16 %v309, %v305
  %v490 = vpack.c.b16 %v314, %v310
  %v491 = vpack.c.b16 %v315, %v311
  %v492 = vpack.c.b16 %v316, %v312
  %v493 = vpack.c.b16 %v317, %v313
  %v494 = vpack.c.b16 %v322, %v318
  %v495 = vpack.c.b16 %v323, %v319
  %v496 = vpack.c.b16 %v324, %v320
  %v497 = vpack.c.b16 %v325, %v321
  %v498 = vpack.c.b16 %v330, %v326
  %v499 = vpack.c.b16 %v331, %v327
  %v500 = vpack.c.b16 %v332, %v328
  %v501 = vpack.c.b16 %v333, %v329
  %v502 = vpack.c.b16 %v338, %v334
  %v503 = vpack.c.b16 %v339, %v335
  %v504 = vpack.c.b16 %v340, %v336
  %v505 = vpack.c.b16 %v341, %v337
  %v506 = vpack.c.b16 %v346, %v342
  %v507 = vpack.c.b16 %v347, %v343
  %v508 = vpack.c.b16 %v348, %v344
  %v509 = vpack.c.b16 %v349, %v345
  %v510 = vpack.c.b16 %v354, %v350
  %v511 = vpack.c.b16 %v355, %v351
  %v512 = vpack.c.b16 %v356, %v352
  %v513 = vpack.c.b16 %v357, %v353
  %v514 = vpack.c.b16 %v362, %v358
  %v515 = vpack.c.b16 %v363, %v359
  %v516 = vpack.c.b16 %v364, %v360
  %v517 = vpack.c.b16 %v365, %v361
  %v518 = vpack.c.b16 %v370, %v366
  %v519 = vpack.c.b16 %v371, %v367
  %v520 = vpack.c.b16 %v372, %v368
  %v521 = vpack.c.b16 %v373, %v369
  %v522 = vpack.c.b16 %v378, %v374
  %v523 = vpack.c.b16 %v379, %v375
  %v524 = vpack.c.b16 %v380, %v376
  %v525 = vpack.c.b16 %v381, %v377
  %v526 = vpack.c.b16 %v386, %v382
  %v527 = vpack.c.b16 %v387, %v383
  %v528 = vpack.c.b16 %v388, %v384
  %v529 = vpack.c.b16 %v389, %v385
  %v530 = vpack.c.b16 %v394, %v390
  %v531 = vpack.c.b16 %v395, %v391
  %v532 = vpack.c.b16 %v396, %v392
  %v533 = vpack.c.b16 %v397, %v393
  %v534 = vpack.c.b16 %v402, %v398
  %v535 = vpack.c.b16 %v403, %v399
  %v536 = vpack.c.b16 %v404, %v400
  %v537 = vpack.c.b16 %v405, %v401
  %v538 = vpack.c.b16 %v410, %v406
  %v539 = vpack.c.b16 %v411, %v407
  %v540 = vpack.c.b16 %v412, %v408
  %v541 = vpack.c.b16 %v413, %v409
  %v542 = vpack.c.b16 %v418, %v414
  %v543 = vpack.c.b16 %v419, %v415
  %v544 = vpack.c.b16 %v420, %v416
  %v545 = vpack.c.b16 %v421, %v417
  %v546 = vpack.c.b16 %v426, %v422
  %v547 = vpack.c.b16 %v427, %v423
  %v548 = vpack.c.b16 %v428, %v424
  %v549 = vpack.c.b16 %v429, %v425
  %v550 = vpack.c.b16 %v434, %v430
  %v551 = vpack.c.b16 %v435, %v431
  %v552 = vpack.c.b16 %v436, %v432
  %v553 = vpack.c.b16 %v437, %v433
  %v554 = vpack.c.b16 %v442, %v438
  %v555 = vpack.c.b16 %v443, %v439
  %v556 = vpack.c.b16 %v444, %v440
  %v557 = vpack.c.b16 %v445, %v441
  %v558 = vpack.c.b16 %v450, %v446
  %v559 = vpack.c.b16 %v451, %v447
  %v560 = vpack.c.b16 %v452, %v448
  %v561 = vpack.c.b16 %v453, %v449
  %v562 = vpack.c.b16 %v458, %v454
  %v563 = vpack.c.b16 %v459, %v455
  %v564 = vpack.c.b16 %v460, %v456
  %v565 = vpack.c.b16 %v461, %v457
  %v566 = vpack.c.b16 %v466, %v462
  %v567 = vpack.c.b16 %v467, %v463
  %v568 = vpack.c.b16 %v468, %v464
  %v569 = vpack.c.b16 %v469, %v465
  %v570 = vpack.c.b16 %v470, %v470
  %v571 = vpack.c.b16 %v471, %v471
  %v572 = vpack.c.b16 %v472, %v472
  %v573 = vpack.c.b16 %v473, %v473
  %v738 = vunpack.c.l.b16 %v112
  %v739 = vunpack.c.l.b16 %v113
  %v740 = vunpack.c.l.b16 %v114
  %v741 = vunpack.c.l.b16 %v115
  %v742 = vunpack.c.l.b16 %v116
  %v743 = vunpack.c.l.b16 %v117
  %v744 = vunpack.c.l.b16 %v118
  %v745 = vunpack.c.l.b16 %v119
  %v746 = vunpack.c.l.b16 %v120
  %v747 = vunpack.c.l.b16 %v121
  %v748 = vunpack.c.l.b16 %v122
  %v749 = vunpack.c.l.b16 %v123
  %v750 = vunpack.c.l.b16 %v124
  %v751 = vunpack.c.l.b16 %v125
  %v752 = vunpack.c.l.b16 %v126
  %v753 = vunpack.c.l.b16 %v127
  %v754 = vunpack.c.l.b16 %v128
  %v755 = vunpack.c.l.b16 %v129
  %v756 = vunpack.c.l.b16 %v130
  %v757 = vunpack.c.l.b16 %v131
  %v758 = vunpack.c.l.b16 %v132
  %v759 = vunpack.c.l.b16 %v133
  %v760 = vunpack.c.l.b16 %v134
  %v761 = vunpack.c.l.b16 %v135
  %v762 = vunpack.c.l.b16 %v136
  %v763 = vunpack.c.l.b16 %v137
  %v764 = vunpack.c.l.b16 %v138
  %v765 = vunpack.c.l.b16 %v139
  %v766 = vunpack.c.l.b16 %v140
  %v767 = vunpack.c.l.b16 %v141
  %v768 = vunpack.c.l.b16 %v142
  %v769 = vunpack.c.l.b16 %v143
  %v770 = vunpack.c.l.b16 %v144
  %v771 = vunpack.c.l.b16 %v145
  %v772 = vunpack.c.l.b16 %v146
  %v773 = vunpack.c.l.b16 %v147
  %v774 = vunpack.c.l.b16 %v148
  %v775 = vunpack.c.l.b16 %v149
  %v776 = vunpack.c.l.b16 %v150
  %v777 = vunpack.c.l.b16 %v151
  %v778 = vunpack.c.l.b16 %v152
  %v779 = vunpack.c.l.b16 %v153
  %v780 = vunpack.c.l.b16 %v154
  %v781 = vunpack.c.l.b16 %v155
  %v782 = vunpack.c.l.b16 %v156
  %v783 = vunpack.c.l.b16 %v157
  %v784 = vunpack.c.l.b16 %v158
  %v785 = vunpack.c.l.b16 %v159
  %v786 = vunpack.c.l.b16 %v160
  %v787 = vunpack.c.l.b16 %v161
  %v788 = vunpack.c.l.b16 %v162
  %v789 = vunpack.c.l.b16 %v163
  %v790 = vunpack.c.l.b16 %v164
  %v791 = vunpack.c.l.b16 %v165
  %v792 = vunpack.c.l.b16 %v166
  %v793 = vunpack.c.l.b16 %v167
  %v794 = vunpack.c.l.b16 %v168
  %v795 = vunpack.c.l.b16 %v169
  %v796 = vunpack.c.l.b16 %v170
  %v797 = vunpack.c.l.b16 %v171
  %v798 = vunpack.c.l.b16 %v172
  %v799 = vunpack.c.l.b16 %v173
  %v800 = vunpack.c.l.b16 %v174
  %v801 = vunpack.c.l.b16 %v175
  %v802 = vpack.c.b16 %v739, %v738
  %v803 = vpack.c.b16 %v741, %v740
  %v804 = vpack.c.b16 %v743, %v742
  %v805 = vpack.c.b16 %v745, %v744
  %v806 = vpack.c.b16 %v747, %v746
  %v807 = vpack.c.b16 %v749, %v748
  %v808 = vpack.c.b16 %v751, %v750
  %v809 = vpack.c.b16 %v753, %v752
  %v810 = vpack.c.b16 %v755, %v754
  %v811 = vpack.c.b16 %v757, %v756
  %v812 = vpack.c.b16 %v759, %v758
  %v813 = vpack.c.b16 %v761, %v760
  %v814 = vpack.c.b16 %v763, %v762
  %v815 = vpack.c.b16 %v765, %v764
  %v816 = vpack.c.b16 %v767, %v766
  %v817 = vpack.c.b16 %v769, %v768
  %v818 = vpack.c.b16 %v771, %v770
  %v819 = vpack.c.b16 %v773, %v772
  %v820 = vpack.c.b16 %v775, %v774
  %v821 = vpack.c.b16 %v777, %v776
  %v822 = vpack.c.b16 %v779, %v778
  %v823 = vpack.c.b16 %v781, %v780
  %v824 = vpack.c.b16 %v783, %v782
  %v825 = vpack.c.b16 %v785, %v784
  %v826 = vpack.c.b16 %v787, %v786
  %v827 = vpack.c.b16 %v789, %v788
  %v828 = vpack.c.b16 %v791, %v790
  %v829 = vpack.c.b16 %v793, %v792
  %v830 = vpack.c.b16 %v795, %v794
  %v831 = vpack.c.b16 %v797, %v796
  %v832 = vpack.c.b16 %v799, %v798
  %v833 = vpack.c.b16 %v801, %v800
  %866 = vmatpush.bf16.msra.mxu0 %v809
  %867 = vmatpush.bf16.msra.mxu0 %v808
  %868 = vmatpush.bf16.msra.mxu0 %v807
  %869 = vmatpush.bf16.msra.mxu0 %v806
  %870 = vmatpush.bf16.msra.mxu0 %v805
  %871 = vmatpush.bf16.msra.mxu0 %v804
  %872 = vmatpush.bf16.msra.mxu0 %v803
  %873 = vmatpush.bf16.msra.mxu0 %v802
  %874 = vmatmul.bf16.gmra.mxu0 %v474
  %v875 = vpop.f32.mrf.mxu0
  %v876 = vadd.f32 %v178, %v875
  %v877 = vpop.f32.mrf.mxu0
  %v878 = vadd.f32 %v178, %v877
  %879 = vmatmul.bf16.gmra.mxu0 %v478
  %v880 = vpop.f32.mrf.mxu0
  %v881 = vadd.f32 %v178, %v880
  %v882 = vpop.f32.mrf.mxu0
  %v883 = vadd.f32 %v178, %v882
  %884 = vmatmul.bf16.gmra.mxu0 %v482
  %v885 = vpop.f32.mrf.mxu0
  %v886 = vadd.f32 %v178, %v885
  %v887 = vpop.f32.mrf.mxu0
  %v888 = vadd.f32 %v178, %v887
  %889 = vmatmul.bf16.gmra.mxu0 %v486
  %v890 = vpop.f32.mrf.mxu0
  %v891 = vadd.f32 %v178, %v890
  %v892 = vpop.f32.mrf.mxu0
  %v893 = vadd.f32 %v178, %v892
  %894 = vmatmul.bf16.gmra.mxu0 %v490
  %v895 = vpop.f32.mrf.mxu0
  %v896 = vadd.f32 %v178, %v895
  %v897 = vpop.f32.mrf.mxu0
  %v898 = vadd.f32 %v178, %v897
  %899 = vmatmul.bf16.gmra.mxu0 %v494
  %v900 = vpop.f32.mrf.mxu0
  %v901 = vadd.f32 %v178, %v900
  %v902 = vpop.f32.mrf.mxu0
  %v903 = vadd.f32 %v178, %v902
  %904 = vmatmul.bf16.gmra.mxu0 %v498
  %v905 = vpop.f32.mrf.mxu0
  %v906 = vadd.f32 %v178, %v905
  %v907 = vpop.f32.mrf.mxu0
  %v908 = vadd.f32 %v178, %v907
  %909 = vmatmul.bf16.gmra.mxu0 %v502
  %v910 = vpop.f32.mrf.mxu0
  %v911 = vadd.f32 %v178, %v910
  %v912 = vpop.f32.mrf.mxu0
  %v913 = vadd.f32 %v178, %v912
  %914 = vmatmul.bf16.gmra.mxu0 %v506
  %v915 = vpop.f32.mrf.mxu0
  %v916 = vadd.f32 %v178, %v915
  %v917 = vpop.f32.mrf.mxu0
  %v918 = vadd.f32 %v178, %v917
  %919 = vmatmul.bf16.gmra.mxu0 %v510
  %v920 = vpop.f32.mrf.mxu0
  %v921 = vadd.f32 %v178, %v920
  %v922 = vpop.f32.mrf.mxu0
  %v923 = vadd.f32 %v178, %v922
  %924 = vmatmul.bf16.gmra.mxu0 %v514
  %v925 = vpop.f32.mrf.mxu0
  %v926 = vadd.f32 %v178, %v925
  %v927 = vpop.f32.mrf.mxu0
  %v928 = vadd.f32 %v178, %v927
  %929 = vmatmul.bf16.gmra.mxu0 %v518
  %v930 = vpop.f32.mrf.mxu0
  %v931 = vadd.f32 %v178, %v930
  %v932 = vpop.f32.mrf.mxu0
  %v933 = vadd.f32 %v178, %v932
  %934 = vmatmul.bf16.gmra.mxu0 %v522
  %v935 = vpop.f32.mrf.mxu0
  %v936 = vadd.f32 %v178, %v935
  %v937 = vpop.f32.mrf.mxu0
  %v938 = vadd.f32 %v178, %v937
  %939 = vmatmul.bf16.gmra.mxu0 %v526
  %v940 = vpop.f32.mrf.mxu0
  %v941 = vadd.f32 %v178, %v940
  %v942 = vpop.f32.mrf.mxu0
  %v943 = vadd.f32 %v178, %v942
  %944 = vmatmul.bf16.gmra.mxu0 %v530
  %v945 = vpop.f32.mrf.mxu0
  %v946 = vadd.f32 %v178, %v945
  %v947 = vpop.f32.mrf.mxu0
  %v948 = vadd.f32 %v178, %v947
  %949 = vmatmul.bf16.gmra.mxu0 %v534
  %v950 = vpop.f32.mrf.mxu0
  %v951 = vadd.f32 %v178, %v950
  %v952 = vpop.f32.mrf.mxu0
  %v953 = vadd.f32 %v178, %v952
  %954 = vmatmul.bf16.gmra.mxu0 %v538
  %v955 = vpop.f32.mrf.mxu0
  %v956 = vadd.f32 %v178, %v955
  %v957 = vpop.f32.mrf.mxu0
  %v958 = vadd.f32 %v178, %v957
  %959 = vmatmul.bf16.gmra.mxu0 %v542
  %v960 = vpop.f32.mrf.mxu0
  %v961 = vadd.f32 %v178, %v960
  %v962 = vpop.f32.mrf.mxu0
  %v963 = vadd.f32 %v178, %v962
  %964 = vmatmul.bf16.gmra.mxu0 %v546
  %v965 = vpop.f32.mrf.mxu0
  %v966 = vadd.f32 %v178, %v965
  %v967 = vpop.f32.mrf.mxu0
  %v968 = vadd.f32 %v178, %v967
  %969 = vmatmul.bf16.gmra.mxu0 %v550
  %v970 = vpop.f32.mrf.mxu0
  %v971 = vadd.f32 %v178, %v970
  %v972 = vpop.f32.mrf.mxu0
  %v973 = vadd.f32 %v178, %v972
  %974 = vmatmul.bf16.gmra.mxu0 %v554
  %v975 = vpop.f32.mrf.mxu0
  %v976 = vadd.f32 %v178, %v975
  %v977 = vpop.f32.mrf.mxu0
  %v978 = vadd.f32 %v178, %v977
  %979 = vmatmul.bf16.gmra.mxu0 %v558
  %v980 = vpop.f32.mrf.mxu0
  %v981 = vadd.f32 %v178, %v980
  %v982 = vpop.f32.mrf.mxu0
  %v983 = vadd.f32 %v178, %v982
  %984 = vmatmul.bf16.gmra.mxu0 %v562
  %v985 = vpop.f32.mrf.mxu0
  %v986 = vadd.f32 %v178, %v985
  %v987 = vpop.f32.mrf.mxu0
  %v988 = vadd.f32 %v178, %v987
  %989 = vmatmul.bf16.gmra.mxu0 %v566
  %v990 = vpop.f32.mrf.mxu0
  %v991 = vadd.f32 %v178, %v990
  %v992 = vpop.f32.mrf.mxu0
  %v993 = vadd.f32 %v178, %v992
  %994 = vmatmul.bf16.gmra.mxu0 %v570
  %v995 = vpop.f32.mrf.mxu0
  %v996 = vadd.f32 %v178, %v995
  %v997 = vpop.f32.mrf.mxu0
  %998 = vdwg.mxu0
  %999 = vmatpush.bf16.msra.mxu0 %v817
  %1000 = vmatpush.bf16.msra.mxu0 %v816
  %1001 = vmatpush.bf16.msra.mxu0 %v815
  %1002 = vmatpush.bf16.msra.mxu0 %v814
  %1003 = vmatpush.bf16.msra.mxu0 %v813
  %1004 = vmatpush.bf16.msra.mxu0 %v812
  %1005 = vmatpush.bf16.msra.mxu0 %v811
  %1006 = vmatpush.bf16.msra.mxu0 %v810
  %1007 = vmatmul.bf16.gmra.mxu0 %v475
  %v1008 = vpop.f32.mrf.mxu0
  %v1009 = vadd.f32 %v876, %v1008
  %v1010 = vpop.f32.mrf.mxu0
  %v1011 = vadd.f32 %v878, %v1010
  %1012 = vmatmul.bf16.gmra.mxu0 %v479
  %v1013 = vpop.f32.mrf.mxu0
  %v1014 = vadd.f32 %v881, %v1013
  %v1015 = vpop.f32.mrf.mxu0
  %v1016 = vadd.f32 %v883, %v1015
  %1017 = vmatmul.bf16.gmra.mxu0 %v483
  %v1018 = vpop.f32.mrf.mxu0
  %v1019 = vadd.f32 %v886, %v1018
  %v1020 = vpop.f32.mrf.mxu0
  %v1021 = vadd.f32 %v888, %v1020
  %1022 = vmatmul.bf16.gmra.mxu0 %v487
  %v1023 = vpop.f32.mrf.mxu0
  %v1024 = vadd.f32 %v891, %v1023
  %v1025 = vpop.f32.mrf.mxu0
  %v1026 = vadd.f32 %v893, %v1025
  %1027 = vmatmul.bf16.gmra.mxu0 %v491
  %v1028 = vpop.f32.mrf.mxu0
  %v1029 = vadd.f32 %v896, %v1028
  %v1030 = vpop.f32.mrf.mxu0
  %v1031 = vadd.f32 %v898, %v1030
  %1032 = vmatmul.bf16.gmra.mxu0 %v495
  %v1033 = vpop.f32.mrf.mxu0
  %v1034 = vadd.f32 %v901, %v1033
  %v1035 = vpop.f32.mrf.mxu0
  %v1036 = vadd.f32 %v903, %v1035
  %1037 = vmatmul.bf16.gmra.mxu0 %v499
  %v1038 = vpop.f32.mrf.mxu0
  %v1039 = vadd.f32 %v906, %v1038
  %v1040 = vpop.f32.mrf.mxu0
  %v1041 = vadd.f32 %v908, %v1040
  %1042 = vmatmul.bf16.gmra.mxu0 %v503
  %v1043 = vpop.f32.mrf.mxu0
  %v1044 = vadd.f32 %v911, %v1043
  %v1045 = vpop.f32.mrf.mxu0
  %v1046 = vadd.f32 %v913, %v1045
  %1047 = vmatmul.bf16.gmra.mxu0 %v507
  %v1048 = vpop.f32.mrf.mxu0
  %v1049 = vadd.f32 %v916, %v1048
  %v1050 = vpop.f32.mrf.mxu0
  %v1051 = vadd.f32 %v918, %v1050
  %1052 = vmatmul.bf16.gmra.mxu0 %v511
  %v1053 = vpop.f32.mrf.mxu0
  %v1054 = vadd.f32 %v921, %v1053
  %v1055 = vpop.f32.mrf.mxu0
  %v1056 = vadd.f32 %v923, %v1055
  %1057 = vmatmul.bf16.gmra.mxu0 %v515
  %v1058 = vpop.f32.mrf.mxu0
  %v1059 = vadd.f32 %v926, %v1058
  %v1060 = vpop.f32.mrf.mxu0
  %v1061 = vadd.f32 %v928, %v1060
  %1062 = vmatmul.bf16.gmra.mxu0 %v519
  %v1063 = vpop.f32.mrf.mxu0
  %v1064 = vadd.f32 %v931, %v1063
  %v1065 = vpop.f32.mrf.mxu0
  %v1066 = vadd.f32 %v933, %v1065
  %1067 = vmatmul.bf16.gmra.mxu0 %v523
  %v1068 = vpop.f32.mrf.mxu0
  %v1069 = vadd.f32 %v936, %v1068
  %v1070 = vpop.f32.mrf.mxu0
  %v1071 = vadd.f32 %v938, %v1070
  %1072 = vmatmul.bf16.gmra.mxu0 %v527
  %v1073 = vpop.f32.mrf.mxu0
  %v1074 = vadd.f32 %v941, %v1073
  %v1075 = vpop.f32.mrf.mxu0
  %v1076 = vadd.f32 %v943, %v1075
  %1077 = vmatmul.bf16.gmra.mxu0 %v531
  %v1078 = vpop.f32.mrf.mxu0
  %v1079 = vadd.f32 %v946, %v1078
  %v1080 = vpop.f32.mrf.mxu0
  %v1081 = vadd.f32 %v948, %v1080
  %1082 = vmatmul.bf16.gmra.mxu0 %v535
  %v1083 = vpop.f32.mrf.mxu0
  %v1084 = vadd.f32 %v951, %v1083
  %v1085 = vpop.f32.mrf.mxu0
  %v1086 = vadd.f32 %v953, %v1085
  %1087 = vmatmul.bf16.gmra.mxu0 %v539
  %v1088 = vpop.f32.mrf.mxu0
  %v1089 = vadd.f32 %v956, %v1088
  %v1090 = vpop.f32.mrf.mxu0
  %v1091 = vadd.f32 %v958, %v1090
  %1092 = vmatmul.bf16.gmra.mxu0 %v543
  %v1093 = vpop.f32.mrf.mxu0
  %v1094 = vadd.f32 %v961, %v1093
  %v1095 = vpop.f32.mrf.mxu0
  %v1096 = vadd.f32 %v963, %v1095
  %1097 = vmatmul.bf16.gmra.mxu0 %v547
  %v1098 = vpop.f32.mrf.mxu0
  %v1099 = vadd.f32 %v966, %v1098
  %v1100 = vpop.f32.mrf.mxu0
  %v1101 = vadd.f32 %v968, %v1100
  %1102 = vmatmul.bf16.gmra.mxu0 %v551
  %v1103 = vpop.f32.mrf.mxu0
  %v1104 = vadd.f32 %v971, %v1103
  %v1105 = vpop.f32.mrf.mxu0
  %v1106 = vadd.f32 %v973, %v1105
  %1107 = vmatmul.bf16.gmra.mxu0 %v555
  %v1108 = vpop.f32.mrf.mxu0
  %v1109 = vadd.f32 %v976, %v1108
  %v1110 = vpop.f32.mrf.mxu0
  %v1111 = vadd.f32 %v978, %v1110
  %1112 = vmatmul.bf16.gmra.mxu0 %v559
  %v1113 = vpop.f32.mrf.mxu0
  %v1114 = vadd.f32 %v981, %v1113
  %v1115 = vpop.f32.mrf.mxu0
  %v1116 = vadd.f32 %v983, %v1115
  %1117 = vmatmul.bf16.gmra.mxu0 %v563
  %v1118 = vpop.f32.mrf.mxu0
  %v1119 = vadd.f32 %v986, %v1118
  %v1120 = vpop.f32.mrf.mxu0
  %v1121 = vadd.f32 %v988, %v1120
  %1122 = vmatmul.bf16.gmra.mxu0 %v567
  %v1123 = vpop.f32.mrf.mxu0
  %v1124 = vadd.f32 %v991, %v1123
  %v1125 = vpop.f32.mrf.mxu0
  %v1126 = vadd.f32 %v993, %v1125
  %1127 = vmatmul.bf16.gmra.mxu0 %v571
  %v1128 = vpop.f32.mrf.mxu0
  %v1129 = vadd.f32 %v996, %v1128
  %v1130 = vpop.f32.mrf.mxu0
  %1131 = vdwg.mxu0
  %1132 = vmatpush.bf16.msra.mxu0 %v825
  %1133 = vmatpush.bf16.msra.mxu0 %v824
  %1134 = vmatpush.bf16.msra.mxu0 %v823
  %1135 = vmatpush.bf16.msra.mxu0 %v822
  %1136 = vmatpush.bf16.msra.mxu0 %v821
  %1137 = vmatpush.bf16.msra.mxu0 %v820
  %1138 = vmatpush.bf16.msra.mxu0 %v819
  %1139 = vmatpush.bf16.msra.mxu0 %v818
  %1140 = vmatmul.bf16.gmra.mxu0 %v476
  %v1141 = vpop.f32.mrf.mxu0
  %v1142 = vadd.f32 %v1009, %v1141
  %v1143 = vpop.f32.mrf.mxu0
  %v1144 = vadd.f32 %v1011, %v1143
  %1145 = vmatmul.bf16.gmra.mxu0 %v480
  %v1146 = vpop.f32.mrf.mxu0
  %v1147 = vadd.f32 %v1014, %v1146
  %v1148 = vpop.f32.mrf.mxu0
  %v1149 = vadd.f32 %v1016, %v1148
  %1150 = vmatmul.bf16.gmra.mxu0 %v484
  %v1151 = vpop.f32.mrf.mxu0
  %v1152 = vadd.f32 %v1019, %v1151
  %v1153 = vpop.f32.mrf.mxu0
  %v1154 = vadd.f32 %v1021, %v1153
  %1155 = vmatmul.bf16.gmra.mxu0 %v488
  %v1156 = vpop.f32.mrf.mxu0
  %v1157 = vadd.f32 %v1024, %v1156
  %v1158 = vpop.f32.mrf.mxu0
  %v1159 = vadd.f32 %v1026, %v1158
  %1160 = vmatmul.bf16.gmra.mxu0 %v492
  %v1161 = vpop.f32.mrf.mxu0
  %v1162 = vadd.f32 %v1029, %v1161
  %v1163 = vpop.f32.mrf.mxu0
  %v1164 = vadd.f32 %v1031, %v1163
  %1165 = vmatmul.bf16.gmra.mxu0 %v496
  %v1166 = vpop.f32.mrf.mxu0
  %v1167 = vadd.f32 %v1034, %v1166
  %v1168 = vpop.f32.mrf.mxu0
  %v1169 = vadd.f32 %v1036, %v1168
  %1170 = vmatmul.bf16.gmra.mxu0 %v500
  %v1171 = vpop.f32.mrf.mxu0
  %v1172 = vadd.f32 %v1039, %v1171
  %v1173 = vpop.f32.mrf.mxu0
  %v1174 = vadd.f32 %v1041, %v1173
  %1175 = vmatmul.bf16.gmra.mxu0 %v504
  %v1176 = vpop.f32.mrf.mxu0
  %v1177 = vadd.f32 %v1044, %v1176
  %v1178 = vpop.f32.mrf.mxu0
  %v1179 = vadd.f32 %v1046, %v1178
  %1180 = vmatmul.bf16.gmra.mxu0 %v508
  %v1181 = vpop.f32.mrf.mxu0
  %v1182 = vadd.f32 %v1049, %v1181
  %v1183 = vpop.f32.mrf.mxu0
  %v1184 = vadd.f32 %v1051, %v1183
  %1185 = vmatmul.bf16.gmra.mxu0 %v512
  %v1186 = vpop.f32.mrf.mxu0
  %v1187 = vadd.f32 %v1054, %v1186
  %v1188 = vpop.f32.mrf.mxu0
  %v1189 = vadd.f32 %v1056, %v1188
  %1190 = vmatmul.bf16.gmra.mxu0 %v516
  %v1191 = vpop.f32.mrf.mxu0
  %v1192 = vadd.f32 %v1059, %v1191
  %v1193 = vpop.f32.mrf.mxu0
  %v1194 = vadd.f32 %v1061, %v1193
  %1195 = vmatmul.bf16.gmra.mxu0 %v520
  %v1196 = vpop.f32.mrf.mxu0
  %v1197 = vadd.f32 %v1064, %v1196
  %v1198 = vpop.f32.mrf.mxu0
  %v1199 = vadd.f32 %v1066, %v1198
  %1200 = vmatmul.bf16.gmra.mxu0 %v524
  %v1201 = vpop.f32.mrf.mxu0
  %v1202 = vadd.f32 %v1069, %v1201
  %v1203 = vpop.f32.mrf.mxu0
  %v1204 = vadd.f32 %v1071, %v1203
  %1205 = vmatmul.bf16.gmra.mxu0 %v528
  %v1206 = vpop.f32.mrf.mxu0
  %v1207 = vadd.f32 %v1074, %v1206
  %v1208 = vpop.f32.mrf.mxu0
  %v1209 = vadd.f32 %v1076, %v1208
  %1210 = vmatmul.bf16.gmra.mxu0 %v532
  %v1211 = vpop.f32.mrf.mxu0
  %v1212 = vadd.f32 %v1079, %v1211
  %v1213 = vpop.f32.mrf.mxu0
  %v1214 = vadd.f32 %v1081, %v1213
  %1215 = vmatmul.bf16.gmra.mxu0 %v536
  %v1216 = vpop.f32.mrf.mxu0
  %v1217 = vadd.f32 %v1084, %v1216
  %v1218 = vpop.f32.mrf.mxu0
  %v1219 = vadd.f32 %v1086, %v1218
  %1220 = vmatmul.bf16.gmra.mxu0 %v540
  %v1221 = vpop.f32.mrf.mxu0
  %v1222 = vadd.f32 %v1089, %v1221
  %v1223 = vpop.f32.mrf.mxu0
  %v1224 = vadd.f32 %v1091, %v1223
  %1225 = vmatmul.bf16.gmra.mxu0 %v544
  %v1226 = vpop.f32.mrf.mxu0
  %v1227 = vadd.f32 %v1094, %v1226
  %v1228 = vpop.f32.mrf.mxu0
  %v1229 = vadd.f32 %v1096, %v1228
  %1230 = vmatmul.bf16.gmra.mxu0 %v548
  %v1231 = vpop.f32.mrf.mxu0
  %v1232 = vadd.f32 %v1099, %v1231
  %v1233 = vpop.f32.mrf.mxu0
  %v1234 = vadd.f32 %v1101, %v1233
  %1235 = vmatmul.bf16.gmra.mxu0 %v552
  %v1236 = vpop.f32.mrf.mxu0
  %v1237 = vadd.f32 %v1104, %v1236
  %v1238 = vpop.f32.mrf.mxu0
  %v1239 = vadd.f32 %v1106, %v1238
  %1240 = vmatmul.bf16.gmra.mxu0 %v556
  %v1241 = vpop.f32.mrf.mxu0
  %v1242 = vadd.f32 %v1109, %v1241
  %v1243 = vpop.f32.mrf.mxu0
  %v1244 = vadd.f32 %v1111, %v1243
  %1245 = vmatmul.bf16.gmra.mxu0 %v560
  %v1246 = vpop.f32.mrf.mxu0
  %v1247 = vadd.f32 %v1114, %v1246
  %v1248 = vpop.f32.mrf.mxu0
  %v1249 = vadd.f32 %v1116, %v1248
  %1250 = vmatmul.bf16.gmra.mxu0 %v564
  %v1251 = vpop.f32.mrf.mxu0
  %v1252 = vadd.f32 %v1119, %v1251
  %v1253 = vpop.f32.mrf.mxu0
  %v1254 = vadd.f32 %v1121, %v1253
  %1255 = vmatmul.bf16.gmra.mxu0 %v568
  %v1256 = vpop.f32.mrf.mxu0
  %v1257 = vadd.f32 %v1124, %v1256
  %v1258 = vpop.f32.mrf.mxu0
  %v1259 = vadd.f32 %v1126, %v1258
  %1260 = vmatmul.bf16.gmra.mxu0 %v572
  %v1261 = vpop.f32.mrf.mxu0
  %v1262 = vadd.f32 %v1129, %v1261
  %v1263 = vpop.f32.mrf.mxu0
  %1264 = vdwg.mxu0
  %1265 = vmatpush.bf16.msra.mxu0 %v833
  %1266 = vmatpush.bf16.msra.mxu0 %v832
  %1267 = vmatpush.bf16.msra.mxu0 %v831
  %1268 = vmatpush.bf16.msra.mxu0 %v830
  %1269 = vmatpush.bf16.msra.mxu0 %v829
  %1270 = vmatpush.bf16.msra.mxu0 %v828
  %1271 = vmatpush.bf16.msra.mxu0 %v827
  %1272 = vmatpush.bf16.msra.mxu0 %v826
  %1273 = vmatmul.bf16.gmra.mxu0 %v477
  %v1274 = vpop.f32.mrf.mxu0
  %v1275 = vadd.f32 %v1142, %v1274
  %v1276 = vpop.f32.mrf.mxu0
  %v1277 = vadd.f32 %v1144, %v1276
  %1278 = vmatmul.bf16.gmra.mxu0 %v481
  %v1279 = vpop.f32.mrf.mxu0
  %v1280 = vadd.f32 %v1147, %v1279
  %v1281 = vpop.f32.mrf.mxu0
  %v1282 = vadd.f32 %v1149, %v1281
  %1283 = vmatmul.bf16.gmra.mxu0 %v485
  %v1284 = vpop.f32.mrf.mxu0
  %v1285 = vadd.f32 %v1152, %v1284
  %v1286 = vpop.f32.mrf.mxu0
  %v1287 = vadd.f32 %v1154, %v1286
  %1288 = vmatmul.bf16.gmra.mxu0 %v489
  %v1289 = vpop.f32.mrf.mxu0
  %v1290 = vadd.f32 %v1157, %v1289
  %v1291 = vpop.f32.mrf.mxu0
  %v1292 = vadd.f32 %v1159, %v1291
  %1293 = vmatmul.bf16.gmra.mxu0 %v493
  %v1294 = vpop.f32.mrf.mxu0
  %v1295 = vadd.f32 %v1162, %v1294
  %v1296 = vpop.f32.mrf.mxu0
  %v1297 = vadd.f32 %v1164, %v1296
  %1298 = vmatmul.bf16.gmra.mxu0 %v497
  %v1299 = vpop.f32.mrf.mxu0
  %v1300 = vadd.f32 %v1167, %v1299
  %v1301 = vpop.f32.mrf.mxu0
  %v1302 = vadd.f32 %v1169, %v1301
  %1303 = vmatmul.bf16.gmra.mxu0 %v501
  %v1304 = vpop.f32.mrf.mxu0
  %v1305 = vadd.f32 %v1172, %v1304
  %v1306 = vpop.f32.mrf.mxu0
  %v1307 = vadd.f32 %v1174, %v1306
  %1308 = vmatmul.bf16.gmra.mxu0 %v505
  %v1309 = vpop.f32.mrf.mxu0
  %v1310 = vadd.f32 %v1177, %v1309
  %v1311 = vpop.f32.mrf.mxu0
  %v1312 = vadd.f32 %v1179, %v1311
  %1313 = vmatmul.bf16.gmra.mxu0 %v509
  %v1314 = vpop.f32.mrf.mxu0
  %v1315 = vadd.f32 %v1182, %v1314
  %v1316 = vpop.f32.mrf.mxu0
  %v1317 = vadd.f32 %v1184, %v1316
  %1318 = vmatmul.bf16.gmra.mxu0 %v513
  %v1319 = vpop.f32.mrf.mxu0
  %v1320 = vadd.f32 %v1187, %v1319
  %v1321 = vpop.f32.mrf.mxu0
  %v1322 = vadd.f32 %v1189, %v1321
  %1323 = vmatmul.bf16.gmra.mxu0 %v517
  %v1324 = vpop.f32.mrf.mxu0
  %v1325 = vadd.f32 %v1192, %v1324
  %v1326 = vpop.f32.mrf.mxu0
  %v1327 = vadd.f32 %v1194, %v1326
  %1328 = vmatmul.bf16.gmra.mxu0 %v521
  %v1329 = vpop.f32.mrf.mxu0
  %v1330 = vadd.f32 %v1197, %v1329
  %v1331 = vpop.f32.mrf.mxu0
  %v1332 = vadd.f32 %v1199, %v1331
  %1333 = vmatmul.bf16.gmra.mxu0 %v525
  %v1334 = vpop.f32.mrf.mxu0
  %v1335 = vadd.f32 %v1202, %v1334
  %v1336 = vpop.f32.mrf.mxu0
  %v1337 = vadd.f32 %v1204, %v1336
  %1338 = vmatmul.bf16.gmra.mxu0 %v529
  %v1339 = vpop.f32.mrf.mxu0
  %v1340 = vadd.f32 %v1207, %v1339
  %v1341 = vpop.f32.mrf.mxu0
  %v1342 = vadd.f32 %v1209, %v1341
  %1343 = vmatmul.bf16.gmra.mxu0 %v533
  %v1344 = vpop.f32.mrf.mxu0
  %v1345 = vadd.f32 %v1212, %v1344
  %v1346 = vpop.f32.mrf.mxu0
  %v1347 = vadd.f32 %v1214, %v1346
  %1348 = vmatmul.bf16.gmra.mxu0 %v537
  %v1349 = vpop.f32.mrf.mxu0
  %v1350 = vadd.f32 %v1217, %v1349
  %v1351 = vpop.f32.mrf.mxu0
  %v1352 = vadd.f32 %v1219, %v1351
  %1353 = vmatmul.bf16.gmra.mxu0 %v541
  %v1354 = vpop.f32.mrf.mxu0
  %v1355 = vadd.f32 %v1222, %v1354
  %v1356 = vpop.f32.mrf.mxu0
  %v1357 = vadd.f32 %v1224, %v1356
  %1358 = vmatmul.bf16.gmra.mxu0 %v545
  %v1359 = vpop.f32.mrf.mxu0
  %v1360 = vadd.f32 %v1227, %v1359
  %v1361 = vpop.f32.mrf.mxu0
  %v1362 = vadd.f32 %v1229, %v1361
  %1363 = vmatmul.bf16.gmra.mxu0 %v549
  %v1364 = vpop.f32.mrf.mxu0
  %v1365 = vadd.f32 %v1232, %v1364
  %v1366 = vpop.f32.mrf.mxu0
  %v1367 = vadd.f32 %v1234, %v1366
  %1368 = vmatmul.bf16.gmra.mxu0 %v553
  %v1369 = vpop.f32.mrf.mxu0
  %v1370 = vadd.f32 %v1237, %v1369
  %v1371 = vpop.f32.mrf.mxu0
  %v1372 = vadd.f32 %v1239, %v1371
  %1373 = vmatmul.bf16.gmra.mxu0 %v557
  %v1374 = vpop.f32.mrf.mxu0
  %v1375 = vadd.f32 %v1242, %v1374
  %v1376 = vpop.f32.mrf.mxu0
  %v1377 = vadd.f32 %v1244, %v1376
  %1378 = vmatmul.bf16.gmra.mxu0 %v561
  %v1379 = vpop.f32.mrf.mxu0
  %v1380 = vadd.f32 %v1247, %v1379
  %v1381 = vpop.f32.mrf.mxu0
  %v1382 = vadd.f32 %v1249, %v1381
  %1383 = vmatmul.bf16.gmra.mxu0 %v565
  %v1384 = vpop.f32.mrf.mxu0
  %v1385 = vadd.f32 %v1252, %v1384
  %v1386 = vpop.f32.mrf.mxu0
  %v1387 = vadd.f32 %v1254, %v1386
  %1388 = vmatmul.bf16.gmra.mxu0 %v569
  %v1389 = vpop.f32.mrf.mxu0
  %v1390 = vadd.f32 %v1257, %v1389
  %v1391 = vpop.f32.mrf.mxu0
  %v1392 = vadd.f32 %v1259, %v1391
  %1393 = vmatmul.bf16.gmra.mxu0 %v573
  %v1394 = vpop.f32.mrf.mxu0
  %v1395 = vadd.f32 %v1262, %v1394
  %v1396 = vpop.f32.mrf.mxu0
  %1397 = vdwg.mxu0
  %v1398 = vmax.f32 %v1275, 0.0
  %v1399 = vmax.f32 %v1277, 0.0
  %v1400 = vmax.f32 %v1280, 0.0
  %v1401 = vmax.f32 %v1282, 0.0
  %v1402 = vmax.f32 %v1285, 0.0
  %v1403 = vmax.f32 %v1287, 0.0
  %v1404 = vmax.f32 %v1290, 0.0
  %v1405 = vmax.f32 %v1292, 0.0
  %v1406 = vmax.f32 %v1295, 0.0
  %v1407 = vmax.f32 %v1297, 0.0
  %v1408 = vmax.f32 %v1300, 0.0
  %v1409 = vmax.f32 %v1302, 0.0
  %v1410 = vmax.f32 %v1305, 0.0
  %v1411 = vmax.f32 %v1307, 0.0
  %v1412 = vmax.f32 %v1310, 0.0
  %v1413 = vmax.f32 %v1312, 0.0
  %v1414 = vmax.f32 %v1315, 0.0
  %v1415 = vmax.f32 %v1317, 0.0
  %v1416 = vmax.f32 %v1320, 0.0
  %v1417 = vmax.f32 %v1322, 0.0
  %v1418 = vmax.f32 %v1325, 0.0
  %v1419 = vmax.f32 %v1327, 0.0
  %v1420 = vmax.f32 %v1330, 0.0
  %v1421 = vmax.f32 %v1332, 0.0
  %v1422 = vmax.f32 %v1335, 0.0
  %v1423 = vmax.f32 %v1337, 0.0
  %v1424 = vmax.f32 %v1340, 0.0
  %v1425 = vmax.f32 %v1342, 0.0
  %v1426 = vmax.f32 %v1345, 0.0
  %v1427 = vmax.f32 %v1347, 0.0
  %v1428 = vmax.f32 %v1350, 0.0
  %v1429 = vmax.f32 %v1352, 0.0
  %v1430 = vmax.f32 %v1355, 0.0
  %v1431 = vmax.f32 %v1357, 0.0
  %v1432 = vmax.f32 %v1360, 0.0
  %v1433 = vmax.f32 %v1362, 0.0
  %v1434 = vmax.f32 %v1365, 0.0
  %v1435 = vmax.f32 %v1367, 0.0
  %v1436 = vmax.f32 %v1370, 0.0
  %v1437 = vmax.f32 %v1372, 0.0
  %v1438 = vmax.f32 %v1375, 0.0
  %v1439 = vmax.f32 %v1377, 0.0
  %v1440 = vmax.f32 %v1380, 0.0
  %v1441 = vmax.f32 %v1382, 0.0
  %v1442 = vmax.f32 %v1385, 0.0
  %v1443 = vmax.f32 %v1387, 0.0
  %v1444 = vmax.f32 %v1390, 0.0
  %v1445 = vmax.f32 %v1392, 0.0
  %v1446 = vmax.f32 %v1395, 0.0
  %v1447 = vpack.c.bf16 %v1398, %v1398
  %v1448 = vpack.c.bf16 %v1399, %v1399
  %v1449 = vpack.c.bf16 %v1400, %v1400
  %v1450 = vpack.c.bf16 %v1401, %v1401
  %v1451 = vpack.c.bf16 %v1402, %v1402
  %v1452 = vpack.c.bf16 %v1403, %v1403
  %v1453 = vpack.c.bf16 %v1404, %v1404
  %v1454 = vpack.c.bf16 %v1405, %v1405
  %v1455 = vpack.c.bf16 %v1406, %v1406
  %v1456 = vpack.c.bf16 %v1407, %v1407
  %v1457 = vpack.c.bf16 %v1408, %v1408
  %v1458 = vpack.c.bf16 %v1409, %v1409
  %v1459 = vpack.c.bf16 %v1410, %v1410
  %v1460 = vpack.c.bf16 %v1411, %v1411
  %v1461 = vpack.c.bf16 %v1412, %v1412
  %v1462 = vpack.c.bf16 %v1413, %v1413
  %v1463 = vpack.c.bf16 %v1414, %v1414
  %v1464 = vpack.c.bf16 %v1415, %v1415
  %v1465 = vpack.c.bf16 %v1416, %v1416
  %v1466 = vpack.c.bf16 %v1417, %v1417
  %v1467 = vpack.c.bf16 %v1418, %v1418
  %v1468 = vpack.c.bf16 %v1419, %v1419
  %v1469 = vpack.c.bf16 %v1420, %v1420
  %v1470 = vpack.c.bf16 %v1421, %v1421
  %v1471 = vpack.c.bf16 %v1422, %v1422
  %v1472 = vpack.c.bf16 %v1423, %v1423
  %v1473 = vpack.c.bf16 %v1424, %v1424
  %v1474 = vpack.c.bf16 %v1425, %v1425
  %v1475 = vpack.c.bf16 %v1426, %v1426
  %v1476 = vpack.c.bf16 %v1427, %v1427
  %v1477 = vpack.c.bf16 %v1428, %v1428
  %v1478 = vpack.c.bf16 %v1429, %v1429
  %v1479 = vpack.c.bf16 %v1430, %v1430
  %v1480 = vpack.c.bf16 %v1431, %v1431
  %v1481 = vpack.c.bf16 %v1432, %v1432
  %v1482 = vpack.c.bf16 %v1433, %v1433
  %v1483 = vpack.c.bf16 %v1434, %v1434
  %v1484 = vpack.c.bf16 %v1435, %v1435
  %v1485 = vpack.c.bf16 %v1436, %v1436
  %v1486 = vpack.c.bf16 %v1437, %v1437
  %v1487 = vpack.c.bf16 %v1438, %v1438
  %v1488 = vpack.c.bf16 %v1439, %v1439
  %v1489 = vpack.c.bf16 %v1440, %v1440
  %v1490 = vpack.c.bf16 %v1441, %v1441
  %v1491 = vpack.c.bf16 %v1442, %v1442
  %v1492 = vpack.c.bf16 %v1443, %v1443
  %v1493 = vpack.c.bf16 %v1444, %v1444
  %v1494 = vpack.c.bf16 %v1445, %v1445
  %v1495 = vpack.c.bf16 %v1446, %v1446
  %vm1496 = vcmask 519168
  %1497 = vst.msk [vmem:[%s3] sm:$0xf] %vm1496, %v1447
  %1498 = vst.msk [vmem:[%s3 + $0x4] sm:$0xf] %vm1496, %v1448
  %1499 = vst.msk [vmem:[%s3 + $0x8] sm:$0xf] %vm1496, %v1449
  %1500 = vst.msk [vmem:[%s3 + $0xc] sm:$0xf] %vm1496, %v1450
  %1501 = vst.msk [vmem:[%s3 + $0x10] sm:$0xf] %vm1496, %v1451
  %1502 = vst.msk [vmem:[%s3 + $0x14] sm:$0xf] %vm1496, %v1452
  %1503 = vst.msk [vmem:[%s3 + $0x18] sm:$0xf] %vm1496, %v1453
  %1504 = vst.msk [vmem:[%s3 + $0x1c] sm:$0xf] %vm1496, %v1454
  %1505 = vst.msk [vmem:[%s3 + $0x20] sm:$0xf] %vm1496, %v1455
  %1506 = vst.msk [vmem:[%s3 + $0x24] sm:$0xf] %vm1496, %v1456
  %1507 = vst.msk [vmem:[%s3 + $0x28] sm:$0xf] %vm1496, %v1457
  %1508 = vst.msk [vmem:[%s3 + $0x2c] sm:$0xf] %vm1496, %v1458
  %1509 = vst.msk [vmem:[%s3 + $0x30] sm:$0xf] %vm1496, %v1459
  %1510 = vst.msk [vmem:[%s3 + $0x34] sm:$0xf] %vm1496, %v1460
  %1511 = vst.msk [vmem:[%s3 + $0x38] sm:$0xf] %vm1496, %v1461
  %1512 = vst.msk [vmem:[%s3 + $0x3c] sm:$0xf] %vm1496, %v1462
  %1513 = vst.msk [vmem:[%s3 + $0x40] sm:$0xf] %vm1496, %v1463
  %1514 = vst.msk [vmem:[%s3 + $0x44] sm:$0xf] %vm1496, %v1464
  %1515 = vst.msk [vmem:[%s3 + $0x48] sm:$0xf] %vm1496, %v1465
  %1516 = vst.msk [vmem:[%s3 + $0x4c] sm:$0xf] %vm1496, %v1466
  %1517 = vst.msk [vmem:[%s3 + $0x50] sm:$0xf] %vm1496, %v1467
  %1518 = vst.msk [vmem:[%s3 + $0x54] sm:$0xf] %vm1496, %v1468
  %1519 = vst.msk [vmem:[%s3 + $0x58] sm:$0xf] %vm1496, %v1469
  %1520 = vst.msk [vmem:[%s3 + $0x5c] sm:$0xf] %vm1496, %v1470
  %1521 = vst.msk [vmem:[%s3 + $0x60] sm:$0xf] %vm1496, %v1471
  %1522 = vst.msk [vmem:[%s3 + $0x64] sm:$0xf] %vm1496, %v1472
  %1523 = vst.msk [vmem:[%s3 + $0x68] sm:$0xf] %vm1496, %v1473
  %1524 = vst.msk [vmem:[%s3 + $0x6c] sm:$0xf] %vm1496, %v1474
  %1525 = vst.msk [vmem:[%s3 + $0x70] sm:$0xf] %vm1496, %v1475
  %1526 = vst.msk [vmem:[%s3 + $0x74] sm:$0xf] %vm1496, %v1476
  %1527 = vst.msk [vmem:[%s3 + $0x78] sm:$0xf] %vm1496, %v1477
  %1528 = vst.msk [vmem:[%s3 + $0x7c] sm:$0xf] %vm1496, %v1478
  %1529 = vst.msk [vmem:[%s3 + $0x80] sm:$0xf] %vm1496, %v1479
  %1530 = vst.msk [vmem:[%s3 + $0x84] sm:$0xf] %vm1496, %v1480
  %1531 = vst.msk [vmem:[%s3 + $0x88] sm:$0xf] %vm1496, %v1481
  %1532 = vst.msk [vmem:[%s3 + $0x8c] sm:$0xf] %vm1496, %v1482
  %1533 = vst.msk [vmem:[%s3 + $0x90] sm:$0xf] %vm1496, %v1483
  %1534 = vst.msk [vmem:[%s3 + $0x94] sm:$0xf] %vm1496, %v1484
  %1535 = vst.msk [vmem:[%s3 + $0x98] sm:$0xf] %vm1496, %v1485
  %1536 = vst.msk [vmem:[%s3 + $0x9c] sm:$0xf] %vm1496, %v1486
  %1537 = vst.msk [vmem:[%s3 + $0xa0] sm:$0xf] %vm1496, %v1487
  %1538 = vst.msk [vmem:[%s3 + $0xa4] sm:$0xf] %vm1496, %v1488
  %1539 = vst.msk [vmem:[%s3 + $0xa8] sm:$0xf] %vm1496, %v1489
  %1540 = vst.msk [vmem:[%s3 + $0xac] sm:$0xf] %vm1496, %v1490
  %1541 = vst.msk [vmem:[%s3 + $0xb0] sm:$0xf] %vm1496, %v1491
  %1542 = vst.msk [vmem:[%s3 + $0xb4] sm:$0xf] %vm1496, %v1492
  %1543 = vst.msk [vmem:[%s3 + $0xb8] sm:$0xf] %vm1496, %v1493
  %1544 = vst.msk [vmem:[%s3 + $0xbc] sm:$0xf] %vm1496, %v1494
  %1545 = vst.msk [vmem:[%s3 + $0xc0] sm:$0xf] %vm1496, %v1495
  // Predicated region
  $region14: #{ppo_forward.5} parent=0 // pred_check
    _
  $region15: #{ppo_forward.5} parent=0 // pred_check_branch
    %1547 = sbr.rel (0) target = $region17
  $region16: #{ppo_forward.5} parent=0 // pred_region
    _
  $region17: #{ppo_forward.5} parent=0 // pred_fallthru
    _
  // Predicated region
  $region18: #{ppo_forward.5} parent=0 // pred_check
    _
  $region19: #{ppo_forward.5} parent=0 // pred_check_branch
    %1549 = sbr.rel (0) target = $region21
  $region20: #{ppo_forward.5} parent=0 // pred_region
    _
  $region21: #{ppo_forward.5} parent=0 // pred_fallthru
    _

// kernel: ppo_forward.6
$region0: #{ppo_forward.6}
  #allocation0 [shape = 'u32[]', space=smem, size = 0x4, offset = 0x4, fixed_abs, tag = 'smem constant byte address 0x4 - core index']
  #allocation1 [shape = 'u32[72,128]{1,0:T(1,128)}', space=vmem, size = 0x9000, scoped, tag = 'internal scratch']
  %s0 = inlined_call_operand.vmem [shape: bf16[288,576], index: 0, kind: input, shape index: {}]
  %s1 = inlined_call_operand.vmem [shape: bf16[576,64], index: 1, kind: input, shape index: {}]
  %s2 = inlined_call_operand.vmem [shape: f32[1,64], index: 2, kind: input, shape index: {}]
  %s3 = inlined_call_operand.vmem [shape: bf16[288,64], index: 3, kind: output, shape index: {}]
  %s4 = sld [smem:[#allocation0]]
  $region22: #{ppo_forward.6} parent=0
    _
  %s6 = ssub.s32 1, %s4
  %s7 = scalar_select 0, %s6, %s4
  // Predicated region
  $region2: #{ppo_forward.6} parent=0 // pred_check
    _
  $region3: #{ppo_forward.6} parent=0 // pred_check_branch
    %9 = sbr.rel (0) target = $region5
  $region4: #{ppo_forward.6} parent=0 // pred_region
    _
  $region5: #{ppo_forward.6} parent=0 // pred_fallthru
    _
  // Predicated region
  $region6: #{ppo_forward.6} parent=0 // pred_check
    _
  $region7: #{ppo_forward.6} parent=0 // pred_check_branch
    %11 = sbr.rel (0) target = $region9
  $region8: #{ppo_forward.6} parent=0 // pred_region
    _
  $region9: #{ppo_forward.6} parent=0 // pred_fallthru
    _
  // Predicated region
  $region10: #{ppo_forward.6} parent=0 // pred_check
    _
  $region11: #{ppo_forward.6} parent=0 // pred_check_branch
    %13 = sbr.rel (0) target = $region13
  $region12: #{ppo_forward.6} parent=0 // pred_region
    _
  $region13: #{ppo_forward.6} parent=0 // pred_fallthru
    _
  %v15 = vld [vmem:[%s0] sm:$0xff]
  %v16 = vld [vmem:[%s0 + $0x8] sm:$0xff]
  %v17 = vld [vmem:[%s0 + $0x10] sm:$0xf]
  %v18 = vld [vmem:[%s0 + $0x14] sm:$0xff]
  %v19 = vld [vmem:[%s0 + $0x1c] sm:$0xff]
  %v20 = vld [vmem:[%s0 + $0x24] sm:$0xf]
  %v21 = vld [vmem:[%s0 + $0x28] sm:$0xff]
  %v22 = vld [vmem:[%s0 + $0x30] sm:$0xff]
  %v23 = vld [vmem:[%s0 + $0x38] sm:$0xf]
  %v24 = vld [vmem:[%s0 + $0x3c] sm:$0xff]
  %v25 = vld [vmem:[%s0 + $0x44] sm:$0xff]
  %v26 = vld [vmem:[%s0 + $0x4c] sm:$0xf]
  %v27 = vld [vmem:[%s0 + $0x50] sm:$0xff]
  %v28 = vld [vmem:[%s0 + $0x58] sm:$0xff]
  %v29 = vld [vmem:[%s0 + $0x60] sm:$0xf]
  %v30 = vld [vmem:[%s0 + $0x64] sm:$0xff]
  %v31 = vld [vmem:[%s0 + $0x6c] sm:$0xff]
  %v32 = vld [vmem:[%s0 + $0x74] sm:$0xf]
  %v33 = vld [vmem:[%s0 + $0x78] sm:$0xff]
  %v34 = vld [vmem:[%s0 + $0x80] sm:$0xff]
  %v35 = vld [vmem:[%s0 + $0x88] sm:$0xf]
  %v36 = vld [vmem:[%s0 + $0x8c] sm:$0xff]
  %v37 = vld [vmem:[%s0 + $0x94] sm:$0xff]
  %v38 = vld [vmem:[%s0 + $0x9c] sm:$0xf]
  %v39 = vld [vmem:[%s0 + $0xa0] sm:$0xff]
  %v40 = vld [vmem:[%s0 + $0xa8] sm:$0xff]
  %v41 = vld [vmem:[%s0 + $0xb0] sm:$0xf]
  %v42 = vld [vmem:[%s0 + $0xb4] sm:$0xff]
  %v43 = vld [vmem:[%s0 + $0xbc] sm:$0xff]
  %v44 = vld [vmem:[%s0 + $0xc4] sm:$0xf]
  %v45 = vld [vmem:[%s0 + $0xc8] sm:$0xff]
  %v46 = vld [vmem:[%s0 + $0xd0] sm:$0xff]
  %v47 = vld [vmem:[%s0 + $0xd8] sm:$0xf]
  %v48 = vld [vmem:[%s0 + $0xdc] sm:$0xff]
  %v49 = vld [vmem:[%s0 + $0xe4] sm:$0xff]
  %v50 = vld [vmem:[%s0 + $0xec] sm:$0xf]
  %v51 = vld [vmem:[%s0 + $0xf0] sm:$0xff]
  %v52 = vld [vmem:[%s0 + $0xf8] sm:$0xff]
  %v53 = vld [vmem:[%s0 + $0x100] sm:$0xf]
  %v54 = vld [vmem:[%s0 + $0x104] sm:$0xff]
  %v55 = vld [vmem:[%s0 + $0x10c] sm:$0xff]
  %v56 = vld [vmem:[%s0 + $0x114] sm:$0xf]
  %v57 = vld [vmem:[%s0 + $0x118] sm:$0xff]
  %v58 = vld [vmem:[%s0 + $0x120] sm:$0xff]
  %v59 = vld [vmem:[%s0 + $0x128] sm:$0xf]
  %v60 = vld [vmem:[%s0 + $0x12c] sm:$0xff]
  %v61 = vld [vmem:[%s0 + $0x134] sm:$0xff]
  %v62 = vld [vmem:[%s0 + $0x13c] sm:$0xf]
  %v63 = vld [vmem:[%s0 + $0x140] sm:$0xff]
  %v64 = vld [vmem:[%s0 + $0x148] sm:$0xff]
  %v65 = vld [vmem:[%s0 + $0x150] sm:$0xf]
  %v66 = vld [vmem:[%s0 + $0x154] sm:$0xff]
  %v67 = vld [vmem:[%s0 + $0x15c] sm:$0xff]
  %v68 = vld [vmem:[%s0 + $0x164] sm:$0xf]
  %v69 = vld [vmem:[%s0 + $0x168] sm:$0xff]
  %v70 = vld [vmem:[%s0 + $0x170] sm:$0xff]
  %v71 = vld [vmem:[%s0 + $0x178] sm:$0xf]
  %v72 = vld [vmem:[%s0 + $0x17c] sm:$0xff]
  %v73 = vld [vmem:[%s0 + $0x184] sm:$0xff]
  %v74 = vld [vmem:[%s0 + $0x18c] sm:$0xf]
  %v75 = vld [vmem:[%s0 + $0x190] sm:$0xff]
  %v76 = vld [vmem:[%s0 + $0x198] sm:$0xff]
  %v77 = vld [vmem:[%s0 + $0x1a0] sm:$0xf]
  %v78 = vld [vmem:[%s0 + $0x1a4] sm:$0xff]
  %v79 = vld [vmem:[%s0 + $0x1ac] sm:$0xff]
  %v80 = vld [vmem:[%s0 + $0x1b4] sm:$0xf]
  %v81 = vld [vmem:[%s0 + $0x1b8] sm:$0xff]
  %v82 = vld [vmem:[%s0 + $0x1c0] sm:$0xff]
  %v83 = vld [vmem:[%s0 + $0x1c8] sm:$0xf]
  %v84 = vld [vmem:[%s0 + $0x1cc] sm:$0xff]
  %v85 = vld [vmem:[%s0 + $0x1d4] sm:$0xff]
  %v86 = vld [vmem:[%s0 + $0x1dc] sm:$0xf]
  %v87 = vld [vmem:[%s0 + $0x1e0] sm:$0xff]
  %v88 = vld [vmem:[%s0 + $0x1e8] sm:$0xff]
  %v89 = vld [vmem:[%s0 + $0x1f0] sm:$0xf]
  %v90 = vld [vmem:[%s0 + $0x1f4] sm:$0xff]
  %v91 = vld [vmem:[%s0 + $0x1fc] sm:$0xff]
  %v92 = vld [vmem:[%s0 + $0x204] sm:$0xf]
  %v93 = vld [vmem:[%s0 + $0x208] sm:$0xff]
  %v94 = vld [vmem:[%s0 + $0x210] sm:$0xff]
  %v95 = vld [vmem:[%s0 + $0x218] sm:$0xf]
  %v96 = vld [vmem:[%s0 + $0x21c] sm:$0xff]
  %v97 = vld [vmem:[%s0 + $0x224] sm:$0xff]
  %v98 = vld [vmem:[%s0 + $0x22c] sm:$0xf]
  %v99 = vld [vmem:[%s0 + $0x230] sm:$0xff]
  %v100 = vld [vmem:[%s0 + $0x238] sm:$0xff]
  %v101 = vld [vmem:[%s0 + $0x240] sm:$0xf]
  %v102 = vld [vmem:[%s0 + $0x244] sm:$0xff]
  %v103 = vld [vmem:[%s0 + $0x24c] sm:$0xff]
  %v104 = vld [vmem:[%s0 + $0x254] sm:$0xf]
  %v105 = vld [vmem:[%s0 + $0x258] sm:$0xff]
  %v106 = vld [vmem:[%s0 + $0x260] sm:$0xff]
  %v107 = vld [vmem:[%s0 + $0x268] sm:$0xf]
  %v108 = vld [vmem:[%s0 + $0x26c] sm:$0xff]
  %v109 = vld [vmem:[%s0 + $0x274] sm:$0xff]
  %v110 = vld [vmem:[%s0 + $0x27c] sm:$0xf]
  %v111 = vld [vmem:[%s0 + $0x280] sm:$0xff]
  %v112 = vld [vmem:[%s0 + $0x288] sm:$0xff]
  %v113 = vld [vmem:[%s0 + $0x290] sm:$0xf]
  %v114 = vld [vmem:[%s0 + $0x294] sm:$0xff]
  %v115 = vld [vmem:[%s0 + $0x29c] sm:$0xff]
  %v116 = vld [vmem:[%s0 + $0x2a4] sm:$0xf]
  %v117 = vld [vmem:[%s0 + $0x2a8] sm:$0xff]
  %v118 = vld [vmem:[%s0 + $0x2b0] sm:$0xff]
  %v119 = vld [vmem:[%s0 + $0x2b8] sm:$0xf]
  %v120 = vld [vmem:[%s0 + $0x2bc] sm:$0xff]
  %v121 = vld [vmem:[%s0 + $0x2c4] sm:$0xff]
  %v122 = vld [vmem:[%s0 + $0x2cc] sm:$0xf]
  %v123 = vld [vmem:[%s1] sm:$0xf]
  %v124 = vld [vmem:[%s1 + $0x4] sm:$0xf]
  %v125 = vld [vmem:[%s1 + $0x8] sm:$0xf]
  %v126 = vld [vmem:[%s1 + $0xc] sm:$0xf]
  %v127 = vld [vmem:[%s1 + $0x10] sm:$0xf]
  %v128 = vld [vmem:[%s1 + $0x14] sm:$0xf]
  %v129 = vld [vmem:[%s1 + $0x18] sm:$0xf]
  %v130 = vld [vmem:[%s1 + $0x1c] sm:$0xf]
  %v131 = vld [vmem:[%s1 + $0x20] sm:$0xf]
  %v132 = vld [vmem:[%s1 + $0x24] sm:$0xf]
  %v133 = vld [vmem:[%s1 + $0x28] sm:$0xf]
  %v134 = vld [vmem:[%s1 + $0x2c] sm:$0xf]
  %v135 = vld [vmem:[%s1 + $0x30] sm:$0xf]
  %v136 = vld [vmem:[%s1 + $0x34] sm:$0xf]
  %v137 = vld [vmem:[%s1 + $0x38] sm:$0xf]
  %v138 = vld [vmem:[%s1 + $0x3c] sm:$0xf]
  %v139 = vld [vmem:[%s1 + $0x40] sm:$0xf]
  %v140 = vld [vmem:[%s1 + $0x44] sm:$0xf]
  %v141 = vld [vmem:[%s1 + $0x48] sm:$0xf]
  %v142 = vld [vmem:[%s1 + $0x4c] sm:$0xf]
  %v143 = vld [vmem:[%s1 + $0x50] sm:$0xf]
  %v144 = vld [vmem:[%s1 + $0x54] sm:$0xf]
  %v145 = vld [vmem:[%s1 + $0x58] sm:$0xf]
  %v146 = vld [vmem:[%s1 + $0x5c] sm:$0xf]
  %v147 = vld [vmem:[%s1 + $0x60] sm:$0xf]
  %v148 = vld [vmem:[%s1 + $0x64] sm:$0xf]
  %v149 = vld [vmem:[%s1 + $0x68] sm:$0xf]
  %v150 = vld [vmem:[%s1 + $0x6c] sm:$0xf]
  %v151 = vld [vmem:[%s1 + $0x70] sm:$0xf]
  %v152 = vld [vmem:[%s1 + $0x74] sm:$0xf]
  %v153 = vld [vmem:[%s1 + $0x78] sm:$0xf]
  %v154 = vld [vmem:[%s1 + $0x7c] sm:$0xf]
  %v155 = vld [vmem:[%s1 + $0x80] sm:$0xf]
  %v156 = vld [vmem:[%s1 + $0x84] sm:$0xf]
  %v157 = vld [vmem:[%s1 + $0x88] sm:$0xf]
  %v158 = vld [vmem:[%s1 + $0x8c] sm:$0xf]
  %v159 = vld [vmem:[%s1 + $0x90] sm:$0xf]
  %v160 = vld [vmem:[%s1 + $0x94] sm:$0xf]
  %v161 = vld [vmem:[%s1 + $0x98] sm:$0xf]
  %v162 = vld [vmem:[%s1 + $0x9c] sm:$0xf]
  %v163 = vld [vmem:[%s1 + $0xa0] sm:$0xf]
  %v164 = vld [vmem:[%s1 + $0xa4] sm:$0xf]
  %v165 = vld [vmem:[%s1 + $0xa8] sm:$0xf]
  %v166 = vld [vmem:[%s1 + $0xac] sm:$0xf]
  %v167 = vld [vmem:[%s1 + $0xb0] sm:$0xf]
  %v168 = vld [vmem:[%s1 + $0xb4] sm:$0xf]
  %v169 = vld [vmem:[%s1 + $0xb8] sm:$0xf]
  %v170 = vld [vmem:[%s1 + $0xbc] sm:$0xf]
  %v171 = vld [vmem:[%s1 + $0xc0] sm:$0xf]
  %v172 = vld [vmem:[%s1 + $0xc4] sm:$0xf]
  %v173 = vld [vmem:[%s1 + $0xc8] sm:$0xf]
  %v174 = vld [vmem:[%s1 + $0xcc] sm:$0xf]
  %v175 = vld [vmem:[%s1 + $0xd0] sm:$0xf]
  %v176 = vld [vmem:[%s1 + $0xd4] sm:$0xf]
  %v177 = vld [vmem:[%s1 + $0xd8] sm:$0xf]
  %v178 = vld [vmem:[%s1 + $0xdc] sm:$0xf]
  %v179 = vld [vmem:[%s1 + $0xe0] sm:$0xf]
  %v180 = vld [vmem:[%s1 + $0xe4] sm:$0xf]
  %v181 = vld [vmem:[%s1 + $0xe8] sm:$0xf]
  %v182 = vld [vmem:[%s1 + $0xec] sm:$0xf]
  %v183 = vld [vmem:[%s1 + $0xf0] sm:$0xf]
  %v184 = vld [vmem:[%s1 + $0xf4] sm:$0xf]
  %v185 = vld [vmem:[%s1 + $0xf8] sm:$0xf]
  %v186 = vld [vmem:[%s1 + $0xfc] sm:$0xf]
  %v187 = vld [vmem:[%s1 + $0x100] sm:$0xf]
  %v188 = vld [vmem:[%s1 + $0x104] sm:$0xf]
  %v189 = vld [vmem:[%s1 + $0x108] sm:$0xf]
  %v190 = vld [vmem:[%s1 + $0x10c] sm:$0xf]
  %v191 = vld [vmem:[%s1 + $0x110] sm:$0xf]
  %v192 = vld [vmem:[%s1 + $0x114] sm:$0xf]
  %v193 = vld [vmem:[%s1 + $0x118] sm:$0xf]
  %v194 = vld [vmem:[%s1 + $0x11c] sm:$0xf]
  %v195 = vld [vmem:[%s2] sm:$0x1]
  %v197 = vperm.slane %v195, 0
  %v307 = vunpack.c.l.b16 %v15
  %v308 = vunpack.c.h.b16 %v15
  %v309 = vunpack.c.l.b16 %v16
  %v310 = vunpack.c.h.b16 %v16
  %v311 = vunpack.c.l.b16 %v17
  %v312 = vunpack.c.l.b16 %v18
  %v313 = vunpack.c.h.b16 %v18
  %v314 = vunpack.c.l.b16 %v19
  %v315 = vunpack.c.h.b16 %v19
  %v316 = vunpack.c.l.b16 %v20
  %v317 = vunpack.c.l.b16 %v21
  %v318 = vunpack.c.h.b16 %v21
  %v319 = vunpack.c.l.b16 %v22
  %v320 = vunpack.c.h.b16 %v22
  %v321 = vunpack.c.l.b16 %v23
  %v322 = vunpack.c.l.b16 %v24
  %v323 = vunpack.c.h.b16 %v24
  %v324 = vunpack.c.l.b16 %v25
  %v325 = vunpack.c.h.b16 %v25
  %v326 = vunpack.c.l.b16 %v26
  %v327 = vunpack.c.l.b16 %v27
  %v328 = vunpack.c.h.b16 %v27
  %v329 = vunpack.c.l.b16 %v28
  %v330 = vunpack.c.h.b16 %v28
  %v331 = vunpack.c.l.b16 %v29
  %v332 = vunpack.c.l.b16 %v30
  %v333 = vunpack.c.h.b16 %v30
  %v334 = vunpack.c.l.b16 %v31
  %v335 = vunpack.c.h.b16 %v31
  %v336 = vunpack.c.l.b16 %v32
  %v337 = vunpack.c.l.b16 %v33
  %v338 = vunpack.c.h.b16 %v33
  %v339 = vunpack.c.l.b16 %v34
  %v340 = vunpack.c.h.b16 %v34
  %v341 = vunpack.c.l.b16 %v35
  %v342 = vunpack.c.l.b16 %v36
  %v343 = vunpack.c.h.b16 %v36
  %v344 = vunpack.c.l.b16 %v37
  %v345 = vunpack.c.h.b16 %v37
  %v346 = vunpack.c.l.b16 %v38
  %v347 = vunpack.c.l.b16 %v39
  %v348 = vunpack.c.h.b16 %v39
  %v349 = vunpack.c.l.b16 %v40
  %v350 = vunpack.c.h.b16 %v40
  %v351 = vunpack.c.l.b16 %v41
  %v352 = vunpack.c.l.b16 %v42
  %v353 = vunpack.c.h.b16 %v42
  %v354 = vunpack.c.l.b16 %v43
  %v355 = vunpack.c.h.b16 %v43
  %v356 = vunpack.c.l.b16 %v44
  %v357 = vunpack.c.l.b16 %v45
  %v358 = vunpack.c.h.b16 %v45
  %v359 = vunpack.c.l.b16 %v46
  %v360 = vunpack.c.h.b16 %v46
  %v361 = vunpack.c.l.b16 %v47
  %v362 = vunpack.c.l.b16 %v48
  %v363 = vunpack.c.h.b16 %v48
  %v364 = vunpack.c.l.b16 %v49
  %v365 = vunpack.c.h.b16 %v49
  %v366 = vunpack.c.l.b16 %v50
  %v367 = vunpack.c.l.b16 %v51
  %v368 = vunpack.c.h.b16 %v51
  %v369 = vunpack.c.l.b16 %v52
  %v370 = vunpack.c.h.b16 %v52
  %v371 = vunpack.c.l.b16 %v53
  %v372 = vunpack.c.l.b16 %v54
  %v373 = vunpack.c.h.b16 %v54
  %v374 = vunpack.c.l.b16 %v55
  %v375 = vunpack.c.h.b16 %v55
  %v376 = vunpack.c.l.b16 %v56
  %v377 = vunpack.c.l.b16 %v57
  %v378 = vunpack.c.h.b16 %v57
  %v379 = vunpack.c.l.b16 %v58
  %v380 = vunpack.c.h.b16 %v58
  %v381 = vunpack.c.l.b16 %v59
  %v382 = vunpack.c.l.b16 %v60
  %v383 = vunpack.c.h.b16 %v60
  %v384 = vunpack.c.l.b16 %v61
  %v385 = vunpack.c.h.b16 %v61
  %v386 = vunpack.c.l.b16 %v62
  %v387 = vunpack.c.l.b16 %v63
  %v388 = vunpack.c.h.b16 %v63
  %v389 = vunpack.c.l.b16 %v64
  %v390 = vunpack.c.h.b16 %v64
  %v391 = vunpack.c.l.b16 %v65
  %v392 = vunpack.c.l.b16 %v66
  %v393 = vunpack.c.h.b16 %v66
  %v394 = vunpack.c.l.b16 %v67
  %v395 = vunpack.c.h.b16 %v67
  %v396 = vunpack.c.l.b16 %v68
  %v397 = vunpack.c.l.b16 %v69
  %v398 = vunpack.c.h.b16 %v69
  %v399 = vunpack.c.l.b16 %v70
  %v400 = vunpack.c.h.b16 %v70
  %v401 = vunpack.c.l.b16 %v71
  %v402 = vunpack.c.l.b16 %v72
  %v403 = vunpack.c.h.b16 %v72
  %v404 = vunpack.c.l.b16 %v73
  %v405 = vunpack.c.h.b16 %v73
  %v406 = vunpack.c.l.b16 %v74
  %v407 = vunpack.c.l.b16 %v75
  %v408 = vunpack.c.h.b16 %v75
  %v409 = vunpack.c.l.b16 %v76
  %v410 = vunpack.c.h.b16 %v76
  %v411 = vunpack.c.l.b16 %v77
  %v412 = vunpack.c.l.b16 %v78
  %v413 = vunpack.c.h.b16 %v78
  %v414 = vunpack.c.l.b16 %v79
  %v415 = vunpack.c.h.b16 %v79
  %v416 = vunpack.c.l.b16 %v80
  %v417 = vunpack.c.l.b16 %v81
  %v418 = vunpack.c.h.b16 %v81
  %v419 = vunpack.c.l.b16 %v82
  %v420 = vunpack.c.h.b16 %v82
  %v421 = vunpack.c.l.b16 %v83
  %v422 = vunpack.c.l.b16 %v84
  %v423 = vunpack.c.h.b16 %v84
  %v424 = vunpack.c.l.b16 %v85
  %v425 = vunpack.c.h.b16 %v85
  %v426 = vunpack.c.l.b16 %v86
  %v427 = vunpack.c.l.b16 %v87
  %v428 = vunpack.c.h.b16 %v87
  %v429 = vunpack.c.l.b16 %v88
  %v430 = vunpack.c.h.b16 %v88
  %v431 = vunpack.c.l.b16 %v89
  %v432 = vunpack.c.l.b16 %v90
  %v433 = vunpack.c.h.b16 %v90
  %v434 = vunpack.c.l.b16 %v91
  %v435 = vunpack.c.h.b16 %v91
  %v436 = vunpack.c.l.b16 %v92
  %v437 = vunpack.c.l.b16 %v93
  %v438 = vunpack.c.h.b16 %v93
  %v439 = vunpack.c.l.b16 %v94
  %v440 = vunpack.c.h.b16 %v94
  %v441 = vunpack.c.l.b16 %v95
  %v442 = vunpack.c.l.b16 %v96
  %v443 = vunpack.c.h.b16 %v96
  %v444 = vunpack.c.l.b16 %v97
  %v445 = vunpack.c.h.b16 %v97
  %v446 = vunpack.c.l.b16 %v98
  %v447 = vunpack.c.l.b16 %v99
  %v448 = vunpack.c.h.b16 %v99
  %v449 = vunpack.c.l.b16 %v100
  %v450 = vunpack.c.h.b16 %v100
  %v451 = vunpack.c.l.b16 %v101
  %v452 = vunpack.c.l.b16 %v102
  %v453 = vunpack.c.h.b16 %v102
  %v454 = vunpack.c.l.b16 %v103
  %v455 = vunpack.c.h.b16 %v103
  %v456 = vunpack.c.l.b16 %v104
  %v457 = vunpack.c.l.b16 %v105
  %v458 = vunpack.c.h.b16 %v105
  %v459 = vunpack.c.l.b16 %v106
  %v460 = vunpack.c.h.b16 %v106
  %v461 = vunpack.c.l.b16 %v107
  %v462 = vunpack.c.l.b16 %v108
  %v463 = vunpack.c.h.b16 %v108
  %v464 = vunpack.c.l.b16 %v109
  %v465 = vunpack.c.h.b16 %v109
  %v466 = vunpack.c.l.b16 %v110
  %v467 = vunpack.c.l.b16 %v111
  %v468 = vunpack.c.h.b16 %v111
  %v469 = vunpack.c.l.b16 %v112
  %v470 = vunpack.c.h.b16 %v112
  %v471 = vunpack.c.l.b16 %v113
  %v472 = vunpack.c.l.b16 %v114
  %v473 = vunpack.c.h.b16 %v114
  %v474 = vunpack.c.l.b16 %v115
  %v475 = vunpack.c.h.b16 %v115
  %v476 = vunpack.c.l.b16 %v116
  %v477 = vunpack.c.l.b16 %v117
  %v478 = vunpack.c.h.b16 %v117
  %v479 = vunpack.c.l.b16 %v118
  %v480 = vunpack.c.h.b16 %v118
  %v481 = vunpack.c.l.b16 %v119
  %v482 = vunpack.c.l.b16 %v120
  %v483 = vunpack.c.h.b16 %v120
  %v484 = vunpack.c.l.b16 %v121
  %v485 = vunpack.c.h.b16 %v121
  %v486 = vunpack.c.l.b16 %v122
  %v487 = vpack.c.b16 %v312, %v307
  %v488 = vpack.c.b16 %v313, %v308
  %v489 = vpack.c.b16 %v314, %v309
  %v490 = vpack.c.b16 %v315, %v310
  %v491 = vpack.c.b16 %v316, %v311
  %v492 = vpack.c.b16 %v322, %v317
  %v493 = vpack.c.b16 %v323, %v318
  %v494 = vpack.c.b16 %v324, %v319
  %v495 = vpack.c.b16 %v325, %v320
  %v496 = vpack.c.b16 %v326, %v321
  %v497 = vpack.c.b16 %v332, %v327
  %v498 = vpack.c.b16 %v333, %v328
  %v499 = vpack.c.b16 %v334, %v329
  %v500 = vpack.c.b16 %v335, %v330
  %v501 = vpack.c.b16 %v336, %v331
  %v502 = vpack.c.b16 %v342, %v337
  %v503 = vpack.c.b16 %v343, %v338
  %v504 = vpack.c.b16 %v344, %v339
  %v505 = vpack.c.b16 %v345, %v340
  %v506 = vpack.c.b16 %v346, %v341
  %v507 = vpack.c.b16 %v352, %v347
  %v508 = vpack.c.b16 %v353, %v348
  %v509 = vpack.c.b16 %v354, %v349
  %v510 = vpack.c.b16 %v355, %v350
  %v511 = vpack.c.b16 %v356, %v351
  %v512 = vpack.c.b16 %v362, %v357
  %v513 = vpack.c.b16 %v363, %v358
  %v514 = vpack.c.b16 %v364, %v359
  %v515 = vpack.c.b16 %v365, %v360
  %v516 = vpack.c.b16 %v366, %v361
  %v517 = vpack.c.b16 %v372, %v367
  %v518 = vpack.c.b16 %v373, %v368
  %v519 = vpack.c.b16 %v374, %v369
  %v520 = vpack.c.b16 %v375, %v370
  %v521 = vpack.c.b16 %v376, %v371
  %v522 = vpack.c.b16 %v382, %v377
  %v523 = vpack.c.b16 %v383, %v378
  %v524 = vpack.c.b16 %v384, %v379
  %v525 = vpack.c.b16 %v385, %v380
  %v526 = vpack.c.b16 %v386, %v381
  %v527 = vpack.c.b16 %v392, %v387
  %v528 = vpack.c.b16 %v393, %v388
  %v529 = vpack.c.b16 %v394, %v389
  %v530 = vpack.c.b16 %v395, %v390
  %v531 = vpack.c.b16 %v396, %v391
  %v532 = vpack.c.b16 %v402, %v397
  %v533 = vpack.c.b16 %v403, %v398
  %v534 = vpack.c.b16 %v404, %v399
  %v535 = vpack.c.b16 %v405, %v400
  %v536 = vpack.c.b16 %v406, %v401
  %v537 = vpack.c.b16 %v412, %v407
  %v538 = vpack.c.b16 %v413, %v408
  %v539 = vpack.c.b16 %v414, %v409
  %v540 = vpack.c.b16 %v415, %v410
  %v541 = vpack.c.b16 %v416, %v411
  %v542 = vpack.c.b16 %v422, %v417
  %v543 = vpack.c.b16 %v423, %v418
  %v544 = vpack.c.b16 %v424, %v419
  %v545 = vpack.c.b16 %v425, %v420
  %v546 = vpack.c.b16 %v426, %v421
  %v547 = vpack.c.b16 %v432, %v427
  %v548 = vpack.c.b16 %v433, %v428
  %v549 = vpack.c.b16 %v434, %v429
  %v550 = vpack.c.b16 %v435, %v430
  %v551 = vpack.c.b16 %v436, %v431
  %v552 = vpack.c.b16 %v442, %v437
  %v553 = vpack.c.b16 %v443, %v438
  %v554 = vpack.c.b16 %v444, %v439
  %v555 = vpack.c.b16 %v445, %v440
  %v556 = vpack.c.b16 %v446, %v441
  %v557 = vpack.c.b16 %v452, %v447
  %v558 = vpack.c.b16 %v453, %v448
  %v559 = vpack.c.b16 %v454, %v449
  %v560 = vpack.c.b16 %v455, %v450
  %v561 = vpack.c.b16 %v456, %v451
  %v562 = vpack.c.b16 %v462, %v457
  %v563 = vpack.c.b16 %v463, %v458
  %v564 = vpack.c.b16 %v464, %v459
  %v565 = vpack.c.b16 %v465, %v460
  %v566 = vpack.c.b16 %v466, %v461
  %v567 = vpack.c.b16 %v472, %v467
  %v568 = vpack.c.b16 %v473, %v468
  %v569 = vpack.c.b16 %v474, %v469
  %v570 = vpack.c.b16 %v475, %v470
  %v571 = vpack.c.b16 %v476, %v471
  %v572 = vpack.c.b16 %v482, %v477
  %v573 = vpack.c.b16 %v483, %v478
  %v574 = vpack.c.b16 %v484, %v479
  %v575 = vpack.c.b16 %v485, %v480
  %v576 = vpack.c.b16 %v486, %v481
  %v721 = vunpack.c.l.b16 %v123
  %v722 = vunpack.c.l.b16 %v124
  %v723 = vunpack.c.l.b16 %v125
  %v724 = vunpack.c.l.b16 %v126
  %v725 = vunpack.c.l.b16 %v127
  %v726 = vunpack.c.l.b16 %v128
  %v727 = vunpack.c.l.b16 %v129
  %v728 = vunpack.c.l.b16 %v130
  %v729 = vunpack.c.l.b16 %v131
  %v730 = vunpack.c.l.b16 %v132
  %v731 = vunpack.c.l.b16 %v133
  %v732 = vunpack.c.l.b16 %v134
  %v733 = vunpack.c.l.b16 %v135
  %v734 = vunpack.c.l.b16 %v136
  %v735 = vunpack.c.l.b16 %v137
  %v736 = vunpack.c.l.b16 %v138
  %v737 = vunpack.c.l.b16 %v139
  %v738 = vunpack.c.l.b16 %v140
  %v739 = vunpack.c.l.b16 %v141
  %v740 = vunpack.c.l.b16 %v142
  %v741 = vunpack.c.l.b16 %v143
  %v742 = vunpack.c.l.b16 %v144
  %v743 = vunpack.c.l.b16 %v145
  %v744 = vunpack.c.l.b16 %v146
  %v745 = vunpack.c.l.b16 %v147
  %v746 = vunpack.c.l.b16 %v148
  %v747 = vunpack.c.l.b16 %v149
  %v748 = vunpack.c.l.b16 %v150
  %v749 = vunpack.c.l.b16 %v151
  %v750 = vunpack.c.l.b16 %v152
  %v751 = vunpack.c.l.b16 %v153
  %v752 = vunpack.c.l.b16 %v154
  %v753 = vunpack.c.l.b16 %v155
  %v754 = vunpack.c.l.b16 %v156
  %v755 = vunpack.c.l.b16 %v157
  %v756 = vunpack.c.l.b16 %v158
  %v757 = vunpack.c.l.b16 %v159
  %v758 = vunpack.c.l.b16 %v160
  %v759 = vunpack.c.l.b16 %v161
  %v760 = vunpack.c.l.b16 %v162
  %v761 = vunpack.c.l.b16 %v163
  %v762 = vunpack.c.l.b16 %v164
  %v763 = vunpack.c.l.b16 %v165
  %v764 = vunpack.c.l.b16 %v166
  %v765 = vunpack.c.l.b16 %v167
  %v766 = vunpack.c.l.b16 %v168
  %v767 = vunpack.c.l.b16 %v169
  %v768 = vunpack.c.l.b16 %v170
  %v769 = vunpack.c.l.b16 %v171
  %v770 = vunpack.c.l.b16 %v172
  %v771 = vunpack.c.l.b16 %v173
  %v772 = vunpack.c.l.b16 %v174
  %v773 = vunpack.c.l.b16 %v175
  %v774 = vunpack.c.l.b16 %v176
  %v775 = vunpack.c.l.b16 %v177
  %v776 = vunpack.c.l.b16 %v178
  %v777 = vunpack.c.l.b16 %v179
  %v778 = vunpack.c.l.b16 %v180
  %v779 = vunpack.c.l.b16 %v181
  %v780 = vunpack.c.l.b16 %v182
  %v781 = vunpack.c.l.b16 %v183
  %v782 = vunpack.c.l.b16 %v184
  %v783 = vunpack.c.l.b16 %v185
  %v784 = vunpack.c.l.b16 %v186
  %v785 = vunpack.c.l.b16 %v187
  %v786 = vunpack.c.l.b16 %v188
  %v787 = vunpack.c.l.b16 %v189
  %v788 = vunpack.c.l.b16 %v190
  %v789 = vunpack.c.l.b16 %v191
  %v790 = vunpack.c.l.b16 %v192
  %v791 = vunpack.c.l.b16 %v193
  %v792 = vunpack.c.l.b16 %v194
  %v793 = vpack.c.b16 %v722, %v721
  %v794 = vpack.c.b16 %v724, %v723
  %v795 = vpack.c.b16 %v726, %v725
  %v796 = vpack.c.b16 %v728, %v727
  %v797 = vpack.c.b16 %v730, %v729
  %v798 = vpack.c.b16 %v732, %v731
  %v799 = vpack.c.b16 %v734, %v733
  %v800 = vpack.c.b16 %v736, %v735
  %v801 = vpack.c.b16 %v738, %v737
  %v802 = vpack.c.b16 %v740, %v739
  %v803 = vpack.c.b16 %v742, %v741
  %v804 = vpack.c.b16 %v744, %v743
  %v805 = vpack.c.b16 %v746, %v745
  %v806 = vpack.c.b16 %v748, %v747
  %v807 = vpack.c.b16 %v750, %v749
  %v808 = vpack.c.b16 %v752, %v751
  %v809 = vpack.c.b16 %v754, %v753
  %v810 = vpack.c.b16 %v756, %v755
  %v811 = vpack.c.b16 %v758, %v757
  %v812 = vpack.c.b16 %v760, %v759
  %v813 = vpack.c.b16 %v762, %v761
  %v814 = vpack.c.b16 %v764, %v763
  %v815 = vpack.c.b16 %v766, %v765
  %v816 = vpack.c.b16 %v768, %v767
  %v817 = vpack.c.b16 %v770, %v769
  %v818 = vpack.c.b16 %v772, %v771
  %v819 = vpack.c.b16 %v774, %v773
  %v820 = vpack.c.b16 %v776, %v775
  %v821 = vpack.c.b16 %v778, %v777
  %v822 = vpack.c.b16 %v780, %v779
  %v823 = vpack.c.b16 %v782, %v781
  %v824 = vpack.c.b16 %v784, %v783
  %v825 = vpack.c.b16 %v786, %v785
  %v826 = vpack.c.b16 %v788, %v787
  %v827 = vpack.c.b16 %v790, %v789
  %v828 = vpack.c.b16 %v792, %v791
  %vm865 = vcmask 523264
  %v867 = vsel %vm865, %v491, 0
  %v870 = vsel %vm865, %v496, 0
  %v873 = vsel %vm865, %v501, 0
  %v876 = vsel %vm865, %v506, 0
  %v879 = vsel %vm865, %v511, 0
  %v882 = vsel %vm865, %v516, 0
  %v885 = vsel %vm865, %v521, 0
  %v888 = vsel %vm865, %v526, 0
  %v891 = vsel %vm865, %v531, 0
  %v894 = vsel %vm865, %v536, 0
  %v897 = vsel %vm865, %v541, 0
  %v900 = vsel %vm865, %v546, 0
  %v903 = vsel %vm865, %v551, 0
  %v906 = vsel %vm865, %v556, 0
  %v909 = vsel %vm865, %v561, 0
  %v912 = vsel %vm865, %v566, 0
  %v915 = vsel %vm865, %v571, 0
  %v918 = vsel %vm865, %v576, 0
  %920 = vmatpush.bf16.msra.mxu0 %v800
  %921 = vmatpush.bf16.msra.mxu0 %v799
  %922 = vmatpush.bf16.msra.mxu0 %v798
  %923 = vmatpush.bf16.msra.mxu0 %v797
  %924 = vmatpush.bf16.msra.mxu0 %v796
  %925 = vmatpush.bf16.msra.mxu0 %v795
  %926 = vmatpush.bf16.msra.mxu0 %v794
  %927 = vmatpush.bf16.msra.mxu0 %v793
  %928 = vmatmul.bf16.gmra.mxu0 %v487
  %v929 = vpop.f32.mrf.mxu0
  %v930 = vadd.f32 %v197, %v929
  %v931 = vpop.f32.mrf.mxu0
  %v932 = vadd.f32 %v197, %v931
  %933 = vmatmul.bf16.gmra.mxu0 %v492
  %v934 = vpop.f32.mrf.mxu0
  %v935 = vadd.f32 %v197, %v934
  %v936 = vpop.f32.mrf.mxu0
  %v937 = vadd.f32 %v197, %v936
  %938 = vmatmul.bf16.gmra.mxu0 %v497
  %v939 = vpop.f32.mrf.mxu0
  %v940 = vadd.f32 %v197, %v939
  %v941 = vpop.f32.mrf.mxu0
  %v942 = vadd.f32 %v197, %v941
  %943 = vmatmul.bf16.gmra.mxu0 %v502
  %v944 = vpop.f32.mrf.mxu0
  %v945 = vadd.f32 %v197, %v944
  %v946 = vpop.f32.mrf.mxu0
  %v947 = vadd.f32 %v197, %v946
  %948 = vmatmul.bf16.gmra.mxu0 %v507
  %v949 = vpop.f32.mrf.mxu0
  %v950 = vadd.f32 %v197, %v949
  %v951 = vpop.f32.mrf.mxu0
  %v952 = vadd.f32 %v197, %v951
  %953 = vmatmul.bf16.gmra.mxu0 %v512
  %v954 = vpop.f32.mrf.mxu0
  %v955 = vadd.f32 %v197, %v954
  %v956 = vpop.f32.mrf.mxu0
  %v957 = vadd.f32 %v197, %v956
  %958 = vmatmul.bf16.gmra.mxu0 %v517
  %v959 = vpop.f32.mrf.mxu0
  %v960 = vadd.f32 %v197, %v959
  %v961 = vpop.f32.mrf.mxu0
  %v962 = vadd.f32 %v197, %v961
  %963 = vmatmul.bf16.gmra.mxu0 %v522
  %v964 = vpop.f32.mrf.mxu0
  %v965 = vadd.f32 %v197, %v964
  %v966 = vpop.f32.mrf.mxu0
  %v967 = vadd.f32 %v197, %v966
  %968 = vmatmul.bf16.gmra.mxu0 %v527
  %v969 = vpop.f32.mrf.mxu0
  %v970 = vadd.f32 %v197, %v969
  %v971 = vpop.f32.mrf.mxu0
  %v972 = vadd.f32 %v197, %v971
  %973 = vmatmul.bf16.gmra.mxu0 %v532
  %v974 = vpop.f32.mrf.mxu0
  %v975 = vadd.f32 %v197, %v974
  %v976 = vpop.f32.mrf.mxu0
  %v977 = vadd.f32 %v197, %v976
  %978 = vmatmul.bf16.gmra.mxu0 %v537
  %v979 = vpop.f32.mrf.mxu0
  %v980 = vadd.f32 %v197, %v979
  %v981 = vpop.f32.mrf.mxu0
  %v982 = vadd.f32 %v197, %v981
  %983 = vmatmul.bf16.gmra.mxu0 %v542
  %v984 = vpop.f32.mrf.mxu0
  %v985 = vadd.f32 %v197, %v984
  %v986 = vpop.f32.mrf.mxu0
  %v987 = vadd.f32 %v197, %v986
  %988 = vmatmul.bf16.gmra.mxu0 %v547
  %v989 = vpop.f32.mrf.mxu0
  %v990 = vadd.f32 %v197, %v989
  %v991 = vpop.f32.mrf.mxu0
  %v992 = vadd.f32 %v197, %v991
  %993 = vmatmul.bf16.gmra.mxu0 %v552
  %v994 = vpop.f32.mrf.mxu0
  %v995 = vadd.f32 %v197, %v994
  %v996 = vpop.f32.mrf.mxu0
  %v997 = vadd.f32 %v197, %v996
  %998 = vmatmul.bf16.gmra.mxu0 %v557
  %v999 = vpop.f32.mrf.mxu0
  %v1000 = vadd.f32 %v197, %v999
  %v1001 = vpop.f32.mrf.mxu0
  %v1002 = vadd.f32 %v197, %v1001
  %1003 = vmatmul.bf16.gmra.mxu0 %v562
  %v1004 = vpop.f32.mrf.mxu0
  %v1005 = vadd.f32 %v197, %v1004
  %v1006 = vpop.f32.mrf.mxu0
  %v1007 = vadd.f32 %v197, %v1006
  %1008 = vmatmul.bf16.gmra.mxu0 %v567
  %v1009 = vpop.f32.mrf.mxu0
  %v1010 = vadd.f32 %v197, %v1009
  %v1011 = vpop.f32.mrf.mxu0
  %v1012 = vadd.f32 %v197, %v1011
  %1013 = vmatmul.bf16.gmra.mxu0 %v572
  %v1014 = vpop.f32.mrf.mxu0
  %v1015 = vadd.f32 %v197, %v1014
  %v1016 = vpop.f32.mrf.mxu0
  %v1017 = vadd.f32 %v197, %v1016
  %1018 = vdwg.mxu0
  %1019 = vmatpush.bf16.msra.mxu0 %v808
  %1020 = vmatpush.bf16.msra.mxu0 %v807
  %1021 = vmatpush.bf16.msra.mxu0 %v806
  %1022 = vmatpush.bf16.msra.mxu0 %v805
  %1023 = vmatpush.bf16.msra.mxu0 %v804
  %1024 = vmatpush.bf16.msra.mxu0 %v803
  %1025 = vmatpush.bf16.msra.mxu0 %v802
  %1026 = vmatpush.bf16.msra.mxu0 %v801
  %1027 = vmatmul.bf16.gmra.mxu0 %v488
  %v1028 = vpop.f32.mrf.mxu0
  %v1029 = vadd.f32 %v930, %v1028
  %v1030 = vpop.f32.mrf.mxu0
  %v1031 = vadd.f32 %v932, %v1030
  %1032 = vmatmul.bf16.gmra.mxu0 %v493
  %v1033 = vpop.f32.mrf.mxu0
  %v1034 = vadd.f32 %v935, %v1033
  %v1035 = vpop.f32.mrf.mxu0
  %v1036 = vadd.f32 %v937, %v1035
  %1037 = vmatmul.bf16.gmra.mxu0 %v498
  %v1038 = vpop.f32.mrf.mxu0
  %v1039 = vadd.f32 %v940, %v1038
  %v1040 = vpop.f32.mrf.mxu0
  %v1041 = vadd.f32 %v942, %v1040
  %1042 = vmatmul.bf16.gmra.mxu0 %v503
  %v1043 = vpop.f32.mrf.mxu0
  %v1044 = vadd.f32 %v945, %v1043
  %v1045 = vpop.f32.mrf.mxu0
  %v1046 = vadd.f32 %v947, %v1045
  %1047 = vmatmul.bf16.gmra.mxu0 %v508
  %v1048 = vpop.f32.mrf.mxu0
  %v1049 = vadd.f32 %v950, %v1048
  %v1050 = vpop.f32.mrf.mxu0
  %v1051 = vadd.f32 %v952, %v1050
  %1052 = vmatmul.bf16.gmra.mxu0 %v513
  %v1053 = vpop.f32.mrf.mxu0
  %v1054 = vadd.f32 %v955, %v1053
  %v1055 = vpop.f32.mrf.mxu0
  %v1056 = vadd.f32 %v957, %v1055
  %1057 = vmatmul.bf16.gmra.mxu0 %v518
  %v1058 = vpop.f32.mrf.mxu0
  %v1059 = vadd.f32 %v960, %v1058
  %v1060 = vpop.f32.mrf.mxu0
  %v1061 = vadd.f32 %v962, %v1060
  %1062 = vmatmul.bf16.gmra.mxu0 %v523
  %v1063 = vpop.f32.mrf.mxu0
  %v1064 = vadd.f32 %v965, %v1063
  %v1065 = vpop.f32.mrf.mxu0
  %v1066 = vadd.f32 %v967, %v1065
  %1067 = vmatmul.bf16.gmra.mxu0 %v528
  %v1068 = vpop.f32.mrf.mxu0
  %v1069 = vadd.f32 %v970, %v1068
  %v1070 = vpop.f32.mrf.mxu0
  %v1071 = vadd.f32 %v972, %v1070
  %1072 = vmatmul.bf16.gmra.mxu0 %v533
  %v1073 = vpop.f32.mrf.mxu0
  %v1074 = vadd.f32 %v975, %v1073
  %v1075 = vpop.f32.mrf.mxu0
  %v1076 = vadd.f32 %v977, %v1075
  %1077 = vmatmul.bf16.gmra.mxu0 %v538
  %v1078 = vpop.f32.mrf.mxu0
  %v1079 = vadd.f32 %v980, %v1078
  %v1080 = vpop.f32.mrf.mxu0
  %v1081 = vadd.f32 %v982, %v1080
  %1082 = vmatmul.bf16.gmra.mxu0 %v543
  %v1083 = vpop.f32.mrf.mxu0
  %v1084 = vadd.f32 %v985, %v1083
  %v1085 = vpop.f32.mrf.mxu0
  %v1086 = vadd.f32 %v987, %v1085
  %1087 = vmatmul.bf16.gmra.mxu0 %v548
  %v1088 = vpop.f32.mrf.mxu0
  %v1089 = vadd.f32 %v990, %v1088
  %v1090 = vpop.f32.mrf.mxu0
  %v1091 = vadd.f32 %v992, %v1090
  %1092 = vmatmul.bf16.gmra.mxu0 %v553
  %v1093 = vpop.f32.mrf.mxu0
  %v1094 = vadd.f32 %v995, %v1093
  %v1095 = vpop.f32.mrf.mxu0
  %v1096 = vadd.f32 %v997, %v1095
  %1097 = vmatmul.bf16.gmra.mxu0 %v558
  %v1098 = vpop.f32.mrf.mxu0
  %v1099 = vadd.f32 %v1000, %v1098
  %v1100 = vpop.f32.mrf.mxu0
  %v1101 = vadd.f32 %v1002, %v1100
  %1102 = vmatmul.bf16.gmra.mxu0 %v563
  %v1103 = vpop.f32.mrf.mxu0
  %v1104 = vadd.f32 %v1005, %v1103
  %v1105 = vpop.f32.mrf.mxu0
  %v1106 = vadd.f32 %v1007, %v1105
  %1107 = vmatmul.bf16.gmra.mxu0 %v568
  %v1108 = vpop.f32.mrf.mxu0
  %v1109 = vadd.f32 %v1010, %v1108
  %v1110 = vpop.f32.mrf.mxu0
  %v1111 = vadd.f32 %v1012, %v1110
  %1112 = vmatmul.bf16.gmra.mxu0 %v573
  %v1113 = vpop.f32.mrf.mxu0
  %v1114 = vadd.f32 %v1015, %v1113
  %v1115 = vpop.f32.mrf.mxu0
  %v1116 = vadd.f32 %v1017, %v1115
  %1117 = vdwg.mxu0
  %1118 = vmatpush.bf16.msra.mxu0 %v816
  %1119 = vmatpush.bf16.msra.mxu0 %v815
  %1120 = vmatpush.bf16.msra.mxu0 %v814
  %1121 = vmatpush.bf16.msra.mxu0 %v813
  %1122 = vmatpush.bf16.msra.mxu0 %v812
  %1123 = vmatpush.bf16.msra.mxu0 %v811
  %1124 = vmatpush.bf16.msra.mxu0 %v810
  %1125 = vmatpush.bf16.msra.mxu0 %v809
  %1126 = vmatmul.bf16.gmra.mxu0 %v489
  %v1127 = vpop.f32.mrf.mxu0
  %v1128 = vadd.f32 %v1029, %v1127
  %v1129 = vpop.f32.mrf.mxu0
  %v1130 = vadd.f32 %v1031, %v1129
  %1131 = vmatmul.bf16.gmra.mxu0 %v494
  %v1132 = vpop.f32.mrf.mxu0
  %v1133 = vadd.f32 %v1034, %v1132
  %v1134 = vpop.f32.mrf.mxu0
  %v1135 = vadd.f32 %v1036, %v1134
  %1136 = vmatmul.bf16.gmra.mxu0 %v499
  %v1137 = vpop.f32.mrf.mxu0
  %v1138 = vadd.f32 %v1039, %v1137
  %v1139 = vpop.f32.mrf.mxu0
  %v1140 = vadd.f32 %v1041, %v1139
  %1141 = vmatmul.bf16.gmra.mxu0 %v504
  %v1142 = vpop.f32.mrf.mxu0
  %v1143 = vadd.f32 %v1044, %v1142
  %v1144 = vpop.f32.mrf.mxu0
  %v1145 = vadd.f32 %v1046, %v1144
  %1146 = vmatmul.bf16.gmra.mxu0 %v509
  %v1147 = vpop.f32.mrf.mxu0
  %v1148 = vadd.f32 %v1049, %v1147
  %v1149 = vpop.f32.mrf.mxu0
  %v1150 = vadd.f32 %v1051, %v1149
  %1151 = vmatmul.bf16.gmra.mxu0 %v514
  %v1152 = vpop.f32.mrf.mxu0
  %v1153 = vadd.f32 %v1054, %v1152
  %v1154 = vpop.f32.mrf.mxu0
  %v1155 = vadd.f32 %v1056, %v1154
  %1156 = vmatmul.bf16.gmra.mxu0 %v519
  %v1157 = vpop.f32.mrf.mxu0
  %v1158 = vadd.f32 %v1059, %v1157
  %v1159 = vpop.f32.mrf.mxu0
  %v1160 = vadd.f32 %v1061, %v1159
  %1161 = vmatmul.bf16.gmra.mxu0 %v524
  %v1162 = vpop.f32.mrf.mxu0
  %v1163 = vadd.f32 %v1064, %v1162
  %v1164 = vpop.f32.mrf.mxu0
  %v1165 = vadd.f32 %v1066, %v1164
  %1166 = vmatmul.bf16.gmra.mxu0 %v529
  %v1167 = vpop.f32.mrf.mxu0
  %v1168 = vadd.f32 %v1069, %v1167
  %v1169 = vpop.f32.mrf.mxu0
  %v1170 = vadd.f32 %v1071, %v1169
  %1171 = vmatmul.bf16.gmra.mxu0 %v534
  %v1172 = vpop.f32.mrf.mxu0
  %v1173 = vadd.f32 %v1074, %v1172
  %v1174 = vpop.f32.mrf.mxu0
  %v1175 = vadd.f32 %v1076, %v1174
  %1176 = vmatmul.bf16.gmra.mxu0 %v539
  %v1177 = vpop.f32.mrf.mxu0
  %v1178 = vadd.f32 %v1079, %v1177
  %v1179 = vpop.f32.mrf.mxu0
  %v1180 = vadd.f32 %v1081, %v1179
  %1181 = vmatmul.bf16.gmra.mxu0 %v544
  %v1182 = vpop.f32.mrf.mxu0
  %v1183 = vadd.f32 %v1084, %v1182
  %v1184 = vpop.f32.mrf.mxu0
  %v1185 = vadd.f32 %v1086, %v1184
  %1186 = vmatmul.bf16.gmra.mxu0 %v549
  %v1187 = vpop.f32.mrf.mxu0
  %v1188 = vadd.f32 %v1089, %v1187
  %v1189 = vpop.f32.mrf.mxu0
  %v1190 = vadd.f32 %v1091, %v1189
  %1191 = vmatmul.bf16.gmra.mxu0 %v554
  %v1192 = vpop.f32.mrf.mxu0
  %v1193 = vadd.f32 %v1094, %v1192
  %v1194 = vpop.f32.mrf.mxu0
  %v1195 = vadd.f32 %v1096, %v1194
  %1196 = vmatmul.bf16.gmra.mxu0 %v559
  %v1197 = vpop.f32.mrf.mxu0
  %v1198 = vadd.f32 %v1099, %v1197
  %v1199 = vpop.f32.mrf.mxu0
  %v1200 = vadd.f32 %v1101, %v1199
  %1201 = vmatmul.bf16.gmra.mxu0 %v564
  %v1202 = vpop.f32.mrf.mxu0
  %v1203 = vadd.f32 %v1104, %v1202
  %v1204 = vpop.f32.mrf.mxu0
  %v1205 = vadd.f32 %v1106, %v1204
  %1206 = vmatmul.bf16.gmra.mxu0 %v569
  %v1207 = vpop.f32.mrf.mxu0
  %v1208 = vadd.f32 %v1109, %v1207
  %v1209 = vpop.f32.mrf.mxu0
  %v1210 = vadd.f32 %v1111, %v1209
  %1211 = vmatmul.bf16.gmra.mxu0 %v574
  %v1212 = vpop.f32.mrf.mxu0
  %v1213 = vadd.f32 %v1114, %v1212
  %v1214 = vpop.f32.mrf.mxu0
  %v1215 = vadd.f32 %v1116, %v1214
  %1216 = vdwg.mxu0
  %1217 = vmatpush.bf16.msra.mxu0 %v824
  %1218 = vmatpush.bf16.msra.mxu0 %v823
  %1219 = vmatpush.bf16.msra.mxu0 %v822
  %1220 = vmatpush.bf16.msra.mxu0 %v821
  %1221 = vmatpush.bf16.msra.mxu0 %v820
  %1222 = vmatpush.bf16.msra.mxu0 %v819
  %1223 = vmatpush.bf16.msra.mxu0 %v818
  %1224 = vmatpush.bf16.msra.mxu0 %v817
  %1225 = vmatmul.bf16.gmra.mxu0 %v490
  %v1226 = vpop.f32.mrf.mxu0
  %v1227 = vadd.f32 %v1128, %v1226
  %v1228 = vpop.f32.mrf.mxu0
  %v1229 = vadd.f32 %v1130, %v1228
  %1230 = vmatmul.bf16.gmra.mxu0 %v495
  %v1231 = vpop.f32.mrf.mxu0
  %v1232 = vadd.f32 %v1133, %v1231
  %v1233 = vpop.f32.mrf.mxu0
  %v1234 = vadd.f32 %v1135, %v1233
  %1235 = vmatmul.bf16.gmra.mxu0 %v500
  %v1236 = vpop.f32.mrf.mxu0
  %v1237 = vadd.f32 %v1138, %v1236
  %v1238 = vpop.f32.mrf.mxu0
  %v1239 = vadd.f32 %v1140, %v1238
  %1240 = vmatmul.bf16.gmra.mxu0 %v505
  %v1241 = vpop.f32.mrf.mxu0
  %v1242 = vadd.f32 %v1143, %v1241
  %v1243 = vpop.f32.mrf.mxu0
  %v1244 = vadd.f32 %v1145, %v1243
  %1245 = vmatmul.bf16.gmra.mxu0 %v510
  %v1246 = vpop.f32.mrf.mxu0
  %v1247 = vadd.f32 %v1148, %v1246
  %v1248 = vpop.f32.mrf.mxu0
  %v1249 = vadd.f32 %v1150, %v1248
  %1250 = vmatmul.bf16.gmra.mxu0 %v515
  %v1251 = vpop.f32.mrf.mxu0
  %v1252 = vadd.f32 %v1153, %v1251
  %v1253 = vpop.f32.mrf.mxu0
  %v1254 = vadd.f32 %v1155, %v1253
  %1255 = vmatmul.bf16.gmra.mxu0 %v520
  %v1256 = vpop.f32.mrf.mxu0
  %v1257 = vadd.f32 %v1158, %v1256
  %v1258 = vpop.f32.mrf.mxu0
  %v1259 = vadd.f32 %v1160, %v1258
  %1260 = vmatmul.bf16.gmra.mxu0 %v525
  %v1261 = vpop.f32.mrf.mxu0
  %v1262 = vadd.f32 %v1163, %v1261
  %v1263 = vpop.f32.mrf.mxu0
  %v1264 = vadd.f32 %v1165, %v1263
  %1265 = vmatmul.bf16.gmra.mxu0 %v530
  %v1266 = vpop.f32.mrf.mxu0
  %v1267 = vadd.f32 %v1168, %v1266
  %v1268 = vpop.f32.mrf.mxu0
  %v1269 = vadd.f32 %v1170, %v1268
  %1270 = vmatmul.bf16.gmra.mxu0 %v535
  %v1271 = vpop.f32.mrf.mxu0
  %v1272 = vadd.f32 %v1173, %v1271
  %v1273 = vpop.f32.mrf.mxu0
  %v1274 = vadd.f32 %v1175, %v1273
  %1275 = vmatmul.bf16.gmra.mxu0 %v540
  %v1276 = vpop.f32.mrf.mxu0
  %v1277 = vadd.f32 %v1178, %v1276
  %v1278 = vpop.f32.mrf.mxu0
  %v1279 = vadd.f32 %v1180, %v1278
  %1280 = vmatmul.bf16.gmra.mxu0 %v545
  %v1281 = vpop.f32.mrf.mxu0
  %v1282 = vadd.f32 %v1183, %v1281
  %v1283 = vpop.f32.mrf.mxu0
  %v1284 = vadd.f32 %v1185, %v1283
  %1285 = vmatmul.bf16.gmra.mxu0 %v550
  %v1286 = vpop.f32.mrf.mxu0
  %v1287 = vadd.f32 %v1188, %v1286
  %v1288 = vpop.f32.mrf.mxu0
  %v1289 = vadd.f32 %v1190, %v1288
  %1290 = vmatmul.bf16.gmra.mxu0 %v555
  %v1291 = vpop.f32.mrf.mxu0
  %v1292 = vadd.f32 %v1193, %v1291
  %v1293 = vpop.f32.mrf.mxu0
  %v1294 = vadd.f32 %v1195, %v1293
  %1295 = vmatmul.bf16.gmra.mxu0 %v560
  %v1296 = vpop.f32.mrf.mxu0
  %v1297 = vadd.f32 %v1198, %v1296
  %v1298 = vpop.f32.mrf.mxu0
  %v1299 = vadd.f32 %v1200, %v1298
  %1300 = vmatmul.bf16.gmra.mxu0 %v565
  %v1301 = vpop.f32.mrf.mxu0
  %v1302 = vadd.f32 %v1203, %v1301
  %v1303 = vpop.f32.mrf.mxu0
  %v1304 = vadd.f32 %v1205, %v1303
  %1305 = vmatmul.bf16.gmra.mxu0 %v570
  %v1306 = vpop.f32.mrf.mxu0
  %v1307 = vadd.f32 %v1208, %v1306
  %v1308 = vpop.f32.mrf.mxu0
  %v1309 = vadd.f32 %v1210, %v1308
  %1310 = vmatmul.bf16.gmra.mxu0 %v575
  %v1311 = vpop.f32.mrf.mxu0
  %v1312 = vadd.f32 %v1213, %v1311
  %v1313 = vpop.f32.mrf.mxu0
  %v1314 = vadd.f32 %v1215, %v1313
  %1315 = vdwg.mxu0
  %1316 = vmatpush.bf16.msra.mxu0 0
  %1317 = vmatpush.bf16.msra.mxu0 0
  %1318 = vmatpush.bf16.msra.mxu0 0
  %1319 = vmatpush.bf16.msra.mxu0 0
  %1320 = vmatpush.bf16.msra.mxu0 %v828
  %1321 = vmatpush.bf16.msra.mxu0 %v827
  %1322 = vmatpush.bf16.msra.mxu0 %v826
  %1323 = vmatpush.bf16.msra.mxu0 %v825
  %1324 = vmatmul.bf16.gmra.mxu0 %v867
  %v1325 = vpop.f32.mrf.mxu0
  %v1326 = vadd.f32 %v1227, %v1325
  %v1327 = vpop.f32.mrf.mxu0
  %v1328 = vadd.f32 %v1229, %v1327
  %1329 = vmatmul.bf16.gmra.mxu0 %v870
  %v1330 = vpop.f32.mrf.mxu0
  %v1331 = vadd.f32 %v1232, %v1330
  %v1332 = vpop.f32.mrf.mxu0
  %v1333 = vadd.f32 %v1234, %v1332
  %1334 = vmatmul.bf16.gmra.mxu0 %v873
  %v1335 = vpop.f32.mrf.mxu0
  %v1336 = vadd.f32 %v1237, %v1335
  %v1337 = vpop.f32.mrf.mxu0
  %v1338 = vadd.f32 %v1239, %v1337
  %1339 = vmatmul.bf16.gmra.mxu0 %v876
  %v1340 = vpop.f32.mrf.mxu0
  %v1341 = vadd.f32 %v1242, %v1340
  %v1342 = vpop.f32.mrf.mxu0
  %v1343 = vadd.f32 %v1244, %v1342
  %1344 = vmatmul.bf16.gmra.mxu0 %v879
  %v1345 = vpop.f32.mrf.mxu0
  %v1346 = vadd.f32 %v1247, %v1345
  %v1347 = vpop.f32.mrf.mxu0
  %v1348 = vadd.f32 %v1249, %v1347
  %1349 = vmatmul.bf16.gmra.mxu0 %v882
  %v1350 = vpop.f32.mrf.mxu0
  %v1351 = vadd.f32 %v1252, %v1350
  %v1352 = vpop.f32.mrf.mxu0
  %v1353 = vadd.f32 %v1254, %v1352
  %1354 = vmatmul.bf16.gmra.mxu0 %v885
  %v1355 = vpop.f32.mrf.mxu0
  %v1356 = vadd.f32 %v1257, %v1355
  %v1357 = vpop.f32.mrf.mxu0
  %v1358 = vadd.f32 %v1259, %v1357
  %1359 = vmatmul.bf16.gmra.mxu0 %v888
  %v1360 = vpop.f32.mrf.mxu0
  %v1361 = vadd.f32 %v1262, %v1360
  %v1362 = vpop.f32.mrf.mxu0
  %v1363 = vadd.f32 %v1264, %v1362
  %1364 = vmatmul.bf16.gmra.mxu0 %v891
  %v1365 = vpop.f32.mrf.mxu0
  %v1366 = vadd.f32 %v1267, %v1365
  %v1367 = vpop.f32.mrf.mxu0
  %v1368 = vadd.f32 %v1269, %v1367
  %1369 = vmatmul.bf16.gmra.mxu0 %v894
  %v1370 = vpop.f32.mrf.mxu0
  %v1371 = vadd.f32 %v1272, %v1370
  %v1372 = vpop.f32.mrf.mxu0
  %v1373 = vadd.f32 %v1274, %v1372
  %1374 = vmatmul.bf16.gmra.mxu0 %v897
  %v1375 = vpop.f32.mrf.mxu0
  %v1376 = vadd.f32 %v1277, %v1375
  %v1377 = vpop.f32.mrf.mxu0
  %v1378 = vadd.f32 %v1279, %v1377
  %1379 = vmatmul.bf16.gmra.mxu0 %v900
  %v1380 = vpop.f32.mrf.mxu0
  %v1381 = vadd.f32 %v1282, %v1380
  %v1382 = vpop.f32.mrf.mxu0
  %v1383 = vadd.f32 %v1284, %v1382
  %1384 = vmatmul.bf16.gmra.mxu0 %v903
  %v1385 = vpop.f32.mrf.mxu0
  %v1386 = vadd.f32 %v1287, %v1385
  %v1387 = vpop.f32.mrf.mxu0
  %v1388 = vadd.f32 %v1289, %v1387
  %1389 = vmatmul.bf16.gmra.mxu0 %v906
  %v1390 = vpop.f32.mrf.mxu0
  %v1391 = vadd.f32 %v1292, %v1390
  %v1392 = vpop.f32.mrf.mxu0
  %v1393 = vadd.f32 %v1294, %v1392
  %1394 = vmatmul.bf16.gmra.mxu0 %v909
  %v1395 = vpop.f32.mrf.mxu0
  %v1396 = vadd.f32 %v1297, %v1395
  %v1397 = vpop.f32.mrf.mxu0
  %v1398 = vadd.f32 %v1299, %v1397
  %1399 = vmatmul.bf16.gmra.mxu0 %v912
  %v1400 = vpop.f32.mrf.mxu0
  %v1401 = vadd.f32 %v1302, %v1400
  %v1402 = vpop.f32.mrf.mxu0
  %v1403 = vadd.f32 %v1304, %v1402
  %1404 = vmatmul.bf16.gmra.mxu0 %v915
  %v1405 = vpop.f32.mrf.mxu0
  %v1406 = vadd.f32 %v1307, %v1405
  %v1407 = vpop.f32.mrf.mxu0
  %v1408 = vadd.f32 %v1309, %v1407
  %1409 = vmatmul.bf16.gmra.mxu0 %v918
  %v1410 = vpop.f32.mrf.mxu0
  %v1411 = vadd.f32 %v1312, %v1410
  %v1412 = vpop.f32.mrf.mxu0
  %v1413 = vadd.f32 %v1314, %v1412
  %1414 = vdwg.mxu0
  %v1415 = vmax.f32 %v1326, 0.0
  %v1416 = vmax.f32 %v1328, 0.0
  %v1417 = vmax.f32 %v1331, 0.0
  %v1418 = vmax.f32 %v1333, 0.0
  %v1419 = vmax.f32 %v1336, 0.0
  %v1420 = vmax.f32 %v1338, 0.0
  %v1421 = vmax.f32 %v1341, 0.0
  %v1422 = vmax.f32 %v1343, 0.0
  %v1423 = vmax.f32 %v1346, 0.0
  %v1424 = vmax.f32 %v1348, 0.0
  %v1425 = vmax.f32 %v1351, 0.0
  %v1426 = vmax.f32 %v1353, 0.0
  %v1427 = vmax.f32 %v1356, 0.0
  %v1428 = vmax.f32 %v1358, 0.0
  %v1429 = vmax.f32 %v1361, 0.0
  %v1430 = vmax.f32 %v1363, 0.0
  %v1431 = vmax.f32 %v1366, 0.0
  %v1432 = vmax.f32 %v1368, 0.0
  %v1433 = vmax.f32 %v1371, 0.0
  %v1434 = vmax.f32 %v1373, 0.0
  %v1435 = vmax.f32 %v1376, 0.0
  %v1436 = vmax.f32 %v1378, 0.0
  %v1437 = vmax.f32 %v1381, 0.0
  %v1438 = vmax.f32 %v1383, 0.0
  %v1439 = vmax.f32 %v1386, 0.0
  %v1440 = vmax.f32 %v1388, 0.0
  %v1441 = vmax.f32 %v1391, 0.0
  %v1442 = vmax.f32 %v1393, 0.0
  %v1443 = vmax.f32 %v1396, 0.0
  %v1444 = vmax.f32 %v1398, 0.0
  %v1445 = vmax.f32 %v1401, 0.0
  %v1446 = vmax.f32 %v1403, 0.0
  %v1447 = vmax.f32 %v1406, 0.0
  %v1448 = vmax.f32 %v1408, 0.0
  %v1449 = vmax.f32 %v1411, 0.0
  %v1450 = vmax.f32 %v1413, 0.0
  %v1451 = vpack.c.bf16 %v1415, %v1415
  %v1452 = vpack.c.bf16 %v1416, %v1416
  %v1453 = vpack.c.bf16 %v1417, %v1417
  %v1454 = vpack.c.bf16 %v1418, %v1418
  %v1455 = vpack.c.bf16 %v1419, %v1419
  %v1456 = vpack.c.bf16 %v1420, %v1420
  %v1457 = vpack.c.bf16 %v1421, %v1421
  %v1458 = vpack.c.bf16 %v1422, %v1422
  %v1459 = vpack.c.bf16 %v1423, %v1423
  %v1460 = vpack.c.bf16 %v1424, %v1424
  %v1461 = vpack.c.bf16 %v1425, %v1425
  %v1462 = vpack.c.bf16 %v1426, %v1426
  %v1463 = vpack.c.bf16 %v1427, %v1427
  %v1464 = vpack.c.bf16 %v1428, %v1428
  %v1465 = vpack.c.bf16 %v1429, %v1429
  %v1466 = vpack.c.bf16 %v1430, %v1430
  %v1467 = vpack.c.bf16 %v1431, %v1431
  %v1468 = vpack.c.bf16 %v1432, %v1432
  %v1469 = vpack.c.bf16 %v1433, %v1433
  %v1470 = vpack.c.bf16 %v1434, %v1434
  %v1471 = vpack.c.bf16 %v1435, %v1435
  %v1472 = vpack.c.bf16 %v1436, %v1436
  %v1473 = vpack.c.bf16 %v1437, %v1437
  %v1474 = vpack.c.bf16 %v1438, %v1438
  %v1475 = vpack.c.bf16 %v1439, %v1439
  %v1476 = vpack.c.bf16 %v1440, %v1440
  %v1477 = vpack.c.bf16 %v1441, %v1441
  %v1478 = vpack.c.bf16 %v1442, %v1442
  %v1479 = vpack.c.bf16 %v1443, %v1443
  %v1480 = vpack.c.bf16 %v1444, %v1444
  %v1481 = vpack.c.bf16 %v1445, %v1445
  %v1482 = vpack.c.bf16 %v1446, %v1446
  %v1483 = vpack.c.bf16 %v1447, %v1447
  %v1484 = vpack.c.bf16 %v1448, %v1448
  %v1485 = vpack.c.bf16 %v1449, %v1449
  %v1486 = vpack.c.bf16 %v1450, %v1450
  %vm1487 = vcmask 519168
  %1488 = vst.msk [vmem:[%s3] sm:$0xf] %vm1487, %v1451
  %1489 = vst.msk [vmem:[%s3 + $0x4] sm:$0xf] %vm1487, %v1452
  %1490 = vst.msk [vmem:[%s3 + $0x8] sm:$0xf] %vm1487, %v1453
  %1491 = vst.msk [vmem:[%s3 + $0xc] sm:$0xf] %vm1487, %v1454
  %1492 = vst.msk [vmem:[%s3 + $0x10] sm:$0xf] %vm1487, %v1455
  %1493 = vst.msk [vmem:[%s3 + $0x14] sm:$0xf] %vm1487, %v1456
  %1494 = vst.msk [vmem:[%s3 + $0x18] sm:$0xf] %vm1487, %v1457
  %1495 = vst.msk [vmem:[%s3 + $0x1c] sm:$0xf] %vm1487, %v1458
  %1496 = vst.msk [vmem:[%s3 + $0x20] sm:$0xf] %vm1487, %v1459
  %1497 = vst.msk [vmem:[%s3 + $0x24] sm:$0xf] %vm1487, %v1460
  %1498 = vst.msk [vmem:[%s3 + $0x28] sm:$0xf] %vm1487, %v1461
  %1499 = vst.msk [vmem:[%s3 + $0x2c] sm:$0xf] %vm1487, %v1462
  %1500 = vst.msk [vmem:[%s3 + $0x30] sm:$0xf] %vm1487, %v1463
  %1501 = vst.msk [vmem:[%s3 + $0x34] sm:$0xf] %vm1487, %v1464
  %1502 = vst.msk [vmem:[%s3 + $0x38] sm:$0xf] %vm1487, %v1465
  %1503 = vst.msk [vmem:[%s3 + $0x3c] sm:$0xf] %vm1487, %v1466
  %1504 = vst.msk [vmem:[%s3 + $0x40] sm:$0xf] %vm1487, %v1467
  %1505 = vst.msk [vmem:[%s3 + $0x44] sm:$0xf] %vm1487, %v1468
  %1506 = vst.msk [vmem:[%s3 + $0x48] sm:$0xf] %vm1487, %v1469
  %1507 = vst.msk [vmem:[%s3 + $0x4c] sm:$0xf] %vm1487, %v1470
  %1508 = vst.msk [vmem:[%s3 + $0x50] sm:$0xf] %vm1487, %v1471
  %1509 = vst.msk [vmem:[%s3 + $0x54] sm:$0xf] %vm1487, %v1472
  %1510 = vst.msk [vmem:[%s3 + $0x58] sm:$0xf] %vm1487, %v1473
  %1511 = vst.msk [vmem:[%s3 + $0x5c] sm:$0xf] %vm1487, %v1474
  %1512 = vst.msk [vmem:[%s3 + $0x60] sm:$0xf] %vm1487, %v1475
  %1513 = vst.msk [vmem:[%s3 + $0x64] sm:$0xf] %vm1487, %v1476
  %1514 = vst.msk [vmem:[%s3 + $0x68] sm:$0xf] %vm1487, %v1477
  %1515 = vst.msk [vmem:[%s3 + $0x6c] sm:$0xf] %vm1487, %v1478
  %1516 = vst.msk [vmem:[%s3 + $0x70] sm:$0xf] %vm1487, %v1479
  %1517 = vst.msk [vmem:[%s3 + $0x74] sm:$0xf] %vm1487, %v1480
  %1518 = vst.msk [vmem:[%s3 + $0x78] sm:$0xf] %vm1487, %v1481
  %1519 = vst.msk [vmem:[%s3 + $0x7c] sm:$0xf] %vm1487, %v1482
  %1520 = vst.msk [vmem:[%s3 + $0x80] sm:$0xf] %vm1487, %v1483
  %1521 = vst.msk [vmem:[%s3 + $0x84] sm:$0xf] %vm1487, %v1484
  %1522 = vst.msk [vmem:[%s3 + $0x88] sm:$0xf] %vm1487, %v1485
  %1523 = vst.msk [vmem:[%s3 + $0x8c] sm:$0xf] %vm1487, %v1486
  // Predicated region
  $region14: #{ppo_forward.6} parent=0 // pred_check
    _
  $region15: #{ppo_forward.6} parent=0 // pred_check_branch
    %1525 = sbr.rel (0) target = $region17
  $region16: #{ppo_forward.6} parent=0 // pred_region
    _
  $region17: #{ppo_forward.6} parent=0 // pred_fallthru
    _
  // Predicated region
  $region18: #{ppo_forward.6} parent=0 // pred_check
    _
  $region19: #{ppo_forward.6} parent=0 // pred_check_branch
    %1527 = sbr.rel (0) target = $region21
  $region20: #{ppo_forward.6} parent=0 // pred_region
    _
  $region21: #{ppo_forward.6} parent=0 // pred_fallthru
    _

// kernel: ppo_forward.7
$region0: #{ppo_forward.7}
  #allocation0 [shape = 'u32[]', space=smem, size = 0x4, offset = 0x4, fixed_abs, tag = 'smem constant byte address 0x4 - core index']
  #allocation1 [shape = 'u32[72,128]{1,0:T(1,128)}', space=vmem, size = 0x9000, scoped, tag = 'internal scratch']
  #allocation2 [shape = 'f32[2,512]{1,0:T(2,128)}', space=vmem, size = 0x1000, scoped, tag = 'scratch operand']
  %s0 = inlined_call_operand.vmem [shape: bf16[2,9216], index: 0, kind: input, shape index: {}]
  %s1 = inlined_call_operand.vmem [shape: f32[2,8], index: 1, kind: input, shape index: {}]
  %s2 = inlined_call_operand.vmem [shape: bf16[9216,512], index: 2, kind: input, shape index: {}]
  %s3 = inlined_call_operand.vmem [shape: f32[8,512], index: 3, kind: input, shape index: {}]
  %s4 = inlined_call_operand.vmem [shape: f32[1,512], index: 4, kind: input, shape index: {}]
  %s5 = inlined_call_operand.vmem [shape: bf16[512,512], index: 5, kind: input, shape index: {}]
  %s6 = inlined_call_operand.vmem [shape: f32[1,512], index: 6, kind: input, shape index: {}]
  %s7 = inlined_call_operand.vmem [shape: bf16[512,8], index: 7, kind: input, shape index: {}]
  %s8 = inlined_call_operand.vmem [shape: f32[1,8], index: 8, kind: input, shape index: {}]
  %s9 = inlined_call_operand.vmem [shape: f32[2,8], index: 9, kind: output, shape index: {}]
  %s10 = sld [smem:[#allocation0]]
  $region77: #{ppo_forward.7} parent=0
    _
  %s12 = ssub.s32 1, %s10
  %s13 = scalar_select 0, %s12, %s10
  loop: start=0, step=1, limit=6
  $region2: #{ppo_forward.7} parent=0 // loop_pre_header
    _
  $region3: #{ppo_forward.7} parent=0 // loop_header
    %s15 = sphi 0, %s19
    %p16 = scmp.ge.s32.totalorder %s15, 6
    %s25 = sphi 0, %s27
    %s28 = sphi 0, %s25
    %s29 = sphi 0, %s28
    %s45 = sphi 0, %s29
    %s49 = sphi 0, %s49
    %s51 = sphi 0, %s49
    %s52 = sphi 0, %s51
    %s66 = sphi 0, %s52
    %s72 = sphi 0, %s74
    %s75 = sphi 0, %s72
    %s76 = sphi 0, %s75
    %s92 = sphi 0, %s76
    %s96 = sphi 0, %s96
    %s98 = sphi 0, %s96
    %s99 = sphi 0, %s98
    %s113 = sphi 0, %s99
    %s117 = sphi 0, %s117
    %s119 = sphi 0, %s117
    %s120 = sphi 0, %s119
    %s134 = sphi 0, %s120
    %s138 = sphi 0, %s138
    %s140 = sphi 0, %s138
    %s141 = sphi 0, %s140
    %s155 = sphi 0, %s141
    %s159 = sphi 0, %s159
    %s161 = sphi 0, %s159
    %s162 = sphi 0, %s161
    %s176 = sphi 0, %s162
    %s180 = sphi 0, %s180
    %s182 = sphi 0, %s180
    %s183 = sphi 0, %s182
    %s197 = sphi 0, %s183
    %s201 = sphi 0, %s201
    %s203 = sphi 0, %s201
    %s204 = sphi 0, %s203
    %s218 = sphi 0, %s204
    %s222 = sphi 0, %s222
    %s224 = sphi 0, %s222
    %s225 = sphi 0, %s224
    %s239 = sphi 0, %s225
  $region4: #{ppo_forward.7} parent=0 // loop_header_branch
    %18 = sbr.rel (%p16) target = $region8
  $region5: #{ppo_forward.7} parent=0 // loop_body
    %s20 = ssub.s32 %s15, 1
    %s21 = ssub.s32 %s15, 2
    %s22 = sadd.s32 %s15, 1
    %s23 = ssub.s32 %s15, %s22
    %p24 = scmp.eq.s32.totalorder %s23, 0
    %s26 = sadd.s32 %s25, 1
    %s27 = scalar_select %p24, %s25, %s26
    %p30 = pneg %p24
    %p31 = scmp.eq.s32.totalorder %s15, 3
    %p32 = por %p30, %p31
    %p33 = scmp.ne.s32.totalorder %s25, %s28
    %p34 = scmp.eq.s32.totalorder %s15, 0
    %p35 = por %p33, %p34
    %p36 = scmp.ne.s32.totalorder %s25, %s28
    %p37 = scmp.eq.s32.totalorder %s20, 3
    %p38 = por %p36, %p37
    %p39 = scmp.ne.s32.totalorder %s28, %s29
    %p40 = scmp.eq.s32.totalorder %s20, 0
    %p41 = por %p39, %p40
    %p42 = scmp.ne.s32.totalorder %s28, %s29
    %p43 = scmp.eq.s32.totalorder %s21, 3
    %p44 = por %p42, %p43
    %p46 = scmp.ne.s32.totalorder %s29, %s45
    %p47 = scmp.eq.s32.totalorder %s21, 0
    %p48 = por %p46, %p47
    %s50 = sadd.s32 %s49, 1
    %p53 = scmp.eq.s32.totalorder %s15, 3
    %p54 = scmp.ne.s32.totalorder %s49, %s51
    %p55 = scmp.eq.s32.totalorder %s15, 0
    %p56 = por %p54, %p55
    %p57 = scmp.ne.s32.totalorder %s49, %s51
    %p58 = scmp.eq.s32.totalorder %s20, 3
    %p59 = por %p57, %p58
    %p60 = scmp.ne.s32.totalorder %s51, %s52
    %p61 = scmp.eq.s32.totalorder %s20, 0
    %p62 = por %p60, %p61
    %p63 = scmp.ne.s32.totalorder %s51, %s52
    %p64 = scmp.eq.s32.totalorder %s21, 3
    %p65 = por %p63, %p64
    %p67 = scmp.ne.s32.totalorder %s52, %s66
    %p68 = scmp.eq.s32.totalorder %s21, 0
    %p69 = por %p67, %p68
    %s70 = ssub.s32 %s15, %s22
    %p71 = scmp.eq.s32.totalorder %s70, 0
    %s73 = sadd.s32 %s72, 1
    %s74 = scalar_select %p71, %s72, %s73
    %p77 = pneg %p71
    %p78 = scmp.eq.s32.totalorder %s15, 3
    %p79 = por %p77, %p78
    %p80 = scmp.ne.s32.totalorder %s72, %s75
    %p81 = scmp.eq.s32.totalorder %s15, 0
    %p82 = por %p80, %p81
    %p83 = scmp.ne.s32.totalorder %s72, %s75
    %p84 = scmp.eq.s32.totalorder %s20, 3
    %p85 = por %p83, %p84
    %p86 = scmp.ne.s32.totalorder %s75, %s76
    %p87 = scmp.eq.s32.totalorder %s20, 0
    %p88 = por %p86, %p87
    %p89 = scmp.ne.s32.totalorder %s75, %s76
    %p90 = scmp.eq.s32.totalorder %s21, 3
    %p91 = por %p89, %p90
    %p93 = scmp.ne.s32.totalorder %s76, %s92
    %p94 = scmp.eq.s32.totalorder %s21, 0
    %p95 = por %p93, %p94
    %s97 = sadd.s32 %s96, 1
    %p100 = scmp.eq.s32.totalorder %s15, 3
    %p101 = scmp.ne.s32.totalorder %s96, %s98
    %p102 = scmp.eq.s32.totalorder %s15, 0
    %p103 = por %p101, %p102
    %p104 = scmp.ne.s32.totalorder %s96, %s98
    %p105 = scmp.eq.s32.totalorder %s20, 3
    %p106 = por %p104, %p105
    %p107 = scmp.ne.s32.totalorder %s98, %s99
    %p108 = scmp.eq.s32.totalorder %s20, 0
    %p109 = por %p107, %p108
    %p110 = scmp.ne.s32.totalorder %s98, %s99
    %p111 = scmp.eq.s32.totalorder %s21, 3
    %p112 = por %p110, %p111
    %p114 = scmp.ne.s32.totalorder %s99, %s113
    %p115 = scmp.eq.s32.totalorder %s21, 0
    %p116 = por %p114, %p115
    %s118 = sadd.s32 %s117, 1
    %p121 = scmp.eq.s32.totalorder %s15, 3
    %p122 = scmp.ne.s32.totalorder %s117, %s119
    %p123 = scmp.eq.s32.totalorder %s15, 0
    %p124 = por %p122, %p123
    %p125 = scmp.ne.s32.totalorder %s117, %s119
    %p126 = scmp.eq.s32.totalorder %s20, 3
    %p127 = por %p125, %p126
    %p128 = scmp.ne.s32.totalorder %s119, %s120
    %p129 = scmp.eq.s32.totalorder %s20, 0
    %p130 = por %p128, %p129
    %p131 = scmp.ne.s32.totalorder %s119, %s120
    %p132 = scmp.eq.s32.totalorder %s21, 3
    %p133 = por %p131, %p132
    %p135 = scmp.ne.s32.totalorder %s120, %s134
    %p136 = scmp.eq.s32.totalorder %s21, 0
    %p137 = por %p135, %p136
    %s139 = sadd.s32 %s138, 1
    %p142 = scmp.eq.s32.totalorder %s15, 3
    %p143 = scmp.ne.s32.totalorder %s138, %s140
    %p144 = scmp.eq.s32.totalorder %s15, 0
    %p145 = por %p143, %p144
    %p146 = scmp.ne.s32.totalorder %s138, %s140
    %p147 = scmp.eq.s32.totalorder %s20, 3
    %p148 = por %p146, %p147
    %p149 = scmp.ne.s32.totalorder %s140, %s141
    %p150 = scmp.eq.s32.totalorder %s20, 0
    %p151 = por %p149, %p150
    %p152 = scmp.ne.s32.totalorder %s140, %s141
    %p153 = scmp.eq.s32.totalorder %s21, 3
    %p154 = por %p152, %p153
    %p156 = scmp.ne.s32.totalorder %s141, %s155
    %p157 = scmp.eq.s32.totalorder %s21, 0
    %p158 = por %p156, %p157
    %s160 = sadd.s32 %s159, 1
    %p163 = scmp.eq.s32.totalorder %s15, 3
    %p164 = scmp.ne.s32.totalorder %s159, %s161
    %p165 = scmp.eq.s32.totalorder %s15, 0
    %p166 = por %p164, %p165
    %p167 = scmp.ne.s32.totalorder %s159, %s161
    %p168 = scmp.eq.s32.totalorder %s20, 3
    %p169 = por %p167, %p168
    %p170 = scmp.ne.s32.totalorder %s161, %s162
    %p171 = scmp.eq.s32.totalorder %s20, 0
    %p172 = por %p170, %p171
    %p173 = scmp.ne.s32.totalorder %s161, %s162
    %p174 = scmp.eq.s32.totalorder %s21, 3
    %p175 = por %p173, %p174
    %p177 = scmp.ne.s32.totalorder %s162, %s176
    %p178 = scmp.eq.s32.totalorder %s21, 0
    %p179 = por %p177, %p178
    %s181 = sadd.s32 %s180, 1
    %p184 = scmp.eq.s32.totalorder %s15, 3
    %p185 = scmp.ne.s32.totalorder %s180, %s182
    %p186 = scmp.eq.s32.totalorder %s15, 0
    %p187 = por %p185, %p186
    %p188 = scmp.ne.s32.totalorder %s180, %s182
    %p189 = scmp.eq.s32.totalorder %s20, 3
    %p190 = por %p188, %p189
    %p191 = scmp.ne.s32.totalorder %s182, %s183
    %p192 = scmp.eq.s32.totalorder %s20, 0
    %p193 = por %p191, %p192
    %p194 = scmp.ne.s32.totalorder %s182, %s183
    %p195 = scmp.eq.s32.totalorder %s21, 3
    %p196 = por %p194, %p195
    %p198 = scmp.ne.s32.totalorder %s183, %s197
    %p199 = scmp.eq.s32.totalorder %s21, 0
    %p200 = por %p198, %p199
    %s202 = sadd.s32 %s201, 1
    %p205 = scmp.eq.s32.totalorder %s15, 3
    %p206 = scmp.ne.s32.totalorder %s201, %s203
    %p207 = scmp.eq.s32.totalorder %s15, 0
    %p208 = por %p206, %p207
    %p209 = scmp.ne.s32.totalorder %s201, %s203
    %p210 = scmp.eq.s32.totalorder %s20, 3
    %p211 = por %p209, %p210
    %p212 = scmp.ne.s32.totalorder %s203, %s204
    %p213 = scmp.eq.s32.totalorder %s20, 0
    %p214 = por %p212, %p213
    %p215 = scmp.ne.s32.totalorder %s203, %s204
    %p216 = scmp.eq.s32.totalorder %s21, 3
    %p217 = por %p215, %p216
    %p219 = scmp.ne.s32.totalorder %s204, %s218
    %p220 = scmp.eq.s32.totalorder %s21, 0
    %p221 = por %p219, %p220
    %s223 = sadd.s32 %s222, 1
    %p226 = scmp.eq.s32.totalorder %s15, 3
    %p227 = scmp.ne.s32.totalorder %s222, %s224
    %p228 = scmp.eq.s32.totalorder %s15, 0
    %p229 = por %p227, %p228
    %p230 = scmp.ne.s32.totalorder %s222, %s224
    %p231 = scmp.eq.s32.totalorder %s20, 3
    %p232 = por %p230, %p231
    %p233 = scmp.ne.s32.totalorder %s224, %s225
    %p234 = scmp.eq.s32.totalorder %s20, 0
    %p235 = por %p233, %p234
    %p236 = scmp.ne.s32.totalorder %s224, %s225
    %p237 = scmp.eq.s32.totalorder %s21, 3
    %p238 = por %p236, %p237
    %p240 = scmp.ne.s32.totalorder %s225, %s239
    %p241 = scmp.eq.s32.totalorder %s21, 0
    %p242 = por %p240, %p241
    %p243 = scmp.le.s32.totalorder 1, %s15
    %p244 = scmp.lt.s32.totalorder %s15, 5
    %p245 = pnand %p243, %p244
    %p246 = pneg %p245
    // Predicated region
    $region9: #{ppo_forward.7} parent=5 // pred_check
      _
    $region10: #{ppo_forward.7} parent=5 // pred_check_branch
      %248 = sbr.rel (%p245) target = $region12
    $region11: #{ppo_forward.7} parent=5 // pred_region
      %s249 = ssub.s32 %s15, 1
      // Predicated region
      $region13: #{ppo_forward.7} parent=11 // pred_check
        %p250 = pneg %p62
      $region14: #{ppo_forward.7} parent=11 // pred_check_branch
        %252 = sbr.rel (%p250) target = $region16
      $region15: #{ppo_forward.7} parent=11 // pred_region
        _
      $region16: #{ppo_forward.7} parent=11 // pred_fallthru
        _
      // Predicated region
      $region17: #{ppo_forward.7} parent=11 // pred_check
        %p253 = pneg %p109
      $region18: #{ppo_forward.7} parent=11 // pred_check_branch
        %255 = sbr.rel (%p253) target = $region20
      $region19: #{ppo_forward.7} parent=11 // pred_region
        _
      $region20: #{ppo_forward.7} parent=11 // pred_fallthru
        _
      // Predicated region
      $region21: #{ppo_forward.7} parent=11 // pred_check
        %p256 = pneg %p130
      $region22: #{ppo_forward.7} parent=11 // pred_check_branch
        %258 = sbr.rel (%p256) target = $region24
      $region23: #{ppo_forward.7} parent=11 // pred_region
        _
      $region24: #{ppo_forward.7} parent=11 // pred_fallthru
        _
      // Predicated region
      $region25: #{ppo_forward.7} parent=11 // pred_check
        %p259 = pneg %p151
      $region26: #{ppo_forward.7} parent=11 // pred_check_branch
        %261 = sbr.rel (%p259) target = $region28
      $region27: #{ppo_forward.7} parent=11 // pred_region
        _
      $region28: #{ppo_forward.7} parent=11 // pred_fallthru
        _
      // Predicated region
      $region29: #{ppo_forward.7} parent=11 // pred_check
        %p262 = pneg %p172
      $region30: #{ppo_forward.7} parent=11 // pred_check_branch
        %264 = sbr.rel (%p262) target = $region32
      $region31: #{ppo_forward.7} parent=11 // pred_region
        _
      $region32: #{ppo_forward.7} parent=11 // pred_fallthru
        _
      // Predicated region
      $region33: #{ppo_forward.7} parent=11 // pred_check
        %p265 = pneg %p193
      $region34: #{ppo_forward.7} parent=11 // pred_check_branch
        %267 = sbr.rel (%p265) target = $region36
      $region35: #{ppo_forward.7} parent=11 // pred_region
        _
      $region36: #{ppo_forward.7} parent=11 // pred_fallthru
        _
      // Predicated region
      $region37: #{ppo_forward.7} parent=11 // pred_check
        %p268 = pneg %p214
      $region38: #{ppo_forward.7} parent=11 // pred_check_branch
        %270 = sbr.rel (%p268) target = $region40
      $region39: #{ppo_forward.7} parent=11 // pred_region
        _
      $region40: #{ppo_forward.7} parent=11 // pred_fallthru
        _
    $region12: #{ppo_forward.7} parent=5 // pred_fallthru
      _
    %p271 = scmp.lt.s32.totalorder %s15, 4
    // Predicated region
    $region41: #{ppo_forward.7} parent=5 // pred_check
      %p272 = pneg %p271
    $region42: #{ppo_forward.7} parent=5 // pred_check_branch
      %274 = sbr.rel (%p272) target = $region44
    $region43: #{ppo_forward.7} parent=5 // pred_region
      // Predicated region
      $region45: #{ppo_forward.7} parent=43 // pred_check
        %p275 = pneg %p35
      $region46: #{ppo_forward.7} parent=43 // pred_check_branch
        %277 = sbr.rel (%p275) target = $region48
      $region47: #{ppo_forward.7} parent=43 // pred_region
        %s278 = smul.u32 18, %s15
        %p279 = scmp.lt.s32.totalorder %s278, 71
        %s280 = scalar_select %p279, %s278, 71
        %s281 = scalar_lea.vmem %s0, %s280
        %s282 = smul.u32 18, %s15
      $region48: #{ppo_forward.7} parent=43 // pred_fallthru
        _
      // Predicated region
      $region49: #{ppo_forward.7} parent=43 // pred_check
        %p283 = pneg %p82
      $region50: #{ppo_forward.7} parent=43 // pred_check_branch
        %285 = sbr.rel (%p283) target = $region52
      $region51: #{ppo_forward.7} parent=43 // pred_region
        %s286 = smul.u32 288, %s15
        %p287 = scmp.lt.s32.totalorder %s286, 1151
        %s288 = scalar_select %p287, %s286, 1151
        %s289 = smul.addr %s288, 4
        %s290 = smul.addr %s289, 4
        %s291 = scalar_lea.vmem %s2, %s290
        %s292 = smul.u32 288, %s15
      $region52: #{ppo_forward.7} parent=43 // pred_fallthru
        _
    $region44: #{ppo_forward.7} parent=5 // pred_fallthru
      _
    %p293 = scmp.le.s32.totalorder 1, %s15
    %p294 = scmp.lt.s32.totalorder %s15, 5
    %p295 = pnand %p293, %p294
    %p296 = pneg %p295
    // Predicated region
    $region53: #{ppo_forward.7} parent=5 // pred_check
      _
    $region54: #{ppo_forward.7} parent=5 // pred_check_branch
      %298 = sbr.rel (%p295) target = $region56
    $region55: #{ppo_forward.7} parent=5 // pred_region
      %s299 = ssub.s32 %s15, 1
      %s300 = smul.u32 18, %s20
      %p301 = scmp.lt.s32.totalorder %s300, 71
      %s302 = scalar_select %p301, %s300, 71
      %s303 = scalar_lea.vmem %s0, %s302
      %p304 = pneg %p41
      %p305 = pneg %p38
      %p306 = pneg %p62
      %p307 = pneg %p59
      %s308 = smul.u32 288, %s20
      %p309 = scmp.lt.s32.totalorder %s308, 1151
      %s310 = scalar_select %p309, %s308, 1151
      %s311 = smul.addr %s310, 4
      %s312 = smul.addr %s311, 4
      %s313 = scalar_lea.vmem %s2, %s312
      %p314 = pneg %p88
      %p315 = pneg %p85
      %p316 = pneg %p109
      %p317 = pneg %p106
      %p318 = pneg %p130
      %p319 = pneg %p127
      %p320 = pneg %p151
      %p321 = pneg %p148
      %p322 = pneg %p172
      %p323 = pneg %p169
      %p324 = pneg %p193
      %p325 = pneg %p190
      %p326 = pneg %p214
      %p327 = pneg %p211
      %p328 = pneg %p235
      %p329 = pneg %p232
      %s330 = smul.u32 18, %s20
      %p331 = scmp.lt.s32.totalorder %s330, 71
      %s332 = scalar_select %p331, %s330, 71
      %s333 = scalar_lea.vmem %s0, %s332
      %s334 = smul.u32 18, %s20
      %s335 = smul.u32 288, %s20
      %p336 = scmp.lt.s32.totalorder %s335, 1151
      %s337 = scalar_select %p336, %s335, 1151
      %s338 = smul.addr %s337, 4
      %s339 = smul.addr %s338, 4
      %s340 = scalar_lea.vmem %s2, %s339
      %s341 = smul.u32 288, %s20
      %p342 = scmp.eq.s32.totalorder %s20, 0
      // Predicated region
      $region57: #{ppo_forward.7} parent=55 // pred_check
        %p343 = pneg %p342
      $region58: #{ppo_forward.7} parent=55 // pred_check_branch
        %345 = sbr.rel (%p343) target = $region60
      $region59: #{ppo_forward.7} parent=55 // pred_region
        %346 = vst [vmem:[#allocation2] sm:$0xff] 0.0
      $region60: #{ppo_forward.7} parent=55 // pred_fallthru
        _
      %v347 = vld [vmem:[#allocation2] sm:$0xff]
      %v348 = vld [vmem:[%s333] sm:$0xff]
      %v349 = vld [vmem:[%s333 + $0x8] sm:$0xff]
      %v350 = vld [vmem:[%s333 + $0x10] sm:$0x3]
      %v351 = vld [vmem:[%s340] sm:$0xff]
      %v352 = vld [vmem:[%s340 + $0x8] sm:$0xff]
      %v353 = vld [vmem:[%s340 + $0x10] sm:$0xff]
      %v354 = vld [vmem:[%s340 + $0x18] sm:$0xff]
      %v355 = vld [vmem:[%s340 + $0x20] sm:$0xff]
      %v356 = vld [vmem:[%s340 + $0x28] sm:$0xff]
      %v357 = vld [vmem:[%s340 + $0x30] sm:$0xff]
      %v358 = vld [vmem:[%s340 + $0x38] sm:$0xff]
      %v359 = vld [vmem:[%s340 + $0x40] sm:$0xff]
      %v360 = vld [vmem:[%s340 + $0x48] sm:$0xff]
      %v361 = vld [vmem:[%s340 + $0x50] sm:$0xff]
      %v362 = vld [vmem:[%s340 + $0x58] sm:$0xff]
      %v363 = vld [vmem:[%s340 + $0x60] sm:$0xff]
      %v364 = vld [vmem:[%s340 + $0x68] sm:$0xff]
      %v365 = vld [vmem:[%s340 + $0x70] sm:$0xff]
      %v366 = vld [vmem:[%s340 + $0x78] sm:$0xff]
      %v367 = vld [vmem:[%s340 + $0x80] sm:$0xff]
      %v368 = vld [vmem:[%s340 + $0x88] sm:$0xff]
      %v369 = vld [vmem:[%s340 + $0x90] sm:$0xff]
      %v370 = vld [vmem:[%s340 + $0x98] sm:$0xff]
      %v371 = vld [vmem:[%s340 + $0xa0] sm:$0xff]
      %v372 = vld [vmem:[%s340 + $0xa8] sm:$0xff]
      %v373 = vld [vmem:[%s340 + $0xb0] sm:$0xff]
      %v374 = vld [vmem:[%s340 + $0xb8] sm:$0xff]
      %v375 = vld [vmem:[%s340 + $0xc0] sm:$0xff]
      %v376 = vld [vmem:[%s340 + $0xc8] sm:$0xff]
      %v377 = vld [vmem:[%s340 + $0xd0] sm:$0xff]
      %v378 = vld [vmem:[%s340 + $0xd8] sm:$0xff]
      %v379 = vld [vmem:[%s340 + $0xe0] sm:$0xff]
      %v380 = vld [vmem:[%s340 + $0xe8] sm:$0xff]
      %v381 = vld [vmem:[%s340 + $0xf0] sm:$0xff]
      %v382 = vld [vmem:[%s340 + $0xf8] sm:$0xff]
      %v383 = vld [vmem:[%s340 + $0x100] sm:$0xff]
      %v384 = vld [vmem:[%s340 + $0x108] sm:$0xff]
      %v385 = vld [vmem:[%s340 + $0x110] sm:$0xff]
      %v386 = vld [vmem:[%s340 + $0x118] sm:$0xff]
      %v387 = vld [vmem:[%s340 + $0x120] sm:$0xff]
      %v388 = vld [vmem:[%s340 + $0x128] sm:$0xff]
      %v389 = vld [vmem:[%s340 + $0x130] sm:$0xff]
      %v390 = vld [vmem:[%s340 + $0x138] sm:$0xff]
      %v391 = vld [vmem:[%s340 + $0x140] sm:$0xff]
      %v392 = vld [vmem:[%s340 + $0x148] sm:$0xff]
      %v393 = vld [vmem:[%s340 + $0x150] sm:$0xff]
      %v394 = vld [vmem:[%s340 + $0x158] sm:$0xff]
      %v395 = vld [vmem:[%s340 + $0x160] sm:$0xff]
      %v396 = vld [vmem:[%s340 + $0x168] sm:$0xff]
      %v397 = vld [vmem:[%s340 + $0x170] sm:$0xff]
      %v398 = vld [vmem:[%s340 + $0x178] sm:$0xff]
      %v399 = vld [vmem:[%s340 + $0x180] sm:$0xff]
      %v400 = vld [vmem:[%s340 + $0x188] sm:$0xff]
      %v401 = vld [vmem:[%s340 + $0x190] sm:$0xff]
      %v402 = vld [vmem:[%s340 + $0x198] sm:$0xff]
      %v403 = vld [vmem:[%s340 + $0x1a0] sm:$0xff]
      %v404 = vld [vmem:[%s340 + $0x1a8] sm:$0xff]
      %v405 = vld [vmem:[%s340 + $0x1b0] sm:$0xff]
      %v406 = vld [vmem:[%s340 + $0x1b8] sm:$0xff]
      %v407 = vld [vmem:[%s340 + $0x1c0] sm:$0xff]
      %v408 = vld [vmem:[%s340 + $0x1c8] sm:$0xff]
      %v409 = vld [vmem:[%s340 + $0x1d0] sm:$0xff]
      %v410 = vld [vmem:[%s340 + $0x1d8] sm:$0xff]
      %v411 = vld [vmem:[%s340 + $0x1e0] sm:$0xff]
      %v412 = vld [vmem:[%s340 + $0x1e8] sm:$0xff]
      %v413 = vld [vmem:[%s340 + $0x1f0] sm:$0xff]
      %v414 = vld [vmem:[%s340 + $0x1f8] sm:$0xff]
      %v415 = vld [vmem:[%s340 + $0x200] sm:$0xff]
      %v416 = vld [vmem:[%s340 + $0x208] sm:$0xff]
      %v417 = vld [vmem:[%s340 + $0x210] sm:$0xff]
      %v418 = vld [vmem:[%s340 + $0x218] sm:$0xff]
      %v419 = vld [vmem:[%s340 + $0x220] sm:$0xff]
      %v420 = vld [vmem:[%s340 + $0x228] sm:$0xff]
      %v421 = vld [vmem:[%s340 + $0x230] sm:$0xff]
      %v422 = vld [vmem:[%s340 + $0x238] sm:$0xff]
      %v423 = vld [vmem:[%s340 + $0x240] sm:$0xff]
      %v424 = vld [vmem:[%s340 + $0x248] sm:$0xff]
      %v425 = vld [vmem:[%s340 + $0x250] sm:$0xff]
      %v426 = vld [vmem:[%s340 + $0x258] sm:$0xff]
      %v427 = vld [vmem:[%s340 + $0x260] sm:$0xff]
      %v428 = vld [vmem:[%s340 + $0x268] sm:$0xff]
      %v429 = vld [vmem:[%s340 + $0x270] sm:$0xff]
      %v430 = vld [vmem:[%s340 + $0x278] sm:$0xff]
      %v431 = vld [vmem:[%s340 + $0x280] sm:$0xff]
      %v432 = vld [vmem:[%s340 + $0x288] sm:$0xff]
      %v433 = vld [vmem:[%s340 + $0x290] sm:$0xff]
      %v434 = vld [vmem:[%s340 + $0x298] sm:$0xff]
      %v435 = vld [vmem:[%s340 + $0x2a0] sm:$0xff]
      %v436 = vld [vmem:[%s340 + $0x2a8] sm:$0xff]
      %v437 = vld [vmem:[%s340 + $0x2b0] sm:$0xff]
      %v438 = vld [vmem:[%s340 + $0x2b8] sm:$0xff]
      %v439 = vld [vmem:[%s340 + $0x2c0] sm:$0xff]
      %v440 = vld [vmem:[%s340 + $0x2c8] sm:$0xff]
      %v441 = vld [vmem:[%s340 + $0x2d0] sm:$0xff]
      %v442 = vld [vmem:[%s340 + $0x2d8] sm:$0xff]
      %v443 = vld [vmem:[%s340 + $0x2e0] sm:$0xff]
      %v444 = vld [vmem:[%s340 + $0x2e8] sm:$0xff]
      %v445 = vld [vmem:[%s340 + $0x2f0] sm:$0xff]
      %v446 = vld [vmem:[%s340 + $0x2f8] sm:$0xff]
      %v447 = vld [vmem:[%s340 + $0x300] sm:$0xff]
      %v448 = vld [vmem:[%s340 + $0x308] sm:$0xff]
      %v449 = vld [vmem:[%s340 + $0x310] sm:$0xff]
      %v450 = vld [vmem:[%s340 + $0x318] sm:$0xff]
      %v451 = vld [vmem:[%s340 + $0x320] sm:$0xff]
      %v452 = vld [vmem:[%s340 + $0x328] sm:$0xff]
      %v453 = vld [vmem:[%s340 + $0x330] sm:$0xff]
      %v454 = vld [vmem:[%s340 + $0x338] sm:$0xff]
      %v455 = vld [vmem:[%s340 + $0x340] sm:$0xff]
      %v456 = vld [vmem:[%s340 + $0x348] sm:$0xff]
      %v457 = vld [vmem:[%s340 + $0x350] sm:$0xff]
      %v458 = vld [vmem:[%s340 + $0x358] sm:$0xff]
      %v459 = vld [vmem:[%s340 + $0x360] sm:$0xff]
      %v460 = vld [vmem:[%s340 + $0x368] sm:$0xff]
      %v461 = vld [vmem:[%s340 + $0x370] sm:$0xff]
      %v462 = vld [vmem:[%s340 + $0x378] sm:$0xff]
      %v463 = vld [vmem:[%s340 + $0x380] sm:$0xff]
      %v464 = vld [vmem:[%s340 + $0x388] sm:$0xff]
      %v465 = vld [vmem:[%s340 + $0x390] sm:$0xff]
      %v466 = vld [vmem:[%s340 + $0x398] sm:$0xff]
      %v467 = vld [vmem:[%s340 + $0x3a0] sm:$0xff]
      %v468 = vld [vmem:[%s340 + $0x3a8] sm:$0xff]
      %v469 = vld [vmem:[%s340 + $0x3b0] sm:$0xff]
      %v470 = vld [vmem:[%s340 + $0x3b8] sm:$0xff]
      %v471 = vld [vmem:[%s340 + $0x3c0] sm:$0xff]
      %v472 = vld [vmem:[%s340 + $0x3c8] sm:$0xff]
      %v473 = vld [vmem:[%s340 + $0x3d0] sm:$0xff]
      %v474 = vld [vmem:[%s340 + $0x3d8] sm:$0xff]
      %v475 = vld [vmem:[%s340 + $0x3e0] sm:$0xff]
      %v476 = vld [vmem:[%s340 + $0x3e8] sm:$0xff]
      %v477 = vld [vmem:[%s340 + $0x3f0] sm:$0xff]
      %v478 = vld [vmem:[%s340 + $0x3f8] sm:$0xff]
      %v479 = vld [vmem:[%s340 + $0x400] sm:$0xff]
      %v480 = vld [vmem:[%s340 + $0x408] sm:$0xff]
      %v481 = vld [vmem:[%s340 + $0x410] sm:$0xff]
      %v482 = vld [vmem:[%s340 + $0x418] sm:$0xff]
      %v483 = vld [vmem:[%s340 + $0x420] sm:$0xff]
      %v484 = vld [vmem:[%s340 + $0x428] sm:$0xff]
      %v485 = vld [vmem:[%s340 + $0x430] sm:$0xff]
      %v486 = vld [vmem:[%s340 + $0x438] sm:$0xff]
      %v487 = vld [vmem:[%s340 + $0x440] sm:$0xff]
      %v488 = vld [vmem:[%s340 + $0x448] sm:$0xff]
      %v489 = vld [vmem:[%s340 + $0x450] sm:$0xff]
      %v490 = vld [vmem:[%s340 + $0x458] sm:$0xff]
      %v491 = vld [vmem:[%s340 + $0x460] sm:$0xff]
      %v492 = vld [vmem:[%s340 + $0x468] sm:$0xff]
      %v493 = vld [vmem:[%s340 + $0x470] sm:$0xff]
      %v494 = vld [vmem:[%s340 + $0x478] sm:$0xff]
      %v495 = vld [vmem:[%s340 + $0x480] sm:$0xff]
      %v496 = vld [vmem:[%s340 + $0x488] sm:$0xff]
      %v497 = vld [vmem:[%s340 + $0x490] sm:$0xff]
      %v498 = vld [vmem:[%s340 + $0x498] sm:$0xff]
      %v499 = vld [vmem:[%s340 + $0x4a0] sm:$0xff]
      %v500 = vld [vmem:[%s340 + $0x4a8] sm:$0xff]
      %v501 = vld [vmem:[%s340 + $0x4b0] sm:$0xff]
      %v502 = vld [vmem:[%s340 + $0x4b8] sm:$0xff]
      %v503 = vld [vmem:[%s340 + $0x4c0] sm:$0xff]
      %v504 = vld [vmem:[%s340 + $0x4c8] sm:$0xff]
      %v505 = vld [vmem:[%s340 + $0x4d0] sm:$0xff]
      %v506 = vld [vmem:[%s340 + $0x4d8] sm:$0xff]
      %v507 = vld [vmem:[%s340 + $0x4e0] sm:$0xff]
      %v508 = vld [vmem:[%s340 + $0x4e8] sm:$0xff]
      %v509 = vld [vmem:[%s340 + $0x4f0] sm:$0xff]
      %v510 = vld [vmem:[%s340 + $0x4f8] sm:$0xff]
      %v511 = vld [vmem:[%s340 + $0x500] sm:$0xff]
      %v512 = vld [vmem:[%s340 + $0x508] sm:$0xff]
      %v513 = vld [vmem:[%s340 + $0x510] sm:$0xff]
      %v514 = vld [vmem:[%s340 + $0x518] sm:$0xff]
      %v515 = vld [vmem:[%s340 + $0x520] sm:$0xff]
      %v516 = vld [vmem:[%s340 + $0x528] sm:$0xff]
      %v517 = vld [vmem:[%s340 + $0x530] sm:$0xff]
      %v518 = vld [vmem:[%s340 + $0x538] sm:$0xff]
      %v519 = vld [vmem:[%s340 + $0x540] sm:$0xff]
      %v520 = vld [vmem:[%s340 + $0x548] sm:$0xff]
      %v521 = vld [vmem:[%s340 + $0x550] sm:$0xff]
      %v522 = vld [vmem:[%s340 + $0x558] sm:$0xff]
      %v523 = vld [vmem:[%s340 + $0x560] sm:$0xff]
      %v524 = vld [vmem:[%s340 + $0x568] sm:$0xff]
      %v525 = vld [vmem:[%s340 + $0x570] sm:$0xff]
      %v526 = vld [vmem:[%s340 + $0x578] sm:$0xff]
      %v527 = vld [vmem:[%s340 + $0x580] sm:$0xff]
      %v528 = vld [vmem:[%s340 + $0x588] sm:$0xff]
      %v529 = vld [vmem:[%s340 + $0x590] sm:$0xff]
      %v530 = vld [vmem:[%s340 + $0x598] sm:$0xff]
      %v531 = vld [vmem:[%s340 + $0x5a0] sm:$0xff]
      %v532 = vld [vmem:[%s340 + $0x5a8] sm:$0xff]
      %v533 = vld [vmem:[%s340 + $0x5b0] sm:$0xff]
      %v534 = vld [vmem:[%s340 + $0x5b8] sm:$0xff]
      %v535 = vld [vmem:[%s340 + $0x5c0] sm:$0xff]
      %v536 = vld [vmem:[%s340 + $0x5c8] sm:$0xff]
      %v537 = vld [vmem:[%s340 + $0x5d0] sm:$0xff]
      %v538 = vld [vmem:[%s340 + $0x5d8] sm:$0xff]
      %v539 = vld [vmem:[%s340 + $0x5e0] sm:$0xff]
      %v540 = vld [vmem:[%s340 + $0x5e8] sm:$0xff]
      %v541 = vld [vmem:[%s340 + $0x5f0] sm:$0xff]
      %v542 = vld [vmem:[%s340 + $0x5f8] sm:$0xff]
      %v543 = vld [vmem:[%s340 + $0x600] sm:$0xff]
      %v544 = vld [vmem:[%s340 + $0x608] sm:$0xff]
      %v545 = vld [vmem:[%s340 + $0x610] sm:$0xff]
      %v546 = vld [vmem:[%s340 + $0x618] sm:$0xff]
      %v547 = vld [vmem:[%s340 + $0x620] sm:$0xff]
      %v548 = vld [vmem:[%s340 + $0x628] sm:$0xff]
      %v549 = vld [vmem:[%s340 + $0x630] sm:$0xff]
      %v550 = vld [vmem:[%s340 + $0x638] sm:$0xff]
      %v551 = vld [vmem:[%s340 + $0x640] sm:$0xff]
      %v552 = vld [vmem:[%s340 + $0x648] sm:$0xff]
      %v553 = vld [vmem:[%s340 + $0x650] sm:$0xff]
      %v554 = vld [vmem:[%s340 + $0x658] sm:$0xff]
      %v555 = vld [vmem:[%s340 + $0x660] sm:$0xff]
      %v556 = vld [vmem:[%s340 + $0x668] sm:$0xff]
      %v557 = vld [vmem:[%s340 + $0x670] sm:$0xff]
      %v558 = vld [vmem:[%s340 + $0x678] sm:$0xff]
      %v559 = vld [vmem:[%s340 + $0x680] sm:$0xff]
      %v560 = vld [vmem:[%s340 + $0x688] sm:$0xff]
      %v561 = vld [vmem:[%s340 + $0x690] sm:$0xff]
      %v562 = vld [vmem:[%s340 + $0x698] sm:$0xff]
      %v563 = vld [vmem:[%s340 + $0x6a0] sm:$0xff]
      %v564 = vld [vmem:[%s340 + $0x6a8] sm:$0xff]
      %v565 = vld [vmem:[%s340 + $0x6b0] sm:$0xff]
      %v566 = vld [vmem:[%s340 + $0x6b8] sm:$0xff]
      %v567 = vld [vmem:[%s340 + $0x6c0] sm:$0xff]
      %v568 = vld [vmem:[%s340 + $0x6c8] sm:$0xff]
      %v569 = vld [vmem:[%s340 + $0x6d0] sm:$0xff]
      %v570 = vld [vmem:[%s340 + $0x6d8] sm:$0xff]
      %v571 = vld [vmem:[%s340 + $0x6e0] sm:$0xff]
      %v572 = vld [vmem:[%s340 + $0x6e8] sm:$0xff]
      %v573 = vld [vmem:[%s340 + $0x6f0] sm:$0xff]
      %v574 = vld [vmem:[%s340 + $0x6f8] sm:$0xff]
      %v575 = vld [vmem:[%s340 + $0x700] sm:$0xff]
      %v576 = vld [vmem:[%s340 + $0x708] sm:$0xff]
      %v577 = vld [vmem:[%s340 + $0x710] sm:$0xff]
      %v578 = vld [vmem:[%s340 + $0x718] sm:$0xff]
      %v579 = vld [vmem:[%s340 + $0x720] sm:$0xff]
      %v580 = vld [vmem:[%s340 + $0x728] sm:$0xff]
      %v581 = vld [vmem:[%s340 + $0x730] sm:$0xff]
      %v582 = vld [vmem:[%s340 + $0x738] sm:$0xff]
      %v583 = vld [vmem:[%s340 + $0x740] sm:$0xff]
      %v584 = vld [vmem:[%s340 + $0x748] sm:$0xff]
      %v585 = vld [vmem:[%s340 + $0x750] sm:$0xff]
      %v586 = vld [vmem:[%s340 + $0x758] sm:$0xff]
      %v587 = vld [vmem:[%s340 + $0x760] sm:$0xff]
      %v588 = vld [vmem:[%s340 + $0x768] sm:$0xff]
      %v589 = vld [vmem:[%s340 + $0x770] sm:$0xff]
      %v590 = vld [vmem:[%s340 + $0x778] sm:$0xff]
      %v591 = vld [vmem:[%s340 + $0x780] sm:$0xff]
      %v592 = vld [vmem:[%s340 + $0x788] sm:$0xff]
      %v593 = vld [vmem:[%s340 + $0x790] sm:$0xff]
      %v594 = vld [vmem:[%s340 + $0x798] sm:$0xff]
      %v595 = vld [vmem:[%s340 + $0x7a0] sm:$0xff]
      %v596 = vld [vmem:[%s340 + $0x7a8] sm:$0xff]
      %v597 = vld [vmem:[%s340 + $0x7b0] sm:$0xff]
      %v598 = vld [vmem:[%s340 + $0x7b8] sm:$0xff]
      %v599 = vld [vmem:[%s340 + $0x7c0] sm:$0xff]
      %v600 = vld [vmem:[%s340 + $0x7c8] sm:$0xff]
      %v601 = vld [vmem:[%s340 + $0x7d0] sm:$0xff]
      %v602 = vld [vmem:[%s340 + $0x7d8] sm:$0xff]
      %v603 = vld [vmem:[%s340 + $0x7e0] sm:$0xff]
      %v604 = vld [vmem:[%s340 + $0x7e8] sm:$0xff]
      %v605 = vld [vmem:[%s340 + $0x7f0] sm:$0xff]
      %v606 = vld [vmem:[%s340 + $0x7f8] sm:$0xff]
      %v607 = vld [vmem:[%s340 + $0x800] sm:$0xff]
      %v608 = vld [vmem:[%s340 + $0x808] sm:$0xff]
      %v609 = vld [vmem:[%s340 + $0x810] sm:$0xff]
      %v610 = vld [vmem:[%s340 + $0x818] sm:$0xff]
      %v611 = vld [vmem:[%s340 + $0x820] sm:$0xff]
      %v612 = vld [vmem:[%s340 + $0x828] sm:$0xff]
      %v613 = vld [vmem:[%s340 + $0x830] sm:$0xff]
      %v614 = vld [vmem:[%s340 + $0x838] sm:$0xff]
      %v615 = vld [vmem:[%s340 + $0x840] sm:$0xff]
      %v616 = vld [vmem:[%s340 + $0x848] sm:$0xff]
      %v617 = vld [vmem:[%s340 + $0x850] sm:$0xff]
      %v618 = vld [vmem:[%s340 + $0x858] sm:$0xff]
      %v619 = vld [vmem:[%s340 + $0x860] sm:$0xff]
      %v620 = vld [vmem:[%s340 + $0x868] sm:$0xff]
      %v621 = vld [vmem:[%s340 + $0x870] sm:$0xff]
      %v622 = vld [vmem:[%s340 + $0x878] sm:$0xff]
      %v623 = vld [vmem:[%s340 + $0x880] sm:$0xff]
      %v624 = vld [vmem:[%s340 + $0x888] sm:$0xff]
      %v625 = vld [vmem:[%s340 + $0x890] sm:$0xff]
      %v626 = vld [vmem:[%s340 + $0x898] sm:$0xff]
      %v627 = vld [vmem:[%s340 + $0x8a0] sm:$0xff]
      %v628 = vld [vmem:[%s340 + $0x8a8] sm:$0xff]
      %v629 = vld [vmem:[%s340 + $0x8b0] sm:$0xff]
      %v630 = vld [vmem:[%s340 + $0x8b8] sm:$0xff]
      %v631 = vld [vmem:[%s340 + $0x8c0] sm:$0xff]
      %v632 = vld [vmem:[%s340 + $0x8c8] sm:$0xff]
      %v633 = vld [vmem:[%s340 + $0x8d0] sm:$0xff]
      %v634 = vld [vmem:[%s340 + $0x8d8] sm:$0xff]
      %v635 = vld [vmem:[%s340 + $0x8e0] sm:$0xff]
      %v636 = vld [vmem:[%s340 + $0x8e8] sm:$0xff]
      %v637 = vld [vmem:[%s340 + $0x8f0] sm:$0xff]
      %v638 = vld [vmem:[%s340 + $0x8f8] sm:$0xff]
      %v639 = vld [vmem:[%s340 + $0x900] sm:$0xff]
      %v640 = vld [vmem:[%s340 + $0x908] sm:$0xff]
      %v641 = vld [vmem:[%s340 + $0x910] sm:$0xff]
      %v642 = vld [vmem:[%s340 + $0x918] sm:$0xff]
      %v643 = vld [vmem:[%s340 + $0x920] sm:$0xff]
      %v644 = vld [vmem:[%s340 + $0x928] sm:$0xff]
      %v645 = vld [vmem:[%s340 + $0x930] sm:$0xff]
      %v646 = vld [vmem:[%s340 + $0x938] sm:$0xff]
      %v647 = vld [vmem:[%s340 + $0x940] sm:$0xff]
      %v648 = vld [vmem:[%s340 + $0x948] sm:$0xff]
      %v649 = vld [vmem:[%s340 + $0x950] sm:$0xff]
      %v650 = vld [vmem:[%s340 + $0x958] sm:$0xff]
      %v651 = vld [vmem:[%s340 + $0x960] sm:$0xff]
      %v652 = vld [vmem:[%s340 + $0x968] sm:$0xff]
      %v653 = vld [vmem:[%s340 + $0x970] sm:$0xff]
      %v654 = vld [vmem:[%s340 + $0x978] sm:$0xff]
      %v655 = vld [vmem:[%s340 + $0x980] sm:$0xff]
      %v656 = vld [vmem:[%s340 + $0x988] sm:$0xff]
      %v657 = vld [vmem:[%s340 + $0x990] sm:$0xff]
      %v658 = vld [vmem:[%s340 + $0x998] sm:$0xff]
      %v659 = vld [vmem:[%s340 + $0x9a0] sm:$0xff]
      %v660 = vld [vmem:[%s340 + $0x9a8] sm:$0xff]
      %v661 = vld [vmem:[%s340 + $0x9b0] sm:$0xff]
      %v662 = vld [vmem:[%s340 + $0x9b8] sm:$0xff]
      %v663 = vld [vmem:[%s340 + $0x9c0] sm:$0xff]
      %v664 = vld [vmem:[%s340 + $0x9c8] sm:$0xff]
      %v665 = vld [vmem:[%s340 + $0x9d0] sm:$0xff]
      %v666 = vld [vmem:[%s340 + $0x9d8] sm:$0xff]
      %v667 = vld [vmem:[%s340 + $0x9e0] sm:$0xff]
      %v668 = vld [vmem:[%s340 + $0x9e8] sm:$0xff]
      %v669 = vld [vmem:[%s340 + $0x9f0] sm:$0xff]
      %v670 = vld [vmem:[%s340 + $0x9f8] sm:$0xff]
      %v671 = vld [vmem:[%s340 + $0xa00] sm:$0xff]
      %v672 = vld [vmem:[%s340 + $0xa08] sm:$0xff]
      %v673 = vld [vmem:[%s340 + $0xa10] sm:$0xff]
      %v674 = vld [vmem:[%s340 + $0xa18] sm:$0xff]
      %v675 = vld [vmem:[%s340 + $0xa20] sm:$0xff]
      %v676 = vld [vmem:[%s340 + $0xa28] sm:$0xff]
      %v677 = vld [vmem:[%s340 + $0xa30] sm:$0xff]
      %v678 = vld [vmem:[%s340 + $0xa38] sm:$0xff]
      %v679 = vld [vmem:[%s340 + $0xa40] sm:$0xff]
      %v680 = vld [vmem:[%s340 + $0xa48] sm:$0xff]
      %v681 = vld [vmem:[%s340 + $0xa50] sm:$0xff]
      %v682 = vld [vmem:[%s340 + $0xa58] sm:$0xff]
      %v683 = vld [vmem:[%s340 + $0xa60] sm:$0xff]
      %v684 = vld [vmem:[%s340 + $0xa68] sm:$0xff]
      %v685 = vld [vmem:[%s340 + $0xa70] sm:$0xff]
      %v686 = vld [vmem:[%s340 + $0xa78] sm:$0xff]
      %v687 = vld [vmem:[%s340 + $0xa80] sm:$0xff]
      %v688 = vld [vmem:[%s340 + $0xa88] sm:$0xff]
      %v689 = vld [vmem:[%s340 + $0xa90] sm:$0xff]
      %v690 = vld [vmem:[%s340 + $0xa98] sm:$0xff]
      %v691 = vld [vmem:[%s340 + $0xaa0] sm:$0xff]
      %v692 = vld [vmem:[%s340 + $0xaa8] sm:$0xff]
      %v693 = vld [vmem:[%s340 + $0xab0] sm:$0xff]
      %v694 = vld [vmem:[%s340 + $0xab8] sm:$0xff]
      %v695 = vld [vmem:[%s340 + $0xac0] sm:$0xff]
      %v696 = vld [vmem:[%s340 + $0xac8] sm:$0xff]
      %v697 = vld [vmem:[%s340 + $0xad0] sm:$0xff]
      %v698 = vld [vmem:[%s340 + $0xad8] sm:$0xff]
      %v699 = vld [vmem:[%s340 + $0xae0] sm:$0xff]
      %v700 = vld [vmem:[%s340 + $0xae8] sm:$0xff]
      %v701 = vld [vmem:[%s340 + $0xaf0] sm:$0xff]
      %v702 = vld [vmem:[%s340 + $0xaf8] sm:$0xff]
      %v703 = vld [vmem:[%s340 + $0xb00] sm:$0xff]
      %v704 = vld [vmem:[%s340 + $0xb08] sm:$0xff]
      %v705 = vld [vmem:[%s340 + $0xb10] sm:$0xff]
      %v706 = vld [vmem:[%s340 + $0xb18] sm:$0xff]
      %v707 = vld [vmem:[%s340 + $0xb20] sm:$0xff]
      %v708 = vld [vmem:[%s340 + $0xb28] sm:$0xff]
      %v709 = vld [vmem:[%s340 + $0xb30] sm:$0xff]
      %v710 = vld [vmem:[%s340 + $0xb38] sm:$0xff]
      %v711 = vld [vmem:[%s340 + $0xb40] sm:$0xff]
      %v712 = vld [vmem:[%s340 + $0xb48] sm:$0xff]
      %v713 = vld [vmem:[%s340 + $0xb50] sm:$0xff]
      %v714 = vld [vmem:[%s340 + $0xb58] sm:$0xff]
      %v715 = vld [vmem:[%s340 + $0xb60] sm:$0xff]
      %v716 = vld [vmem:[%s340 + $0xb68] sm:$0xff]
      %v717 = vld [vmem:[%s340 + $0xb70] sm:$0xff]
      %v718 = vld [vmem:[%s340 + $0xb78] sm:$0xff]
      %v719 = vld [vmem:[%s340 + $0xb80] sm:$0xff]
      %v720 = vld [vmem:[%s340 + $0xb88] sm:$0xff]
      %v721 = vld [vmem:[%s340 + $0xb90] sm:$0xff]
      %v722 = vld [vmem:[%s340 + $0xb98] sm:$0xff]
      %v723 = vld [vmem:[%s340 + $0xba0] sm:$0xff]
      %v724 = vld [vmem:[%s340 + $0xba8] sm:$0xff]
      %v725 = vld [vmem:[%s340 + $0xbb0] sm:$0xff]
      %v726 = vld [vmem:[%s340 + $0xbb8] sm:$0xff]
      %v727 = vld [vmem:[%s340 + $0xbc0] sm:$0xff]
      %v728 = vld [vmem:[%s340 + $0xbc8] sm:$0xff]
      %v729 = vld [vmem:[%s340 + $0xbd0] sm:$0xff]
      %v730 = vld [vmem:[%s340 + $0xbd8] sm:$0xff]
      %v731 = vld [vmem:[%s340 + $0xbe0] sm:$0xff]
      %v732 = vld [vmem:[%s340 + $0xbe8] sm:$0xff]
      %v733 = vld [vmem:[%s340 + $0xbf0] sm:$0xff]
      %v734 = vld [vmem:[%s340 + $0xbf8] sm:$0xff]
      %v735 = vld [vmem:[%s340 + $0xc00] sm:$0xff]
      %v736 = vld [vmem:[%s340 + $0xc08] sm:$0xff]
      %v737 = vld [vmem:[%s340 + $0xc10] sm:$0xff]
      %v738 = vld [vmem:[%s340 + $0xc18] sm:$0xff]
      %v739 = vld [vmem:[%s340 + $0xc20] sm:$0xff]
      %v740 = vld [vmem:[%s340 + $0xc28] sm:$0xff]
      %v741 = vld [vmem:[%s340 + $0xc30] sm:$0xff]
      %v742 = vld [vmem:[%s340 + $0xc38] sm:$0xff]
      %v743 = vld [vmem:[%s340 + $0xc40] sm:$0xff]
      %v744 = vld [vmem:[%s340 + $0xc48] sm:$0xff]
      %v745 = vld [vmem:[%s340 + $0xc50] sm:$0xff]
      %v746 = vld [vmem:[%s340 + $0xc58] sm:$0xff]
      %v747 = vld [vmem:[%s340 + $0xc60] sm:$0xff]
      %v748 = vld [vmem:[%s340 + $0xc68] sm:$0xff]
      %v749 = vld [vmem:[%s340 + $0xc70] sm:$0xff]
      %v750 = vld [vmem:[%s340 + $0xc78] sm:$0xff]
      %v751 = vld [vmem:[%s340 + $0xc80] sm:$0xff]
      %v752 = vld [vmem:[%s340 + $0xc88] sm:$0xff]
      %v753 = vld [vmem:[%s340 + $0xc90] sm:$0xff]
      %v754 = vld [vmem:[%s340 + $0xc98] sm:$0xff]
      %v755 = vld [vmem:[%s340 + $0xca0] sm:$0xff]
      %v756 = vld [vmem:[%s340 + $0xca8] sm:$0xff]
      %v757 = vld [vmem:[%s340 + $0xcb0] sm:$0xff]
      %v758 = vld [vmem:[%s340 + $0xcb8] sm:$0xff]
      %v759 = vld [vmem:[%s340 + $0xcc0] sm:$0xff]
      %v760 = vld [vmem:[%s340 + $0xcc8] sm:$0xff]
      %v761 = vld [vmem:[%s340 + $0xcd0] sm:$0xff]
      %v762 = vld [vmem:[%s340 + $0xcd8] sm:$0xff]
      %v763 = vld [vmem:[%s340 + $0xce0] sm:$0xff]
      %v764 = vld [vmem:[%s340 + $0xce8] sm:$0xff]
      %v765 = vld [vmem:[%s340 + $0xcf0] sm:$0xff]
      %v766 = vld [vmem:[%s340 + $0xcf8] sm:$0xff]
      %v767 = vld [vmem:[%s340 + $0xd00] sm:$0xff]
      %v768 = vld [vmem:[%s340 + $0xd08] sm:$0xff]
      %v769 = vld [vmem:[%s340 + $0xd10] sm:$0xff]
      %v770 = vld [vmem:[%s340 + $0xd18] sm:$0xff]
      %v771 = vld [vmem:[%s340 + $0xd20] sm:$0xff]
      %v772 = vld [vmem:[%s340 + $0xd28] sm:$0xff]
      %v773 = vld [vmem:[%s340 + $0xd30] sm:$0xff]
      %v774 = vld [vmem:[%s340 + $0xd38] sm:$0xff]
      %v775 = vld [vmem:[%s340 + $0xd40] sm:$0xff]
      %v776 = vld [vmem:[%s340 + $0xd48] sm:$0xff]
      %v777 = vld [vmem:[%s340 + $0xd50] sm:$0xff]
      %v778 = vld [vmem:[%s340 + $0xd58] sm:$0xff]
      %v779 = vld [vmem:[%s340 + $0xd60] sm:$0xff]
      %v780 = vld [vmem:[%s340 + $0xd68] sm:$0xff]
      %v781 = vld [vmem:[%s340 + $0xd70] sm:$0xff]
      %v782 = vld [vmem:[%s340 + $0xd78] sm:$0xff]
      %v783 = vld [vmem:[%s340 + $0xd80] sm:$0xff]
      %v784 = vld [vmem:[%s340 + $0xd88] sm:$0xff]
      %v785 = vld [vmem:[%s340 + $0xd90] sm:$0xff]
      %v786 = vld [vmem:[%s340 + $0xd98] sm:$0xff]
      %v787 = vld [vmem:[%s340 + $0xda0] sm:$0xff]
      %v788 = vld [vmem:[%s340 + $0xda8] sm:$0xff]
      %v789 = vld [vmem:[%s340 + $0xdb0] sm:$0xff]
      %v790 = vld [vmem:[%s340 + $0xdb8] sm:$0xff]
      %v791 = vld [vmem:[%s340 + $0xdc0] sm:$0xff]
      %v792 = vld [vmem:[%s340 + $0xdc8] sm:$0xff]
      %v793 = vld [vmem:[%s340 + $0xdd0] sm:$0xff]
      %v794 = vld [vmem:[%s340 + $0xdd8] sm:$0xff]
      %v795 = vld [vmem:[%s340 + $0xde0] sm:$0xff]
      %v796 = vld [vmem:[%s340 + $0xde8] sm:$0xff]
      %v797 = vld [vmem:[%s340 + $0xdf0] sm:$0xff]
      %v798 = vld [vmem:[%s340 + $0xdf8] sm:$0xff]
      %v799 = vld [vmem:[%s340 + $0xe00] sm:$0xff]
      %v800 = vld [vmem:[%s340 + $0xe08] sm:$0xff]
      %v801 = vld [vmem:[%s340 + $0xe10] sm:$0xff]
      %v802 = vld [vmem:[%s340 + $0xe18] sm:$0xff]
      %v803 = vld [vmem:[%s340 + $0xe20] sm:$0xff]
      %v804 = vld [vmem:[%s340 + $0xe28] sm:$0xff]
      %v805 = vld [vmem:[%s340 + $0xe30] sm:$0xff]
      %v806 = vld [vmem:[%s340 + $0xe38] sm:$0xff]
      %v807 = vld [vmem:[%s340 + $0xe40] sm:$0xff]
      %v808 = vld [vmem:[%s340 + $0xe48] sm:$0xff]
      %v809 = vld [vmem:[%s340 + $0xe50] sm:$0xff]
      %v810 = vld [vmem:[%s340 + $0xe58] sm:$0xff]
      %v811 = vld [vmem:[%s340 + $0xe60] sm:$0xff]
      %v812 = vld [vmem:[%s340 + $0xe68] sm:$0xff]
      %v813 = vld [vmem:[%s340 + $0xe70] sm:$0xff]
      %v814 = vld [vmem:[%s340 + $0xe78] sm:$0xff]
      %v815 = vld [vmem:[%s340 + $0xe80] sm:$0xff]
      %v816 = vld [vmem:[%s340 + $0xe88] sm:$0xff]
      %v817 = vld [vmem:[%s340 + $0xe90] sm:$0xff]
      %v818 = vld [vmem:[%s340 + $0xe98] sm:$0xff]
      %v819 = vld [vmem:[%s340 + $0xea0] sm:$0xff]
      %v820 = vld [vmem:[%s340 + $0xea8] sm:$0xff]
      %v821 = vld [vmem:[%s340 + $0xeb0] sm:$0xff]
      %v822 = vld [vmem:[%s340 + $0xeb8] sm:$0xff]
      %v823 = vld [vmem:[%s340 + $0xec0] sm:$0xff]
      %v824 = vld [vmem:[%s340 + $0xec8] sm:$0xff]
      %v825 = vld [vmem:[%s340 + $0xed0] sm:$0xff]
      %v826 = vld [vmem:[%s340 + $0xed8] sm:$0xff]
      %v827 = vld [vmem:[%s340 + $0xee0] sm:$0xff]
      %v828 = vld [vmem:[%s340 + $0xee8] sm:$0xff]
      %v829 = vld [vmem:[%s340 + $0xef0] sm:$0xff]
      %v830 = vld [vmem:[%s340 + $0xef8] sm:$0xff]
      %v831 = vld [vmem:[%s340 + $0xf00] sm:$0xff]
      %v832 = vld [vmem:[%s340 + $0xf08] sm:$0xff]
      %v833 = vld [vmem:[%s340 + $0xf10] sm:$0xff]
      %v834 = vld [vmem:[%s340 + $0xf18] sm:$0xff]
      %v835 = vld [vmem:[%s340 + $0xf20] sm:$0xff]
      %v836 = vld [vmem:[%s340 + $0xf28] sm:$0xff]
      %v837 = vld [vmem:[%s340 + $0xf30] sm:$0xff]
      %v838 = vld [vmem:[%s340 + $0xf38] sm:$0xff]
      %v839 = vld [vmem:[%s340 + $0xf40] sm:$0xff]
      %v840 = vld [vmem:[%s340 + $0xf48] sm:$0xff]
      %v841 = vld [vmem:[%s340 + $0xf50] sm:$0xff]
      %v842 = vld [vmem:[%s340 + $0xf58] sm:$0xff]
      %v843 = vld [vmem:[%s340 + $0xf60] sm:$0xff]
      %v844 = vld [vmem:[%s340 + $0xf68] sm:$0xff]
      %v845 = vld [vmem:[%s340 + $0xf70] sm:$0xff]
      %v846 = vld [vmem:[%s340 + $0xf78] sm:$0xff]
      %v847 = vld [vmem:[%s340 + $0xf80] sm:$0xff]
      %v848 = vld [vmem:[%s340 + $0xf88] sm:$0xff]
      %v849 = vld [vmem:[%s340 + $0xf90] sm:$0xff]
      %v850 = vld [vmem:[%s340 + $0xf98] sm:$0xff]
      %v851 = vld [vmem:[%s340 + $0xfa0] sm:$0xff]
      %v852 = vld [vmem:[%s340 + $0xfa8] sm:$0xff]
      %v853 = vld [vmem:[%s340 + $0xfb0] sm:$0xff]
      %v854 = vld [vmem:[%s340 + $0xfb8] sm:$0xff]
      %v855 = vld [vmem:[%s340 + $0xfc0] sm:$0xff]
      %v856 = vld [vmem:[%s340 + $0xfc8] sm:$0xff]
      %v857 = vld [vmem:[%s340 + $0xfd0] sm:$0xff]
      %v858 = vld [vmem:[%s340 + $0xfd8] sm:$0xff]
      %v859 = vld [vmem:[%s340 + $0xfe0] sm:$0xff]
      %v860 = vld [vmem:[%s340 + $0xfe8] sm:$0xff]
      %v861 = vld [vmem:[%s340 + $0xff0] sm:$0xff]
      %v862 = vld [vmem:[%s340 + $0xff8] sm:$0xff]
      %v863 = vld [vmem:[%s340 + $0x1000] sm:$0xff]
      %v864 = vld [vmem:[%s340 + $0x1008] sm:$0xff]
      %v865 = vld [vmem:[%s340 + $0x1010] sm:$0xff]
      %v866 = vld [vmem:[%s340 + $0x1018] sm:$0xff]
      %v867 = vld [vmem:[%s340 + $0x1020] sm:$0xff]
      %v868 = vld [vmem:[%s340 + $0x1028] sm:$0xff]
      %v869 = vld [vmem:[%s340 + $0x1030] sm:$0xff]
      %v870 = vld [vmem:[%s340 + $0x1038] sm:$0xff]
      %v871 = vld [vmem:[%s340 + $0x1040] sm:$0xff]
      %v872 = vld [vmem:[%s340 + $0x1048] sm:$0xff]
      %v873 = vld [vmem:[%s340 + $0x1050] sm:$0xff]
      %v874 = vld [vmem:[%s340 + $0x1058] sm:$0xff]
      %v875 = vld [vmem:[%s340 + $0x1060] sm:$0xff]
      %v876 = vld [vmem:[%s340 + $0x1068] sm:$0xff]
      %v877 = vld [vmem:[%s340 + $0x1070] sm:$0xff]
      %v878 = vld [vmem:[%s340 + $0x1078] sm:$0xff]
      %v879 = vld [vmem:[%s340 + $0x1080] sm:$0xff]
      %v880 = vld [vmem:[%s340 + $0x1088] sm:$0xff]
      %v881 = vld [vmem:[%s340 + $0x1090] sm:$0xff]
      %v882 = vld [vmem:[%s340 + $0x1098] sm:$0xff]
      %v883 = vld [vmem:[%s340 + $0x10a0] sm:$0xff]
      %v884 = vld [vmem:[%s340 + $0x10a8] sm:$0xff]
      %v885 = vld [vmem:[%s340 + $0x10b0] sm:$0xff]
      %v886 = vld [vmem:[%s340 + $0x10b8] sm:$0xff]
      %v887 = vld [vmem:[%s340 + $0x10c0] sm:$0xff]
      %v888 = vld [vmem:[%s340 + $0x10c8] sm:$0xff]
      %v889 = vld [vmem:[%s340 + $0x10d0] sm:$0xff]
      %v890 = vld [vmem:[%s340 + $0x10d8] sm:$0xff]
      %v891 = vld [vmem:[%s340 + $0x10e0] sm:$0xff]
      %v892 = vld [vmem:[%s340 + $0x10e8] sm:$0xff]
      %v893 = vld [vmem:[%s340 + $0x10f0] sm:$0xff]
      %v894 = vld [vmem:[%s340 + $0x10f8] sm:$0xff]
      %v895 = vld [vmem:[%s340 + $0x1100] sm:$0xff]
      %v896 = vld [vmem:[%s340 + $0x1108] sm:$0xff]
      %v897 = vld [vmem:[%s340 + $0x1110] sm:$0xff]
      %v898 = vld [vmem:[%s340 + $0x1118] sm:$0xff]
      %v899 = vld [vmem:[%s340 + $0x1120] sm:$0xff]
      %v900 = vld [vmem:[%s340 + $0x1128] sm:$0xff]
      %v901 = vld [vmem:[%s340 + $0x1130] sm:$0xff]
      %v902 = vld [vmem:[%s340 + $0x1138] sm:$0xff]
      %v903 = vld [vmem:[%s340 + $0x1140] sm:$0xff]
      %v904 = vld [vmem:[%s340 + $0x1148] sm:$0xff]
      %v905 = vld [vmem:[%s340 + $0x1150] sm:$0xff]
      %v906 = vld [vmem:[%s340 + $0x1158] sm:$0xff]
      %v907 = vld [vmem:[%s340 + $0x1160] sm:$0xff]
      %v908 = vld [vmem:[%s340 + $0x1168] sm:$0xff]
      %v909 = vld [vmem:[%s340 + $0x1170] sm:$0xff]
      %v910 = vld [vmem:[%s340 + $0x1178] sm:$0xff]
      %v911 = vld [vmem:[%s340 + $0x1180] sm:$0xff]
      %v912 = vld [vmem:[%s340 + $0x1188] sm:$0xff]
      %v913 = vld [vmem:[%s340 + $0x1190] sm:$0xff]
      %v914 = vld [vmem:[%s340 + $0x1198] sm:$0xff]
      %v915 = vld [vmem:[%s340 + $0x11a0] sm:$0xff]
      %v916 = vld [vmem:[%s340 + $0x11a8] sm:$0xff]
      %v917 = vld [vmem:[%s340 + $0x11b0] sm:$0xff]
      %v918 = vld [vmem:[%s340 + $0x11b8] sm:$0xff]
      %v919 = vld [vmem:[%s340 + $0x11c0] sm:$0xff]
      %v920 = vld [vmem:[%s340 + $0x11c8] sm:$0xff]
      %v921 = vld [vmem:[%s340 + $0x11d0] sm:$0xff]
      %v922 = vld [vmem:[%s340 + $0x11d8] sm:$0xff]
      %v923 = vld [vmem:[%s340 + $0x11e0] sm:$0xff]
      %v924 = vld [vmem:[%s340 + $0x11e8] sm:$0xff]
      %v925 = vld [vmem:[%s340 + $0x11f0] sm:$0xff]
      %v926 = vld [vmem:[%s340 + $0x11f8] sm:$0xff]
      %928 = vst [vmem:[#allocation1] ss:$9 sm:$0xff] %v348
      %v929 = vld [vmem:[#allocation1] sm:$0xff]
      %v930 = vld [vmem:[#allocation1 + $0x9] sm:$0xff]
      %v931 = vld [vmem:[#allocation1 + $0x12] sm:$0xff]
      %v932 = vld [vmem:[#allocation1 + $0x1b] sm:$0xff]
      %v933 = vld [vmem:[#allocation1 + $0x24] sm:$0xff]
      %v934 = vld [vmem:[#allocation1 + $0x2d] sm:$0xff]
      %v935 = vld [vmem:[#allocation1 + $0x36] sm:$0xff]
      %v936 = vld [vmem:[#allocation1 + $0x3f] sm:$0xff]
      %938 = vst [vmem:[#allocation1] ss:$9 sm:$0xff] %v349
      %v939 = vld [vmem:[#allocation1] sm:$0xff]
      %v940 = vld [vmem:[#allocation1 + $0x9] sm:$0xff]
      %v941 = vld [vmem:[#allocation1 + $0x12] sm:$0xff]
      %v942 = vld [vmem:[#allocation1 + $0x1b] sm:$0xff]
      %v943 = vld [vmem:[#allocation1 + $0x24] sm:$0xff]
      %v944 = vld [vmem:[#allocation1 + $0x2d] sm:$0xff]
      %v945 = vld [vmem:[#allocation1 + $0x36] sm:$0xff]
      %v946 = vld [vmem:[#allocation1 + $0x3f] sm:$0xff]
      %948 = vst [vmem:[#allocation1] ss:$9 sm:$0xff] %v350
      %v949 = vld [vmem:[#allocation1] sm:$0xff]
      %v950 = vld [vmem:[#allocation1 + $0x9] sm:$0xff]
      %v1545 = vunpack.c.l.b16 %v351
      %v1546 = vunpack.c.h.b16 %v351
      %v1547 = vunpack.c.l.b16 %v352
      %v1548 = vunpack.c.h.b16 %v352
      %v1549 = vunpack.c.l.b16 %v353
      %v1550 = vunpack.c.h.b16 %v353
      %v1551 = vunpack.c.l.b16 %v354
      %v1552 = vunpack.c.h.b16 %v354
      %v1553 = vunpack.c.l.b16 %v355
      %v1554 = vunpack.c.h.b16 %v355
      %v1555 = vunpack.c.l.b16 %v356
      %v1556 = vunpack.c.h.b16 %v356
      %v1557 = vunpack.c.l.b16 %v357
      %v1558 = vunpack.c.h.b16 %v357
      %v1559 = vunpack.c.l.b16 %v358
      %v1560 = vunpack.c.h.b16 %v358
      %v1561 = vunpack.c.l.b16 %v359
      %v1562 = vunpack.c.h.b16 %v359
      %v1563 = vunpack.c.l.b16 %v360
      %v1564 = vunpack.c.h.b16 %v360
      %v1565 = vunpack.c.l.b16 %v361
      %v1566 = vunpack.c.h.b16 %v361
      %v1567 = vunpack.c.l.b16 %v362
      %v1568 = vunpack.c.h.b16 %v362
      %v1569 = vunpack.c.l.b16 %v363
      %v1570 = vunpack.c.h.b16 %v363
      %v1571 = vunpack.c.l.b16 %v364
      %v1572 = vunpack.c.h.b16 %v364
      %v1573 = vunpack.c.l.b16 %v365
      %v1574 = vunpack.c.h.b16 %v365
      %v1575 = vunpack.c.l.b16 %v366
      %v1576 = vunpack.c.h.b16 %v366
      %v1577 = vunpack.c.l.b16 %v367
      %v1578 = vunpack.c.h.b16 %v367
      %v1579 = vunpack.c.l.b16 %v368
      %v1580 = vunpack.c.h.b16 %v368
      %v1581 = vunpack.c.l.b16 %v369
      %v1582 = vunpack.c.h.b16 %v369
      %v1583 = vunpack.c.l.b16 %v370
      %v1584 = vunpack.c.h.b16 %v370
      %v1585 = vunpack.c.l.b16 %v371
      %v1586 = vunpack.c.h.b16 %v371
      %v1587 = vunpack.c.l.b16 %v372
      %v1588 = vunpack.c.h.b16 %v372
      %v1589 = vunpack.c.l.b16 %v373
      %v1590 = vunpack.c.h.b16 %v373
      %v1591 = vunpack.c.l.b16 %v374
      %v1592 = vunpack.c.h.b16 %v374
      %v1593 = vunpack.c.l.b16 %v375
      %v1594 = vunpack.c.h.b16 %v375
      %v1595 = vunpack.c.l.b16 %v376
      %v1596 = vunpack.c.h.b16 %v376
      %v1597 = vunpack.c.l.b16 %v377
      %v1598 = vunpack.c.h.b16 %v377
      %v1599 = vunpack.c.l.b16 %v378
      %v1600 = vunpack.c.h.b16 %v378
      %v1601 = vunpack.c.l.b16 %v379
      %v1602 = vunpack.c.h.b16 %v379
      %v1603 = vunpack.c.l.b16 %v380
      %v1604 = vunpack.c.h.b16 %v380
      %v1605 = vunpack.c.l.b16 %v381
      %v1606 = vunpack.c.h.b16 %v381
      %v1607 = vunpack.c.l.b16 %v382
      %v1608 = vunpack.c.h.b16 %v382
      %v1609 = vunpack.c.l.b16 %v383
      %v1610 = vunpack.c.h.b16 %v383
      %v1611 = vunpack.c.l.b16 %v384
      %v1612 = vunpack.c.h.b16 %v384
      %v1613 = vunpack.c.l.b16 %v385
      %v1614 = vunpack.c.h.b16 %v385
      %v1615 = vunpack.c.l.b16 %v386
      %v1616 = vunpack.c.h.b16 %v386
      %v1617 = vunpack.c.l.b16 %v387
      %v1618 = vunpack.c.h.b16 %v387
      %v1619 = vunpack.c.l.b16 %v388
      %v1620 = vunpack.c.h.b16 %v388
      %v1621 = vunpack.c.l.b16 %v389
      %v1622 = vunpack.c.h.b16 %v389
      %v1623 = vunpack.c.l.b16 %v390
      %v1624 = vunpack.c.h.b16 %v390
      %v1625 = vunpack.c.l.b16 %v391
      %v1626 = vunpack.c.h.b16 %v391
      %v1627 = vunpack.c.l.b16 %v392
      %v1628 = vunpack.c.h.b16 %v392
      %v1629 = vunpack.c.l.b16 %v393
      %v1630 = vunpack.c.h.b16 %v393
      %v1631 = vunpack.c.l.b16 %v394
      %v1632 = vunpack.c.h.b16 %v394
      %v1633 = vunpack.c.l.b16 %v395
      %v1634 = vunpack.c.h.b16 %v395
      %v1635 = vunpack.c.l.b16 %v396
      %v1636 = vunpack.c.h.b16 %v396
      %v1637 = vunpack.c.l.b16 %v397
      %v1638 = vunpack.c.h.b16 %v397
      %v1639 = vunpack.c.l.b16 %v398
      %v1640 = vunpack.c.h.b16 %v398
      %v1641 = vunpack.c.l.b16 %v399
      %v1642 = vunpack.c.h.b16 %v399
      %v1643 = vunpack.c.l.b16 %v400
      %v1644 = vunpack.c.h.b16 %v400
      %v1645 = vunpack.c.l.b16 %v401
      %v1646 = vunpack.c.h.b16 %v401
      %v1647 = vunpack.c.l.b16 %v402
      %v1648 = vunpack.c.h.b16 %v402
      %v1649 = vunpack.c.l.b16 %v403
      %v1650 = vunpack.c.h.b16 %v403
      %v1651 = vunpack.c.l.b16 %v404
      %v1652 = vunpack.c.h.b16 %v404
      %v1653 = vunpack.c.l.b16 %v405
      %v1654 = vunpack.c.h.b16 %v405
      %v1655 = vunpack.c.l.b16 %v406
      %v1656 = vunpack.c.h.b16 %v406
      %v1657 = vunpack.c.l.b16 %v407
      %v1658 = vunpack.c.h.b16 %v407
      %v1659 = vunpack.c.l.b16 %v408
      %v1660 = vunpack.c.h.b16 %v408
      %v1661 = vunpack.c.l.b16 %v409
      %v1662 = vunpack.c.h.b16 %v409
      %v1663 = vunpack.c.l.b16 %v410
      %v1664 = vunpack.c.h.b16 %v410
      %v1665 = vunpack.c.l.b16 %v411
      %v1666 = vunpack.c.h.b16 %v411
      %v1667 = vunpack.c.l.b16 %v412
      %v1668 = vunpack.c.h.b16 %v412
      %v1669 = vunpack.c.l.b16 %v413
      %v1670 = vunpack.c.h.b16 %v413
      %v1671 = vunpack.c.l.b16 %v414
      %v1672 = vunpack.c.h.b16 %v414
      %v1673 = vunpack.c.l.b16 %v415
      %v1674 = vunpack.c.h.b16 %v415
      %v1675 = vunpack.c.l.b16 %v416
      %v1676 = vunpack.c.h.b16 %v416
      %v1677 = vunpack.c.l.b16 %v417
      %v1678 = vunpack.c.h.b16 %v417
      %v1679 = vunpack.c.l.b16 %v418
      %v1680 = vunpack.c.h.b16 %v418
      %v1681 = vunpack.c.l.b16 %v419
      %v1682 = vunpack.c.h.b16 %v419
      %v1683 = vunpack.c.l.b16 %v420
      %v1684 = vunpack.c.h.b16 %v420
      %v1685 = vunpack.c.l.b16 %v421
      %v1686 = vunpack.c.h.b16 %v421
      %v1687 = vunpack.c.l.b16 %v422
      %v1688 = vunpack.c.h.b16 %v422
      %v1689 = vunpack.c.l.b16 %v423
      %v1690 = vunpack.c.h.b16 %v423
      %v1691 = vunpack.c.l.b16 %v424
      %v1692 = vunpack.c.h.b16 %v424
      %v1693 = vunpack.c.l.b16 %v425
      %v1694 = vunpack.c.h.b16 %v425
      %v1695 = vunpack.c.l.b16 %v426
      %v1696 = vunpack.c.h.b16 %v426
      %v1697 = vunpack.c.l.b16 %v427
      %v1698 = vunpack.c.h.b16 %v427
      %v1699 = vunpack.c.l.b16 %v428
      %v1700 = vunpack.c.h.b16 %v428
      %v1701 = vunpack.c.l.b16 %v429
      %v1702 = vunpack.c.h.b16 %v429
      %v1703 = vunpack.c.l.b16 %v430
      %v1704 = vunpack.c.h.b16 %v430
      %v1705 = vunpack.c.l.b16 %v431
      %v1706 = vunpack.c.h.b16 %v431
      %v1707 = vunpack.c.l.b16 %v432
      %v1708 = vunpack.c.h.b16 %v432
      %v1709 = vunpack.c.l.b16 %v433
      %v1710 = vunpack.c.h.b16 %v433
      %v1711 = vunpack.c.l.b16 %v434
      %v1712 = vunpack.c.h.b16 %v434
      %v1713 = vunpack.c.l.b16 %v435
      %v1714 = vunpack.c.h.b16 %v435
      %v1715 = vunpack.c.l.b16 %v436
      %v1716 = vunpack.c.h.b16 %v436
      %v1717 = vunpack.c.l.b16 %v437
      %v1718 = vunpack.c.h.b16 %v437
      %v1719 = vunpack.c.l.b16 %v438
      %v1720 = vunpack.c.h.b16 %v438
      %v1721 = vunpack.c.l.b16 %v439
      %v1722 = vunpack.c.h.b16 %v439
      %v1723 = vunpack.c.l.b16 %v440
      %v1724 = vunpack.c.h.b16 %v440
      %v1725 = vunpack.c.l.b16 %v441
      %v1726 = vunpack.c.h.b16 %v441
      %v1727 = vunpack.c.l.b16 %v442
      %v1728 = vunpack.c.h.b16 %v442
      %v1729 = vunpack.c.l.b16 %v443
      %v1730 = vunpack.c.h.b16 %v443
      %v1731 = vunpack.c.l.b16 %v444
      %v1732 = vunpack.c.h.b16 %v444
      %v1733 = vunpack.c.l.b16 %v445
      %v1734 = vunpack.c.h.b16 %v445
      %v1735 = vunpack.c.l.b16 %v446
      %v1736 = vunpack.c.h.b16 %v446
      %v1737 = vunpack.c.l.b16 %v447
      %v1738 = vunpack.c.h.b16 %v447
      %v1739 = vunpack.c.l.b16 %v448
      %v1740 = vunpack.c.h.b16 %v448
      %v1741 = vunpack.c.l.b16 %v449
      %v1742 = vunpack.c.h.b16 %v449
      %v1743 = vunpack.c.l.b16 %v450
      %v1744 = vunpack.c.h.b16 %v450
      %v1745 = vunpack.c.l.b16 %v451
      %v1746 = vunpack.c.h.b16 %v451
      %v1747 = vunpack.c.l.b16 %v452
      %v1748 = vunpack.c.h.b16 %v452
      %v1749 = vunpack.c.l.b16 %v453
      %v1750 = vunpack.c.h.b16 %v453
      %v1751 = vunpack.c.l.b16 %v454
      %v1752 = vunpack.c.h.b16 %v454
      %v1753 = vunpack.c.l.b16 %v455
      %v1754 = vunpack.c.h.b16 %v455
      %v1755 = vunpack.c.l.b16 %v456
      %v1756 = vunpack.c.h.b16 %v456
      %v1757 = vunpack.c.l.b16 %v457
      %v1758 = vunpack.c.h.b16 %v457
      %v1759 = vunpack.c.l.b16 %v458
      %v1760 = vunpack.c.h.b16 %v458
      %v1761 = vunpack.c.l.b16 %v459
      %v1762 = vunpack.c.h.b16 %v459
      %v1763 = vunpack.c.l.b16 %v460
      %v1764 = vunpack.c.h.b16 %v460
      %v1765 = vunpack.c.l.b16 %v461
      %v1766 = vunpack.c.h.b16 %v461
      %v1767 = vunpack.c.l.b16 %v462
      %v1768 = vunpack.c.h.b16 %v462
      %v1769 = vunpack.c.l.b16 %v463
      %v1770 = vunpack.c.h.b16 %v463
      %v1771 = vunpack.c.l.b16 %v464
      %v1772 = vunpack.c.h.b16 %v464
      %v1773 = vunpack.c.l.b16 %v465
      %v1774 = vunpack.c.h.b16 %v465
      %v1775 = vunpack.c.l.b16 %v466
      %v1776 = vunpack.c.h.b16 %v466
      %v1777 = vunpack.c.l.b16 %v467
      %v1778 = vunpack.c.h.b16 %v467
      %v1779 = vunpack.c.l.b16 %v468
      %v1780 = vunpack.c.h.b16 %v468
      %v1781 = vunpack.c.l.b16 %v469
      %v1782 = vunpack.c.h.b16 %v469
      %v1783 = vunpack.c.l.b16 %v470
      %v1784 = vunpack.c.h.b16 %v470
      %v1785 = vunpack.c.l.b16 %v471
      %v1786 = vunpack.c.h.b16 %v471
      %v1787 = vunpack.c.l.b16 %v472
      %v1788 = vunpack.c.h.b16 %v472
      %v1789 = vunpack.c.l.b16 %v473
      %v1790 = vunpack.c.h.b16 %v473
      %v1791 = vunpack.c.l.b16 %v474
      %v1792 = vunpack.c.h.b16 %v474
      %v1793 = vunpack.c.l.b16 %v475
      %v1794 = vunpack.c.h.b16 %v475
      %v1795 = vunpack.c.l.b16 %v476
      %v1796 = vunpack.c.h.b16 %v476
      %v1797 = vunpack.c.l.b16 %v477
      %v1798 = vunpack.c.h.b16 %v477
      %v1799 = vunpack.c.l.b16 %v478
      %v1800 = vunpack.c.h.b16 %v478
      %v1801 = vunpack.c.l.b16 %v479
      %v1802 = vunpack.c.h.b16 %v479
      %v1803 = vunpack.c.l.b16 %v480
      %v1804 = vunpack.c.h.b16 %v480
      %v1805 = vunpack.c.l.b16 %v481
      %v1806 = vunpack.c.h.b16 %v481
      %v1807 = vunpack.c.l.b16 %v482
      %v1808 = vunpack.c.h.b16 %v482
      %v1809 = vunpack.c.l.b16 %v483
      %v1810 = vunpack.c.h.b16 %v483
      %v1811 = vunpack.c.l.b16 %v484
      %v1812 = vunpack.c.h.b16 %v484
      %v1813 = vunpack.c.l.b16 %v485
      %v1814 = vunpack.c.h.b16 %v485
      %v1815 = vunpack.c.l.b16 %v486
      %v1816 = vunpack.c.h.b16 %v486
      %v1817 = vunpack.c.l.b16 %v487
      %v1818 = vunpack.c.h.b16 %v487
      %v1819 = vunpack.c.l.b16 %v488
      %v1820 = vunpack.c.h.b16 %v488
      %v1821 = vunpack.c.l.b16 %v489
      %v1822 = vunpack.c.h.b16 %v489
      %v1823 = vunpack.c.l.b16 %v490
      %v1824 = vunpack.c.h.b16 %v490
      %v1825 = vunpack.c.l.b16 %v491
      %v1826 = vunpack.c.h.b16 %v491
      %v1827 = vunpack.c.l.b16 %v492
      %v1828 = vunpack.c.h.b16 %v492
      %v1829 = vunpack.c.l.b16 %v493
      %v1830 = vunpack.c.h.b16 %v493
      %v1831 = vunpack.c.l.b16 %v494
      %v1832 = vunpack.c.h.b16 %v494
      %v1833 = vunpack.c.l.b16 %v495
      %v1834 = vunpack.c.h.b16 %v495
      %v1835 = vunpack.c.l.b16 %v496
      %v1836 = vunpack.c.h.b16 %v496
      %v1837 = vunpack.c.l.b16 %v497
      %v1838 = vunpack.c.h.b16 %v497
      %v1839 = vunpack.c.l.b16 %v498
      %v1840 = vunpack.c.h.b16 %v498
      %v1841 = vunpack.c.l.b16 %v499
      %v1842 = vunpack.c.h.b16 %v499
      %v1843 = vunpack.c.l.b16 %v500
      %v1844 = vunpack.c.h.b16 %v500
      %v1845 = vunpack.c.l.b16 %v501
      %v1846 = vunpack.c.h.b16 %v501
      %v1847 = vunpack.c.l.b16 %v502
      %v1848 = vunpack.c.h.b16 %v502
      %v1849 = vunpack.c.l.b16 %v503
      %v1850 = vunpack.c.h.b16 %v503
      %v1851 = vunpack.c.l.b16 %v504
      %v1852 = vunpack.c.h.b16 %v504
      %v1853 = vunpack.c.l.b16 %v505
      %v1854 = vunpack.c.h.b16 %v505
      %v1855 = vunpack.c.l.b16 %v506
      %v1856 = vunpack.c.h.b16 %v506
      %v1857 = vunpack.c.l.b16 %v507
      %v1858 = vunpack.c.h.b16 %v507
      %v1859 = vunpack.c.l.b16 %v508
      %v1860 = vunpack.c.h.b16 %v508
      %v1861 = vunpack.c.l.b16 %v509
      %v1862 = vunpack.c.h.b16 %v509
      %v1863 = vunpack.c.l.b16 %v510
      %v1864 = vunpack.c.h.b16 %v510
      %v1865 = vunpack.c.l.b16 %v511
      %v1866 = vunpack.c.h.b16 %v511
      %v1867 = vunpack.c.l.b16 %v512
      %v1868 = vunpack.c.h.b16 %v512
      %v1869 = vunpack.c.l.b16 %v513
      %v1870 = vunpack.c.h.b16 %v513
      %v1871 = vunpack.c.l.b16 %v514
      %v1872 = vunpack.c.h.b16 %v514
      %v1873 = vunpack.c.l.b16 %v515
      %v1874 = vunpack.c.h.b16 %v515
      %v1875 = vunpack.c.l.b16 %v516
      %v1876 = vunpack.c.h.b16 %v516
      %v1877 = vunpack.c.l.b16 %v517
      %v1878 = vunpack.c.h.b16 %v517
      %v1879 = vunpack.c.l.b16 %v518
      %v1880 = vunpack.c.h.b16 %v518
      %v1881 = vunpack.c.l.b16 %v519
      %v1882 = vunpack.c.h.b16 %v519
      %v1883 = vunpack.c.l.b16 %v520
      %v1884 = vunpack.c.h.b16 %v520
      %v1885 = vunpack.c.l.b16 %v521
      %v1886 = vunpack.c.h.b16 %v521
      %v1887 = vunpack.c.l.b16 %v522
      %v1888 = vunpack.c.h.b16 %v522
      %v1889 = vunpack.c.l.b16 %v523
      %v1890 = vunpack.c.h.b16 %v523
      %v1891 = vunpack.c.l.b16 %v524
      %v1892 = vunpack.c.h.b16 %v524
      %v1893 = vunpack.c.l.b16 %v525
      %v1894 = vunpack.c.h.b16 %v525
      %v1895 = vunpack.c.l.b16 %v526
      %v1896 = vunpack.c.h.b16 %v526
      %v1897 = vunpack.c.l.b16 %v527
      %v1898 = vunpack.c.h.b16 %v527
      %v1899 = vunpack.c.l.b16 %v528
      %v1900 = vunpack.c.h.b16 %v528
      %v1901 = vunpack.c.l.b16 %v529
      %v1902 = vunpack.c.h.b16 %v529
      %v1903 = vunpack.c.l.b16 %v530
      %v1904 = vunpack.c.h.b16 %v530
      %v1905 = vunpack.c.l.b16 %v531
      %v1906 = vunpack.c.h.b16 %v531
      %v1907 = vunpack.c.l.b16 %v532
      %v1908 = vunpack.c.h.b16 %v532
      %v1909 = vunpack.c.l.b16 %v533
      %v1910 = vunpack.c.h.b16 %v533
      %v1911 = vunpack.c.l.b16 %v534
      %v1912 = vunpack.c.h.b16 %v534
      %v1913 = vunpack.c.l.b16 %v535
      %v1914 = vunpack.c.h.b16 %v535
      %v1915 = vunpack.c.l.b16 %v536
      %v1916 = vunpack.c.h.b16 %v536
      %v1917 = vunpack.c.l.b16 %v537
      %v1918 = vunpack.c.h.b16 %v537
      %v1919 = vunpack.c.l.b16 %v538
      %v1920 = vunpack.c.h.b16 %v538
      %v1921 = vunpack.c.l.b16 %v539
      %v1922 = vunpack.c.h.b16 %v539
      %v1923 = vunpack.c.l.b16 %v540
      %v1924 = vunpack.c.h.b16 %v540
      %v1925 = vunpack.c.l.b16 %v541
      %v1926 = vunpack.c.h.b16 %v541
      %v1927 = vunpack.c.l.b16 %v542
      %v1928 = vunpack.c.h.b16 %v542
      %v1929 = vunpack.c.l.b16 %v543
      %v1930 = vunpack.c.h.b16 %v543
      %v1931 = vunpack.c.l.b16 %v544
      %v1932 = vunpack.c.h.b16 %v544
      %v1933 = vunpack.c.l.b16 %v545
      %v1934 = vunpack.c.h.b16 %v545
      %v1935 = vunpack.c.l.b16 %v546
      %v1936 = vunpack.c.h.b16 %v546
      %v1937 = vunpack.c.l.b16 %v547
      %v1938 = vunpack.c.h.b16 %v547
      %v1939 = vunpack.c.l.b16 %v548
      %v1940 = vunpack.c.h.b16 %v548
      %v1941 = vunpack.c.l.b16 %v549
      %v1942 = vunpack.c.h.b16 %v549
      %v1943 = vunpack.c.l.b16 %v550
      %v1944 = vunpack.c.h.b16 %v550
      %v1945 = vunpack.c.l.b16 %v551
      %v1946 = vunpack.c.h.b16 %v551
      %v1947 = vunpack.c.l.b16 %v552
      %v1948 = vunpack.c.h.b16 %v552
      %v1949 = vunpack.c.l.b16 %v553
      %v1950 = vunpack.c.h.b16 %v553
      %v1951 = vunpack.c.l.b16 %v554
      %v1952 = vunpack.c.h.b16 %v554
      %v1953 = vunpack.c.l.b16 %v555
      %v1954 = vunpack.c.h.b16 %v555
      %v1955 = vunpack.c.l.b16 %v556
      %v1956 = vunpack.c.h.b16 %v556
      %v1957 = vunpack.c.l.b16 %v557
      %v1958 = vunpack.c.h.b16 %v557
      %v1959 = vunpack.c.l.b16 %v558
      %v1960 = vunpack.c.h.b16 %v558
      %v1961 = vunpack.c.l.b16 %v559
      %v1962 = vunpack.c.h.b16 %v559
      %v1963 = vunpack.c.l.b16 %v560
      %v1964 = vunpack.c.h.b16 %v560
      %v1965 = vunpack.c.l.b16 %v561
      %v1966 = vunpack.c.h.b16 %v561
      %v1967 = vunpack.c.l.b16 %v562
      %v1968 = vunpack.c.h.b16 %v562
      %v1969 = vunpack.c.l.b16 %v563
      %v1970 = vunpack.c.h.b16 %v563
      %v1971 = vunpack.c.l.b16 %v564
      %v1972 = vunpack.c.h.b16 %v564
      %v1973 = vunpack.c.l.b16 %v565
      %v1974 = vunpack.c.h.b16 %v565
      %v1975 = vunpack.c.l.b16 %v566
      %v1976 = vunpack.c.h.b16 %v566
      %v1977 = vunpack.c.l.b16 %v567
      %v1978 = vunpack.c.h.b16 %v567
      %v1979 = vunpack.c.l.b16 %v568
      %v1980 = vunpack.c.h.b16 %v568
      %v1981 = vunpack.c.l.b16 %v569
      %v1982 = vunpack.c.h.b16 %v569
      %v1983 = vunpack.c.l.b16 %v570
      %v1984 = vunpack.c.h.b16 %v570
      %v1985 = vunpack.c.l.b16 %v571
      %v1986 = vunpack.c.h.b16 %v571
      %v1987 = vunpack.c.l.b16 %v572
      %v1988 = vunpack.c.h.b16 %v572
      %v1989 = vunpack.c.l.b16 %v573
      %v1990 = vunpack.c.h.b16 %v573
      %v1991 = vunpack.c.l.b16 %v574
      %v1992 = vunpack.c.h.b16 %v574
      %v1993 = vunpack.c.l.b16 %v575
      %v1994 = vunpack.c.h.b16 %v575
      %v1995 = vunpack.c.l.b16 %v576
      %v1996 = vunpack.c.h.b16 %v576
      %v1997 = vunpack.c.l.b16 %v577
      %v1998 = vunpack.c.h.b16 %v577
      %v1999 = vunpack.c.l.b16 %v578
      %v2000 = vunpack.c.h.b16 %v578
      %v2001 = vunpack.c.l.b16 %v579
      %v2002 = vunpack.c.h.b16 %v579
      %v2003 = vunpack.c.l.b16 %v580
      %v2004 = vunpack.c.h.b16 %v580
      %v2005 = vunpack.c.l.b16 %v581
      %v2006 = vunpack.c.h.b16 %v581
      %v2007 = vunpack.c.l.b16 %v582
      %v2008 = vunpack.c.h.b16 %v582
      %v2009 = vunpack.c.l.b16 %v583
      %v2010 = vunpack.c.h.b16 %v583
      %v2011 = vunpack.c.l.b16 %v584
      %v2012 = vunpack.c.h.b16 %v584
      %v2013 = vunpack.c.l.b16 %v585
      %v2014 = vunpack.c.h.b16 %v585
      %v2015 = vunpack.c.l.b16 %v586
      %v2016 = vunpack.c.h.b16 %v586
      %v2017 = vunpack.c.l.b16 %v587
      %v2018 = vunpack.c.h.b16 %v587
      %v2019 = vunpack.c.l.b16 %v588
      %v2020 = vunpack.c.h.b16 %v588
      %v2021 = vunpack.c.l.b16 %v589
      %v2022 = vunpack.c.h.b16 %v589
      %v2023 = vunpack.c.l.b16 %v590
      %v2024 = vunpack.c.h.b16 %v590
      %v2025 = vunpack.c.l.b16 %v591
      %v2026 = vunpack.c.h.b16 %v591
      %v2027 = vunpack.c.l.b16 %v592
      %v2028 = vunpack.c.h.b16 %v592
      %v2029 = vunpack.c.l.b16 %v593
      %v2030 = vunpack.c.h.b16 %v593
      %v2031 = vunpack.c.l.b16 %v594
      %v2032 = vunpack.c.h.b16 %v594
      %v2033 = vunpack.c.l.b16 %v595
      %v2034 = vunpack.c.h.b16 %v595
      %v2035 = vunpack.c.l.b16 %v596
      %v2036 = vunpack.c.h.b16 %v596
      %v2037 = vunpack.c.l.b16 %v597
      %v2038 = vunpack.c.h.b16 %v597
      %v2039 = vunpack.c.l.b16 %v598
      %v2040 = vunpack.c.h.b16 %v598
      %v2041 = vunpack.c.l.b16 %v599
      %v2042 = vunpack.c.h.b16 %v599
      %v2043 = vunpack.c.l.b16 %v600
      %v2044 = vunpack.c.h.b16 %v600
      %v2045 = vunpack.c.l.b16 %v601
      %v2046 = vunpack.c.h.b16 %v601
      %v2047 = vunpack.c.l.b16 %v602
      %v2048 = vunpack.c.h.b16 %v602
      %v2049 = vunpack.c.l.b16 %v603
      %v2050 = vunpack.c.h.b16 %v603
      %v2051 = vunpack.c.l.b16 %v604
      %v2052 = vunpack.c.h.b16 %v604
      %v2053 = vunpack.c.l.b16 %v605
      %v2054 = vunpack.c.h.b16 %v605
      %v2055 = vunpack.c.l.b16 %v606
      %v2056 = vunpack.c.h.b16 %v606
      %v2057 = vunpack.c.l.b16 %v607
      %v2058 = vunpack.c.h.b16 %v607
      %v2059 = vunpack.c.l.b16 %v608
      %v2060 = vunpack.c.h.b16 %v608
      %v2061 = vunpack.c.l.b16 %v609
      %v2062 = vunpack.c.h.b16 %v609
      %v2063 = vunpack.c.l.b16 %v610
      %v2064 = vunpack.c.h.b16 %v610
      %v2065 = vunpack.c.l.b16 %v611
      %v2066 = vunpack.c.h.b16 %v611
      %v2067 = vunpack.c.l.b16 %v612
      %v2068 = vunpack.c.h.b16 %v612
      %v2069 = vunpack.c.l.b16 %v613
      %v2070 = vunpack.c.h.b16 %v613
      %v2071 = vunpack.c.l.b16 %v614
      %v2072 = vunpack.c.h.b16 %v614
      %v2073 = vunpack.c.l.b16 %v615
      %v2074 = vunpack.c.h.b16 %v615
      %v2075 = vunpack.c.l.b16 %v616
      %v2076 = vunpack.c.h.b16 %v616
      %v2077 = vunpack.c.l.b16 %v617
      %v2078 = vunpack.c.h.b16 %v617
      %v2079 = vunpack.c.l.b16 %v618
      %v2080 = vunpack.c.h.b16 %v618
      %v2081 = vunpack.c.l.b16 %v619
      %v2082 = vunpack.c.h.b16 %v619
      %v2083 = vunpack.c.l.b16 %v620
      %v2084 = vunpack.c.h.b16 %v620
      %v2085 = vunpack.c.l.b16 %v621
      %v2086 = vunpack.c.h.b16 %v621
      %v2087 = vunpack.c.l.b16 %v622
      %v2088 = vunpack.c.h.b16 %v622
      %v2089 = vunpack.c.l.b16 %v623
      %v2090 = vunpack.c.h.b16 %v623
      %v2091 = vunpack.c.l.b16 %v624
      %v2092 = vunpack.c.h.b16 %v624
      %v2093 = vunpack.c.l.b16 %v625
      %v2094 = vunpack.c.h.b16 %v625
      %v2095 = vunpack.c.l.b16 %v626
      %v2096 = vunpack.c.h.b16 %v626
      %v2097 = vunpack.c.l.b16 %v627
      %v2098 = vunpack.c.h.b16 %v627
      %v2099 = vunpack.c.l.b16 %v628
      %v2100 = vunpack.c.h.b16 %v628
      %v2101 = vunpack.c.l.b16 %v629
      %v2102 = vunpack.c.h.b16 %v629
      %v2103 = vunpack.c.l.b16 %v630
      %v2104 = vunpack.c.h.b16 %v630
      %v2105 = vunpack.c.l.b16 %v631
      %v2106 = vunpack.c.h.b16 %v631
      %v2107 = vunpack.c.l.b16 %v632
      %v2108 = vunpack.c.h.b16 %v632
      %v2109 = vunpack.c.l.b16 %v633
      %v2110 = vunpack.c.h.b16 %v633
      %v2111 = vunpack.c.l.b16 %v634
      %v2112 = vunpack.c.h.b16 %v634
      %v2113 = vunpack.c.l.b16 %v635
      %v2114 = vunpack.c.h.b16 %v635
      %v2115 = vunpack.c.l.b16 %v636
      %v2116 = vunpack.c.h.b16 %v636
      %v2117 = vunpack.c.l.b16 %v637
      %v2118 = vunpack.c.h.b16 %v637
      %v2119 = vunpack.c.l.b16 %v638
      %v2120 = vunpack.c.h.b16 %v638
      %v2121 = vunpack.c.l.b16 %v639
      %v2122 = vunpack.c.h.b16 %v639
      %v2123 = vunpack.c.l.b16 %v640
      %v2124 = vunpack.c.h.b16 %v640
      %v2125 = vunpack.c.l.b16 %v641
      %v2126 = vunpack.c.h.b16 %v641
      %v2127 = vunpack.c.l.b16 %v642
      %v2128 = vunpack.c.h.b16 %v642
      %v2129 = vunpack.c.l.b16 %v643
      %v2130 = vunpack.c.h.b16 %v643
      %v2131 = vunpack.c.l.b16 %v644
      %v2132 = vunpack.c.h.b16 %v644
      %v2133 = vunpack.c.l.b16 %v645
      %v2134 = vunpack.c.h.b16 %v645
      %v2135 = vunpack.c.l.b16 %v646
      %v2136 = vunpack.c.h.b16 %v646
      %v2137 = vunpack.c.l.b16 %v647
      %v2138 = vunpack.c.h.b16 %v647
      %v2139 = vunpack.c.l.b16 %v648
      %v2140 = vunpack.c.h.b16 %v648
      %v2141 = vunpack.c.l.b16 %v649
      %v2142 = vunpack.c.h.b16 %v649
      %v2143 = vunpack.c.l.b16 %v650
      %v2144 = vunpack.c.h.b16 %v650
      %v2145 = vunpack.c.l.b16 %v651
      %v2146 = vunpack.c.h.b16 %v651
      %v2147 = vunpack.c.l.b16 %v652
      %v2148 = vunpack.c.h.b16 %v652
      %v2149 = vunpack.c.l.b16 %v653
      %v2150 = vunpack.c.h.b16 %v653
      %v2151 = vunpack.c.l.b16 %v654
      %v2152 = vunpack.c.h.b16 %v654
      %v2153 = vunpack.c.l.b16 %v655
      %v2154 = vunpack.c.h.b16 %v655
      %v2155 = vunpack.c.l.b16 %v656
      %v2156 = vunpack.c.h.b16 %v656
      %v2157 = vunpack.c.l.b16 %v657
      %v2158 = vunpack.c.h.b16 %v657
      %v2159 = vunpack.c.l.b16 %v658
      %v2160 = vunpack.c.h.b16 %v658
      %v2161 = vunpack.c.l.b16 %v659
      %v2162 = vunpack.c.h.b16 %v659
      %v2163 = vunpack.c.l.b16 %v660
      %v2164 = vunpack.c.h.b16 %v660
      %v2165 = vunpack.c.l.b16 %v661
      %v2166 = vunpack.c.h.b16 %v661
      %v2167 = vunpack.c.l.b16 %v662
      %v2168 = vunpack.c.h.b16 %v662
      %v2169 = vunpack.c.l.b16 %v663
      %v2170 = vunpack.c.h.b16 %v663
      %v2171 = vunpack.c.l.b16 %v664
      %v2172 = vunpack.c.h.b16 %v664
      %v2173 = vunpack.c.l.b16 %v665
      %v2174 = vunpack.c.h.b16 %v665
      %v2175 = vunpack.c.l.b16 %v666
      %v2176 = vunpack.c.h.b16 %v666
      %v2177 = vunpack.c.l.b16 %v667
      %v2178 = vunpack.c.h.b16 %v667
      %v2179 = vunpack.c.l.b16 %v668
      %v2180 = vunpack.c.h.b16 %v668
      %v2181 = vunpack.c.l.b16 %v669
      %v2182 = vunpack.c.h.b16 %v669
      %v2183 = vunpack.c.l.b16 %v670
      %v2184 = vunpack.c.h.b16 %v670
      %v2185 = vunpack.c.l.b16 %v671
      %v2186 = vunpack.c.h.b16 %v671
      %v2187 = vunpack.c.l.b16 %v672
      %v2188 = vunpack.c.h.b16 %v672
      %v2189 = vunpack.c.l.b16 %v673
      %v2190 = vunpack.c.h.b16 %v673
      %v2191 = vunpack.c.l.b16 %v674
      %v2192 = vunpack.c.h.b16 %v674
      %v2193 = vunpack.c.l.b16 %v675
      %v2194 = vunpack.c.h.b16 %v675
      %v2195 = vunpack.c.l.b16 %v676
      %v2196 = vunpack.c.h.b16 %v676
      %v2197 = vunpack.c.l.b16 %v677
      %v2198 = vunpack.c.h.b16 %v677
      %v2199 = vunpack.c.l.b16 %v678
      %v2200 = vunpack.c.h.b16 %v678
      %v2201 = vunpack.c.l.b16 %v679
      %v2202 = vunpack.c.h.b16 %v679
      %v2203 = vunpack.c.l.b16 %v680
      %v2204 = vunpack.c.h.b16 %v680
      %v2205 = vunpack.c.l.b16 %v681
      %v2206 = vunpack.c.h.b16 %v681
      %v2207 = vunpack.c.l.b16 %v682
      %v2208 = vunpack.c.h.b16 %v682
      %v2209 = vunpack.c.l.b16 %v683
      %v2210 = vunpack.c.h.b16 %v683
      %v2211 = vunpack.c.l.b16 %v684
      %v2212 = vunpack.c.h.b16 %v684
      %v2213 = vunpack.c.l.b16 %v685
      %v2214 = vunpack.c.h.b16 %v685
      %v2215 = vunpack.c.l.b16 %v686
      %v2216 = vunpack.c.h.b16 %v686
      %v2217 = vunpack.c.l.b16 %v687
      %v2218 = vunpack.c.h.b16 %v687
      %v2219 = vunpack.c.l.b16 %v688
      %v2220 = vunpack.c.h.b16 %v688
      %v2221 = vunpack.c.l.b16 %v689
      %v2222 = vunpack.c.h.b16 %v689
      %v2223 = vunpack.c.l.b16 %v690
      %v2224 = vunpack.c.h.b16 %v690
      %v2225 = vunpack.c.l.b16 %v691
      %v2226 = vunpack.c.h.b16 %v691
      %v2227 = vunpack.c.l.b16 %v692
      %v2228 = vunpack.c.h.b16 %v692
      %v2229 = vunpack.c.l.b16 %v693
      %v2230 = vunpack.c.h.b16 %v693
      %v2231 = vunpack.c.l.b16 %v694
      %v2232 = vunpack.c.h.b16 %v694
      %v2233 = vunpack.c.l.b16 %v695
      %v2234 = vunpack.c.h.b16 %v695
      %v2235 = vunpack.c.l.b16 %v696
      %v2236 = vunpack.c.h.b16 %v696
      %v2237 = vunpack.c.l.b16 %v697
      %v2238 = vunpack.c.h.b16 %v697
      %v2239 = vunpack.c.l.b16 %v698
      %v2240 = vunpack.c.h.b16 %v698
      %v2241 = vunpack.c.l.b16 %v699
      %v2242 = vunpack.c.h.b16 %v699
      %v2243 = vunpack.c.l.b16 %v700
      %v2244 = vunpack.c.h.b16 %v700
      %v2245 = vunpack.c.l.b16 %v701
      %v2246 = vunpack.c.h.b16 %v701
      %v2247 = vunpack.c.l.b16 %v702
      %v2248 = vunpack.c.h.b16 %v702
      %v2249 = vunpack.c.l.b16 %v703
      %v2250 = vunpack.c.h.b16 %v703
      %v2251 = vunpack.c.l.b16 %v704
      %v2252 = vunpack.c.h.b16 %v704
      %v2253 = vunpack.c.l.b16 %v705
      %v2254 = vunpack.c.h.b16 %v705
      %v2255 = vunpack.c.l.b16 %v706
      %v2256 = vunpack.c.h.b16 %v706
      %v2257 = vunpack.c.l.b16 %v707
      %v2258 = vunpack.c.h.b16 %v707
      %v2259 = vunpack.c.l.b16 %v708
      %v2260 = vunpack.c.h.b16 %v708
      %v2261 = vunpack.c.l.b16 %v709
      %v2262 = vunpack.c.h.b16 %v709
      %v2263 = vunpack.c.l.b16 %v710
      %v2264 = vunpack.c.h.b16 %v710
      %v2265 = vunpack.c.l.b16 %v711
      %v2266 = vunpack.c.h.b16 %v711
      %v2267 = vunpack.c.l.b16 %v712
      %v2268 = vunpack.c.h.b16 %v712
      %v2269 = vunpack.c.l.b16 %v713
      %v2270 = vunpack.c.h.b16 %v713
      %v2271 = vunpack.c.l.b16 %v714
      %v2272 = vunpack.c.h.b16 %v714
      %v2273 = vunpack.c.l.b16 %v715
      %v2274 = vunpack.c.h.b16 %v715
      %v2275 = vunpack.c.l.b16 %v716
      %v2276 = vunpack.c.h.b16 %v716
      %v2277 = vunpack.c.l.b16 %v717
      %v2278 = vunpack.c.h.b16 %v717
      %v2279 = vunpack.c.l.b16 %v718
      %v2280 = vunpack.c.h.b16 %v718
      %v2281 = vunpack.c.l.b16 %v719
      %v2282 = vunpack.c.h.b16 %v719
      %v2283 = vunpack.c.l.b16 %v720
      %v2284 = vunpack.c.h.b16 %v720
      %v2285 = vunpack.c.l.b16 %v721
      %v2286 = vunpack.c.h.b16 %v721
      %v2287 = vunpack.c.l.b16 %v722
      %v2288 = vunpack.c.h.b16 %v722
      %v2289 = vunpack.c.l.b16 %v723
      %v2290 = vunpack.c.h.b16 %v723
      %v2291 = vunpack.c.l.b16 %v724
      %v2292 = vunpack.c.h.b16 %v724
      %v2293 = vunpack.c.l.b16 %v725
      %v2294 = vunpack.c.h.b16 %v725
      %v2295 = vunpack.c.l.b16 %v726
      %v2296 = vunpack.c.h.b16 %v726
      %v2297 = vunpack.c.l.b16 %v727
      %v2298 = vunpack.c.h.b16 %v727
      %v2299 = vunpack.c.l.b16 %v728
      %v2300 = vunpack.c.h.b16 %v728
      %v2301 = vunpack.c.l.b16 %v729
      %v2302 = vunpack.c.h.b16 %v729
      %v2303 = vunpack.c.l.b16 %v730
      %v2304 = vunpack.c.h.b16 %v730
      %v2305 = vunpack.c.l.b16 %v731
      %v2306 = vunpack.c.h.b16 %v731
      %v2307 = vunpack.c.l.b16 %v732
      %v2308 = vunpack.c.h.b16 %v732
      %v2309 = vunpack.c.l.b16 %v733
      %v2310 = vunpack.c.h.b16 %v733
      %v2311 = vunpack.c.l.b16 %v734
      %v2312 = vunpack.c.h.b16 %v734
      %v2313 = vunpack.c.l.b16 %v735
      %v2314 = vunpack.c.h.b16 %v735
      %v2315 = vunpack.c.l.b16 %v736
      %v2316 = vunpack.c.h.b16 %v736
      %v2317 = vunpack.c.l.b16 %v737
      %v2318 = vunpack.c.h.b16 %v737
      %v2319 = vunpack.c.l.b16 %v738
      %v2320 = vunpack.c.h.b16 %v738
      %v2321 = vunpack.c.l.b16 %v739
      %v2322 = vunpack.c.h.b16 %v739
      %v2323 = vunpack.c.l.b16 %v740
      %v2324 = vunpack.c.h.b16 %v740
      %v2325 = vunpack.c.l.b16 %v741
      %v2326 = vunpack.c.h.b16 %v741
      %v2327 = vunpack.c.l.b16 %v742
      %v2328 = vunpack.c.h.b16 %v742
      %v2329 = vunpack.c.l.b16 %v743
      %v2330 = vunpack.c.h.b16 %v743
      %v2331 = vunpack.c.l.b16 %v744
      %v2332 = vunpack.c.h.b16 %v744
      %v2333 = vunpack.c.l.b16 %v745
      %v2334 = vunpack.c.h.b16 %v745
      %v2335 = vunpack.c.l.b16 %v746
      %v2336 = vunpack.c.h.b16 %v746
      %v2337 = vunpack.c.l.b16 %v747
      %v2338 = vunpack.c.h.b16 %v747
      %v2339 = vunpack.c.l.b16 %v748
      %v2340 = vunpack.c.h.b16 %v748
      %v2341 = vunpack.c.l.b16 %v749
      %v2342 = vunpack.c.h.b16 %v749
      %v2343 = vunpack.c.l.b16 %v750
      %v2344 = vunpack.c.h.b16 %v750
      %v2345 = vunpack.c.l.b16 %v751
      %v2346 = vunpack.c.h.b16 %v751
      %v2347 = vunpack.c.l.b16 %v752
      %v2348 = vunpack.c.h.b16 %v752
      %v2349 = vunpack.c.l.b16 %v753
      %v2350 = vunpack.c.h.b16 %v753
      %v2351 = vunpack.c.l.b16 %v754
      %v2352 = vunpack.c.h.b16 %v754
      %v2353 = vunpack.c.l.b16 %v755
      %v2354 = vunpack.c.h.b16 %v755
      %v2355 = vunpack.c.l.b16 %v756
      %v2356 = vunpack.c.h.b16 %v756
      %v2357 = vunpack.c.l.b16 %v757
      %v2358 = vunpack.c.h.b16 %v757
      %v2359 = vunpack.c.l.b16 %v758
      %v2360 = vunpack.c.h.b16 %v758
      %v2361 = vunpack.c.l.b16 %v759
      %v2362 = vunpack.c.h.b16 %v759
      %v2363 = vunpack.c.l.b16 %v760
      %v2364 = vunpack.c.h.b16 %v760
      %v2365 = vunpack.c.l.b16 %v761
      %v2366 = vunpack.c.h.b16 %v761
      %v2367 = vunpack.c.l.b16 %v762
      %v2368 = vunpack.c.h.b16 %v762
      %v2369 = vunpack.c.l.b16 %v763
      %v2370 = vunpack.c.h.b16 %v763
      %v2371 = vunpack.c.l.b16 %v764
      %v2372 = vunpack.c.h.b16 %v764
      %v2373 = vunpack.c.l.b16 %v765
      %v2374 = vunpack.c.h.b16 %v765
      %v2375 = vunpack.c.l.b16 %v766
      %v2376 = vunpack.c.h.b16 %v766
      %v2377 = vunpack.c.l.b16 %v767
      %v2378 = vunpack.c.h.b16 %v767
      %v2379 = vunpack.c.l.b16 %v768
      %v2380 = vunpack.c.h.b16 %v768
      %v2381 = vunpack.c.l.b16 %v769
      %v2382 = vunpack.c.h.b16 %v769
      %v2383 = vunpack.c.l.b16 %v770
      %v2384 = vunpack.c.h.b16 %v770
      %v2385 = vunpack.c.l.b16 %v771
      %v2386 = vunpack.c.h.b16 %v771
      %v2387 = vunpack.c.l.b16 %v772
      %v2388 = vunpack.c.h.b16 %v772
      %v2389 = vunpack.c.l.b16 %v773
      %v2390 = vunpack.c.h.b16 %v773
      %v2391 = vunpack.c.l.b16 %v774
      %v2392 = vunpack.c.h.b16 %v774
      %v2393 = vunpack.c.l.b16 %v775
      %v2394 = vunpack.c.h.b16 %v775
      %v2395 = vunpack.c.l.b16 %v776
      %v2396 = vunpack.c.h.b16 %v776
      %v2397 = vunpack.c.l.b16 %v777
      %v2398 = vunpack.c.h.b16 %v777
      %v2399 = vunpack.c.l.b16 %v778
      %v2400 = vunpack.c.h.b16 %v778
      %v2401 = vunpack.c.l.b16 %v779
      %v2402 = vunpack.c.h.b16 %v779
      %v2403 = vunpack.c.l.b16 %v780
      %v2404 = vunpack.c.h.b16 %v780
      %v2405 = vunpack.c.l.b16 %v781
      %v2406 = vunpack.c.h.b16 %v781
      %v2407 = vunpack.c.l.b16 %v782
      %v2408 = vunpack.c.h.b16 %v782
      %v2409 = vunpack.c.l.b16 %v783
      %v2410 = vunpack.c.h.b16 %v783
      %v2411 = vunpack.c.l.b16 %v784
      %v2412 = vunpack.c.h.b16 %v784
      %v2413 = vunpack.c.l.b16 %v785
      %v2414 = vunpack.c.h.b16 %v785
      %v2415 = vunpack.c.l.b16 %v786
      %v2416 = vunpack.c.h.b16 %v786
      %v2417 = vunpack.c.l.b16 %v787
      %v2418 = vunpack.c.h.b16 %v787
      %v2419 = vunpack.c.l.b16 %v788
      %v2420 = vunpack.c.h.b16 %v788
      %v2421 = vunpack.c.l.b16 %v789
      %v2422 = vunpack.c.h.b16 %v789
      %v2423 = vunpack.c.l.b16 %v790
      %v2424 = vunpack.c.h.b16 %v790
      %v2425 = vunpack.c.l.b16 %v791
      %v2426 = vunpack.c.h.b16 %v791
      %v2427 = vunpack.c.l.b16 %v792
      %v2428 = vunpack.c.h.b16 %v792
      %v2429 = vunpack.c.l.b16 %v793
      %v2430 = vunpack.c.h.b16 %v793
      %v2431 = vunpack.c.l.b16 %v794
      %v2432 = vunpack.c.h.b16 %v794
      %v2433 = vunpack.c.l.b16 %v795
      %v2434 = vunpack.c.h.b16 %v795
      %v2435 = vunpack.c.l.b16 %v796
      %v2436 = vunpack.c.h.b16 %v796
      %v2437 = vunpack.c.l.b16 %v797
      %v2438 = vunpack.c.h.b16 %v797
      %v2439 = vunpack.c.l.b16 %v798
      %v2440 = vunpack.c.h.b16 %v798
      %v2441 = vunpack.c.l.b16 %v799
      %v2442 = vunpack.c.h.b16 %v799
      %v2443 = vunpack.c.l.b16 %v800
      %v2444 = vunpack.c.h.b16 %v800
      %v2445 = vunpack.c.l.b16 %v801
      %v2446 = vunpack.c.h.b16 %v801
      %v2447 = vunpack.c.l.b16 %v802
      %v2448 = vunpack.c.h.b16 %v802
      %v2449 = vunpack.c.l.b16 %v803
      %v2450 = vunpack.c.h.b16 %v803
      %v2451 = vunpack.c.l.b16 %v804
      %v2452 = vunpack.c.h.b16 %v804
      %v2453 = vunpack.c.l.b16 %v805
      %v2454 = vunpack.c.h.b16 %v805
      %v2455 = vunpack.c.l.b16 %v806
      %v2456 = vunpack.c.h.b16 %v806
      %v2457 = vunpack.c.l.b16 %v807
      %v2458 = vunpack.c.h.b16 %v807
      %v2459 = vunpack.c.l.b16 %v808
      %v2460 = vunpack.c.h.b16 %v808
      %v2461 = vunpack.c.l.b16 %v809
      %v2462 = vunpack.c.h.b16 %v809
      %v2463 = vunpack.c.l.b16 %v810
      %v2464 = vunpack.c.h.b16 %v810
      %v2465 = vunpack.c.l.b16 %v811
      %v2466 = vunpack.c.h.b16 %v811
      %v2467 = vunpack.c.l.b16 %v812
      %v2468 = vunpack.c.h.b16 %v812
      %v2469 = vunpack.c.l.b16 %v813
      %v2470 = vunpack.c.h.b16 %v813
      %v2471 = vunpack.c.l.b16 %v814
      %v2472 = vunpack.c.h.b16 %v814
      %v2473 = vunpack.c.l.b16 %v815
      %v2474 = vunpack.c.h.b16 %v815
      %v2475 = vunpack.c.l.b16 %v816
      %v2476 = vunpack.c.h.b16 %v816
      %v2477 = vunpack.c.l.b16 %v817
      %v2478 = vunpack.c.h.b16 %v817
      %v2479 = vunpack.c.l.b16 %v818
      %v2480 = vunpack.c.h.b16 %v818
      %v2481 = vunpack.c.l.b16 %v819
      %v2482 = vunpack.c.h.b16 %v819
      %v2483 = vunpack.c.l.b16 %v820
      %v2484 = vunpack.c.h.b16 %v820
      %v2485 = vunpack.c.l.b16 %v821
      %v2486 = vunpack.c.h.b16 %v821
      %v2487 = vunpack.c.l.b16 %v822
      %v2488 = vunpack.c.h.b16 %v822
      %v2489 = vunpack.c.l.b16 %v823
      %v2490 = vunpack.c.h.b16 %v823
      %v2491 = vunpack.c.l.b16 %v824
      %v2492 = vunpack.c.h.b16 %v824
      %v2493 = vunpack.c.l.b16 %v825
      %v2494 = vunpack.c.h.b16 %v825
      %v2495 = vunpack.c.l.b16 %v826
      %v2496 = vunpack.c.h.b16 %v826
      %v2497 = vunpack.c.l.b16 %v827
      %v2498 = vunpack.c.h.b16 %v827
      %v2499 = vunpack.c.l.b16 %v828
      %v2500 = vunpack.c.h.b16 %v828
      %v2501 = vunpack.c.l.b16 %v829
      %v2502 = vunpack.c.h.b16 %v829
      %v2503 = vunpack.c.l.b16 %v830
      %v2504 = vunpack.c.h.b16 %v830
      %v2505 = vunpack.c.l.b16 %v831
      %v2506 = vunpack.c.h.b16 %v831
      %v2507 = vunpack.c.l.b16 %v832
      %v2508 = vunpack.c.h.b16 %v832
      %v2509 = vunpack.c.l.b16 %v833
      %v2510 = vunpack.c.h.b16 %v833
      %v2511 = vunpack.c.l.b16 %v834
      %v2512 = vunpack.c.h.b16 %v834
      %v2513 = vunpack.c.l.b16 %v835
      %v2514 = vunpack.c.h.b16 %v835
      %v2515 = vunpack.c.l.b16 %v836
      %v2516 = vunpack.c.h.b16 %v836
      %v2517 = vunpack.c.l.b16 %v837
      %v2518 = vunpack.c.h.b16 %v837
      %v2519 = vunpack.c.l.b16 %v838
      %v2520 = vunpack.c.h.b16 %v838
      %v2521 = vunpack.c.l.b16 %v839
      %v2522 = vunpack.c.h.b16 %v839
      %v2523 = vunpack.c.l.b16 %v840
      %v2524 = vunpack.c.h.b16 %v840
      %v2525 = vunpack.c.l.b16 %v841
      %v2526 = vunpack.c.h.b16 %v841
      %v2527 = vunpack.c.l.b16 %v842
      %v2528 = vunpack.c.h.b16 %v842
      %v2529 = vunpack.c.l.b16 %v843
      %v2530 = vunpack.c.h.b16 %v843
      %v2531 = vunpack.c.l.b16 %v844
      %v2532 = vunpack.c.h.b16 %v844
      %v2533 = vunpack.c.l.b16 %v845
      %v2534 = vunpack.c.h.b16 %v845
      %v2535 = vunpack.c.l.b16 %v846
      %v2536 = vunpack.c.h.b16 %v846
      %v2537 = vunpack.c.l.b16 %v847
      %v2538 = vunpack.c.h.b16 %v847
      %v2539 = vunpack.c.l.b16 %v848
      %v2540 = vunpack.c.h.b16 %v848
      %v2541 = vunpack.c.l.b16 %v849
      %v2542 = vunpack.c.h.b16 %v849
      %v2543 = vunpack.c.l.b16 %v850
      %v2544 = vunpack.c.h.b16 %v850
      %v2545 = vunpack.c.l.b16 %v851
      %v2546 = vunpack.c.h.b16 %v851
      %v2547 = vunpack.c.l.b16 %v852
      %v2548 = vunpack.c.h.b16 %v852
      %v2549 = vunpack.c.l.b16 %v853
      %v2550 = vunpack.c.h.b16 %v853
      %v2551 = vunpack.c.l.b16 %v854
      %v2552 = vunpack.c.h.b16 %v854
      %v2553 = vunpack.c.l.b16 %v855
      %v2554 = vunpack.c.h.b16 %v855
      %v2555 = vunpack.c.l.b16 %v856
      %v2556 = vunpack.c.h.b16 %v856
      %v2557 = vunpack.c.l.b16 %v857
      %v2558 = vunpack.c.h.b16 %v857
      %v2559 = vunpack.c.l.b16 %v858
      %v2560 = vunpack.c.h.b16 %v858
      %v2561 = vunpack.c.l.b16 %v859
      %v2562 = vunpack.c.h.b16 %v859
      %v2563 = vunpack.c.l.b16 %v860
      %v2564 = vunpack.c.h.b16 %v860
      %v2565 = vunpack.c.l.b16 %v861
      %v2566 = vunpack.c.h.b16 %v861
      %v2567 = vunpack.c.l.b16 %v862
      %v2568 = vunpack.c.h.b16 %v862
      %v2569 = vunpack.c.l.b16 %v863
      %v2570 = vunpack.c.h.b16 %v863
      %v2571 = vunpack.c.l.b16 %v864
      %v2572 = vunpack.c.h.b16 %v864
      %v2573 = vunpack.c.l.b16 %v865
      %v2574 = vunpack.c.h.b16 %v865
      %v2575 = vunpack.c.l.b16 %v866
      %v2576 = vunpack.c.h.b16 %v866
      %v2577 = vunpack.c.l.b16 %v867
      %v2578 = vunpack.c.h.b16 %v867
      %v2579 = vunpack.c.l.b16 %v868
      %v2580 = vunpack.c.h.b16 %v868
      %v2581 = vunpack.c.l.b16 %v869
      %v2582 = vunpack.c.h.b16 %v869
      %v2583 = vunpack.c.l.b16 %v870
      %v2584 = vunpack.c.h.b16 %v870
      %v2585 = vunpack.c.l.b16 %v871
      %v2586 = vunpack.c.h.b16 %v871
      %v2587 = vunpack.c.l.b16 %v872
      %v2588 = vunpack.c.h.b16 %v872
      %v2589 = vunpack.c.l.b16 %v873
      %v2590 = vunpack.c.h.b16 %v873
      %v2591 = vunpack.c.l.b16 %v874
      %v2592 = vunpack.c.h.b16 %v874
      %v2593 = vunpack.c.l.b16 %v875
      %v2594 = vunpack.c.h.b16 %v875
      %v2595 = vunpack.c.l.b16 %v876
      %v2596 = vunpack.c.h.b16 %v876
      %v2597 = vunpack.c.l.b16 %v877
      %v2598 = vunpack.c.h.b16 %v877
      %v2599 = vunpack.c.l.b16 %v878
      %v2600 = vunpack.c.h.b16 %v878
      %v2601 = vunpack.c.l.b16 %v879
      %v2602 = vunpack.c.h.b16 %v879
      %v2603 = vunpack.c.l.b16 %v880
      %v2604 = vunpack.c.h.b16 %v880
      %v2605 = vunpack.c.l.b16 %v881
      %v2606 = vunpack.c.h.b16 %v881
      %v2607 = vunpack.c.l.b16 %v882
      %v2608 = vunpack.c.h.b16 %v882
      %v2609 = vunpack.c.l.b16 %v883
      %v2610 = vunpack.c.h.b16 %v883
      %v2611 = vunpack.c.l.b16 %v884
      %v2612 = vunpack.c.h.b16 %v884
      %v2613 = vunpack.c.l.b16 %v885
      %v2614 = vunpack.c.h.b16 %v885
      %v2615 = vunpack.c.l.b16 %v886
      %v2616 = vunpack.c.h.b16 %v886
      %v2617 = vunpack.c.l.b16 %v887
      %v2618 = vunpack.c.h.b16 %v887
      %v2619 = vunpack.c.l.b16 %v888
      %v2620 = vunpack.c.h.b16 %v888
      %v2621 = vunpack.c.l.b16 %v889
      %v2622 = vunpack.c.h.b16 %v889
      %v2623 = vunpack.c.l.b16 %v890
      %v2624 = vunpack.c.h.b16 %v890
      %v2625 = vunpack.c.l.b16 %v891
      %v2626 = vunpack.c.h.b16 %v891
      %v2627 = vunpack.c.l.b16 %v892
      %v2628 = vunpack.c.h.b16 %v892
      %v2629 = vunpack.c.l.b16 %v893
      %v2630 = vunpack.c.h.b16 %v893
      %v2631 = vunpack.c.l.b16 %v894
      %v2632 = vunpack.c.h.b16 %v894
      %v2633 = vunpack.c.l.b16 %v895
      %v2634 = vunpack.c.h.b16 %v895
      %v2635 = vunpack.c.l.b16 %v896
      %v2636 = vunpack.c.h.b16 %v896
      %v2637 = vunpack.c.l.b16 %v897
      %v2638 = vunpack.c.h.b16 %v897
      %v2639 = vunpack.c.l.b16 %v898
      %v2640 = vunpack.c.h.b16 %v898
      %v2641 = vunpack.c.l.b16 %v899
      %v2642 = vunpack.c.h.b16 %v899
      %v2643 = vunpack.c.l.b16 %v900
      %v2644 = vunpack.c.h.b16 %v900
      %v2645 = vunpack.c.l.b16 %v901
      %v2646 = vunpack.c.h.b16 %v901
      %v2647 = vunpack.c.l.b16 %v902
      %v2648 = vunpack.c.h.b16 %v902
      %v2649 = vunpack.c.l.b16 %v903
      %v2650 = vunpack.c.h.b16 %v903
      %v2651 = vunpack.c.l.b16 %v904
      %v2652 = vunpack.c.h.b16 %v904
      %v2653 = vunpack.c.l.b16 %v905
      %v2654 = vunpack.c.h.b16 %v905
      %v2655 = vunpack.c.l.b16 %v906
      %v2656 = vunpack.c.h.b16 %v906
      %v2657 = vunpack.c.l.b16 %v907
      %v2658 = vunpack.c.h.b16 %v907
      %v2659 = vunpack.c.l.b16 %v908
      %v2660 = vunpack.c.h.b16 %v908
      %v2661 = vunpack.c.l.b16 %v909
      %v2662 = vunpack.c.h.b16 %v909
      %v2663 = vunpack.c.l.b16 %v910
      %v2664 = vunpack.c.h.b16 %v910
      %v2665 = vunpack.c.l.b16 %v911
      %v2666 = vunpack.c.h.b16 %v911
      %v2667 = vunpack.c.l.b16 %v912
      %v2668 = vunpack.c.h.b16 %v912
      %v2669 = vunpack.c.l.b16 %v913
      %v2670 = vunpack.c.h.b16 %v913
      %v2671 = vunpack.c.l.b16 %v914
      %v2672 = vunpack.c.h.b16 %v914
      %v2673 = vunpack.c.l.b16 %v915
      %v2674 = vunpack.c.h.b16 %v915
      %v2675 = vunpack.c.l.b16 %v916
      %v2676 = vunpack.c.h.b16 %v916
      %v2677 = vunpack.c.l.b16 %v917
      %v2678 = vunpack.c.h.b16 %v917
      %v2679 = vunpack.c.l.b16 %v918
      %v2680 = vunpack.c.h.b16 %v918
      %v2681 = vunpack.c.l.b16 %v919
      %v2682 = vunpack.c.h.b16 %v919
      %v2683 = vunpack.c.l.b16 %v920
      %v2684 = vunpack.c.h.b16 %v920
      %v2685 = vunpack.c.l.b16 %v921
      %v2686 = vunpack.c.h.b16 %v921
      %v2687 = vunpack.c.l.b16 %v922
      %v2688 = vunpack.c.h.b16 %v922
      %v2689 = vunpack.c.l.b16 %v923
      %v2690 = vunpack.c.h.b16 %v923
      %v2691 = vunpack.c.l.b16 %v924
      %v2692 = vunpack.c.h.b16 %v924
      %v2693 = vunpack.c.l.b16 %v925
      %v2694 = vunpack.c.h.b16 %v925
      %v2695 = vunpack.c.l.b16 %v926
      %v2696 = vunpack.c.h.b16 %v926
      %v2697 = vpack.c.b16 %v1549, %v1545
      %v2698 = vpack.c.b16 %v1550, %v1546
      %v2699 = vpack.c.b16 %v1551, %v1547
      %v2700 = vpack.c.b16 %v1552, %v1548
      %v2701 = vpack.c.b16 %v1557, %v1553
      %v2702 = vpack.c.b16 %v1558, %v1554
      %v2703 = vpack.c.b16 %v1559, %v1555
      %v2704 = vpack.c.b16 %v1560, %v1556
      %v2705 = vpack.c.b16 %v1565, %v1561
      %v2706 = vpack.c.b16 %v1566, %v1562
      %v2707 = vpack.c.b16 %v1567, %v1563
      %v2708 = vpack.c.b16 %v1568, %v1564
      %v2709 = vpack.c.b16 %v1573, %v1569
      %v2710 = vpack.c.b16 %v1574, %v1570
      %v2711 = vpack.c.b16 %v1575, %v1571
      %v2712 = vpack.c.b16 %v1576, %v1572
      %v2713 = vpack.c.b16 %v1581, %v1577
      %v2714 = vpack.c.b16 %v1582, %v1578
      %v2715 = vpack.c.b16 %v1583, %v1579
      %v2716 = vpack.c.b16 %v1584, %v1580
      %v2717 = vpack.c.b16 %v1589, %v1585
      %v2718 = vpack.c.b16 %v1590, %v1586
      %v2719 = vpack.c.b16 %v1591, %v1587
      %v2720 = vpack.c.b16 %v1592, %v1588
      %v2721 = vpack.c.b16 %v1597, %v1593
      %v2722 = vpack.c.b16 %v1598, %v1594
      %v2723 = vpack.c.b16 %v1599, %v1595
      %v2724 = vpack.c.b16 %v1600, %v1596
      %v2725 = vpack.c.b16 %v1605, %v1601
      %v2726 = vpack.c.b16 %v1606, %v1602
      %v2727 = vpack.c.b16 %v1607, %v1603
      %v2728 = vpack.c.b16 %v1608, %v1604
      %v2729 = vpack.c.b16 %v1613, %v1609
      %v2730 = vpack.c.b16 %v1614, %v1610
      %v2731 = vpack.c.b16 %v1615, %v1611
      %v2732 = vpack.c.b16 %v1616, %v1612
      %v2733 = vpack.c.b16 %v1621, %v1617
      %v2734 = vpack.c.b16 %v1622, %v1618
      %v2735 = vpack.c.b16 %v1623, %v1619
      %v2736 = vpack.c.b16 %v1624, %v1620
      %v2737 = vpack.c.b16 %v1629, %v1625
      %v2738 = vpack.c.b16 %v1630, %v1626
      %v2739 = vpack.c.b16 %v1631, %v1627
      %v2740 = vpack.c.b16 %v1632, %v1628
      %v2741 = vpack.c.b16 %v1637, %v1633
      %v2742 = vpack.c.b16 %v1638, %v1634
      %v2743 = vpack.c.b16 %v1639, %v1635
      %v2744 = vpack.c.b16 %v1640, %v1636
      %v2745 = vpack.c.b16 %v1645, %v1641
      %v2746 = vpack.c.b16 %v1646, %v1642
      %v2747 = vpack.c.b16 %v1647, %v1643
      %v2748 = vpack.c.b16 %v1648, %v1644
      %v2749 = vpack.c.b16 %v1653, %v1649
      %v2750 = vpack.c.b16 %v1654, %v1650
      %v2751 = vpack.c.b16 %v1655, %v1651
      %v2752 = vpack.c.b16 %v1656, %v1652
      %v2753 = vpack.c.b16 %v1661, %v1657
      %v2754 = vpack.c.b16 %v1662, %v1658
      %v2755 = vpack.c.b16 %v1663, %v1659
      %v2756 = vpack.c.b16 %v1664, %v1660
      %v2757 = vpack.c.b16 %v1669, %v1665
      %v2758 = vpack.c.b16 %v1670, %v1666
      %v2759 = vpack.c.b16 %v1671, %v1667
      %v2760 = vpack.c.b16 %v1672, %v1668
      %v2761 = vpack.c.b16 %v1677, %v1673
      %v2762 = vpack.c.b16 %v1678, %v1674
      %v2763 = vpack.c.b16 %v1679, %v1675
      %v2764 = vpack.c.b16 %v1680, %v1676
      %v2765 = vpack.c.b16 %v1685, %v1681
      %v2766 = vpack.c.b16 %v1686, %v1682
      %v2767 = vpack.c.b16 %v1687, %v1683
      %v2768 = vpack.c.b16 %v1688, %v1684
      %v2769 = vpack.c.b16 %v1693, %v1689
      %v2770 = vpack.c.b16 %v1694, %v1690
      %v2771 = vpack.c.b16 %v1695, %v1691
      %v2772 = vpack.c.b16 %v1696, %v1692
      %v2773 = vpack.c.b16 %v1701, %v1697
      %v2774 = vpack.c.b16 %v1702, %v1698
      %v2775 = vpack.c.b16 %v1703, %v1699
      %v2776 = vpack.c.b16 %v1704, %v1700
      %v2777 = vpack.c.b16 %v1709, %v1705
      %v2778 = vpack.c.b16 %v1710, %v1706
      %v2779 = vpack.c.b16 %v1711, %v1707
      %v2780 = vpack.c.b16 %v1712, %v1708
      %v2781 = vpack.c.b16 %v1717, %v1713
      %v2782 = vpack.c.b16 %v1718, %v1714
      %v2783 = vpack.c.b16 %v1719, %v1715
      %v2784 = vpack.c.b16 %v1720, %v1716
      %v2785 = vpack.c.b16 %v1725, %v1721
      %v2786 = vpack.c.b16 %v1726, %v1722
      %v2787 = vpack.c.b16 %v1727, %v1723
      %v2788 = vpack.c.b16 %v1728, %v1724
      %v2789 = vpack.c.b16 %v1733, %v1729
      %v2790 = vpack.c.b16 %v1734, %v1730
      %v2791 = vpack.c.b16 %v1735, %v1731
      %v2792 = vpack.c.b16 %v1736, %v1732
      %v2793 = vpack.c.b16 %v1741, %v1737
      %v2794 = vpack.c.b16 %v1742, %v1738
      %v2795 = vpack.c.b16 %v1743, %v1739
      %v2796 = vpack.c.b16 %v1744, %v1740
      %v2797 = vpack.c.b16 %v1749, %v1745
      %v2798 = vpack.c.b16 %v1750, %v1746
      %v2799 = vpack.c.b16 %v1751, %v1747
      %v2800 = vpack.c.b16 %v1752, %v1748
      %v2801 = vpack.c.b16 %v1757, %v1753
      %v2802 = vpack.c.b16 %v1758, %v1754
      %v2803 = vpack.c.b16 %v1759, %v1755
      %v2804 = vpack.c.b16 %v1760, %v1756
      %v2805 = vpack.c.b16 %v1765, %v1761
      %v2806 = vpack.c.b16 %v1766, %v1762
      %v2807 = vpack.c.b16 %v1767, %v1763
      %v2808 = vpack.c.b16 %v1768, %v1764
      %v2809 = vpack.c.b16 %v1773, %v1769
      %v2810 = vpack.c.b16 %v1774, %v1770
      %v2811 = vpack.c.b16 %v1775, %v1771
      %v2812 = vpack.c.b16 %v1776, %v1772
      %v2813 = vpack.c.b16 %v1781, %v1777
      %v2814 = vpack.c.b16 %v1782, %v1778
      %v2815 = vpack.c.b16 %v1783, %v1779
      %v2816 = vpack.c.b16 %v1784, %v1780
      %v2817 = vpack.c.b16 %v1789, %v1785
      %v2818 = vpack.c.b16 %v1790, %v1786
      %v2819 = vpack.c.b16 %v1791, %v1787
      %v2820 = vpack.c.b16 %v1792, %v1788
      %v2821 = vpack.c.b16 %v1797, %v1793
      %v2822 = vpack.c.b16 %v1798, %v1794
      %v2823 = vpack.c.b16 %v1799, %v1795
      %v2824 = vpack.c.b16 %v1800, %v1796
      %v2825 = vpack.c.b16 %v1805, %v1801
      %v2826 = vpack.c.b16 %v1806, %v1802
      %v2827 = vpack.c.b16 %v1807, %v1803
      %v2828 = vpack.c.b16 %v1808, %v1804
      %v2829 = vpack.c.b16 %v1813, %v1809
      %v2830 = vpack.c.b16 %v1814, %v1810
      %v2831 = vpack.c.b16 %v1815, %v1811
      %v2832 = vpack.c.b16 %v1816, %v1812
      %v2833 = vpack.c.b16 %v1821, %v1817
      %v2834 = vpack.c.b16 %v1822, %v1818
      %v2835 = vpack.c.b16 %v1823, %v1819
      %v2836 = vpack.c.b16 %v1824, %v1820
      %v2837 = vpack.c.b16 %v1829, %v1825
      %v2838 = vpack.c.b16 %v1830, %v1826
      %v2839 = vpack.c.b16 %v1831, %v1827
      %v2840 = vpack.c.b16 %v1832, %v1828
      %v2841 = vpack.c.b16 %v1837, %v1833
      %v2842 = vpack.c.b16 %v1838, %v1834
      %v2843 = vpack.c.b16 %v1839, %v1835
      %v2844 = vpack.c.b16 %v1840, %v1836
      %v2845 = vpack.c.b16 %v1845, %v1841
      %v2846 = vpack.c.b16 %v1846, %v1842
      %v2847 = vpack.c.b16 %v1847, %v1843
      %v2848 = vpack.c.b16 %v1848, %v1844
      %v2849 = vpack.c.b16 %v1853, %v1849
      %v2850 = vpack.c.b16 %v1854, %v1850
      %v2851 = vpack.c.b16 %v1855, %v1851
      %v2852 = vpack.c.b16 %v1856, %v1852
      %v2853 = vpack.c.b16 %v1861, %v1857
      %v2854 = vpack.c.b16 %v1862, %v1858
      %v2855 = vpack.c.b16 %v1863, %v1859
      %v2856 = vpack.c.b16 %v1864, %v1860
      %v2857 = vpack.c.b16 %v1869, %v1865
      %v2858 = vpack.c.b16 %v1870, %v1866
      %v2859 = vpack.c.b16 %v1871, %v1867
      %v2860 = vpack.c.b16 %v1872, %v1868
      %v2861 = vpack.c.b16 %v1877, %v1873
      %v2862 = vpack.c.b16 %v1878, %v1874
      %v2863 = vpack.c.b16 %v1879, %v1875
      %v2864 = vpack.c.b16 %v1880, %v1876
      %v2865 = vpack.c.b16 %v1885, %v1881
      %v2866 = vpack.c.b16 %v1886, %v1882
      %v2867 = vpack.c.b16 %v1887, %v1883
      %v2868 = vpack.c.b16 %v1888, %v1884
      %v2869 = vpack.c.b16 %v1893, %v1889
      %v2870 = vpack.c.b16 %v1894, %v1890
      %v2871 = vpack.c.b16 %v1895, %v1891
      %v2872 = vpack.c.b16 %v1896, %v1892
      %v2873 = vpack.c.b16 %v1901, %v1897
      %v2874 = vpack.c.b16 %v1902, %v1898
      %v2875 = vpack.c.b16 %v1903, %v1899
      %v2876 = vpack.c.b16 %v1904, %v1900
      %v2877 = vpack.c.b16 %v1909, %v1905
      %v2878 = vpack.c.b16 %v1910, %v1906
      %v2879 = vpack.c.b16 %v1911, %v1907
      %v2880 = vpack.c.b16 %v1912, %v1908
      %v2881 = vpack.c.b16 %v1917, %v1913
      %v2882 = vpack.c.b16 %v1918, %v1914
      %v2883 = vpack.c.b16 %v1919, %v1915
      %v2884 = vpack.c.b16 %v1920, %v1916
      %v2885 = vpack.c.b16 %v1925, %v1921
      %v2886 = vpack.c.b16 %v1926, %v1922
      %v2887 = vpack.c.b16 %v1927, %v1923
      %v2888 = vpack.c.b16 %v1928, %v1924
      %v2889 = vpack.c.b16 %v1933, %v1929
      %v2890 = vpack.c.b16 %v1934, %v1930
      %v2891 = vpack.c.b16 %v1935, %v1931
      %v2892 = vpack.c.b16 %v1936, %v1932
      %v2893 = vpack.c.b16 %v1941, %v1937
      %v2894 = vpack.c.b16 %v1942, %v1938
      %v2895 = vpack.c.b16 %v1943, %v1939
      %v2896 = vpack.c.b16 %v1944, %v1940
      %v2897 = vpack.c.b16 %v1949, %v1945
      %v2898 = vpack.c.b16 %v1950, %v1946
      %v2899 = vpack.c.b16 %v1951, %v1947
      %v2900 = vpack.c.b16 %v1952, %v1948
      %v2901 = vpack.c.b16 %v1957, %v1953
      %v2902 = vpack.c.b16 %v1958, %v1954
      %v2903 = vpack.c.b16 %v1959, %v1955
      %v2904 = vpack.c.b16 %v1960, %v1956
      %v2905 = vpack.c.b16 %v1965, %v1961
      %v2906 = vpack.c.b16 %v1966, %v1962
      %v2907 = vpack.c.b16 %v1967, %v1963
      %v2908 = vpack.c.b16 %v1968, %v1964
      %v2909 = vpack.c.b16 %v1973, %v1969
      %v2910 = vpack.c.b16 %v1974, %v1970
      %v2911 = vpack.c.b16 %v1975, %v1971
      %v2912 = vpack.c.b16 %v1976, %v1972
      %v2913 = vpack.c.b16 %v1981, %v1977
      %v2914 = vpack.c.b16 %v1982, %v1978
      %v2915 = vpack.c.b16 %v1983, %v1979
      %v2916 = vpack.c.b16 %v1984, %v1980
      %v2917 = vpack.c.b16 %v1989, %v1985
      %v2918 = vpack.c.b16 %v1990, %v1986
      %v2919 = vpack.c.b16 %v1991, %v1987
      %v2920 = vpack.c.b16 %v1992, %v1988
      %v2921 = vpack.c.b16 %v1997, %v1993
      %v2922 = vpack.c.b16 %v1998, %v1994
      %v2923 = vpack.c.b16 %v1999, %v1995
      %v2924 = vpack.c.b16 %v2000, %v1996
      %v2925 = vpack.c.b16 %v2005, %v2001
      %v2926 = vpack.c.b16 %v2006, %v2002
      %v2927 = vpack.c.b16 %v2007, %v2003
      %v2928 = vpack.c.b16 %v2008, %v2004
      %v2929 = vpack.c.b16 %v2013, %v2009
      %v2930 = vpack.c.b16 %v2014, %v2010
      %v2931 = vpack.c.b16 %v2015, %v2011
      %v2932 = vpack.c.b16 %v2016, %v2012
      %v2933 = vpack.c.b16 %v2021, %v2017
      %v2934 = vpack.c.b16 %v2022, %v2018
      %v2935 = vpack.c.b16 %v2023, %v2019
      %v2936 = vpack.c.b16 %v2024, %v2020
      %v2937 = vpack.c.b16 %v2029, %v2025
      %v2938 = vpack.c.b16 %v2030, %v2026
      %v2939 = vpack.c.b16 %v2031, %v2027
      %v2940 = vpack.c.b16 %v2032, %v2028
      %v2941 = vpack.c.b16 %v2037, %v2033
      %v2942 = vpack.c.b16 %v2038, %v2034
      %v2943 = vpack.c.b16 %v2039, %v2035
      %v2944 = vpack.c.b16 %v2040, %v2036
      %v2945 = vpack.c.b16 %v2045, %v2041
      %v2946 = vpack.c.b16 %v2046, %v2042
      %v2947 = vpack.c.b16 %v2047, %v2043
      %v2948 = vpack.c.b16 %v2048, %v2044
      %v2949 = vpack.c.b16 %v2053, %v2049
      %v2950 = vpack.c.b16 %v2054, %v2050
      %v2951 = vpack.c.b16 %v2055, %v2051
      %v2952 = vpack.c.b16 %v2056, %v2052
      %v2953 = vpack.c.b16 %v2061, %v2057
      %v2954 = vpack.c.b16 %v2062, %v2058
      %v2955 = vpack.c.b16 %v2063, %v2059
      %v2956 = vpack.c.b16 %v2064, %v2060
      %v2957 = vpack.c.b16 %v2069, %v2065
      %v2958 = vpack.c.b16 %v2070, %v2066
      %v2959 = vpack.c.b16 %v2071, %v2067
      %v2960 = vpack.c.b16 %v2072, %v2068
      %v2961 = vpack.c.b16 %v2077, %v2073
      %v2962 = vpack.c.b16 %v2078, %v2074
      %v2963 = vpack.c.b16 %v2079, %v2075
      %v2964 = vpack.c.b16 %v2080, %v2076
      %v2965 = vpack.c.b16 %v2085, %v2081
      %v2966 = vpack.c.b16 %v2086, %v2082
      %v2967 = vpack.c.b16 %v2087, %v2083
      %v2968 = vpack.c.b16 %v2088, %v2084
      %v2969 = vpack.c.b16 %v2093, %v2089
      %v2970 = vpack.c.b16 %v2094, %v2090
      %v2971 = vpack.c.b16 %v2095, %v2091
      %v2972 = vpack.c.b16 %v2096, %v2092
      %v2973 = vpack.c.b16 %v2101, %v2097
      %v2974 = vpack.c.b16 %v2102, %v2098
      %v2975 = vpack.c.b16 %v2103, %v2099
      %v2976 = vpack.c.b16 %v2104, %v2100
      %v2977 = vpack.c.b16 %v2109, %v2105
      %v2978 = vpack.c.b16 %v2110, %v2106
      %v2979 = vpack.c.b16 %v2111, %v2107
      %v2980 = vpack.c.b16 %v2112, %v2108
      %v2981 = vpack.c.b16 %v2117, %v2113
      %v2982 = vpack.c.b16 %v2118, %v2114
      %v2983 = vpack.c.b16 %v2119, %v2115
      %v2984 = vpack.c.b16 %v2120, %v2116
      %v2985 = vpack.c.b16 %v2125, %v2121
      %v2986 = vpack.c.b16 %v2126, %v2122
      %v2987 = vpack.c.b16 %v2127, %v2123
      %v2988 = vpack.c.b16 %v2128, %v2124
      %v2989 = vpack.c.b16 %v2133, %v2129
      %v2990 = vpack.c.b16 %v2134, %v2130
      %v2991 = vpack.c.b16 %v2135, %v2131
      %v2992 = vpack.c.b16 %v2136, %v2132
      %v2993 = vpack.c.b16 %v2141, %v2137
      %v2994 = vpack.c.b16 %v2142, %v2138
      %v2995 = vpack.c.b16 %v2143, %v2139
      %v2996 = vpack.c.b16 %v2144, %v2140
      %v2997 = vpack.c.b16 %v2149, %v2145
      %v2998 = vpack.c.b16 %v2150, %v2146
      %v2999 = vpack.c.b16 %v2151, %v2147
      %v3000 = vpack.c.b16 %v2152, %v2148
      %v3001 = vpack.c.b16 %v2157, %v2153
      %v3002 = vpack.c.b16 %v2158, %v2154
      %v3003 = vpack.c.b16 %v2159, %v2155
      %v3004 = vpack.c.b16 %v2160, %v2156
      %v3005 = vpack.c.b16 %v2165, %v2161
      %v3006 = vpack.c.b16 %v2166, %v2162
      %v3007 = vpack.c.b16 %v2167, %v2163
      %v3008 = vpack.c.b16 %v2168, %v2164
      %v3009 = vpack.c.b16 %v2173, %v2169
      %v3010 = vpack.c.b16 %v2174, %v2170
      %v3011 = vpack.c.b16 %v2175, %v2171
      %v3012 = vpack.c.b16 %v2176, %v2172
      %v3013 = vpack.c.b16 %v2181, %v2177
      %v3014 = vpack.c.b16 %v2182, %v2178
      %v3015 = vpack.c.b16 %v2183, %v2179
      %v3016 = vpack.c.b16 %v2184, %v2180
      %v3017 = vpack.c.b16 %v2189, %v2185
      %v3018 = vpack.c.b16 %v2190, %v2186
      %v3019 = vpack.c.b16 %v2191, %v2187
      %v3020 = vpack.c.b16 %v2192, %v2188
      %v3021 = vpack.c.b16 %v2197, %v2193
      %v3022 = vpack.c.b16 %v2198, %v2194
      %v3023 = vpack.c.b16 %v2199, %v2195
      %v3024 = vpack.c.b16 %v2200, %v2196
      %v3025 = vpack.c.b16 %v2205, %v2201
      %v3026 = vpack.c.b16 %v2206, %v2202
      %v3027 = vpack.c.b16 %v2207, %v2203
      %v3028 = vpack.c.b16 %v2208, %v2204
      %v3029 = vpack.c.b16 %v2213, %v2209
      %v3030 = vpack.c.b16 %v2214, %v2210
      %v3031 = vpack.c.b16 %v2215, %v2211
      %v3032 = vpack.c.b16 %v2216, %v2212
      %v3033 = vpack.c.b16 %v2221, %v2217
      %v3034 = vpack.c.b16 %v2222, %v2218
      %v3035 = vpack.c.b16 %v2223, %v2219
      %v3036 = vpack.c.b16 %v2224, %v2220
      %v3037 = vpack.c.b16 %v2229, %v2225
      %v3038 = vpack.c.b16 %v2230, %v2226
      %v3039 = vpack.c.b16 %v2231, %v2227
      %v3040 = vpack.c.b16 %v2232, %v2228
      %v3041 = vpack.c.b16 %v2237, %v2233
      %v3042 = vpack.c.b16 %v2238, %v2234
      %v3043 = vpack.c.b16 %v2239, %v2235
      %v3044 = vpack.c.b16 %v2240, %v2236
      %v3045 = vpack.c.b16 %v2245, %v2241
      %v3046 = vpack.c.b16 %v2246, %v2242
      %v3047 = vpack.c.b16 %v2247, %v2243
      %v3048 = vpack.c.b16 %v2248, %v2244
      %v3049 = vpack.c.b16 %v2253, %v2249
      %v3050 = vpack.c.b16 %v2254, %v2250
      %v3051 = vpack.c.b16 %v2255, %v2251
      %v3052 = vpack.c.b16 %v2256, %v2252
      %v3053 = vpack.c.b16 %v2261, %v2257
      %v3054 = vpack.c.b16 %v2262, %v2258
      %v3055 = vpack.c.b16 %v2263, %v2259
      %v3056 = vpack.c.b16 %v2264, %v2260
      %v3057 = vpack.c.b16 %v2269, %v2265
      %v3058 = vpack.c.b16 %v2270, %v2266
      %v3059 = vpack.c.b16 %v2271, %v2267
      %v3060 = vpack.c.b16 %v2272, %v2268
      %v3061 = vpack.c.b16 %v2277, %v2273
      %v3062 = vpack.c.b16 %v2278, %v2274
      %v3063 = vpack.c.b16 %v2279, %v2275
      %v3064 = vpack.c.b16 %v2280, %v2276
      %v3065 = vpack.c.b16 %v2285, %v2281
      %v3066 = vpack.c.b16 %v2286, %v2282
      %v3067 = vpack.c.b16 %v2287, %v2283
      %v3068 = vpack.c.b16 %v2288, %v2284
      %v3069 = vpack.c.b16 %v2293, %v2289
      %v3070 = vpack.c.b16 %v2294, %v2290
      %v3071 = vpack.c.b16 %v2295, %v2291
      %v3072 = vpack.c.b16 %v2296, %v2292
      %v3073 = vpack.c.b16 %v2301, %v2297
      %v3074 = vpack.c.b16 %v2302, %v2298
      %v3075 = vpack.c.b16 %v2303, %v2299
      %v3076 = vpack.c.b16 %v2304, %v2300
      %v3077 = vpack.c.b16 %v2309, %v2305
      %v3078 = vpack.c.b16 %v2310, %v2306
      %v3079 = vpack.c.b16 %v2311, %v2307
      %v3080 = vpack.c.b16 %v2312, %v2308
      %v3081 = vpack.c.b16 %v2317, %v2313
      %v3082 = vpack.c.b16 %v2318, %v2314
      %v3083 = vpack.c.b16 %v2319, %v2315
      %v3084 = vpack.c.b16 %v2320, %v2316
      %v3085 = vpack.c.b16 %v2325, %v2321
      %v3086 = vpack.c.b16 %v2326, %v2322
      %v3087 = vpack.c.b16 %v2327, %v2323
      %v3088 = vpack.c.b16 %v2328, %v2324
      %v3089 = vpack.c.b16 %v2333, %v2329
      %v3090 = vpack.c.b16 %v2334, %v2330
      %v3091 = vpack.c.b16 %v2335, %v2331
      %v3092 = vpack.c.b16 %v2336, %v2332
      %v3093 = vpack.c.b16 %v2341, %v2337
      %v3094 = vpack.c.b16 %v2342, %v2338
      %v3095 = vpack.c.b16 %v2343, %v2339
      %v3096 = vpack.c.b16 %v2344, %v2340
      %v3097 = vpack.c.b16 %v2349, %v2345
      %v3098 = vpack.c.b16 %v2350, %v2346
      %v3099 = vpack.c.b16 %v2351, %v2347
      %v3100 = vpack.c.b16 %v2352, %v2348
      %v3101 = vpack.c.b16 %v2357, %v2353
      %v3102 = vpack.c.b16 %v2358, %v2354
      %v3103 = vpack.c.b16 %v2359, %v2355
      %v3104 = vpack.c.b16 %v2360, %v2356
      %v3105 = vpack.c.b16 %v2365, %v2361
      %v3106 = vpack.c.b16 %v2366, %v2362
      %v3107 = vpack.c.b16 %v2367, %v2363
      %v3108 = vpack.c.b16 %v2368, %v2364
      %v3109 = vpack.c.b16 %v2373, %v2369
      %v3110 = vpack.c.b16 %v2374, %v2370
      %v3111 = vpack.c.b16 %v2375, %v2371
      %v3112 = vpack.c.b16 %v2376, %v2372
      %v3113 = vpack.c.b16 %v2381, %v2377
      %v3114 = vpack.c.b16 %v2382, %v2378
      %v3115 = vpack.c.b16 %v2383, %v2379
      %v3116 = vpack.c.b16 %v2384, %v2380
      %v3117 = vpack.c.b16 %v2389, %v2385
      %v3118 = vpack.c.b16 %v2390, %v2386
      %v3119 = vpack.c.b16 %v2391, %v2387
      %v3120 = vpack.c.b16 %v2392, %v2388
      %v3121 = vpack.c.b16 %v2397, %v2393
      %v3122 = vpack.c.b16 %v2398, %v2394
      %v3123 = vpack.c.b16 %v2399, %v2395
      %v3124 = vpack.c.b16 %v2400, %v2396
      %v3125 = vpack.c.b16 %v2405, %v2401
      %v3126 = vpack.c.b16 %v2406, %v2402
      %v3127 = vpack.c.b16 %v2407, %v2403
      %v3128 = vpack.c.b16 %v2408, %v2404
      %v3129 = vpack.c.b16 %v2413, %v2409
      %v3130 = vpack.c.b16 %v2414, %v2410
      %v3131 = vpack.c.b16 %v2415, %v2411
      %v3132 = vpack.c.b16 %v2416, %v2412
      %v3133 = vpack.c.b16 %v2421, %v2417
      %v3134 = vpack.c.b16 %v2422, %v2418
      %v3135 = vpack.c.b16 %v2423, %v2419
      %v3136 = vpack.c.b16 %v2424, %v2420
      %v3137 = vpack.c.b16 %v2429, %v2425
      %v3138 = vpack.c.b16 %v2430, %v2426
      %v3139 = vpack.c.b16 %v2431, %v2427
      %v3140 = vpack.c.b16 %v2432, %v2428
      %v3141 = vpack.c.b16 %v2437, %v2433
      %v3142 = vpack.c.b16 %v2438, %v2434
      %v3143 = vpack.c.b16 %v2439, %v2435
      %v3144 = vpack.c.b16 %v2440, %v2436
      %v3145 = vpack.c.b16 %v2445, %v2441
      %v3146 = vpack.c.b16 %v2446, %v2442
      %v3147 = vpack.c.b16 %v2447, %v2443
      %v3148 = vpack.c.b16 %v2448, %v2444
      %v3149 = vpack.c.b16 %v2453, %v2449
      %v3150 = vpack.c.b16 %v2454, %v2450
      %v3151 = vpack.c.b16 %v2455, %v2451
      %v3152 = vpack.c.b16 %v2456, %v2452
      %v3153 = vpack.c.b16 %v2461, %v2457
      %v3154 = vpack.c.b16 %v2462, %v2458
      %v3155 = vpack.c.b16 %v2463, %v2459
      %v3156 = vpack.c.b16 %v2464, %v2460
      %v3157 = vpack.c.b16 %v2469, %v2465
      %v3158 = vpack.c.b16 %v2470, %v2466
      %v3159 = vpack.c.b16 %v2471, %v2467
      %v3160 = vpack.c.b16 %v2472, %v2468
      %v3161 = vpack.c.b16 %v2477, %v2473
      %v3162 = vpack.c.b16 %v2478, %v2474
      %v3163 = vpack.c.b16 %v2479, %v2475
      %v3164 = vpack.c.b16 %v2480, %v2476
      %v3165 = vpack.c.b16 %v2485, %v2481
      %v3166 = vpack.c.b16 %v2486, %v2482
      %v3167 = vpack.c.b16 %v2487, %v2483
      %v3168 = vpack.c.b16 %v2488, %v2484
      %v3169 = vpack.c.b16 %v2493, %v2489
      %v3170 = vpack.c.b16 %v2494, %v2490
      %v3171 = vpack.c.b16 %v2495, %v2491
      %v3172 = vpack.c.b16 %v2496, %v2492
      %v3173 = vpack.c.b16 %v2501, %v2497
      %v3174 = vpack.c.b16 %v2502, %v2498
      %v3175 = vpack.c.b16 %v2503, %v2499
      %v3176 = vpack.c.b16 %v2504, %v2500
      %v3177 = vpack.c.b16 %v2509, %v2505
      %v3178 = vpack.c.b16 %v2510, %v2506
      %v3179 = vpack.c.b16 %v2511, %v2507
      %v3180 = vpack.c.b16 %v2512, %v2508
      %v3181 = vpack.c.b16 %v2517, %v2513
      %v3182 = vpack.c.b16 %v2518, %v2514
      %v3183 = vpack.c.b16 %v2519, %v2515
      %v3184 = vpack.c.b16 %v2520, %v2516
      %v3185 = vpack.c.b16 %v2525, %v2521
      %v3186 = vpack.c.b16 %v2526, %v2522
      %v3187 = vpack.c.b16 %v2527, %v2523
      %v3188 = vpack.c.b16 %v2528, %v2524
      %v3189 = vpack.c.b16 %v2533, %v2529
      %v3190 = vpack.c.b16 %v2534, %v2530
      %v3191 = vpack.c.b16 %v2535, %v2531
      %v3192 = vpack.c.b16 %v2536, %v2532
      %v3193 = vpack.c.b16 %v2541, %v2537
      %v3194 = vpack.c.b16 %v2542, %v2538
      %v3195 = vpack.c.b16 %v2543, %v2539
      %v3196 = vpack.c.b16 %v2544, %v2540
      %v3197 = vpack.c.b16 %v2549, %v2545
      %v3198 = vpack.c.b16 %v2550, %v2546
      %v3199 = vpack.c.b16 %v2551, %v2547
      %v3200 = vpack.c.b16 %v2552, %v2548
      %v3201 = vpack.c.b16 %v2557, %v2553
      %v3202 = vpack.c.b16 %v2558, %v2554
      %v3203 = vpack.c.b16 %v2559, %v2555
      %v3204 = vpack.c.b16 %v2560, %v2556
      %v3205 = vpack.c.b16 %v2565, %v2561
      %v3206 = vpack.c.b16 %v2566, %v2562
      %v3207 = vpack.c.b16 %v2567, %v2563
      %v3208 = vpack.c.b16 %v2568, %v2564
      %v3209 = vpack.c.b16 %v2573, %v2569
      %v3210 = vpack.c.b16 %v2574, %v2570
      %v3211 = vpack.c.b16 %v2575, %v2571
      %v3212 = vpack.c.b16 %v2576, %v2572
      %v3213 = vpack.c.b16 %v2581, %v2577
      %v3214 = vpack.c.b16 %v2582, %v2578
      %v3215 = vpack.c.b16 %v2583, %v2579
      %v3216 = vpack.c.b16 %v2584, %v2580
      %v3217 = vpack.c.b16 %v2589, %v2585
      %v3218 = vpack.c.b16 %v2590, %v2586
      %v3219 = vpack.c.b16 %v2591, %v2587
      %v3220 = vpack.c.b16 %v2592, %v2588
      %v3221 = vpack.c.b16 %v2597, %v2593
      %v3222 = vpack.c.b16 %v2598, %v2594
      %v3223 = vpack.c.b16 %v2599, %v2595
      %v3224 = vpack.c.b16 %v2600, %v2596
      %v3225 = vpack.c.b16 %v2605, %v2601
      %v3226 = vpack.c.b16 %v2606, %v2602
      %v3227 = vpack.c.b16 %v2607, %v2603
      %v3228 = vpack.c.b16 %v2608, %v2604
      %v3229 = vpack.c.b16 %v2613, %v2609
      %v3230 = vpack.c.b16 %v2614, %v2610
      %v3231 = vpack.c.b16 %v2615, %v2611
      %v3232 = vpack.c.b16 %v2616, %v2612
      %v3233 = vpack.c.b16 %v2621, %v2617
      %v3234 = vpack.c.b16 %v2622, %v2618
      %v3235 = vpack.c.b16 %v2623, %v2619
      %v3236 = vpack.c.b16 %v2624, %v2620
      %v3237 = vpack.c.b16 %v2629, %v2625
      %v3238 = vpack.c.b16 %v2630, %v2626
      %v3239 = vpack.c.b16 %v2631, %v2627
      %v3240 = vpack.c.b16 %v2632, %v2628
      %v3241 = vpack.c.b16 %v2637, %v2633
      %v3242 = vpack.c.b16 %v2638, %v2634
      %v3243 = vpack.c.b16 %v2639, %v2635
      %v3244 = vpack.c.b16 %v2640, %v2636
      %v3245 = vpack.c.b16 %v2645, %v2641
      %v3246 = vpack.c.b16 %v2646, %v2642
      %v3247 = vpack.c.b16 %v2647, %v2643
      %v3248 = vpack.c.b16 %v2648, %v2644
      %v3249 = vpack.c.b16 %v2653, %v2649
      %v3250 = vpack.c.b16 %v2654, %v2650
      %v3251 = vpack.c.b16 %v2655, %v2651
      %v3252 = vpack.c.b16 %v2656, %v2652
      %v3253 = vpack.c.b16 %v2661, %v2657
      %v3254 = vpack.c.b16 %v2662, %v2658
      %v3255 = vpack.c.b16 %v2663, %v2659
      %v3256 = vpack.c.b16 %v2664, %v2660
      %v3257 = vpack.c.b16 %v2669, %v2665
      %v3258 = vpack.c.b16 %v2670, %v2666
      %v3259 = vpack.c.b16 %v2671, %v2667
      %v3260 = vpack.c.b16 %v2672, %v2668
      %v3261 = vpack.c.b16 %v2677, %v2673
      %v3262 = vpack.c.b16 %v2678, %v2674
      %v3263 = vpack.c.b16 %v2679, %v2675
      %v3264 = vpack.c.b16 %v2680, %v2676
      %v3265 = vpack.c.b16 %v2685, %v2681
      %v3266 = vpack.c.b16 %v2686, %v2682
      %v3267 = vpack.c.b16 %v2687, %v2683
      %v3268 = vpack.c.b16 %v2688, %v2684
      %v3269 = vpack.c.b16 %v2693, %v2689
      %v3270 = vpack.c.b16 %v2694, %v2690
      %v3271 = vpack.c.b16 %v2695, %v2691
      %v3272 = vpack.c.b16 %v2696, %v2692
      %3849 = vmatpush.bf16.msra.mxu0 %v2725
      %3850 = vmatpush.bf16.msra.mxu0 %v2721
      %3851 = vmatpush.bf16.msra.mxu0 %v2717
      %3852 = vmatpush.bf16.msra.mxu0 %v2713
      %3853 = vmatpush.bf16.msra.mxu0 %v2709
      %3854 = vmatpush.bf16.msra.mxu0 %v2705
      %3855 = vmatpush.bf16.msra.mxu0 %v2701
      %3856 = vmatpush.bf16.msra.mxu0 %v2697
      %3857 = vmatmul.bf16.gmra.mxu0 %v929
      %v3858 = vpop.f32.mrf.mxu0
      %v3859 = vadd.f32 0.0, %v3858
      %v3860 = vpop.f32.mrf.mxu0
      %3861 = vdwg.mxu0
      %3862 = vmatpush.bf16.msra.mxu0 %v2757
      %3863 = vmatpush.bf16.msra.mxu0 %v2753
      %3864 = vmatpush.bf16.msra.mxu0 %v2749
      %3865 = vmatpush.bf16.msra.mxu0 %v2745
      %3866 = vmatpush.bf16.msra.mxu0 %v2741
      %3867 = vmatpush.bf16.msra.mxu0 %v2737
      %3868 = vmatpush.bf16.msra.mxu0 %v2733
      %3869 = vmatpush.bf16.msra.mxu0 %v2729
      %3870 = vmatmul.bf16.gmra.mxu0 %v930
      %v3871 = vpop.f32.mrf.mxu0
      %v3872 = vadd.f32 %v3859, %v3871
      %v3873 = vpop.f32.mrf.mxu0
      %3874 = vdwg.mxu0
      %3875 = vmatpush.bf16.msra.mxu0 %v2789
      %3876 = vmatpush.bf16.msra.mxu0 %v2785
      %3877 = vmatpush.bf16.msra.mxu0 %v2781
      %3878 = vmatpush.bf16.msra.mxu0 %v2777
      %3879 = vmatpush.bf16.msra.mxu0 %v2773
      %3880 = vmatpush.bf16.msra.mxu0 %v2769
      %3881 = vmatpush.bf16.msra.mxu0 %v2765
      %3882 = vmatpush.bf16.msra.mxu0 %v2761
      %3883 = vmatmul.bf16.gmra.mxu0 %v931
      %v3884 = vpop.f32.mrf.mxu0
      %v3885 = vadd.f32 %v3872, %v3884
      %v3886 = vpop.f32.mrf.mxu0
      %3887 = vdwg.mxu0
      %3888 = vmatpush.bf16.msra.mxu0 %v2821
      %3889 = vmatpush.bf16.msra.mxu0 %v2817
      %3890 = vmatpush.bf16.msra.mxu0 %v2813
      %3891 = vmatpush.bf16.msra.mxu0 %v2809
      %3892 = vmatpush.bf16.msra.mxu0 %v2805
      %3893 = vmatpush.bf16.msra.mxu0 %v2801
      %3894 = vmatpush.bf16.msra.mxu0 %v2797
      %3895 = vmatpush.bf16.msra.mxu0 %v2793
      %3896 = vmatmul.bf16.gmra.mxu0 %v932
      %v3897 = vpop.f32.mrf.mxu0
      %v3898 = vadd.f32 %v3885, %v3897
      %v3899 = vpop.f32.mrf.mxu0
      %3900 = vdwg.mxu0
      %3901 = vmatpush.bf16.msra.mxu0 %v2853
      %3902 = vmatpush.bf16.msra.mxu0 %v2849
      %3903 = vmatpush.bf16.msra.mxu0 %v2845
      %3904 = vmatpush.bf16.msra.mxu0 %v2841
      %3905 = vmatpush.bf16.msra.mxu0 %v2837
      %3906 = vmatpush.bf16.msra.mxu0 %v2833
      %3907 = vmatpush.bf16.msra.mxu0 %v2829
      %3908 = vmatpush.bf16.msra.mxu0 %v2825
      %3909 = vmatmul.bf16.gmra.mxu0 %v933
      %v3910 = vpop.f32.mrf.mxu0
      %v3911 = vadd.f32 %v3898, %v3910
      %v3912 = vpop.f32.mrf.mxu0
      %3913 = vdwg.mxu0
      %3914 = vmatpush.bf16.msra.mxu0 %v2885
      %3915 = vmatpush.bf16.msra.mxu0 %v2881
      %3916 = vmatpush.bf16.msra.mxu0 %v2877
      %3917 = vmatpush.bf16.msra.mxu0 %v2873
      %3918 = vmatpush.bf16.msra.mxu0 %v2869
      %3919 = vmatpush.bf16.msra.mxu0 %v2865
      %3920 = vmatpush.bf16.msra.mxu0 %v2861
      %3921 = vmatpush.bf16.msra.mxu0 %v2857
      %3922 = vmatmul.bf16.gmra.mxu0 %v934
      %v3923 = vpop.f32.mrf.mxu0
      %v3924 = vadd.f32 %v3911, %v3923
      %v3925 = vpop.f32.mrf.mxu0
      %3926 = vdwg.mxu0
      %3927 = vmatpush.bf16.msra.mxu0 %v2917
      %3928 = vmatpush.bf16.msra.mxu0 %v2913
      %3929 = vmatpush.bf16.msra.mxu0 %v2909
      %3930 = vmatpush.bf16.msra.mxu0 %v2905
      %3931 = vmatpush.bf16.msra.mxu0 %v2901
      %3932 = vmatpush.bf16.msra.mxu0 %v2897
      %3933 = vmatpush.bf16.msra.mxu0 %v2893
      %3934 = vmatpush.bf16.msra.mxu0 %v2889
      %3935 = vmatmul.bf16.gmra.mxu0 %v935
      %v3936 = vpop.f32.mrf.mxu0
      %v3937 = vadd.f32 %v3924, %v3936
      %v3938 = vpop.f32.mrf.mxu0
      %3939 = vdwg.mxu0
      %3940 = vmatpush.bf16.msra.mxu0 %v2949
      %3941 = vmatpush.bf16.msra.mxu0 %v2945
      %3942 = vmatpush.bf16.msra.mxu0 %v2941
      %3943 = vmatpush.bf16.msra.mxu0 %v2937
      %3944 = vmatpush.bf16.msra.mxu0 %v2933
      %3945 = vmatpush.bf16.msra.mxu0 %v2929
      %3946 = vmatpush.bf16.msra.mxu0 %v2925
      %3947 = vmatpush.bf16.msra.mxu0 %v2921
      %3948 = vmatmul.bf16.gmra.mxu0 %v936
      %v3949 = vpop.f32.mrf.mxu0
      %v3950 = vadd.f32 %v3937, %v3949
      %v3951 = vpop.f32.mrf.mxu0
      %3952 = vdwg.mxu0
      %3953 = vmatpush.bf16.msra.mxu0 %v2981
      %3954 = vmatpush.bf16.msra.mxu0 %v2977
      %3955 = vmatpush.bf16.msra.mxu0 %v2973
      %3956 = vmatpush.bf16.msra.mxu0 %v2969
      %3957 = vmatpush.bf16.msra.mxu0 %v2965
      %3958 = vmatpush.bf16.msra.mxu0 %v2961
      %3959 = vmatpush.bf16.msra.mxu0 %v2957
      %3960 = vmatpush.bf16.msra.mxu0 %v2953
      %3961 = vmatmul.bf16.gmra.mxu0 %v939
      %v3962 = vpop.f32.mrf.mxu0
      %v3963 = vadd.f32 %v3950, %v3962
      %v3964 = vpop.f32.mrf.mxu0
      %3965 = vdwg.mxu0
      %3966 = vmatpush.bf16.msra.mxu0 %v3013
      %3967 = vmatpush.bf16.msra.mxu0 %v3009
      %3968 = vmatpush.bf16.msra.mxu0 %v3005
      %3969 = vmatpush.bf16.msra.mxu0 %v3001
      %3970 = vmatpush.bf16.msra.mxu0 %v2997
      %3971 = vmatpush.bf16.msra.mxu0 %v2993
      %3972 = vmatpush.bf16.msra.mxu0 %v2989
      %3973 = vmatpush.bf16.msra.mxu0 %v2985
      %3974 = vmatmul.bf16.gmra.mxu0 %v940
      %v3975 = vpop.f32.mrf.mxu0
      %v3976 = vadd.f32 %v3963, %v3975
      %v3977 = vpop.f32.mrf.mxu0
      %3978 = vdwg.mxu0
      %3979 = vmatpush.bf16.msra.mxu0 %v3045
      %3980 = vmatpush.bf16.msra.mxu0 %v3041
      %3981 = vmatpush.bf16.msra.mxu0 %v3037
      %3982 = vmatpush.bf16.msra.mxu0 %v3033
      %3983 = vmatpush.bf16.msra.mxu0 %v3029
      %3984 = vmatpush.bf16.msra.mxu0 %v3025
      %3985 = vmatpush.bf16.msra.mxu0 %v3021
      %3986 = vmatpush.bf16.msra.mxu0 %v3017
      %3987 = vmatmul.bf16.gmra.mxu0 %v941
      %v3988 = vpop.f32.mrf.mxu0
      %v3989 = vadd.f32 %v3976, %v3988
      %v3990 = vpop.f32.mrf.mxu0
      %3991 = vdwg.mxu0
      %3992 = vmatpush.bf16.msra.mxu0 %v3077
      %3993 = vmatpush.bf16.msra.mxu0 %v3073
      %3994 = vmatpush.bf16.msra.mxu0 %v3069
      %3995 = vmatpush.bf16.msra.mxu0 %v3065
      %3996 = vmatpush.bf16.msra.mxu0 %v3061
      %3997 = vmatpush.bf16.msra.mxu0 %v3057
      %3998 = vmatpush.bf16.msra.mxu0 %v3053
      %3999 = vmatpush.bf16.msra.mxu0 %v3049
      %4000 = vmatmul.bf16.gmra.mxu0 %v942
      %v4001 = vpop.f32.mrf.mxu0
      %v4002 = vadd.f32 %v3989, %v4001
      %v4003 = vpop.f32.mrf.mxu0
      %4004 = vdwg.mxu0
      %4005 = vmatpush.bf16.msra.mxu0 %v3109
      %4006 = vmatpush.bf16.msra.mxu0 %v3105
      %4007 = vmatpush.bf16.msra.mxu0 %v3101
      %4008 = vmatpush.bf16.msra.mxu0 %v3097
      %4009 = vmatpush.bf16.msra.mxu0 %v3093
      %4010 = vmatpush.bf16.msra.mxu0 %v3089
      %4011 = vmatpush.bf16.msra.mxu0 %v3085
      %4012 = vmatpush.bf16.msra.mxu0 %v3081
      %4013 = vmatmul.bf16.gmra.mxu0 %v943
      %v4014 = vpop.f32.mrf.mxu0
      %v4015 = vadd.f32 %v4002, %v4014
      %v4016 = vpop.f32.mrf.mxu0
      %4017 = vdwg.mxu0
      %4018 = vmatpush.bf16.msra.mxu0 %v3141
      %4019 = vmatpush.bf16.msra.mxu0 %v3137
      %4020 = vmatpush.bf16.msra.mxu0 %v3133
      %4021 = vmatpush.bf16.msra.mxu0 %v3129
      %4022 = vmatpush.bf16.msra.mxu0 %v3125
      %4023 = vmatpush.bf16.msra.mxu0 %v3121
      %4024 = vmatpush.bf16.msra.mxu0 %v3117
      %4025 = vmatpush.bf16.msra.mxu0 %v3113
      %4026 = vmatmul.bf16.gmra.mxu0 %v944
      %v4027 = vpop.f32.mrf.mxu0
      %v4028 = vadd.f32 %v4015, %v4027
      %v4029 = vpop.f32.mrf.mxu0
      %4030 = vdwg.mxu0
      %4031 = vmatpush.bf16.msra.mxu0 %v3173
      %4032 = vmatpush.bf16.msra.mxu0 %v3169
      %4033 = vmatpush.bf16.msra.mxu0 %v3165
      %4034 = vmatpush.bf16.msra.mxu0 %v3161
      %4035 = vmatpush.bf16.msra.mxu0 %v3157
      %4036 = vmatpush.bf16.msra.mxu0 %v3153
      %4037 = vmatpush.bf16.msra.mxu0 %v3149
      %4038 = vmatpush.bf16.msra.mxu0 %v3145
      %4039 = vmatmul.bf16.gmra.mxu0 %v945
      %v4040 = vpop.f32.mrf.mxu0
      %v4041 = vadd.f32 %v4028, %v4040
      %v4042 = vpop.f32.mrf.mxu0
      %4043 = vdwg.mxu0
      %4044 = vmatpush.bf16.msra.mxu0 %v3205
      %4045 = vmatpush.bf16.msra.mxu0 %v3201
      %4046 = vmatpush.bf16.msra.mxu0 %v3197
      %4047 = vmatpush.bf16.msra.mxu0 %v3193
      %4048 = vmatpush.bf16.msra.mxu0 %v3189
      %4049 = vmatpush.bf16.msra.mxu0 %v3185
      %4050 = vmatpush.bf16.msra.mxu0 %v3181
      %4051 = vmatpush.bf16.msra.mxu0 %v3177
      %4052 = vmatmul.bf16.gmra.mxu0 %v946
      %v4053 = vpop.f32.mrf.mxu0
      %v4054 = vadd.f32 %v4041, %v4053
      %v4055 = vpop.f32.mrf.mxu0
      %4056 = vdwg.mxu0
      %4057 = vmatpush.bf16.msra.mxu0 %v3237
      %4058 = vmatpush.bf16.msra.mxu0 %v3233
      %4059 = vmatpush.bf16.msra.mxu0 %v3229
      %4060 = vmatpush.bf16.msra.mxu0 %v3225
      %4061 = vmatpush.bf16.msra.mxu0 %v3221
      %4062 = vmatpush.bf16.msra.mxu0 %v3217
      %4063 = vmatpush.bf16.msra.mxu0 %v3213
      %4064 = vmatpush.bf16.msra.mxu0 %v3209
      %4065 = vmatmul.bf16.gmra.mxu0 %v949
      %v4066 = vpop.f32.mrf.mxu0
      %v4067 = vadd.f32 %v4054, %v4066
      %v4068 = vpop.f32.mrf.mxu0
      %4069 = vdwg.mxu0
      %4070 = vmatpush.bf16.msra.mxu0 %v3269
      %4071 = vmatpush.bf16.msra.mxu0 %v3265
      %4072 = vmatpush.bf16.msra.mxu0 %v3261
      %4073 = vmatpush.bf16.msra.mxu0 %v3257
      %4074 = vmatpush.bf16.msra.mxu0 %v3253
      %4075 = vmatpush.bf16.msra.mxu0 %v3249
      %4076 = vmatpush.bf16.msra.mxu0 %v3245
      %4077 = vmatpush.bf16.msra.mxu0 %v3241
      %4078 = vmatmul.bf16.gmra.mxu0 %v950
      %v4079 = vpop.f32.mrf.mxu0
      %v4080 = vadd.f32 %v4067, %v4079
      %v4081 = vpop.f32.mrf.mxu0
      %4082 = vdwg.mxu0
      %4083 = vmatpush.bf16.msra.mxu0 %v2726
      %4084 = vmatpush.bf16.msra.mxu0 %v2722
      %4085 = vmatpush.bf16.msra.mxu0 %v2718
      %4086 = vmatpush.bf16.msra.mxu0 %v2714
      %4087 = vmatpush.bf16.msra.mxu0 %v2710
      %4088 = vmatpush.bf16.msra.mxu0 %v2706
      %4089 = vmatpush.bf16.msra.mxu0 %v2702
      %4090 = vmatpush.bf16.msra.mxu0 %v2698
      %4091 = vmatmul.bf16.gmra.mxu0 %v929
      %v4092 = vpop.f32.mrf.mxu0
      %v4093 = vadd.f32 0.0, %v4092
      %v4094 = vpop.f32.mrf.mxu0
      %4095 = vdwg.mxu0
      %4096 = vmatpush.bf16.msra.mxu0 %v2758
      %4097 = vmatpush.bf16.msra.mxu0 %v2754
      %4098 = vmatpush.bf16.msra.mxu0 %v2750
      %4099 = vmatpush.bf16.msra.mxu0 %v2746
      %4100 = vmatpush.bf16.msra.mxu0 %v2742
      %4101 = vmatpush.bf16.msra.mxu0 %v2738
      %4102 = vmatpush.bf16.msra.mxu0 %v2734
      %4103 = vmatpush.bf16.msra.mxu0 %v2730
      %4104 = vmatmul.bf16.gmra.mxu0 %v930
      %v4105 = vpop.f32.mrf.mxu0
      %v4106 = vadd.f32 %v4093, %v4105
      %v4107 = vpop.f32.mrf.mxu0
      %4108 = vdwg.mxu0
      %4109 = vmatpush.bf16.msra.mxu0 %v2790
      %4110 = vmatpush.bf16.msra.mxu0 %v2786
      %4111 = vmatpush.bf16.msra.mxu0 %v2782
      %4112 = vmatpush.bf16.msra.mxu0 %v2778
      %4113 = vmatpush.bf16.msra.mxu0 %v2774
      %4114 = vmatpush.bf16.msra.mxu0 %v2770
      %4115 = vmatpush.bf16.msra.mxu0 %v2766
      %4116 = vmatpush.bf16.msra.mxu0 %v2762
      %4117 = vmatmul.bf16.gmra.mxu0 %v931
      %v4118 = vpop.f32.mrf.mxu0
      %v4119 = vadd.f32 %v4106, %v4118
      %v4120 = vpop.f32.mrf.mxu0
      %4121 = vdwg.mxu0
      %4122 = vmatpush.bf16.msra.mxu0 %v2822
      %4123 = vmatpush.bf16.msra.mxu0 %v2818
      %4124 = vmatpush.bf16.msra.mxu0 %v2814
      %4125 = vmatpush.bf16.msra.mxu0 %v2810
      %4126 = vmatpush.bf16.msra.mxu0 %v2806
      %4127 = vmatpush.bf16.msra.mxu0 %v2802
      %4128 = vmatpush.bf16.msra.mxu0 %v2798
      %4129 = vmatpush.bf16.msra.mxu0 %v2794
      %4130 = vmatmul.bf16.gmra.mxu0 %v932
      %v4131 = vpop.f32.mrf.mxu0
      %v4132 = vadd.f32 %v4119, %v4131
      %v4133 = vpop.f32.mrf.mxu0
      %4134 = vdwg.mxu0
      %4135 = vmatpush.bf16.msra.mxu0 %v2854
      %4136 = vmatpush.bf16.msra.mxu0 %v2850
      %4137 = vmatpush.bf16.msra.mxu0 %v2846
      %4138 = vmatpush.bf16.msra.mxu0 %v2842
      %4139 = vmatpush.bf16.msra.mxu0 %v2838
      %4140 = vmatpush.bf16.msra.mxu0 %v2834
      %4141 = vmatpush.bf16.msra.mxu0 %v2830
      %4142 = vmatpush.bf16.msra.mxu0 %v2826
      %4143 = vmatmul.bf16.gmra.mxu0 %v933
      %v4144 = vpop.f32.mrf.mxu0
      %v4145 = vadd.f32 %v4132, %v4144
      %v4146 = vpop.f32.mrf.mxu0
      %4147 = vdwg.mxu0
      %4148 = vmatpush.bf16.msra.mxu0 %v2886
      %4149 = vmatpush.bf16.msra.mxu0 %v2882
      %4150 = vmatpush.bf16.msra.mxu0 %v2878
      %4151 = vmatpush.bf16.msra.mxu0 %v2874
      %4152 = vmatpush.bf16.msra.mxu0 %v2870
      %4153 = vmatpush.bf16.msra.mxu0 %v2866
      %4154 = vmatpush.bf16.msra.mxu0 %v2862
      %4155 = vmatpush.bf16.msra.mxu0 %v2858
      %4156 = vmatmul.bf16.gmra.mxu0 %v934
      %v4157 = vpop.f32.mrf.mxu0
      %v4158 = vadd.f32 %v4145, %v4157
      %v4159 = vpop.f32.mrf.mxu0
      %4160 = vdwg.mxu0
      %4161 = vmatpush.bf16.msra.mxu0 %v2918
      %4162 = vmatpush.bf16.msra.mxu0 %v2914
      %4163 = vmatpush.bf16.msra.mxu0 %v2910
      %4164 = vmatpush.bf16.msra.mxu0 %v2906
      %4165 = vmatpush.bf16.msra.mxu0 %v2902
      %4166 = vmatpush.bf16.msra.mxu0 %v2898
      %4167 = vmatpush.bf16.msra.mxu0 %v2894
      %4168 = vmatpush.bf16.msra.mxu0 %v2890
      %4169 = vmatmul.bf16.gmra.mxu0 %v935
      %v4170 = vpop.f32.mrf.mxu0
      %v4171 = vadd.f32 %v4158, %v4170
      %v4172 = vpop.f32.mrf.mxu0
      %4173 = vdwg.mxu0
      %4174 = vmatpush.bf16.msra.mxu0 %v2950
      %4175 = vmatpush.bf16.msra.mxu0 %v2946
      %4176 = vmatpush.bf16.msra.mxu0 %v2942
      %4177 = vmatpush.bf16.msra.mxu0 %v2938
      %4178 = vmatpush.bf16.msra.mxu0 %v2934
      %4179 = vmatpush.bf16.msra.mxu0 %v2930
      %4180 = vmatpush.bf16.msra.mxu0 %v2926
      %4181 = vmatpush.bf16.msra.mxu0 %v2922
      %4182 = vmatmul.bf16.gmra.mxu0 %v936
      %v4183 = vpop.f32.mrf.mxu0
      %v4184 = vadd.f32 %v4171, %v4183
      %v4185 = vpop.f32.mrf.mxu0
      %4186 = vdwg.mxu0
      %4187 = vmatpush.bf16.msra.mxu0 %v2982
      %4188 = vmatpush.bf16.msra.mxu0 %v2978
      %4189 = vmatpush.bf16.msra.mxu0 %v2974
      %4190 = vmatpush.bf16.msra.mxu0 %v2970
      %4191 = vmatpush.bf16.msra.mxu0 %v2966
      %4192 = vmatpush.bf16.msra.mxu0 %v2962
      %4193 = vmatpush.bf16.msra.mxu0 %v2958
      %4194 = vmatpush.bf16.msra.mxu0 %v2954
      %4195 = vmatmul.bf16.gmra.mxu0 %v939
      %v4196 = vpop.f32.mrf.mxu0
      %v4197 = vadd.f32 %v4184, %v4196
      %v4198 = vpop.f32.mrf.mxu0
      %4199 = vdwg.mxu0
      %4200 = vmatpush.bf16.msra.mxu0 %v3014
      %4201 = vmatpush.bf16.msra.mxu0 %v3010
      %4202 = vmatpush.bf16.msra.mxu0 %v3006
      %4203 = vmatpush.bf16.msra.mxu0 %v3002
      %4204 = vmatpush.bf16.msra.mxu0 %v2998
      %4205 = vmatpush.bf16.msra.mxu0 %v2994
      %4206 = vmatpush.bf16.msra.mxu0 %v2990
      %4207 = vmatpush.bf16.msra.mxu0 %v2986
      %4208 = vmatmul.bf16.gmra.mxu0 %v940
      %v4209 = vpop.f32.mrf.mxu0
      %v4210 = vadd.f32 %v4197, %v4209
      %v4211 = vpop.f32.mrf.mxu0
      %4212 = vdwg.mxu0
      %4213 = vmatpush.bf16.msra.mxu0 %v3046
      %4214 = vmatpush.bf16.msra.mxu0 %v3042
      %4215 = vmatpush.bf16.msra.mxu0 %v3038
      %4216 = vmatpush.bf16.msra.mxu0 %v3034
      %4217 = vmatpush.bf16.msra.mxu0 %v3030
      %4218 = vmatpush.bf16.msra.mxu0 %v3026
      %4219 = vmatpush.bf16.msra.mxu0 %v3022
      %4220 = vmatpush.bf16.msra.mxu0 %v3018
      %4221 = vmatmul.bf16.gmra.mxu0 %v941
      %v4222 = vpop.f32.mrf.mxu0
      %v4223 = vadd.f32 %v4210, %v4222
      %v4224 = vpop.f32.mrf.mxu0
      %4225 = vdwg.mxu0
      %4226 = vmatpush.bf16.msra.mxu0 %v3078
      %4227 = vmatpush.bf16.msra.mxu0 %v3074
      %4228 = vmatpush.bf16.msra.mxu0 %v3070
      %4229 = vmatpush.bf16.msra.mxu0 %v3066
      %4230 = vmatpush.bf16.msra.mxu0 %v3062
      %4231 = vmatpush.bf16.msra.mxu0 %v3058
      %4232 = vmatpush.bf16.msra.mxu0 %v3054
      %4233 = vmatpush.bf16.msra.mxu0 %v3050
      %4234 = vmatmul.bf16.gmra.mxu0 %v942
      %v4235 = vpop.f32.mrf.mxu0
      %v4236 = vadd.f32 %v4223, %v4235
      %v4237 = vpop.f32.mrf.mxu0
      %4238 = vdwg.mxu0
      %4239 = vmatpush.bf16.msra.mxu0 %v3110
      %4240 = vmatpush.bf16.msra.mxu0 %v3106
      %4241 = vmatpush.bf16.msra.mxu0 %v3102
      %4242 = vmatpush.bf16.msra.mxu0 %v3098
      %4243 = vmatpush.bf16.msra.mxu0 %v3094
      %4244 = vmatpush.bf16.msra.mxu0 %v3090
      %4245 = vmatpush.bf16.msra.mxu0 %v3086
      %4246 = vmatpush.bf16.msra.mxu0 %v3082
      %4247 = vmatmul.bf16.gmra.mxu0 %v943
      %v4248 = vpop.f32.mrf.mxu0
      %v4249 = vadd.f32 %v4236, %v4248
      %v4250 = vpop.f32.mrf.mxu0
      %4251 = vdwg.mxu0
      %4252 = vmatpush.bf16.msra.mxu0 %v3142
      %4253 = vmatpush.bf16.msra.mxu0 %v3138
      %4254 = vmatpush.bf16.msra.mxu0 %v3134
      %4255 = vmatpush.bf16.msra.mxu0 %v3130
      %4256 = vmatpush.bf16.msra.mxu0 %v3126
      %4257 = vmatpush.bf16.msra.mxu0 %v3122
      %4258 = vmatpush.bf16.msra.mxu0 %v3118
      %4259 = vmatpush.bf16.msra.mxu0 %v3114
      %4260 = vmatmul.bf16.gmra.mxu0 %v944
      %v4261 = vpop.f32.mrf.mxu0
      %v4262 = vadd.f32 %v4249, %v4261
      %v4263 = vpop.f32.mrf.mxu0
      %4264 = vdwg.mxu0
      %4265 = vmatpush.bf16.msra.mxu0 %v3174
      %4266 = vmatpush.bf16.msra.mxu0 %v3170
      %4267 = vmatpush.bf16.msra.mxu0 %v3166
      %4268 = vmatpush.bf16.msra.mxu0 %v3162
      %4269 = vmatpush.bf16.msra.mxu0 %v3158
      %4270 = vmatpush.bf16.msra.mxu0 %v3154
      %4271 = vmatpush.bf16.msra.mxu0 %v3150
      %4272 = vmatpush.bf16.msra.mxu0 %v3146
      %4273 = vmatmul.bf16.gmra.mxu0 %v945
      %v4274 = vpop.f32.mrf.mxu0
      %v4275 = vadd.f32 %v4262, %v4274
      %v4276 = vpop.f32.mrf.mxu0
      %4277 = vdwg.mxu0
      %4278 = vmatpush.bf16.msra.mxu0 %v3206
      %4279 = vmatpush.bf16.msra.mxu0 %v3202
      %4280 = vmatpush.bf16.msra.mxu0 %v3198
      %4281 = vmatpush.bf16.msra.mxu0 %v3194
      %4282 = vmatpush.bf16.msra.mxu0 %v3190
      %4283 = vmatpush.bf16.msra.mxu0 %v3186
      %4284 = vmatpush.bf16.msra.mxu0 %v3182
      %4285 = vmatpush.bf16.msra.mxu0 %v3178
      %4286 = vmatmul.bf16.gmra.mxu0 %v946
      %v4287 = vpop.f32.mrf.mxu0
      %v4288 = vadd.f32 %v4275, %v4287
      %v4289 = vpop.f32.mrf.mxu0
      %4290 = vdwg.mxu0
      %4291 = vmatpush.bf16.msra.mxu0 %v3238
      %4292 = vmatpush.bf16.msra.mxu0 %v3234
      %4293 = vmatpush.bf16.msra.mxu0 %v3230
      %4294 = vmatpush.bf16.msra.mxu0 %v3226
      %4295 = vmatpush.bf16.msra.mxu0 %v3222
      %4296 = vmatpush.bf16.msra.mxu0 %v3218
      %4297 = vmatpush.bf16.msra.mxu0 %v3214
      %4298 = vmatpush.bf16.msra.mxu0 %v3210
      %4299 = vmatmul.bf16.gmra.mxu0 %v949
      %v4300 = vpop.f32.mrf.mxu0
      %v4301 = vadd.f32 %v4288, %v4300
      %v4302 = vpop.f32.mrf.mxu0
      %4303 = vdwg.mxu0
      %4304 = vmatpush.bf16.msra.mxu0 %v3270
      %4305 = vmatpush.bf16.msra.mxu0 %v3266
      %4306 = vmatpush.bf16.msra.mxu0 %v3262
      %4307 = vmatpush.bf16.msra.mxu0 %v3258
      %4308 = vmatpush.bf16.msra.mxu0 %v3254
      %4309 = vmatpush.bf16.msra.mxu0 %v3250
      %4310 = vmatpush.bf16.msra.mxu0 %v3246
      %4311 = vmatpush.bf16.msra.mxu0 %v3242
      %4312 = vmatmul.bf16.gmra.mxu0 %v950
      %v4313 = vpop.f32.mrf.mxu0
      %v4314 = vadd.f32 %v4301, %v4313
      %v4315 = vpop.f32.mrf.mxu0
      %4316 = vdwg.mxu0
      %4317 = vmatpush.bf16.msra.mxu0 %v2727
      %4318 = vmatpush.bf16.msra.mxu0 %v2723
      %4319 = vmatpush.bf16.msra.mxu0 %v2719
      %4320 = vmatpush.bf16.msra.mxu0 %v2715
      %4321 = vmatpush.bf16.msra.mxu0 %v2711
      %4322 = vmatpush.bf16.msra.mxu0 %v2707
      %4323 = vmatpush.bf16.msra.mxu0 %v2703
      %4324 = vmatpush.bf16.msra.mxu0 %v2699
      %4325 = vmatmul.bf16.gmra.mxu0 %v929
      %v4326 = vpop.f32.mrf.mxu0
      %v4327 = vadd.f32 0.0, %v4326
      %v4328 = vpop.f32.mrf.mxu0
      %4329 = vdwg.mxu0
      %4330 = vmatpush.bf16.msra.mxu0 %v2759
      %4331 = vmatpush.bf16.msra.mxu0 %v2755
      %4332 = vmatpush.bf16.msra.mxu0 %v2751
      %4333 = vmatpush.bf16.msra.mxu0 %v2747
      %4334 = vmatpush.bf16.msra.mxu0 %v2743
      %4335 = vmatpush.bf16.msra.mxu0 %v2739
      %4336 = vmatpush.bf16.msra.mxu0 %v2735
      %4337 = vmatpush.bf16.msra.mxu0 %v2731
      %4338 = vmatmul.bf16.gmra.mxu0 %v930
      %v4339 = vpop.f32.mrf.mxu0
      %v4340 = vadd.f32 %v4327, %v4339
      %v4341 = vpop.f32.mrf.mxu0
      %4342 = vdwg.mxu0
      %4343 = vmatpush.bf16.msra.mxu0 %v2791
      %4344 = vmatpush.bf16.msra.mxu0 %v2787
      %4345 = vmatpush.bf16.msra.mxu0 %v2783
      %4346 = vmatpush.bf16.msra.mxu0 %v2779
      %4347 = vmatpush.bf16.msra.mxu0 %v2775
      %4348 = vmatpush.bf16.msra.mxu0 %v2771
      %4349 = vmatpush.bf16.msra.mxu0 %v2767
      %4350 = vmatpush.bf16.msra.mxu0 %v2763
      %4351 = vmatmul.bf16.gmra.mxu0 %v931
      %v4352 = vpop.f32.mrf.mxu0
      %v4353 = vadd.f32 %v4340, %v4352
      %v4354 = vpop.f32.mrf.mxu0
      %4355 = vdwg.mxu0
      %4356 = vmatpush.bf16.msra.mxu0 %v2823
      %4357 = vmatpush.bf16.msra.mxu0 %v2819
      %4358 = vmatpush.bf16.msra.mxu0 %v2815
      %4359 = vmatpush.bf16.msra.mxu0 %v2811
      %4360 = vmatpush.bf16.msra.mxu0 %v2807
      %4361 = vmatpush.bf16.msra.mxu0 %v2803
      %4362 = vmatpush.bf16.msra.mxu0 %v2799
      %4363 = vmatpush.bf16.msra.mxu0 %v2795
      %4364 = vmatmul.bf16.gmra.mxu0 %v932
      %v4365 = vpop.f32.mrf.mxu0
      %v4366 = vadd.f32 %v4353, %v4365
      %v4367 = vpop.f32.mrf.mxu0
      %4368 = vdwg.mxu0
      %4369 = vmatpush.bf16.msra.mxu0 %v2855
      %4370 = vmatpush.bf16.msra.mxu0 %v2851
      %4371 = vmatpush.bf16.msra.mxu0 %v2847
      %4372 = vmatpush.bf16.msra.mxu0 %v2843
      %4373 = vmatpush.bf16.msra.mxu0 %v2839
      %4374 = vmatpush.bf16.msra.mxu0 %v2835
      %4375 = vmatpush.bf16.msra.mxu0 %v2831
      %4376 = vmatpush.bf16.msra.mxu0 %v2827
      %4377 = vmatmul.bf16.gmra.mxu0 %v933
      %v4378 = vpop.f32.mrf.mxu0
      %v4379 = vadd.f32 %v4366, %v4378
      %v4380 = vpop.f32.mrf.mxu0
      %4381 = vdwg.mxu0
      %4382 = vmatpush.bf16.msra.mxu0 %v2887
      %4383 = vmatpush.bf16.msra.mxu0 %v2883
      %4384 = vmatpush.bf16.msra.mxu0 %v2879
      %4385 = vmatpush.bf16.msra.mxu0 %v2875
      %4386 = vmatpush.bf16.msra.mxu0 %v2871
      %4387 = vmatpush.bf16.msra.mxu0 %v2867
      %4388 = vmatpush.bf16.msra.mxu0 %v2863
      %4389 = vmatpush.bf16.msra.mxu0 %v2859
      %4390 = vmatmul.bf16.gmra.mxu0 %v934
      %v4391 = vpop.f32.mrf.mxu0
      %v4392 = vadd.f32 %v4379, %v4391
      %v4393 = vpop.f32.mrf.mxu0
      %4394 = vdwg.mxu0
      %4395 = vmatpush.bf16.msra.mxu0 %v2919
      %4396 = vmatpush.bf16.msra.mxu0 %v2915
      %4397 = vmatpush.bf16.msra.mxu0 %v2911
      %4398 = vmatpush.bf16.msra.mxu0 %v2907
      %4399 = vmatpush.bf16.msra.mxu0 %v2903
      %4400 = vmatpush.bf16.msra.mxu0 %v2899
      %4401 = vmatpush.bf16.msra.mxu0 %v2895
      %4402 = vmatpush.bf16.msra.mxu0 %v2891
      %4403 = vmatmul.bf16.gmra.mxu0 %v935
      %v4404 = vpop.f32.mrf.mxu0
      %v4405 = vadd.f32 %v4392, %v4404
      %v4406 = vpop.f32.mrf.mxu0
      %4407 = vdwg.mxu0
      %4408 = vmatpush.bf16.msra.mxu0 %v2951
      %4409 = vmatpush.bf16.msra.mxu0 %v2947
      %4410 = vmatpush.bf16.msra.mxu0 %v2943
      %4411 = vmatpush.bf16.msra.mxu0 %v2939
      %4412 = vmatpush.bf16.msra.mxu0 %v2935
      %4413 = vmatpush.bf16.msra.mxu0 %v2931
      %4414 = vmatpush.bf16.msra.mxu0 %v2927
      %4415 = vmatpush.bf16.msra.mxu0 %v2923
      %4416 = vmatmul.bf16.gmra.mxu0 %v936
      %v4417 = vpop.f32.mrf.mxu0
      %v4418 = vadd.f32 %v4405, %v4417
      %v4419 = vpop.f32.mrf.mxu0
      %4420 = vdwg.mxu0
      %4421 = vmatpush.bf16.msra.mxu0 %v2983
      %4422 = vmatpush.bf16.msra.mxu0 %v2979
      %4423 = vmatpush.bf16.msra.mxu0 %v2975
      %4424 = vmatpush.bf16.msra.mxu0 %v2971
      %4425 = vmatpush.bf16.msra.mxu0 %v2967
      %4426 = vmatpush.bf16.msra.mxu0 %v2963
      %4427 = vmatpush.bf16.msra.mxu0 %v2959
      %4428 = vmatpush.bf16.msra.mxu0 %v2955
      %4429 = vmatmul.bf16.gmra.mxu0 %v939
      %v4430 = vpop.f32.mrf.mxu0
      %v4431 = vadd.f32 %v4418, %v4430
      %v4432 = vpop.f32.mrf.mxu0
      %4433 = vdwg.mxu0
      %4434 = vmatpush.bf16.msra.mxu0 %v3015
      %4435 = vmatpush.bf16.msra.mxu0 %v3011
      %4436 = vmatpush.bf16.msra.mxu0 %v3007
      %4437 = vmatpush.bf16.msra.mxu0 %v3003
      %4438 = vmatpush.bf16.msra.mxu0 %v2999
      %4439 = vmatpush.bf16.msra.mxu0 %v2995
      %4440 = vmatpush.bf16.msra.mxu0 %v2991
      %4441 = vmatpush.bf16.msra.mxu0 %v2987
      %4442 = vmatmul.bf16.gmra.mxu0 %v940
      %v4443 = vpop.f32.mrf.mxu0
      %v4444 = vadd.f32 %v4431, %v4443
      %v4445 = vpop.f32.mrf.mxu0
      %4446 = vdwg.mxu0
      %4447 = vmatpush.bf16.msra.mxu0 %v3047
      %4448 = vmatpush.bf16.msra.mxu0 %v3043
      %4449 = vmatpush.bf16.msra.mxu0 %v3039
      %4450 = vmatpush.bf16.msra.mxu0 %v3035
      %4451 = vmatpush.bf16.msra.mxu0 %v3031
      %4452 = vmatpush.bf16.msra.mxu0 %v3027
      %4453 = vmatpush.bf16.msra.mxu0 %v3023
      %4454 = vmatpush.bf16.msra.mxu0 %v3019
      %4455 = vmatmul.bf16.gmra.mxu0 %v941
      %v4456 = vpop.f32.mrf.mxu0
      %v4457 = vadd.f32 %v4444, %v4456
      %v4458 = vpop.f32.mrf.mxu0
      %4459 = vdwg.mxu0
      %4460 = vmatpush.bf16.msra.mxu0 %v3079
      %4461 = vmatpush.bf16.msra.mxu0 %v3075
      %4462 = vmatpush.bf16.msra.mxu0 %v3071
      %4463 = vmatpush.bf16.msra.mxu0 %v3067
      %4464 = vmatpush.bf16.msra.mxu0 %v3063
      %4465 = vmatpush.bf16.msra.mxu0 %v3059
      %4466 = vmatpush.bf16.msra.mxu0 %v3055
      %4467 = vmatpush.bf16.msra.mxu0 %v3051
      %4468 = vmatmul.bf16.gmra.mxu0 %v942
      %v4469 = vpop.f32.mrf.mxu0
      %v4470 = vadd.f32 %v4457, %v4469
      %v4471 = vpop.f32.mrf.mxu0
      %4472 = vdwg.mxu0
      %4473 = vmatpush.bf16.msra.mxu0 %v3111
      %4474 = vmatpush.bf16.msra.mxu0 %v3107
      %4475 = vmatpush.bf16.msra.mxu0 %v3103
      %4476 = vmatpush.bf16.msra.mxu0 %v3099
      %4477 = vmatpush.bf16.msra.mxu0 %v3095
      %4478 = vmatpush.bf16.msra.mxu0 %v3091
      %4479 = vmatpush.bf16.msra.mxu0 %v3087
      %4480 = vmatpush.bf16.msra.mxu0 %v3083
      %4481 = vmatmul.bf16.gmra.mxu0 %v943
      %v4482 = vpop.f32.mrf.mxu0
      %v4483 = vadd.f32 %v4470, %v4482
      %v4484 = vpop.f32.mrf.mxu0
      %4485 = vdwg.mxu0
      %4486 = vmatpush.bf16.msra.mxu0 %v3143
      %4487 = vmatpush.bf16.msra.mxu0 %v3139
      %4488 = vmatpush.bf16.msra.mxu0 %v3135
      %4489 = vmatpush.bf16.msra.mxu0 %v3131
      %4490 = vmatpush.bf16.msra.mxu0 %v3127
      %4491 = vmatpush.bf16.msra.mxu0 %v3123
      %4492 = vmatpush.bf16.msra.mxu0 %v3119
      %4493 = vmatpush.bf16.msra.mxu0 %v3115
      %4494 = vmatmul.bf16.gmra.mxu0 %v944
      %v4495 = vpop.f32.mrf.mxu0
      %v4496 = vadd.f32 %v4483, %v4495
      %v4497 = vpop.f32.mrf.mxu0
      %4498 = vdwg.mxu0
      %4499 = vmatpush.bf16.msra.mxu0 %v3175
      %4500 = vmatpush.bf16.msra.mxu0 %v3171
      %4501 = vmatpush.bf16.msra.mxu0 %v3167
      %4502 = vmatpush.bf16.msra.mxu0 %v3163
      %4503 = vmatpush.bf16.msra.mxu0 %v3159
      %4504 = vmatpush.bf16.msra.mxu0 %v3155
      %4505 = vmatpush.bf16.msra.mxu0 %v3151
      %4506 = vmatpush.bf16.msra.mxu0 %v3147
      %4507 = vmatmul.bf16.gmra.mxu0 %v945
      %v4508 = vpop.f32.mrf.mxu0
      %v4509 = vadd.f32 %v4496, %v4508
      %v4510 = vpop.f32.mrf.mxu0
      %4511 = vdwg.mxu0
      %4512 = vmatpush.bf16.msra.mxu0 %v3207
      %4513 = vmatpush.bf16.msra.mxu0 %v3203
      %4514 = vmatpush.bf16.msra.mxu0 %v3199
      %4515 = vmatpush.bf16.msra.mxu0 %v3195
      %4516 = vmatpush.bf16.msra.mxu0 %v3191
      %4517 = vmatpush.bf16.msra.mxu0 %v3187
      %4518 = vmatpush.bf16.msra.mxu0 %v3183
      %4519 = vmatpush.bf16.msra.mxu0 %v3179
      %4520 = vmatmul.bf16.gmra.mxu0 %v946
      %v4521 = vpop.f32.mrf.mxu0
      %v4522 = vadd.f32 %v4509, %v4521
      %v4523 = vpop.f32.mrf.mxu0
      %4524 = vdwg.mxu0
      %4525 = vmatpush.bf16.msra.mxu0 %v3239
      %4526 = vmatpush.bf16.msra.mxu0 %v3235
      %4527 = vmatpush.bf16.msra.mxu0 %v3231
      %4528 = vmatpush.bf16.msra.mxu0 %v3227
      %4529 = vmatpush.bf16.msra.mxu0 %v3223
      %4530 = vmatpush.bf16.msra.mxu0 %v3219
      %4531 = vmatpush.bf16.msra.mxu0 %v3215
      %4532 = vmatpush.bf16.msra.mxu0 %v3211
      %4533 = vmatmul.bf16.gmra.mxu0 %v949
      %v4534 = vpop.f32.mrf.mxu0
      %v4535 = vadd.f32 %v4522, %v4534
      %v4536 = vpop.f32.mrf.mxu0
      %4537 = vdwg.mxu0
      %4538 = vmatpush.bf16.msra.mxu0 %v3271
      %4539 = vmatpush.bf16.msra.mxu0 %v3267
      %4540 = vmatpush.bf16.msra.mxu0 %v3263
      %4541 = vmatpush.bf16.msra.mxu0 %v3259
      %4542 = vmatpush.bf16.msra.mxu0 %v3255
      %4543 = vmatpush.bf16.msra.mxu0 %v3251
      %4544 = vmatpush.bf16.msra.mxu0 %v3247
      %4545 = vmatpush.bf16.msra.mxu0 %v3243
      %4546 = vmatmul.bf16.gmra.mxu0 %v950
      %v4547 = vpop.f32.mrf.mxu0
      %v4548 = vadd.f32 %v4535, %v4547
      %v4549 = vpop.f32.mrf.mxu0
      %4550 = vdwg.mxu0
      %4551 = vmatpush.bf16.msra.mxu0 %v2728
      %4552 = vmatpush.bf16.msra.mxu0 %v2724
      %4553 = vmatpush.bf16.msra.mxu0 %v2720
      %4554 = vmatpush.bf16.msra.mxu0 %v2716
      %4555 = vmatpush.bf16.msra.mxu0 %v2712
      %4556 = vmatpush.bf16.msra.mxu0 %v2708
      %4557 = vmatpush.bf16.msra.mxu0 %v2704
      %4558 = vmatpush.bf16.msra.mxu0 %v2700
      %4559 = vmatmul.bf16.gmra.mxu0 %v929
      %v4560 = vpop.f32.mrf.mxu0
      %v4561 = vadd.f32 0.0, %v4560
      %v4562 = vpop.f32.mrf.mxu0
      %4563 = vdwg.mxu0
      %4564 = vmatpush.bf16.msra.mxu0 %v2760
      %4565 = vmatpush.bf16.msra.mxu0 %v2756
      %4566 = vmatpush.bf16.msra.mxu0 %v2752
      %4567 = vmatpush.bf16.msra.mxu0 %v2748
      %4568 = vmatpush.bf16.msra.mxu0 %v2744
      %4569 = vmatpush.bf16.msra.mxu0 %v2740
      %4570 = vmatpush.bf16.msra.mxu0 %v2736
      %4571 = vmatpush.bf16.msra.mxu0 %v2732
      %4572 = vmatmul.bf16.gmra.mxu0 %v930
      %v4573 = vpop.f32.mrf.mxu0
      %v4574 = vadd.f32 %v4561, %v4573
      %v4575 = vpop.f32.mrf.mxu0
      %4576 = vdwg.mxu0
      %4577 = vmatpush.bf16.msra.mxu0 %v2792
      %4578 = vmatpush.bf16.msra.mxu0 %v2788
      %4579 = vmatpush.bf16.msra.mxu0 %v2784
      %4580 = vmatpush.bf16.msra.mxu0 %v2780
      %4581 = vmatpush.bf16.msra.mxu0 %v2776
      %4582 = vmatpush.bf16.msra.mxu0 %v2772
      %4583 = vmatpush.bf16.msra.mxu0 %v2768
      %4584 = vmatpush.bf16.msra.mxu0 %v2764
      %4585 = vmatmul.bf16.gmra.mxu0 %v931
      %v4586 = vpop.f32.mrf.mxu0
      %v4587 = vadd.f32 %v4574, %v4586
      %v4588 = vpop.f32.mrf.mxu0
      %4589 = vdwg.mxu0
      %4590 = vmatpush.bf16.msra.mxu0 %v2824
      %4591 = vmatpush.bf16.msra.mxu0 %v2820
      %4592 = vmatpush.bf16.msra.mxu0 %v2816
      %4593 = vmatpush.bf16.msra.mxu0 %v2812
      %4594 = vmatpush.bf16.msra.mxu0 %v2808
      %4595 = vmatpush.bf16.msra.mxu0 %v2804
      %4596 = vmatpush.bf16.msra.mxu0 %v2800
      %4597 = vmatpush.bf16.msra.mxu0 %v2796
      %4598 = vmatmul.bf16.gmra.mxu0 %v932
      %v4599 = vpop.f32.mrf.mxu0
      %v4600 = vadd.f32 %v4587, %v4599
      %v4601 = vpop.f32.mrf.mxu0
      %4602 = vdwg.mxu0
      %4603 = vmatpush.bf16.msra.mxu0 %v2856
      %4604 = vmatpush.bf16.msra.mxu0 %v2852
      %4605 = vmatpush.bf16.msra.mxu0 %v2848
      %4606 = vmatpush.bf16.msra.mxu0 %v2844
      %4607 = vmatpush.bf16.msra.mxu0 %v2840
      %4608 = vmatpush.bf16.msra.mxu0 %v2836
      %4609 = vmatpush.bf16.msra.mxu0 %v2832
      %4610 = vmatpush.bf16.msra.mxu0 %v2828
      %4611 = vmatmul.bf16.gmra.mxu0 %v933
      %v4612 = vpop.f32.mrf.mxu0
      %v4613 = vadd.f32 %v4600, %v4612
      %v4614 = vpop.f32.mrf.mxu0
      %4615 = vdwg.mxu0
      %4616 = vmatpush.bf16.msra.mxu0 %v2888
      %4617 = vmatpush.bf16.msra.mxu0 %v2884
      %4618 = vmatpush.bf16.msra.mxu0 %v2880
      %4619 = vmatpush.bf16.msra.mxu0 %v2876
      %4620 = vmatpush.bf16.msra.mxu0 %v2872
      %4621 = vmatpush.bf16.msra.mxu0 %v2868
      %4622 = vmatpush.bf16.msra.mxu0 %v2864
      %4623 = vmatpush.bf16.msra.mxu0 %v2860
      %4624 = vmatmul.bf16.gmra.mxu0 %v934
      %v4625 = vpop.f32.mrf.mxu0
      %v4626 = vadd.f32 %v4613, %v4625
      %v4627 = vpop.f32.mrf.mxu0
      %4628 = vdwg.mxu0
      %4629 = vmatpush.bf16.msra.mxu0 %v2920
      %4630 = vmatpush.bf16.msra.mxu0 %v2916
      %4631 = vmatpush.bf16.msra.mxu0 %v2912
      %4632 = vmatpush.bf16.msra.mxu0 %v2908
      %4633 = vmatpush.bf16.msra.mxu0 %v2904
      %4634 = vmatpush.bf16.msra.mxu0 %v2900
      %4635 = vmatpush.bf16.msra.mxu0 %v2896
      %4636 = vmatpush.bf16.msra.mxu0 %v2892
      %4637 = vmatmul.bf16.gmra.mxu0 %v935
      %v4638 = vpop.f32.mrf.mxu0
      %v4639 = vadd.f32 %v4626, %v4638
      %v4640 = vpop.f32.mrf.mxu0
      %4641 = vdwg.mxu0
      %4642 = vmatpush.bf16.msra.mxu0 %v2952
      %4643 = vmatpush.bf16.msra.mxu0 %v2948
      %4644 = vmatpush.bf16.msra.mxu0 %v2944
      %4645 = vmatpush.bf16.msra.mxu0 %v2940
      %4646 = vmatpush.bf16.msra.mxu0 %v2936
      %4647 = vmatpush.bf16.msra.mxu0 %v2932
      %4648 = vmatpush.bf16.msra.mxu0 %v2928
      %4649 = vmatpush.bf16.msra.mxu0 %v2924
      %4650 = vmatmul.bf16.gmra.mxu0 %v936
      %v4651 = vpop.f32.mrf.mxu0
      %v4652 = vadd.f32 %v4639, %v4651
      %v4653 = vpop.f32.mrf.mxu0
      %4654 = vdwg.mxu0
      %4655 = vmatpush.bf16.msra.mxu0 %v2984
      %4656 = vmatpush.bf16.msra.mxu0 %v2980
      %4657 = vmatpush.bf16.msra.mxu0 %v2976
      %4658 = vmatpush.bf16.msra.mxu0 %v2972
      %4659 = vmatpush.bf16.msra.mxu0 %v2968
      %4660 = vmatpush.bf16.msra.mxu0 %v2964
      %4661 = vmatpush.bf16.msra.mxu0 %v2960
      %4662 = vmatpush.bf16.msra.mxu0 %v2956
      %4663 = vmatmul.bf16.gmra.mxu0 %v939
      %v4664 = vpop.f32.mrf.mxu0
      %v4665 = vadd.f32 %v4652, %v4664
      %v4666 = vpop.f32.mrf.mxu0
      %4667 = vdwg.mxu0
      %4668 = vmatpush.bf16.msra.mxu0 %v3016
      %4669 = vmatpush.bf16.msra.mxu0 %v3012
      %4670 = vmatpush.bf16.msra.mxu0 %v3008
      %4671 = vmatpush.bf16.msra.mxu0 %v3004
      %4672 = vmatpush.bf16.msra.mxu0 %v3000
      %4673 = vmatpush.bf16.msra.mxu0 %v2996
      %4674 = vmatpush.bf16.msra.mxu0 %v2992
      %4675 = vmatpush.bf16.msra.mxu0 %v2988
      %4676 = vmatmul.bf16.gmra.mxu0 %v940
      %v4677 = vpop.f32.mrf.mxu0
      %v4678 = vadd.f32 %v4665, %v4677
      %v4679 = vpop.f32.mrf.mxu0
      %4680 = vdwg.mxu0
      %4681 = vmatpush.bf16.msra.mxu0 %v3048
      %4682 = vmatpush.bf16.msra.mxu0 %v3044
      %4683 = vmatpush.bf16.msra.mxu0 %v3040
      %4684 = vmatpush.bf16.msra.mxu0 %v3036
      %4685 = vmatpush.bf16.msra.mxu0 %v3032
      %4686 = vmatpush.bf16.msra.mxu0 %v3028
      %4687 = vmatpush.bf16.msra.mxu0 %v3024
      %4688 = vmatpush.bf16.msra.mxu0 %v3020
      %4689 = vmatmul.bf16.gmra.mxu0 %v941
      %v4690 = vpop.f32.mrf.mxu0
      %v4691 = vadd.f32 %v4678, %v4690
      %v4692 = vpop.f32.mrf.mxu0
      %4693 = vdwg.mxu0
      %4694 = vmatpush.bf16.msra.mxu0 %v3080
      %4695 = vmatpush.bf16.msra.mxu0 %v3076
      %4696 = vmatpush.bf16.msra.mxu0 %v3072
      %4697 = vmatpush.bf16.msra.mxu0 %v3068
      %4698 = vmatpush.bf16.msra.mxu0 %v3064
      %4699 = vmatpush.bf16.msra.mxu0 %v3060
      %4700 = vmatpush.bf16.msra.mxu0 %v3056
      %4701 = vmatpush.bf16.msra.mxu0 %v3052
      %4702 = vmatmul.bf16.gmra.mxu0 %v942
      %v4703 = vpop.f32.mrf.mxu0
      %v4704 = vadd.f32 %v4691, %v4703
      %v4705 = vpop.f32.mrf.mxu0
      %4706 = vdwg.mxu0
      %4707 = vmatpush.bf16.msra.mxu0 %v3112
      %4708 = vmatpush.bf16.msra.mxu0 %v3108
      %4709 = vmatpush.bf16.msra.mxu0 %v3104
      %4710 = vmatpush.bf16.msra.mxu0 %v3100
      %4711 = vmatpush.bf16.msra.mxu0 %v3096
      %4712 = vmatpush.bf16.msra.mxu0 %v3092
      %4713 = vmatpush.bf16.msra.mxu0 %v3088
      %4714 = vmatpush.bf16.msra.mxu0 %v3084
      %4715 = vmatmul.bf16.gmra.mxu0 %v943
      %v4716 = vpop.f32.mrf.mxu0
      %v4717 = vadd.f32 %v4704, %v4716
      %v4718 = vpop.f32.mrf.mxu0
      %4719 = vdwg.mxu0
      %4720 = vmatpush.bf16.msra.mxu0 %v3144
      %4721 = vmatpush.bf16.msra.mxu0 %v3140
      %4722 = vmatpush.bf16.msra.mxu0 %v3136
      %4723 = vmatpush.bf16.msra.mxu0 %v3132
      %4724 = vmatpush.bf16.msra.mxu0 %v3128
      %4725 = vmatpush.bf16.msra.mxu0 %v3124
      %4726 = vmatpush.bf16.msra.mxu0 %v3120
      %4727 = vmatpush.bf16.msra.mxu0 %v3116
      %4728 = vmatmul.bf16.gmra.mxu0 %v944
      %v4729 = vpop.f32.mrf.mxu0
      %v4730 = vadd.f32 %v4717, %v4729
      %v4731 = vpop.f32.mrf.mxu0
      %4732 = vdwg.mxu0
      %4733 = vmatpush.bf16.msra.mxu0 %v3176
      %4734 = vmatpush.bf16.msra.mxu0 %v3172
      %4735 = vmatpush.bf16.msra.mxu0 %v3168
      %4736 = vmatpush.bf16.msra.mxu0 %v3164
      %4737 = vmatpush.bf16.msra.mxu0 %v3160
      %4738 = vmatpush.bf16.msra.mxu0 %v3156
      %4739 = vmatpush.bf16.msra.mxu0 %v3152
      %4740 = vmatpush.bf16.msra.mxu0 %v3148
      %4741 = vmatmul.bf16.gmra.mxu0 %v945
      %v4742 = vpop.f32.mrf.mxu0
      %v4743 = vadd.f32 %v4730, %v4742
      %v4744 = vpop.f32.mrf.mxu0
      %4745 = vdwg.mxu0
      %4746 = vmatpush.bf16.msra.mxu0 %v3208
      %4747 = vmatpush.bf16.msra.mxu0 %v3204
      %4748 = vmatpush.bf16.msra.mxu0 %v3200
      %4749 = vmatpush.bf16.msra.mxu0 %v3196
      %4750 = vmatpush.bf16.msra.mxu0 %v3192
      %4751 = vmatpush.bf16.msra.mxu0 %v3188
      %4752 = vmatpush.bf16.msra.mxu0 %v3184
      %4753 = vmatpush.bf16.msra.mxu0 %v3180
      %4754 = vmatmul.bf16.gmra.mxu0 %v946
      %v4755 = vpop.f32.mrf.mxu0
      %v4756 = vadd.f32 %v4743, %v4755
      %v4757 = vpop.f32.mrf.mxu0
      %4758 = vdwg.mxu0
      %4759 = vmatpush.bf16.msra.mxu0 %v3240
      %4760 = vmatpush.bf16.msra.mxu0 %v3236
      %4761 = vmatpush.bf16.msra.mxu0 %v3232
      %4762 = vmatpush.bf16.msra.mxu0 %v3228
      %4763 = vmatpush.bf16.msra.mxu0 %v3224
      %4764 = vmatpush.bf16.msra.mxu0 %v3220
      %4765 = vmatpush.bf16.msra.mxu0 %v3216
      %4766 = vmatpush.bf16.msra.mxu0 %v3212
      %4767 = vmatmul.bf16.gmra.mxu0 %v949
      %v4768 = vpop.f32.mrf.mxu0
      %v4769 = vadd.f32 %v4756, %v4768
      %v4770 = vpop.f32.mrf.mxu0
      %4771 = vdwg.mxu0
      %4772 = vmatpush.bf16.msra.mxu0 %v3272
      %4773 = vmatpush.bf16.msra.mxu0 %v3268
      %4774 = vmatpush.bf16.msra.mxu0 %v3264
      %4775 = vmatpush.bf16.msra.mxu0 %v3260
      %4776 = vmatpush.bf16.msra.mxu0 %v3256
      %4777 = vmatpush.bf16.msra.mxu0 %v3252
      %4778 = vmatpush.bf16.msra.mxu0 %v3248
      %4779 = vmatpush.bf16.msra.mxu0 %v3244
      %4780 = vmatmul.bf16.gmra.mxu0 %v950
      %v4781 = vpop.f32.mrf.mxu0
      %v4782 = vadd.f32 %v4769, %v4781
      %v4783 = vpop.f32.mrf.mxu0
      %4784 = vdwg.mxu0
      %v4789 = vrot.slane %v4314, 6
      %v4790 = vrot.slane %v4548, 4
      %v4791 = vrot.slane %v4782, 2
      %vm4792 = vcmask 1041408
      %v4793 = vsel %vm4792, %v4080, %v4789
      %vm4794 = vcmask 1045508
      %v4795 = vsel %vm4794, %v4790, %v4791
      %vm4796 = vcmask 1043456
      %v4797 = vsel %vm4796, %v4793, %v4795
      %v4799 = vadd.f32 %v347, %v4797
      %4800 = vst [vmem:[#allocation2] sm:$0xff] %v4799
      %p4801 = scmp.eq.s32.totalorder %s20, 3
      // Predicated region
      $region61: #{ppo_forward.7} parent=55 // pred_check
        %p4802 = pneg %p4801
      $region62: #{ppo_forward.7} parent=55 // pred_check_branch
        %4804 = sbr.rel (%p4802) target = $region64
      $region63: #{ppo_forward.7} parent=55 // pred_region
        %v4805 = vld [vmem:[#allocation2] sm:$0xff]
        %v4806 = vld [vmem:[%s1] sm:$0x3]
        %v4807 = vld [vmem:[%s3] sm:$0xff]
        %v4808 = vld [vmem:[%s3 + $0x8] sm:$0xff]
        %v4809 = vld [vmem:[%s3 + $0x10] sm:$0xff]
        %v4810 = vld [vmem:[%s3 + $0x18] sm:$0xff]
        %vm4811 = vcmask 64512
        %v4813 = vsel %vm4811, %v4806, 0
        %4815 = vmatpush.msra.mxu0 0.0
        %4816 = vmatpush.msra.mxu0 0.0
        %4817 = vmatpush.msra.mxu0 0.0
        %4818 = vmatpush.msra.mxu0 0.0
        %4819 = vmatpush.msra.mxu0 0.0
        %4820 = vmatpush.msra.mxu0 0.0
        %4821 = vmatpush.msra.mxu0 0.0
        %4822 = vmatpush.msra.mxu0 0.0
        %4823 = vmatpush.msra.mxu0 0.0
        %4824 = vmatpush.msra.mxu0 0.0
        %4825 = vmatpush.msra.mxu0 0.0
        %4826 = vmatpush.msra.mxu0 0.0
        %4827 = vmatpush.msra.mxu0 0.0
        %4828 = vmatpush.msra.mxu0 0.0
        %4829 = vmatpush.msra.mxu0 0.0
        %4830 = vmatpush.msra.mxu0 %v4807
        %4831 = vmatmul.f32.gmra.mxu0 %v4813
        %v4832 = vpop.f32.mrf.mxu0
        %v4833 = vadd.f32 0.0, %v4832
        %4834 = vdwg.mxu0
        %4835 = vmatpush.msra.mxu0 0.0
        %4836 = vmatpush.msra.mxu0 0.0
        %4837 = vmatpush.msra.mxu0 0.0
        %4838 = vmatpush.msra.mxu0 0.0
        %4839 = vmatpush.msra.mxu0 0.0
        %4840 = vmatpush.msra.mxu0 0.0
        %4841 = vmatpush.msra.mxu0 0.0
        %4842 = vmatpush.msra.mxu0 0.0
        %4843 = vmatpush.msra.mxu0 0.0
        %4844 = vmatpush.msra.mxu0 0.0
        %4845 = vmatpush.msra.mxu0 0.0
        %4846 = vmatpush.msra.mxu0 0.0
        %4847 = vmatpush.msra.mxu0 0.0
        %4848 = vmatpush.msra.mxu0 0.0
        %4849 = vmatpush.msra.mxu0 0.0
        %4850 = vmatpush.msra.mxu0 %v4808
        %4851 = vmatmul.f32.gmra.mxu0 %v4813
        %v4852 = vpop.f32.mrf.mxu0
        %v4853 = vadd.f32 0.0, %v4852
        %4854 = vdwg.mxu0
        %4855 = vmatpush.msra.mxu0 0.0
        %4856 = vmatpush.msra.mxu0 0.0
        %4857 = vmatpush.msra.mxu0 0.0
        %4858 = vmatpush.msra.mxu0 0.0
        %4859 = vmatpush.msra.mxu0 0.0
        %4860 = vmatpush.msra.mxu0 0.0
        %4861 = vmatpush.msra.mxu0 0.0
        %4862 = vmatpush.msra.mxu0 0.0
        %4863 = vmatpush.msra.mxu0 0.0
        %4864 = vmatpush.msra.mxu0 0.0
        %4865 = vmatpush.msra.mxu0 0.0
        %4866 = vmatpush.msra.mxu0 0.0
        %4867 = vmatpush.msra.mxu0 0.0
        %4868 = vmatpush.msra.mxu0 0.0
        %4869 = vmatpush.msra.mxu0 0.0
        %4870 = vmatpush.msra.mxu0 %v4809
        %4871 = vmatmul.f32.gmra.mxu0 %v4813
        %v4872 = vpop.f32.mrf.mxu0
        %v4873 = vadd.f32 0.0, %v4872
        %4874 = vdwg.mxu0
        %4875 = vmatpush.msra.mxu0 0.0
        %4876 = vmatpush.msra.mxu0 0.0
        %4877 = vmatpush.msra.mxu0 0.0
        %4878 = vmatpush.msra.mxu0 0.0
        %4879 = vmatpush.msra.mxu0 0.0
        %4880 = vmatpush.msra.mxu0 0.0
        %4881 = vmatpush.msra.mxu0 0.0
        %4882 = vmatpush.msra.mxu0 0.0
        %4883 = vmatpush.msra.mxu0 0.0
        %4884 = vmatpush.msra.mxu0 0.0
        %4885 = vmatpush.msra.mxu0 0.0
        %4886 = vmatpush.msra.mxu0 0.0
        %4887 = vmatpush.msra.mxu0 0.0
        %4888 = vmatpush.msra.mxu0 0.0
        %4889 = vmatpush.msra.mxu0 0.0
        %4890 = vmatpush.msra.mxu0 %v4810
        %4891 = vmatmul.f32.gmra.mxu0 %v4813
        %v4892 = vpop.f32.mrf.mxu0
        %v4893 = vadd.f32 0.0, %v4892
        %4894 = vdwg.mxu0
        %v4899 = vrot.slane %v4853, 6
        %v4900 = vrot.slane %v4873, 4
        %v4901 = vrot.slane %v4893, 2
        %v4902 = vsel %vm4792, %v4833, %v4899
        %v4903 = vsel %vm4794, %v4900, %v4901
        %v4904 = vsel %vm4796, %v4902, %v4903
        %v4906 = vadd.f32 %v4805, %v4904
        %v4907 = vld [vmem:[%s4] sm:$0xf]
        %v4909 = vperm.slane %v4907, 0
        %v4910 = vperm.slane %v4907, 1
        %v4911 = vperm.slane %v4907, 2
        %v4912 = vperm.slane %v4907, 3
        %v4913 = vrot.slane %v4910, 6
        %v4914 = vrot.slane %v4911, 4
        %v4915 = vrot.slane %v4912, 2
        %v4916 = vsel %vm4792, %v4909, %v4913
        %v4917 = vsel %vm4794, %v4914, %v4915
        %v4918 = vsel %vm4796, %v4916, %v4917
        %v4920 = vadd.f32 %v4906, %v4918
        %v4921 = vmax.f32 %v4920, 0.0
        %4923 = vst [vmem:[#allocation1] ss:$4 sm:$0xff] %v4921
        %v4924 = vld.sshfl [vmem:[#allocation1] sm:$0xff pattern:$0x73625140]
        %v4925 = vld.sshfl [vmem:[#allocation1 + $0x8] sm:$0xff pattern:$0x73625140]
        %v4926 = vld.sshfl [vmem:[#allocation1 + $0x10] sm:$0xff pattern:$0x73625140]
        %v4927 = vld.sshfl [vmem:[#allocation1 + $0x18] sm:$0xff pattern:$0x73625140]
        %v4932 = vpack.c.bf16 %v4924, %v4924
        %v4933 = vpack.c.bf16 %v4925, %v4925
        %v4934 = vpack.c.bf16 %v4926, %v4926
        %v4935 = vpack.c.bf16 %v4927, %v4927
        %v4936 = vld [vmem:[%s5] sm:$0xff]
        %v4937 = vld [vmem:[%s5 + $0x8] sm:$0xff]
        %v4938 = vld [vmem:[%s5 + $0x10] sm:$0xff]
        %v4939 = vld [vmem:[%s5 + $0x18] sm:$0xff]
        %v4940 = vld [vmem:[%s5 + $0x20] sm:$0xff]
        %v4941 = vld [vmem:[%s5 + $0x28] sm:$0xff]
        %v4942 = vld [vmem:[%s5 + $0x30] sm:$0xff]
        %v4943 = vld [vmem:[%s5 + $0x38] sm:$0xff]
        %v4944 = vld [vmem:[%s5 + $0x40] sm:$0xff]
        %v4945 = vld [vmem:[%s5 + $0x48] sm:$0xff]
        %v4946 = vld [vmem:[%s5 + $0x50] sm:$0xff]
        %v4947 = vld [vmem:[%s5 + $0x58] sm:$0xff]
        %v4948 = vld [vmem:[%s5 + $0x60] sm:$0xff]
        %v4949 = vld [vmem:[%s5 + $0x68] sm:$0xff]
        %v4950 = vld [vmem:[%s5 + $0x70] sm:$0xff]
        %v4951 = vld [vmem:[%s5 + $0x78] sm:$0xff]
        %v4952 = vld [vmem:[%s5 + $0x80] sm:$0xff]
        %v4953 = vld [vmem:[%s5 + $0x88] sm:$0xff]
        %v4954 = vld [vmem:[%s5 + $0x90] sm:$0xff]
        %v4955 = vld [vmem:[%s5 + $0x98] sm:$0xff]
        %v4956 = vld [vmem:[%s5 + $0xa0] sm:$0xff]
        %v4957 = vld [vmem:[%s5 + $0xa8] sm:$0xff]
        %v4958 = vld [vmem:[%s5 + $0xb0] sm:$0xff]
        %v4959 = vld [vmem:[%s5 + $0xb8] sm:$0xff]
        %v4960 = vld [vmem:[%s5 + $0xc0] sm:$0xff]
        %v4961 = vld [vmem:[%s5 + $0xc8] sm:$0xff]
        %v4962 = vld [vmem:[%s5 + $0xd0] sm:$0xff]
        %v4963 = vld [vmem:[%s5 + $0xd8] sm:$0xff]
        %v4964 = vld [vmem:[%s5 + $0xe0] sm:$0xff]
        %v4965 = vld [vmem:[%s5 + $0xe8] sm:$0xff]
        %v4966 = vld [vmem:[%s5 + $0xf0] sm:$0xff]
        %v4967 = vld [vmem:[%s5 + $0xf8] sm:$0xff]
        %v4968 = vld [vmem:[%s5 + $0x100] sm:$0xff]
        %v4969 = vld [vmem:[%s5 + $0x108] sm:$0xff]
        %v4970 = vld [vmem:[%s5 + $0x110] sm:$0xff]
        %v4971 = vld [vmem:[%s5 + $0x118] sm:$0xff]
        %v4972 = vld [vmem:[%s5 + $0x120] sm:$0xff]
        %v4973 = vld [vmem:[%s5 + $0x128] sm:$0xff]
        %v4974 = vld [vmem:[%s5 + $0x130] sm:$0xff]
        %v4975 = vld [vmem:[%s5 + $0x138] sm:$0xff]
        %v4976 = vld [vmem:[%s5 + $0x140] sm:$0xff]
        %v4977 = vld [vmem:[%s5 + $0x148] sm:$0xff]
        %v4978 = vld [vmem:[%s5 + $0x150] sm:$0xff]
        %v4979 = vld [vmem:[%s5 + $0x158] sm:$0xff]
        %v4980 = vld [vmem:[%s5 + $0x160] sm:$0xff]
        %v4981 = vld [vmem:[%s5 + $0x168] sm:$0xff]
        %v4982 = vld [vmem:[%s5 + $0x170] sm:$0xff]
        %v4983 = vld [vmem:[%s5 + $0x178] sm:$0xff]
        %v4984 = vld [vmem:[%s5 + $0x180] sm:$0xff]
        %v4985 = vld [vmem:[%s5 + $0x188] sm:$0xff]
        %v4986 = vld [vmem:[%s5 + $0x190] sm:$0xff]
        %v4987 = vld [vmem:[%s5 + $0x198] sm:$0xff]
        %v4988 = vld [vmem:[%s5 + $0x1a0] sm:$0xff]
        %v4989 = vld [vmem:[%s5 + $0x1a8] sm:$0xff]
        %v4990 = vld [vmem:[%s5 + $0x1b0] sm:$0xff]
        %v4991 = vld [vmem:[%s5 + $0x1b8] sm:$0xff]
        %v4992 = vld [vmem:[%s5 + $0x1c0] sm:$0xff]
        %v4993 = vld [vmem:[%s5 + $0x1c8] sm:$0xff]
        %v4994 = vld [vmem:[%s5 + $0x1d0] sm:$0xff]
        %v4995 = vld [vmem:[%s5 + $0x1d8] sm:$0xff]
        %v4996 = vld [vmem:[%s5 + $0x1e0] sm:$0xff]
        %v4997 = vld [vmem:[%s5 + $0x1e8] sm:$0xff]
        %v4998 = vld [vmem:[%s5 + $0x1f0] sm:$0xff]
        %v4999 = vld [vmem:[%s5 + $0x1f8] sm:$0xff]
        %v5000 = vld [vmem:[%s5 + $0x200] sm:$0xff]
        %v5001 = vld [vmem:[%s5 + $0x208] sm:$0xff]
        %v5002 = vld [vmem:[%s5 + $0x210] sm:$0xff]
        %v5003 = vld [vmem:[%s5 + $0x218] sm:$0xff]
        %v5004 = vld [vmem:[%s5 + $0x220] sm:$0xff]
        %v5005 = vld [vmem:[%s5 + $0x228] sm:$0xff]
        %v5006 = vld [vmem:[%s5 + $0x230] sm:$0xff]
        %v5007 = vld [vmem:[%s5 + $0x238] sm:$0xff]
        %v5008 = vld [vmem:[%s5 + $0x240] sm:$0xff]
        %v5009 = vld [vmem:[%s5 + $0x248] sm:$0xff]
        %v5010 = vld [vmem:[%s5 + $0x250] sm:$0xff]
        %v5011 = vld [vmem:[%s5 + $0x258] sm:$0xff]
        %v5012 = vld [vmem:[%s5 + $0x260] sm:$0xff]
        %v5013 = vld [vmem:[%s5 + $0x268] sm:$0xff]
        %v5014 = vld [vmem:[%s5 + $0x270] sm:$0xff]
        %v5015 = vld [vmem:[%s5 + $0x278] sm:$0xff]
        %v5016 = vld [vmem:[%s5 + $0x280] sm:$0xff]
        %v5017 = vld [vmem:[%s5 + $0x288] sm:$0xff]
        %v5018 = vld [vmem:[%s5 + $0x290] sm:$0xff]
        %v5019 = vld [vmem:[%s5 + $0x298] sm:$0xff]
        %v5020 = vld [vmem:[%s5 + $0x2a0] sm:$0xff]
        %v5021 = vld [vmem:[%s5 + $0x2a8] sm:$0xff]
        %v5022 = vld [vmem:[%s5 + $0x2b0] sm:$0xff]
        %v5023 = vld [vmem:[%s5 + $0x2b8] sm:$0xff]
        %v5024 = vld [vmem:[%s5 + $0x2c0] sm:$0xff]
        %v5025 = vld [vmem:[%s5 + $0x2c8] sm:$0xff]
        %v5026 = vld [vmem:[%s5 + $0x2d0] sm:$0xff]
        %v5027 = vld [vmem:[%s5 + $0x2d8] sm:$0xff]
        %v5028 = vld [vmem:[%s5 + $0x2e0] sm:$0xff]
        %v5029 = vld [vmem:[%s5 + $0x2e8] sm:$0xff]
        %v5030 = vld [vmem:[%s5 + $0x2f0] sm:$0xff]
        %v5031 = vld [vmem:[%s5 + $0x2f8] sm:$0xff]
        %v5032 = vld [vmem:[%s5 + $0x300] sm:$0xff]
        %v5033 = vld [vmem:[%s5 + $0x308] sm:$0xff]
        %v5034 = vld [vmem:[%s5 + $0x310] sm:$0xff]
        %v5035 = vld [vmem:[%s5 + $0x318] sm:$0xff]
        %v5036 = vld [vmem:[%s5 + $0x320] sm:$0xff]
        %v5037 = vld [vmem:[%s5 + $0x328] sm:$0xff]
        %v5038 = vld [vmem:[%s5 + $0x330] sm:$0xff]
        %v5039 = vld [vmem:[%s5 + $0x338] sm:$0xff]
        %v5040 = vld [vmem:[%s5 + $0x340] sm:$0xff]
        %v5041 = vld [vmem:[%s5 + $0x348] sm:$0xff]
        %v5042 = vld [vmem:[%s5 + $0x350] sm:$0xff]
        %v5043 = vld [vmem:[%s5 + $0x358] sm:$0xff]
        %v5044 = vld [vmem:[%s5 + $0x360] sm:$0xff]
        %v5045 = vld [vmem:[%s5 + $0x368] sm:$0xff]
        %v5046 = vld [vmem:[%s5 + $0x370] sm:$0xff]
        %v5047 = vld [vmem:[%s5 + $0x378] sm:$0xff]
        %v5048 = vld [vmem:[%s5 + $0x380] sm:$0xff]
        %v5049 = vld [vmem:[%s5 + $0x388] sm:$0xff]
        %v5050 = vld [vmem:[%s5 + $0x390] sm:$0xff]
        %v5051 = vld [vmem:[%s5 + $0x398] sm:$0xff]
        %v5052 = vld [vmem:[%s5 + $0x3a0] sm:$0xff]
        %v5053 = vld [vmem:[%s5 + $0x3a8] sm:$0xff]
        %v5054 = vld [vmem:[%s5 + $0x3b0] sm:$0xff]
        %v5055 = vld [vmem:[%s5 + $0x3b8] sm:$0xff]
        %v5056 = vld [vmem:[%s5 + $0x3c0] sm:$0xff]
        %v5057 = vld [vmem:[%s5 + $0x3c8] sm:$0xff]
        %v5058 = vld [vmem:[%s5 + $0x3d0] sm:$0xff]
        %v5059 = vld [vmem:[%s5 + $0x3d8] sm:$0xff]
        %v5060 = vld [vmem:[%s5 + $0x3e0] sm:$0xff]
        %v5061 = vld [vmem:[%s5 + $0x3e8] sm:$0xff]
        %v5062 = vld [vmem:[%s5 + $0x3f0] sm:$0xff]
        %v5063 = vld [vmem:[%s5 + $0x3f8] sm:$0xff]
        %v5064 = vld [vmem:[%s6] sm:$0xf]
        %v5066 = vperm.slane %v5064, 0
        %v5067 = vperm.slane %v5064, 1
        %v5068 = vperm.slane %v5064, 2
        %v5069 = vperm.slane %v5064, 3
        %v5202 = vunpack.c.l.b16 %v4936
        %v5203 = vunpack.c.h.b16 %v4936
        %v5204 = vunpack.c.l.b16 %v4937
        %v5205 = vunpack.c.h.b16 %v4937
        %v5206 = vunpack.c.l.b16 %v4938
        %v5207 = vunpack.c.h.b16 %v4938
        %v5208 = vunpack.c.l.b16 %v4939
        %v5209 = vunpack.c.h.b16 %v4939
        %v5210 = vunpack.c.l.b16 %v4940
        %v5211 = vunpack.c.h.b16 %v4940
        %v5212 = vunpack.c.l.b16 %v4941
        %v5213 = vunpack.c.h.b16 %v4941
        %v5214 = vunpack.c.l.b16 %v4942
        %v5215 = vunpack.c.h.b16 %v4942
        %v5216 = vunpack.c.l.b16 %v4943
        %v5217 = vunpack.c.h.b16 %v4943
        %v5218 = vunpack.c.l.b16 %v4944
        %v5219 = vunpack.c.h.b16 %v4944
        %v5220 = vunpack.c.l.b16 %v4945
        %v5221 = vunpack.c.h.b16 %v4945
        %v5222 = vunpack.c.l.b16 %v4946
        %v5223 = vunpack.c.h.b16 %v4946
        %v5224 = vunpack.c.l.b16 %v4947
        %v5225 = vunpack.c.h.b16 %v4947
        %v5226 = vunpack.c.l.b16 %v4948
        %v5227 = vunpack.c.h.b16 %v4948
        %v5228 = vunpack.c.l.b16 %v4949
        %v5229 = vunpack.c.h.b16 %v4949
        %v5230 = vunpack.c.l.b16 %v4950
        %v5231 = vunpack.c.h.b16 %v4950
        %v5232 = vunpack.c.l.b16 %v4951
        %v5233 = vunpack.c.h.b16 %v4951
        %v5234 = vunpack.c.l.b16 %v4952
        %v5235 = vunpack.c.h.b16 %v4952
        %v5236 = vunpack.c.l.b16 %v4953
        %v5237 = vunpack.c.h.b16 %v4953
        %v5238 = vunpack.c.l.b16 %v4954
        %v5239 = vunpack.c.h.b16 %v4954
        %v5240 = vunpack.c.l.b16 %v4955
        %v5241 = vunpack.c.h.b16 %v4955
        %v5242 = vunpack.c.l.b16 %v4956
        %v5243 = vunpack.c.h.b16 %v4956
        %v5244 = vunpack.c.l.b16 %v4957
        %v5245 = vunpack.c.h.b16 %v4957
        %v5246 = vunpack.c.l.b16 %v4958
        %v5247 = vunpack.c.h.b16 %v4958
        %v5248 = vunpack.c.l.b16 %v4959
        %v5249 = vunpack.c.h.b16 %v4959
        %v5250 = vunpack.c.l.b16 %v4960
        %v5251 = vunpack.c.h.b16 %v4960
        %v5252 = vunpack.c.l.b16 %v4961
        %v5253 = vunpack.c.h.b16 %v4961
        %v5254 = vunpack.c.l.b16 %v4962
        %v5255 = vunpack.c.h.b16 %v4962
        %v5256 = vunpack.c.l.b16 %v4963
        %v5257 = vunpack.c.h.b16 %v4963
        %v5258 = vunpack.c.l.b16 %v4964
        %v5259 = vunpack.c.h.b16 %v4964
        %v5260 = vunpack.c.l.b16 %v4965
        %v5261 = vunpack.c.h.b16 %v4965
        %v5262 = vunpack.c.l.b16 %v4966
        %v5263 = vunpack.c.h.b16 %v4966
        %v5264 = vunpack.c.l.b16 %v4967
        %v5265 = vunpack.c.h.b16 %v4967
        %v5266 = vunpack.c.l.b16 %v4968
        %v5267 = vunpack.c.h.b16 %v4968
        %v5268 = vunpack.c.l.b16 %v4969
        %v5269 = vunpack.c.h.b16 %v4969
        %v5270 = vunpack.c.l.b16 %v4970
        %v5271 = vunpack.c.h.b16 %v4970
        %v5272 = vunpack.c.l.b16 %v4971
        %v5273 = vunpack.c.h.b16 %v4971
        %v5274 = vunpack.c.l.b16 %v4972
        %v5275 = vunpack.c.h.b16 %v4972
        %v5276 = vunpack.c.l.b16 %v4973
        %v5277 = vunpack.c.h.b16 %v4973
        %v5278 = vunpack.c.l.b16 %v4974
        %v5279 = vunpack.c.h.b16 %v4974
        %v5280 = vunpack.c.l.b16 %v4975
        %v5281 = vunpack.c.h.b16 %v4975
        %v5282 = vunpack.c.l.b16 %v4976
        %v5283 = vunpack.c.h.b16 %v4976
        %v5284 = vunpack.c.l.b16 %v4977
        %v5285 = vunpack.c.h.b16 %v4977
        %v5286 = vunpack.c.l.b16 %v4978
        %v5287 = vunpack.c.h.b16 %v4978
        %v5288 = vunpack.c.l.b16 %v4979
        %v5289 = vunpack.c.h.b16 %v4979
        %v5290 = vunpack.c.l.b16 %v4980
        %v5291 = vunpack.c.h.b16 %v4980
        %v5292 = vunpack.c.l.b16 %v4981
        %v5293 = vunpack.c.h.b16 %v4981
        %v5294 = vunpack.c.l.b16 %v4982
        %v5295 = vunpack.c.h.b16 %v4982
        %v5296 = vunpack.c.l.b16 %v4983
        %v5297 = vunpack.c.h.b16 %v4983
        %v5298 = vunpack.c.l.b16 %v4984
        %v5299 = vunpack.c.h.b16 %v4984
        %v5300 = vunpack.c.l.b16 %v4985
        %v5301 = vunpack.c.h.b16 %v4985
        %v5302 = vunpack.c.l.b16 %v4986
        %v5303 = vunpack.c.h.b16 %v4986
        %v5304 = vunpack.c.l.b16 %v4987
        %v5305 = vunpack.c.h.b16 %v4987
        %v5306 = vunpack.c.l.b16 %v4988
        %v5307 = vunpack.c.h.b16 %v4988
        %v5308 = vunpack.c.l.b16 %v4989
        %v5309 = vunpack.c.h.b16 %v4989
        %v5310 = vunpack.c.l.b16 %v4990
        %v5311 = vunpack.c.h.b16 %v4990
        %v5312 = vunpack.c.l.b16 %v4991
        %v5313 = vunpack.c.h.b16 %v4991
        %v5314 = vunpack.c.l.b16 %v4992
        %v5315 = vunpack.c.h.b16 %v4992
        %v5316 = vunpack.c.l.b16 %v4993
        %v5317 = vunpack.c.h.b16 %v4993
        %v5318 = vunpack.c.l.b16 %v4994
        %v5319 = vunpack.c.h.b16 %v4994
        %v5320 = vunpack.c.l.b16 %v4995
        %v5321 = vunpack.c.h.b16 %v4995
        %v5322 = vunpack.c.l.b16 %v4996
        %v5323 = vunpack.c.h.b16 %v4996
        %v5324 = vunpack.c.l.b16 %v4997
        %v5325 = vunpack.c.h.b16 %v4997
        %v5326 = vunpack.c.l.b16 %v4998
        %v5327 = vunpack.c.h.b16 %v4998
        %v5328 = vunpack.c.l.b16 %v4999
        %v5329 = vunpack.c.h.b16 %v4999
        %v5330 = vunpack.c.l.b16 %v5000
        %v5331 = vunpack.c.h.b16 %v5000
        %v5332 = vunpack.c.l.b16 %v5001
        %v5333 = vunpack.c.h.b16 %v5001
        %v5334 = vunpack.c.l.b16 %v5002
        %v5335 = vunpack.c.h.b16 %v5002
        %v5336 = vunpack.c.l.b16 %v5003
        %v5337 = vunpack.c.h.b16 %v5003
        %v5338 = vunpack.c.l.b16 %v5004
        %v5339 = vunpack.c.h.b16 %v5004
        %v5340 = vunpack.c.l.b16 %v5005
        %v5341 = vunpack.c.h.b16 %v5005
        %v5342 = vunpack.c.l.b16 %v5006
        %v5343 = vunpack.c.h.b16 %v5006
        %v5344 = vunpack.c.l.b16 %v5007
        %v5345 = vunpack.c.h.b16 %v5007
        %v5346 = vunpack.c.l.b16 %v5008
        %v5347 = vunpack.c.h.b16 %v5008
        %v5348 = vunpack.c.l.b16 %v5009
        %v5349 = vunpack.c.h.b16 %v5009
        %v5350 = vunpack.c.l.b16 %v5010
        %v5351 = vunpack.c.h.b16 %v5010
        %v5352 = vunpack.c.l.b16 %v5011
        %v5353 = vunpack.c.h.b16 %v5011
        %v5354 = vunpack.c.l.b16 %v5012
        %v5355 = vunpack.c.h.b16 %v5012
        %v5356 = vunpack.c.l.b16 %v5013
        %v5357 = vunpack.c.h.b16 %v5013
        %v5358 = vunpack.c.l.b16 %v5014
        %v5359 = vunpack.c.h.b16 %v5014
        %v5360 = vunpack.c.l.b16 %v5015
        %v5361 = vunpack.c.h.b16 %v5015
        %v5362 = vunpack.c.l.b16 %v5016
        %v5363 = vunpack.c.h.b16 %v5016
        %v5364 = vunpack.c.l.b16 %v5017
        %v5365 = vunpack.c.h.b16 %v5017
        %v5366 = vunpack.c.l.b16 %v5018
        %v5367 = vunpack.c.h.b16 %v5018
        %v5368 = vunpack.c.l.b16 %v5019
        %v5369 = vunpack.c.h.b16 %v5019
        %v5370 = vunpack.c.l.b16 %v5020
        %v5371 = vunpack.c.h.b16 %v5020
        %v5372 = vunpack.c.l.b16 %v5021
        %v5373 = vunpack.c.h.b16 %v5021
        %v5374 = vunpack.c.l.b16 %v5022
        %v5375 = vunpack.c.h.b16 %v5022
        %v5376 = vunpack.c.l.b16 %v5023
        %v5377 = vunpack.c.h.b16 %v5023
        %v5378 = vunpack.c.l.b16 %v5024
        %v5379 = vunpack.c.h.b16 %v5024
        %v5380 = vunpack.c.l.b16 %v5025
        %v5381 = vunpack.c.h.b16 %v5025
        %v5382 = vunpack.c.l.b16 %v5026
        %v5383 = vunpack.c.h.b16 %v5026
        %v5384 = vunpack.c.l.b16 %v5027
        %v5385 = vunpack.c.h.b16 %v5027
        %v5386 = vunpack.c.l.b16 %v5028
        %v5387 = vunpack.c.h.b16 %v5028
        %v5388 = vunpack.c.l.b16 %v5029
        %v5389 = vunpack.c.h.b16 %v5029
        %v5390 = vunpack.c.l.b16 %v5030
        %v5391 = vunpack.c.h.b16 %v5030
        %v5392 = vunpack.c.l.b16 %v5031
        %v5393 = vunpack.c.h.b16 %v5031
        %v5394 = vunpack.c.l.b16 %v5032
        %v5395 = vunpack.c.h.b16 %v5032
        %v5396 = vunpack.c.l.b16 %v5033
        %v5397 = vunpack.c.h.b16 %v5033
        %v5398 = vunpack.c.l.b16 %v5034
        %v5399 = vunpack.c.h.b16 %v5034
        %v5400 = vunpack.c.l.b16 %v5035
        %v5401 = vunpack.c.h.b16 %v5035
        %v5402 = vunpack.c.l.b16 %v5036
        %v5403 = vunpack.c.h.b16 %v5036
        %v5404 = vunpack.c.l.b16 %v5037
        %v5405 = vunpack.c.h.b16 %v5037
        %v5406 = vunpack.c.l.b16 %v5038
        %v5407 = vunpack.c.h.b16 %v5038
        %v5408 = vunpack.c.l.b16 %v5039
        %v5409 = vunpack.c.h.b16 %v5039
        %v5410 = vunpack.c.l.b16 %v5040
        %v5411 = vunpack.c.h.b16 %v5040
        %v5412 = vunpack.c.l.b16 %v5041
        %v5413 = vunpack.c.h.b16 %v5041
        %v5414 = vunpack.c.l.b16 %v5042
        %v5415 = vunpack.c.h.b16 %v5042
        %v5416 = vunpack.c.l.b16 %v5043
        %v5417 = vunpack.c.h.b16 %v5043
        %v5418 = vunpack.c.l.b16 %v5044
        %v5419 = vunpack.c.h.b16 %v5044
        %v5420 = vunpack.c.l.b16 %v5045
        %v5421 = vunpack.c.h.b16 %v5045
        %v5422 = vunpack.c.l.b16 %v5046
        %v5423 = vunpack.c.h.b16 %v5046
        %v5424 = vunpack.c.l.b16 %v5047
        %v5425 = vunpack.c.h.b16 %v5047
        %v5426 = vunpack.c.l.b16 %v5048
        %v5427 = vunpack.c.h.b16 %v5048
        %v5428 = vunpack.c.l.b16 %v5049
        %v5429 = vunpack.c.h.b16 %v5049
        %v5430 = vunpack.c.l.b16 %v5050
        %v5431 = vunpack.c.h.b16 %v5050
        %v5432 = vunpack.c.l.b16 %v5051
        %v5433 = vunpack.c.h.b16 %v5051
        %v5434 = vunpack.c.l.b16 %v5052
        %v5435 = vunpack.c.h.b16 %v5052
        %v5436 = vunpack.c.l.b16 %v5053
        %v5437 = vunpack.c.h.b16 %v5053
        %v5438 = vunpack.c.l.b16 %v5054
        %v5439 = vunpack.c.h.b16 %v5054
        %v5440 = vunpack.c.l.b16 %v5055
        %v5441 = vunpack.c.h.b16 %v5055
        %v5442 = vunpack.c.l.b16 %v5056
        %v5443 = vunpack.c.h.b16 %v5056
        %v5444 = vunpack.c.l.b16 %v5057
        %v5445 = vunpack.c.h.b16 %v5057
        %v5446 = vunpack.c.l.b16 %v5058
        %v5447 = vunpack.c.h.b16 %v5058
        %v5448 = vunpack.c.l.b16 %v5059
        %v5449 = vunpack.c.h.b16 %v5059
        %v5450 = vunpack.c.l.b16 %v5060
        %v5451 = vunpack.c.h.b16 %v5060
        %v5452 = vunpack.c.l.b16 %v5061
        %v5453 = vunpack.c.h.b16 %v5061
        %v5454 = vunpack.c.l.b16 %v5062
        %v5455 = vunpack.c.h.b16 %v5062
        %v5456 = vunpack.c.l.b16 %v5063
        %v5457 = vunpack.c.h.b16 %v5063
        %v5458 = vpack.c.b16 %v5206, %v5202
        %v5459 = vpack.c.b16 %v5207, %v5203
        %v5460 = vpack.c.b16 %v5208, %v5204
        %v5461 = vpack.c.b16 %v5209, %v5205
        %v5462 = vpack.c.b16 %v5214, %v5210
        %v5463 = vpack.c.b16 %v5215, %v5211
        %v5464 = vpack.c.b16 %v5216, %v5212
        %v5465 = vpack.c.b16 %v5217, %v5213
        %v5466 = vpack.c.b16 %v5222, %v5218
        %v5467 = vpack.c.b16 %v5223, %v5219
        %v5468 = vpack.c.b16 %v5224, %v5220
        %v5469 = vpack.c.b16 %v5225, %v5221
        %v5470 = vpack.c.b16 %v5230, %v5226
        %v5471 = vpack.c.b16 %v5231, %v5227
        %v5472 = vpack.c.b16 %v5232, %v5228
        %v5473 = vpack.c.b16 %v5233, %v5229
        %v5474 = vpack.c.b16 %v5238, %v5234
        %v5475 = vpack.c.b16 %v5239, %v5235
        %v5476 = vpack.c.b16 %v5240, %v5236
        %v5477 = vpack.c.b16 %v5241, %v5237
        %v5478 = vpack.c.b16 %v5246, %v5242
        %v5479 = vpack.c.b16 %v5247, %v5243
        %v5480 = vpack.c.b16 %v5248, %v5244
        %v5481 = vpack.c.b16 %v5249, %v5245
        %v5482 = vpack.c.b16 %v5254, %v5250
        %v5483 = vpack.c.b16 %v5255, %v5251
        %v5484 = vpack.c.b16 %v5256, %v5252
        %v5485 = vpack.c.b16 %v5257, %v5253
        %v5486 = vpack.c.b16 %v5262, %v5258
        %v5487 = vpack.c.b16 %v5263, %v5259
        %v5488 = vpack.c.b16 %v5264, %v5260
        %v5489 = vpack.c.b16 %v5265, %v5261
        %v5490 = vpack.c.b16 %v5270, %v5266
        %v5491 = vpack.c.b16 %v5271, %v5267
        %v5492 = vpack.c.b16 %v5272, %v5268
        %v5493 = vpack.c.b16 %v5273, %v5269
        %v5494 = vpack.c.b16 %v5278, %v5274
        %v5495 = vpack.c.b16 %v5279, %v5275
        %v5496 = vpack.c.b16 %v5280, %v5276
        %v5497 = vpack.c.b16 %v5281, %v5277
        %v5498 = vpack.c.b16 %v5286, %v5282
        %v5499 = vpack.c.b16 %v5287, %v5283
        %v5500 = vpack.c.b16 %v5288, %v5284
        %v5501 = vpack.c.b16 %v5289, %v5285
        %v5502 = vpack.c.b16 %v5294, %v5290
        %v5503 = vpack.c.b16 %v5295, %v5291
        %v5504 = vpack.c.b16 %v5296, %v5292
        %v5505 = vpack.c.b16 %v5297, %v5293
        %v5506 = vpack.c.b16 %v5302, %v5298
        %v5507 = vpack.c.b16 %v5303, %v5299
        %v5508 = vpack.c.b16 %v5304, %v5300
        %v5509 = vpack.c.b16 %v5305, %v5301
        %v5510 = vpack.c.b16 %v5310, %v5306
        %v5511 = vpack.c.b16 %v5311, %v5307
        %v5512 = vpack.c.b16 %v5312, %v5308
        %v5513 = vpack.c.b16 %v5313, %v5309
        %v5514 = vpack.c.b16 %v5318, %v5314
        %v5515 = vpack.c.b16 %v5319, %v5315
        %v5516 = vpack.c.b16 %v5320, %v5316
        %v5517 = vpack.c.b16 %v5321, %v5317
        %v5518 = vpack.c.b16 %v5326, %v5322
        %v5519 = vpack.c.b16 %v5327, %v5323
        %v5520 = vpack.c.b16 %v5328, %v5324
        %v5521 = vpack.c.b16 %v5329, %v5325
        %v5522 = vpack.c.b16 %v5334, %v5330
        %v5523 = vpack.c.b16 %v5335, %v5331
        %v5524 = vpack.c.b16 %v5336, %v5332
        %v5525 = vpack.c.b16 %v5337, %v5333
        %v5526 = vpack.c.b16 %v5342, %v5338
        %v5527 = vpack.c.b16 %v5343, %v5339
        %v5528 = vpack.c.b16 %v5344, %v5340
        %v5529 = vpack.c.b16 %v5345, %v5341
        %v5530 = vpack.c.b16 %v5350, %v5346
        %v5531 = vpack.c.b16 %v5351, %v5347
        %v5532 = vpack.c.b16 %v5352, %v5348
        %v5533 = vpack.c.b16 %v5353, %v5349
        %v5534 = vpack.c.b16 %v5358, %v5354
        %v5535 = vpack.c.b16 %v5359, %v5355
        %v5536 = vpack.c.b16 %v5360, %v5356
        %v5537 = vpack.c.b16 %v5361, %v5357
        %v5538 = vpack.c.b16 %v5366, %v5362
        %v5539 = vpack.c.b16 %v5367, %v5363
        %v5540 = vpack.c.b16 %v5368, %v5364
        %v5541 = vpack.c.b16 %v5369, %v5365
        %v5542 = vpack.c.b16 %v5374, %v5370
        %v5543 = vpack.c.b16 %v5375, %v5371
        %v5544 = vpack.c.b16 %v5376, %v5372
        %v5545 = vpack.c.b16 %v5377, %v5373
        %v5546 = vpack.c.b16 %v5382, %v5378
        %v5547 = vpack.c.b16 %v5383, %v5379
        %v5548 = vpack.c.b16 %v5384, %v5380
        %v5549 = vpack.c.b16 %v5385, %v5381
        %v5550 = vpack.c.b16 %v5390, %v5386
        %v5551 = vpack.c.b16 %v5391, %v5387
        %v5552 = vpack.c.b16 %v5392, %v5388
        %v5553 = vpack.c.b16 %v5393, %v5389
        %v5554 = vpack.c.b16 %v5398, %v5394
        %v5555 = vpack.c.b16 %v5399, %v5395
        %v5556 = vpack.c.b16 %v5400, %v5396
        %v5557 = vpack.c.b16 %v5401, %v5397
        %v5558 = vpack.c.b16 %v5406, %v5402
        %v5559 = vpack.c.b16 %v5407, %v5403
        %v5560 = vpack.c.b16 %v5408, %v5404
        %v5561 = vpack.c.b16 %v5409, %v5405
        %v5562 = vpack.c.b16 %v5414, %v5410
        %v5563 = vpack.c.b16 %v5415, %v5411
        %v5564 = vpack.c.b16 %v5416, %v5412
        %v5565 = vpack.c.b16 %v5417, %v5413
        %v5566 = vpack.c.b16 %v5422, %v5418
        %v5567 = vpack.c.b16 %v5423, %v5419
        %v5568 = vpack.c.b16 %v5424, %v5420
        %v5569 = vpack.c.b16 %v5425, %v5421
        %v5570 = vpack.c.b16 %v5430, %v5426
        %v5571 = vpack.c.b16 %v5431, %v5427
        %v5572 = vpack.c.b16 %v5432, %v5428
        %v5573 = vpack.c.b16 %v5433, %v5429
        %v5574 = vpack.c.b16 %v5438, %v5434
        %v5575 = vpack.c.b16 %v5439, %v5435
        %v5576 = vpack.c.b16 %v5440, %v5436
        %v5577 = vpack.c.b16 %v5441, %v5437
        %v5578 = vpack.c.b16 %v5446, %v5442
        %v5579 = vpack.c.b16 %v5447, %v5443
        %v5580 = vpack.c.b16 %v5448, %v5444
        %v5581 = vpack.c.b16 %v5449, %v5445
        %v5582 = vpack.c.b16 %v5454, %v5450
        %v5583 = vpack.c.b16 %v5455, %v5451
        %v5584 = vpack.c.b16 %v5456, %v5452
        %v5585 = vpack.c.b16 %v5457, %v5453
        %5714 = vmatpush.bf16.msra.mxu0 %v5486
        %5715 = vmatpush.bf16.msra.mxu0 %v5482
        %5716 = vmatpush.bf16.msra.mxu0 %v5478
        %5717 = vmatpush.bf16.msra.mxu0 %v5474
        %5718 = vmatpush.bf16.msra.mxu0 %v5470
        %5719 = vmatpush.bf16.msra.mxu0 %v5466
        %5720 = vmatpush.bf16.msra.mxu0 %v5462
        %5721 = vmatpush.bf16.msra.mxu0 %v5458
        %5722 = vmatmul.bf16.gmra.mxu0 %v4932
        %v5723 = vpop.f32.mrf.mxu0
        %v5724 = vadd.f32 %v5066, %v5723
        %v5725 = vpop.f32.mrf.mxu0
        %5726 = vdwg.mxu0
        %5727 = vmatpush.bf16.msra.mxu0 %v5518
        %5728 = vmatpush.bf16.msra.mxu0 %v5514
        %5729 = vmatpush.bf16.msra.mxu0 %v5510
        %5730 = vmatpush.bf16.msra.mxu0 %v5506
        %5731 = vmatpush.bf16.msra.mxu0 %v5502
        %5732 = vmatpush.bf16.msra.mxu0 %v5498
        %5733 = vmatpush.bf16.msra.mxu0 %v5494
        %5734 = vmatpush.bf16.msra.mxu0 %v5490
        %5735 = vmatmul.bf16.gmra.mxu0 %v4933
        %v5736 = vpop.f32.mrf.mxu0
        %v5737 = vadd.f32 %v5724, %v5736
        %v5738 = vpop.f32.mrf.mxu0
        %5739 = vdwg.mxu0
        %5740 = vmatpush.bf16.msra.mxu0 %v5550
        %5741 = vmatpush.bf16.msra.mxu0 %v5546
        %5742 = vmatpush.bf16.msra.mxu0 %v5542
        %5743 = vmatpush.bf16.msra.mxu0 %v5538
        %5744 = vmatpush.bf16.msra.mxu0 %v5534
        %5745 = vmatpush.bf16.msra.mxu0 %v5530
        %5746 = vmatpush.bf16.msra.mxu0 %v5526
        %5747 = vmatpush.bf16.msra.mxu0 %v5522
        %5748 = vmatmul.bf16.gmra.mxu0 %v4934
        %v5749 = vpop.f32.mrf.mxu0
        %v5750 = vadd.f32 %v5737, %v5749
        %v5751 = vpop.f32.mrf.mxu0
        %5752 = vdwg.mxu0
        %5753 = vmatpush.bf16.msra.mxu0 %v5582
        %5754 = vmatpush.bf16.msra.mxu0 %v5578
        %5755 = vmatpush.bf16.msra.mxu0 %v5574
        %5756 = vmatpush.bf16.msra.mxu0 %v5570
        %5757 = vmatpush.bf16.msra.mxu0 %v5566
        %5758 = vmatpush.bf16.msra.mxu0 %v5562
        %5759 = vmatpush.bf16.msra.mxu0 %v5558
        %5760 = vmatpush.bf16.msra.mxu0 %v5554
        %5761 = vmatmul.bf16.gmra.mxu0 %v4935
        %v5762 = vpop.f32.mrf.mxu0
        %v5763 = vadd.f32 %v5750, %v5762
        %v5764 = vpop.f32.mrf.mxu0
        %5765 = vdwg.mxu0
        %5766 = vmatpush.bf16.msra.mxu0 %v5487
        %5767 = vmatpush.bf16.msra.mxu0 %v5483
        %5768 = vmatpush.bf16.msra.mxu0 %v5479
        %5769 = vmatpush.bf16.msra.mxu0 %v5475
        %5770 = vmatpush.bf16.msra.mxu0 %v5471
        %5771 = vmatpush.bf16.msra.mxu0 %v5467
        %5772 = vmatpush.bf16.msra.mxu0 %v5463
        %5773 = vmatpush.bf16.msra.mxu0 %v5459
        %5774 = vmatmul.bf16.gmra.mxu0 %v4932
        %v5775 = vpop.f32.mrf.mxu0
        %v5776 = vadd.f32 %v5067, %v5775
        %v5777 = vpop.f32.mrf.mxu0
        %5778 = vdwg.mxu0
        %5779 = vmatpush.bf16.msra.mxu0 %v5519
        %5780 = vmatpush.bf16.msra.mxu0 %v5515
        %5781 = vmatpush.bf16.msra.mxu0 %v5511
        %5782 = vmatpush.bf16.msra.mxu0 %v5507
        %5783 = vmatpush.bf16.msra.mxu0 %v5503
        %5784 = vmatpush.bf16.msra.mxu0 %v5499
        %5785 = vmatpush.bf16.msra.mxu0 %v5495
        %5786 = vmatpush.bf16.msra.mxu0 %v5491
        %5787 = vmatmul.bf16.gmra.mxu0 %v4933
        %v5788 = vpop.f32.mrf.mxu0
        %v5789 = vadd.f32 %v5776, %v5788
        %v5790 = vpop.f32.mrf.mxu0
        %5791 = vdwg.mxu0
        %5792 = vmatpush.bf16.msra.mxu0 %v5551
        %5793 = vmatpush.bf16.msra.mxu0 %v5547
        %5794 = vmatpush.bf16.msra.mxu0 %v5543
        %5795 = vmatpush.bf16.msra.mxu0 %v5539
        %5796 = vmatpush.bf16.msra.mxu0 %v5535
        %5797 = vmatpush.bf16.msra.mxu0 %v5531
        %5798 = vmatpush.bf16.msra.mxu0 %v5527
        %5799 = vmatpush.bf16.msra.mxu0 %v5523
        %5800 = vmatmul.bf16.gmra.mxu0 %v4934
        %v5801 = vpop.f32.mrf.mxu0
        %v5802 = vadd.f32 %v5789, %v5801
        %v5803 = vpop.f32.mrf.mxu0
        %5804 = vdwg.mxu0
        %5805 = vmatpush.bf16.msra.mxu0 %v5583
        %5806 = vmatpush.bf16.msra.mxu0 %v5579
        %5807 = vmatpush.bf16.msra.mxu0 %v5575
        %5808 = vmatpush.bf16.msra.mxu0 %v5571
        %5809 = vmatpush.bf16.msra.mxu0 %v5567
        %5810 = vmatpush.bf16.msra.mxu0 %v5563
        %5811 = vmatpush.bf16.msra.mxu0 %v5559
        %5812 = vmatpush.bf16.msra.mxu0 %v5555
        %5813 = vmatmul.bf16.gmra.mxu0 %v4935
        %v5814 = vpop.f32.mrf.mxu0
        %v5815 = vadd.f32 %v5802, %v5814
        %v5816 = vpop.f32.mrf.mxu0
        %5817 = vdwg.mxu0
        %5818 = vmatpush.bf16.msra.mxu0 %v5488
        %5819 = vmatpush.bf16.msra.mxu0 %v5484
        %5820 = vmatpush.bf16.msra.mxu0 %v5480
        %5821 = vmatpush.bf16.msra.mxu0 %v5476
        %5822 = vmatpush.bf16.msra.mxu0 %v5472
        %5823 = vmatpush.bf16.msra.mxu0 %v5468
        %5824 = vmatpush.bf16.msra.mxu0 %v5464
        %5825 = vmatpush.bf16.msra.mxu0 %v5460
        %5826 = vmatmul.bf16.gmra.mxu0 %v4932
        %v5827 = vpop.f32.mrf.mxu0
        %v5828 = vadd.f32 %v5068, %v5827
        %v5829 = vpop.f32.mrf.mxu0
        %5830 = vdwg.mxu0
        %5831 = vmatpush.bf16.msra.mxu0 %v5520
        %5832 = vmatpush.bf16.msra.mxu0 %v5516
        %5833 = vmatpush.bf16.msra.mxu0 %v5512
        %5834 = vmatpush.bf16.msra.mxu0 %v5508
        %5835 = vmatpush.bf16.msra.mxu0 %v5504
        %5836 = vmatpush.bf16.msra.mxu0 %v5500
        %5837 = vmatpush.bf16.msra.mxu0 %v5496
        %5838 = vmatpush.bf16.msra.mxu0 %v5492
        %5839 = vmatmul.bf16.gmra.mxu0 %v4933
        %v5840 = vpop.f32.mrf.mxu0
        %v5841 = vadd.f32 %v5828, %v5840
        %v5842 = vpop.f32.mrf.mxu0
        %5843 = vdwg.mxu0
        %5844 = vmatpush.bf16.msra.mxu0 %v5552
        %5845 = vmatpush.bf16.msra.mxu0 %v5548
        %5846 = vmatpush.bf16.msra.mxu0 %v5544
        %5847 = vmatpush.bf16.msra.mxu0 %v5540
        %5848 = vmatpush.bf16.msra.mxu0 %v5536
        %5849 = vmatpush.bf16.msra.mxu0 %v5532
        %5850 = vmatpush.bf16.msra.mxu0 %v5528
        %5851 = vmatpush.bf16.msra.mxu0 %v5524
        %5852 = vmatmul.bf16.gmra.mxu0 %v4934
        %v5853 = vpop.f32.mrf.mxu0
        %v5854 = vadd.f32 %v5841, %v5853
        %v5855 = vpop.f32.mrf.mxu0
        %5856 = vdwg.mxu0
        %5857 = vmatpush.bf16.msra.mxu0 %v5584
        %5858 = vmatpush.bf16.msra.mxu0 %v5580
        %5859 = vmatpush.bf16.msra.mxu0 %v5576
        %5860 = vmatpush.bf16.msra.mxu0 %v5572
        %5861 = vmatpush.bf16.msra.mxu0 %v5568
        %5862 = vmatpush.bf16.msra.mxu0 %v5564
        %5863 = vmatpush.bf16.msra.mxu0 %v5560
        %5864 = vmatpush.bf16.msra.mxu0 %v5556
        %5865 = vmatmul.bf16.gmra.mxu0 %v4935
        %v5866 = vpop.f32.mrf.mxu0
        %v5867 = vadd.f32 %v5854, %v5866
        %v5868 = vpop.f32.mrf.mxu0
        %5869 = vdwg.mxu0
        %5870 = vmatpush.bf16.msra.mxu0 %v5489
        %5871 = vmatpush.bf16.msra.mxu0 %v5485
        %5872 = vmatpush.bf16.msra.mxu0 %v5481
        %5873 = vmatpush.bf16.msra.mxu0 %v5477
        %5874 = vmatpush.bf16.msra.mxu0 %v5473
        %5875 = vmatpush.bf16.msra.mxu0 %v5469
        %5876 = vmatpush.bf16.msra.mxu0 %v5465
        %5877 = vmatpush.bf16.msra.mxu0 %v5461
        %5878 = vmatmul.bf16.gmra.mxu0 %v4932
        %v5879 = vpop.f32.mrf.mxu0
        %v5880 = vadd.f32 %v5069, %v5879
        %v5881 = vpop.f32.mrf.mxu0
        %5882 = vdwg.mxu0
        %5883 = vmatpush.bf16.msra.mxu0 %v5521
        %5884 = vmatpush.bf16.msra.mxu0 %v5517
        %5885 = vmatpush.bf16.msra.mxu0 %v5513
        %5886 = vmatpush.bf16.msra.mxu0 %v5509
        %5887 = vmatpush.bf16.msra.mxu0 %v5505
        %5888 = vmatpush.bf16.msra.mxu0 %v5501
        %5889 = vmatpush.bf16.msra.mxu0 %v5497
        %5890 = vmatpush.bf16.msra.mxu0 %v5493
        %5891 = vmatmul.bf16.gmra.mxu0 %v4933
        %v5892 = vpop.f32.mrf.mxu0
        %v5893 = vadd.f32 %v5880, %v5892
        %v5894 = vpop.f32.mrf.mxu0
        %5895 = vdwg.mxu0
        %5896 = vmatpush.bf16.msra.mxu0 %v5553
        %5897 = vmatpush.bf16.msra.mxu0 %v5549
        %5898 = vmatpush.bf16.msra.mxu0 %v5545
        %5899 = vmatpush.bf16.msra.mxu0 %v5541
        %5900 = vmatpush.bf16.msra.mxu0 %v5537
        %5901 = vmatpush.bf16.msra.mxu0 %v5533
        %5902 = vmatpush.bf16.msra.mxu0 %v5529
        %5903 = vmatpush.bf16.msra.mxu0 %v5525
        %5904 = vmatmul.bf16.gmra.mxu0 %v4934
        %v5905 = vpop.f32.mrf.mxu0
        %v5906 = vadd.f32 %v5893, %v5905
        %v5907 = vpop.f32.mrf.mxu0
        %5908 = vdwg.mxu0
        %5909 = vmatpush.bf16.msra.mxu0 %v5585
        %5910 = vmatpush.bf16.msra.mxu0 %v5581
        %5911 = vmatpush.bf16.msra.mxu0 %v5577
        %5912 = vmatpush.bf16.msra.mxu0 %v5573
        %5913 = vmatpush.bf16.msra.mxu0 %v5569
        %5914 = vmatpush.bf16.msra.mxu0 %v5565
        %5915 = vmatpush.bf16.msra.mxu0 %v5561
        %5916 = vmatpush.bf16.msra.mxu0 %v5557
        %5917 = vmatmul.bf16.gmra.mxu0 %v4935
        %v5918 = vpop.f32.mrf.mxu0
        %v5919 = vadd.f32 %v5906, %v5918
        %v5920 = vpop.f32.mrf.mxu0
        %5921 = vdwg.mxu0
        %v5922 = vmax.f32 %v5763, 0.0
        %v5923 = vmax.f32 %v5815, 0.0
        %v5924 = vmax.f32 %v5867, 0.0
        %v5925 = vmax.f32 %v5919, 0.0
        %v5926 = vpack.c.bf16 %v5922, %v5922
        %v5927 = vpack.c.bf16 %v5923, %v5923
        %v5928 = vpack.c.bf16 %v5924, %v5924
        %v5929 = vpack.c.bf16 %v5925, %v5925
        %v5930 = vld [vmem:[%s7] sm:$0xf]
        %v5931 = vld [vmem:[%s7 + $0x4] sm:$0xf]
        %v5932 = vld [vmem:[%s7 + $0x8] sm:$0xf]
        %v5933 = vld [vmem:[%s7 + $0xc] sm:$0xf]
        %v5934 = vld [vmem:[%s7 + $0x10] sm:$0xf]
        %v5935 = vld [vmem:[%s7 + $0x14] sm:$0xf]
        %v5936 = vld [vmem:[%s7 + $0x18] sm:$0xf]
        %v5937 = vld [vmem:[%s7 + $0x1c] sm:$0xf]
        %v5938 = vld [vmem:[%s7 + $0x20] sm:$0xf]
        %v5939 = vld [vmem:[%s7 + $0x24] sm:$0xf]
        %v5940 = vld [vmem:[%s7 + $0x28] sm:$0xf]
        %v5941 = vld [vmem:[%s7 + $0x2c] sm:$0xf]
        %v5942 = vld [vmem:[%s7 + $0x30] sm:$0xf]
        %v5943 = vld [vmem:[%s7 + $0x34] sm:$0xf]
        %v5944 = vld [vmem:[%s7 + $0x38] sm:$0xf]
        %v5945 = vld [vmem:[%s7 + $0x3c] sm:$0xf]
        %v5946 = vld [vmem:[%s7 + $0x40] sm:$0xf]
        %v5947 = vld [vmem:[%s7 + $0x44] sm:$0xf]
        %v5948 = vld [vmem:[%s7 + $0x48] sm:$0xf]
        %v5949 = vld [vmem:[%s7 + $0x4c] sm:$0xf]
        %v5950 = vld [vmem:[%s7 + $0x50] sm:$0xf]
        %v5951 = vld [vmem:[%s7 + $0x54] sm:$0xf]
        %v5952 = vld [vmem:[%s7 + $0x58] sm:$0xf]
        %v5953 = vld [vmem:[%s7 + $0x5c] sm:$0xf]
        %v5954 = vld [vmem:[%s7 + $0x60] sm:$0xf]
        %v5955 = vld [vmem:[%s7 + $0x64] sm:$0xf]
        %v5956 = vld [vmem:[%s7 + $0x68] sm:$0xf]
        %v5957 = vld [vmem:[%s7 + $0x6c] sm:$0xf]
        %v5958 = vld [vmem:[%s7 + $0x70] sm:$0xf]
        %v5959 = vld [vmem:[%s7 + $0x74] sm:$0xf]
        %v5960 = vld [vmem:[%s7 + $0x78] sm:$0xf]
        %v5961 = vld [vmem:[%s7 + $0x7c] sm:$0xf]
        %v5962 = vld [vmem:[%s7 + $0x80] sm:$0xf]
        %v5963 = vld [vmem:[%s7 + $0x84] sm:$0xf]
        %v5964 = vld [vmem:[%s7 + $0x88] sm:$0xf]
        %v5965 = vld [vmem:[%s7 + $0x8c] sm:$0xf]
        %v5966 = vld [vmem:[%s7 + $0x90] sm:$0xf]
        %v5967 = vld [vmem:[%s7 + $0x94] sm:$0xf]
        %v5968 = vld [vmem:[%s7 + $0x98] sm:$0xf]
        %v5969 = vld [vmem:[%s7 + $0x9c] sm:$0xf]
        %v5970 = vld [vmem:[%s7 + $0xa0] sm:$0xf]
        %v5971 = vld [vmem:[%s7 + $0xa4] sm:$0xf]
        %v5972 = vld [vmem:[%s7 + $0xa8] sm:$0xf]
        %v5973 = vld [vmem:[%s7 + $0xac] sm:$0xf]
        %v5974 = vld [vmem:[%s7 + $0xb0] sm:$0xf]
        %v5975 = vld [vmem:[%s7 + $0xb4] sm:$0xf]
        %v5976 = vld [vmem:[%s7 + $0xb8] sm:$0xf]
        %v5977 = vld [vmem:[%s7 + $0xbc] sm:$0xf]
        %v5978 = vld [vmem:[%s7 + $0xc0] sm:$0xf]
        %v5979 = vld [vmem:[%s7 + $0xc4] sm:$0xf]
        %v5980 = vld [vmem:[%s7 + $0xc8] sm:$0xf]
        %v5981 = vld [vmem:[%s7 + $0xcc] sm:$0xf]
        %v5982 = vld [vmem:[%s7 + $0xd0] sm:$0xf]
        %v5983 = vld [vmem:[%s7 + $0xd4] sm:$0xf]
        %v5984 = vld [vmem:[%s7 + $0xd8] sm:$0xf]
        %v5985 = vld [vmem:[%s7 + $0xdc] sm:$0xf]
        %v5986 = vld [vmem:[%s7 + $0xe0] sm:$0xf]
        %v5987 = vld [vmem:[%s7 + $0xe4] sm:$0xf]
        %v5988 = vld [vmem:[%s7 + $0xe8] sm:$0xf]
        %v5989 = vld [vmem:[%s7 + $0xec] sm:$0xf]
        %v5990 = vld [vmem:[%s7 + $0xf0] sm:$0xf]
        %v5991 = vld [vmem:[%s7 + $0xf4] sm:$0xf]
        %v5992 = vld [vmem:[%s7 + $0xf8] sm:$0xf]
        %v5993 = vld [vmem:[%s7 + $0xfc] sm:$0xf]
        %v5994 = vld [vmem:[%s8] sm:$0x1]
        %v5996 = vperm.slane %v5994, 0
        %v6062 = vunpack.c.l.b16 %v5930
        %v6063 = vunpack.c.l.b16 %v5931
        %v6064 = vunpack.c.l.b16 %v5932
        %v6065 = vunpack.c.l.b16 %v5933
        %v6066 = vunpack.c.l.b16 %v5934
        %v6067 = vunpack.c.l.b16 %v5935
        %v6068 = vunpack.c.l.b16 %v5936
        %v6069 = vunpack.c.l.b16 %v5937
        %v6070 = vunpack.c.l.b16 %v5938
        %v6071 = vunpack.c.l.b16 %v5939
        %v6072 = vunpack.c.l.b16 %v5940
        %v6073 = vunpack.c.l.b16 %v5941
        %v6074 = vunpack.c.l.b16 %v5942
        %v6075 = vunpack.c.l.b16 %v5943
        %v6076 = vunpack.c.l.b16 %v5944
        %v6077 = vunpack.c.l.b16 %v5945
        %v6078 = vunpack.c.l.b16 %v5946
        %v6079 = vunpack.c.l.b16 %v5947
        %v6080 = vunpack.c.l.b16 %v5948
        %v6081 = vunpack.c.l.b16 %v5949
        %v6082 = vunpack.c.l.b16 %v5950
        %v6083 = vunpack.c.l.b16 %v5951
        %v6084 = vunpack.c.l.b16 %v5952
        %v6085 = vunpack.c.l.b16 %v5953
        %v6086 = vunpack.c.l.b16 %v5954
        %v6087 = vunpack.c.l.b16 %v5955
        %v6088 = vunpack.c.l.b16 %v5956
        %v6089 = vunpack.c.l.b16 %v5957
        %v6090 = vunpack.c.l.b16 %v5958
        %v6091 = vunpack.c.l.b16 %v5959
        %v6092 = vunpack.c.l.b16 %v5960
        %v6093 = vunpack.c.l.b16 %v5961
        %v6094 = vunpack.c.l.b16 %v5962
        %v6095 = vunpack.c.l.b16 %v5963
        %v6096 = vunpack.c.l.b16 %v5964
        %v6097 = vunpack.c.l.b16 %v5965
        %v6098 = vunpack.c.l.b16 %v5966
        %v6099 = vunpack.c.l.b16 %v5967
        %v6100 = vunpack.c.l.b16 %v5968
        %v6101 = vunpack.c.l.b16 %v5969
        %v6102 = vunpack.c.l.b16 %v5970
        %v6103 = vunpack.c.l.b16 %v5971
        %v6104 = vunpack.c.l.b16 %v5972
        %v6105 = vunpack.c.l.b16 %v5973
        %v6106 = vunpack.c.l.b16 %v5974
        %v6107 = vunpack.c.l.b16 %v5975
        %v6108 = vunpack.c.l.b16 %v5976
        %v6109 = vunpack.c.l.b16 %v5977
        %v6110 = vunpack.c.l.b16 %v5978
        %v6111 = vunpack.c.l.b16 %v5979
        %v6112 = vunpack.c.l.b16 %v5980
        %v6113 = vunpack.c.l.b16 %v5981
        %v6114 = vunpack.c.l.b16 %v5982
        %v6115 = vunpack.c.l.b16 %v5983
        %v6116 = vunpack.c.l.b16 %v5984
        %v6117 = vunpack.c.l.b16 %v5985
        %v6118 = vunpack.c.l.b16 %v5986
        %v6119 = vunpack.c.l.b16 %v5987
        %v6120 = vunpack.c.l.b16 %v5988
        %v6121 = vunpack.c.l.b16 %v5989
        %v6122 = vunpack.c.l.b16 %v5990
        %v6123 = vunpack.c.l.b16 %v5991
        %v6124 = vunpack.c.l.b16 %v5992
        %v6125 = vunpack.c.l.b16 %v5993
        %v6126 = vpack.c.b16 %v6063, %v6062
        %v6127 = vpack.c.b16 %v6065, %v6064
        %v6128 = vpack.c.b16 %v6067, %v6066
        %v6129 = vpack.c.b16 %v6069, %v6068
        %v6130 = vpack.c.b16 %v6071, %v6070
        %v6131 = vpack.c.b16 %v6073, %v6072
        %v6132 = vpack.c.b16 %v6075, %v6074
        %v6133 = vpack.c.b16 %v6077, %v6076
        %v6134 = vpack.c.b16 %v6079, %v6078
        %v6135 = vpack.c.b16 %v6081, %v6080
        %v6136 = vpack.c.b16 %v6083, %v6082
        %v6137 = vpack.c.b16 %v6085, %v6084
        %v6138 = vpack.c.b16 %v6087, %v6086
        %v6139 = vpack.c.b16 %v6089, %v6088
        %v6140 = vpack.c.b16 %v6091, %v6090
        %v6141 = vpack.c.b16 %v6093, %v6092
        %v6142 = vpack.c.b16 %v6095, %v6094
        %v6143 = vpack.c.b16 %v6097, %v6096
        %v6144 = vpack.c.b16 %v6099, %v6098
        %v6145 = vpack.c.b16 %v6101, %v6100
        %v6146 = vpack.c.b16 %v6103, %v6102
        %v6147 = vpack.c.b16 %v6105, %v6104
        %v6148 = vpack.c.b16 %v6107, %v6106
        %v6149 = vpack.c.b16 %v6109, %v6108
        %v6150 = vpack.c.b16 %v6111, %v6110
        %v6151 = vpack.c.b16 %v6113, %v6112
        %v6152 = vpack.c.b16 %v6115, %v6114
        %v6153 = vpack.c.b16 %v6117, %v6116
        %v6154 = vpack.c.b16 %v6119, %v6118
        %v6155 = vpack.c.b16 %v6121, %v6120
        %v6156 = vpack.c.b16 %v6123, %v6122
        %v6157 = vpack.c.b16 %v6125, %v6124
        %6190 = vmatpush.bf16.msra.mxu0 %v6133
        %6191 = vmatpush.bf16.msra.mxu0 %v6132
        %6192 = vmatpush.bf16.msra.mxu0 %v6131
        %6193 = vmatpush.bf16.msra.mxu0 %v6130
        %6194 = vmatpush.bf16.msra.mxu0 %v6129
        %6195 = vmatpush.bf16.msra.mxu0 %v6128
        %6196 = vmatpush.bf16.msra.mxu0 %v6127
        %6197 = vmatpush.bf16.msra.mxu0 %v6126
        %6198 = vmatmul.bf16.gmra.mxu0 %v5926
        %v6199 = vpop.f32.mrf.mxu0
        %v6200 = vadd.f32 %v5996, %v6199
        %v6201 = vpop.f32.mrf.mxu0
        %6202 = vdwg.mxu0
        %6203 = vmatpush.bf16.msra.mxu0 %v6141
        %6204 = vmatpush.bf16.msra.mxu0 %v6140
        %6205 = vmatpush.bf16.msra.mxu0 %v6139
        %6206 = vmatpush.bf16.msra.mxu0 %v6138
        %6207 = vmatpush.bf16.msra.mxu0 %v6137
        %6208 = vmatpush.bf16.msra.mxu0 %v6136
        %6209 = vmatpush.bf16.msra.mxu0 %v6135
        %6210 = vmatpush.bf16.msra.mxu0 %v6134
        %6211 = vmatmul.bf16.gmra.mxu0 %v5927
        %v6212 = vpop.f32.mrf.mxu0
        %v6213 = vadd.f32 %v6200, %v6212
        %v6214 = vpop.f32.mrf.mxu0
        %6215 = vdwg.mxu0
        %6216 = vmatpush.bf16.msra.mxu0 %v6149
        %6217 = vmatpush.bf16.msra.mxu0 %v6148
        %6218 = vmatpush.bf16.msra.mxu0 %v6147
        %6219 = vmatpush.bf16.msra.mxu0 %v6146
        %6220 = vmatpush.bf16.msra.mxu0 %v6145
        %6221 = vmatpush.bf16.msra.mxu0 %v6144
        %6222 = vmatpush.bf16.msra.mxu0 %v6143
        %6223 = vmatpush.bf16.msra.mxu0 %v6142
        %6224 = vmatmul.bf16.gmra.mxu0 %v5928
        %v6225 = vpop.f32.mrf.mxu0
        %v6226 = vadd.f32 %v6213, %v6225
        %v6227 = vpop.f32.mrf.mxu0
        %6228 = vdwg.mxu0
        %6229 = vmatpush.bf16.msra.mxu0 %v6157
        %6230 = vmatpush.bf16.msra.mxu0 %v6156
        %6231 = vmatpush.bf16.msra.mxu0 %v6155
        %6232 = vmatpush.bf16.msra.mxu0 %v6154
        %6233 = vmatpush.bf16.msra.mxu0 %v6153
        %6234 = vmatpush.bf16.msra.mxu0 %v6152
        %6235 = vmatpush.bf16.msra.mxu0 %v6151
        %6236 = vmatpush.bf16.msra.mxu0 %v6150
        %6237 = vmatmul.bf16.gmra.mxu0 %v5929
        %v6238 = vpop.f32.mrf.mxu0
        %v6239 = vadd.f32 %v6226, %v6238
        %v6240 = vpop.f32.mrf.mxu0
        %6241 = vdwg.mxu0
        %vm6242 = vcmask 58368
        %6243 = vst.msk [vmem:[%s9] sm:$0x3] %vm6242, %v6239
      $region64: #{ppo_forward.7} parent=55 // pred_fallthru
        _
      // Predicated region
      $region65: #{ppo_forward.7} parent=55 // pred_check
        %p6244 = pneg %p232
      $region66: #{ppo_forward.7} parent=55 // pred_check_branch
        %6246 = sbr.rel (%p6244) target = $region68
      $region67: #{ppo_forward.7} parent=55 // pred_region
        _
      $region68: #{ppo_forward.7} parent=55 // pred_fallthru
        _
      // Predicated region
      $region69: #{ppo_forward.7} parent=55 // pred_check
        %p6247 = pneg %p232
      $region70: #{ppo_forward.7} parent=55 // pred_check_branch
        %6249 = sbr.rel (%p6247) target = $region72
      $region71: #{ppo_forward.7} parent=55 // pred_region
        _
      $region72: #{ppo_forward.7} parent=55 // pred_fallthru
        _
    $region56: #{ppo_forward.7} parent=5 // pred_fallthru
      _
    %p6250 = scmp.le.s32.totalorder 2, %s15
    // Predicated region
    $region73: #{ppo_forward.7} parent=5 // pred_check
      %p6251 = pneg %p6250
    $region74: #{ppo_forward.7} parent=5 // pred_check_branch
      %6253 = sbr.rel (%p6251) target = $region76
    $region75: #{ppo_forward.7} parent=5 // pred_region
      %s6254 = ssub.s32 %s15, 2
    $region76: #{ppo_forward.7} parent=5 // pred_fallthru
      _
  $region6: #{ppo_forward.7} parent=0 // loop_footer
    %s19 = sadd.s32 1, %s15
  $region7: #{ppo_forward.7} parent=0 // loop_footer_branch
    %14 = sbr.rel target = $region3
  $region8: #{ppo_forward.7} parent=0 // loop_exit
    _

</llo_original>
